<compile_context>
chip_gen: v7x
topology: tpu7x:2x2x1
jax: 0.10.0
libtpu: 0.0.40
codegen_flags: <defaults>
</compile_context>

<pallas_src>
import math

import numpy as np
import jax
import jax.numpy as jnp
from jax.experimental import pallas as pl
from jax.experimental.pallas import tpu as pltpu


# --------------------------------------------------------------------- helpers
def find_multiple(n: int, k: int) -> int:
    if n % k == 0:
        return n
    return n + k - n % k


def _round_up(x: int, m: int) -> int:
    return (x + m - 1) // m * m


def _row_tile(m: int, cap: int = 1024):
    """Row tile + padded row count.  Full extent for small M (=> no pad copy)."""
    if m <= cap:
        return m, m
    if m % 256 == 0:
        return 256, m
    return 256, _round_up(m, 256)


def _col_tile(n: int, cap: int = 512) -> int:
    """Lane-dense column tile that divides n exactly (never pads the lane axis)."""
    if n <= cap or n % 128 != 0:
        return n
    for t in (cap, 512, 256, 128):
        if t <= cap and n % t == 0:
            return t
    return n


def _seq_tile(n: int, cap: int) -> int:
    if n <= cap or n % 8 != 0:
        return n
    for t in (cap, 512, 256, 128, 64, 32, 16, 8):
        if t <= cap and n % t == 0:
            return t
    return n


def _vmem_limit(bytes_needed: int) -> int:
    # Actual working set + headroom, capped at 48 MiB (v7x has 64 MiB physical).
    return int(min(48 * 1024 * 1024,
                   max(16 * 1024 * 1024, int(bytes_needed) + (4 << 20))))


# ----------------------------------------------------------------- RoPE tables
def precompute_freqs_cis_2d(grid_size: int, n_elem: int, base: int = 10000,
                            cls_token_num: int = 1) -> jnp.ndarray:
    half_dim = n_elem // 2
    freqs = 1.0 / base ** (np.arange(0, half_dim, 2)[: half_dim // 2].astype(np.float32) / half_dim)
    t = np.arange(grid_size, dtype=np.float32)
    freqs = np.outer(t, freqs)                                   # (g, half//2)
    freqs_grid = np.concatenate(
        [np.broadcast_to(freqs[:, None, :], (grid_size, grid_size, freqs.shape[-1])),
         np.broadcast_to(freqs[None, :, :], (grid_size, grid_size, freqs.shape[-1]))],
        axis=-1)                                                 # (g, g, half)
    cache_grid = np.stack([np.cos(freqs_grid), np.sin(freqs_grid)], axis=-1)
    cache = cache_grid.reshape(grid_size * grid_size, half_dim, 2)
    cond_cache = np.concatenate(
        [np.zeros((cls_token_num, n_elem // 2, 2), np.float32), cache.astype(np.float32)], axis=0)
    return jnp.asarray(cond_cache)                               # (cls + g*g, half, 2)


def build_rope_planes(freqs_cis, n_head):
    """cos/sin planes (B, P, D//2) matching the half-split per-head layout."""
    c = freqs_cis[..., 0]                                        # (B, P, Dh//2)
    s = freqs_cis[..., 1]
    cos = jnp.tile(c, (1, 1, n_head)).astype(jnp.float32)        # (B, P, D//2)
    sin = jnp.tile(s, (1, 1, n_head)).astype(jnp.float32)
    return cos, sin


def rope_permute_cols(w, n_head, head_dim):
    """Column permutation: PyTorch interleaved pair layout -> half-split layout.

    Applied once, host-side, to the q / k projection weights.  Attention scores
    are unchanged because q and k are permuted identically."""
    half = head_dim // 2
    idx = []
    for h in range(n_head):
        base = h * head_dim
        idx.extend((base + 2 * np.arange(half)).tolist())
        idx.extend((base + 2 * np.arange(half) + 1).tolist())
    return w[:, np.asarray(idx, dtype=np.int32)]


# ------------------------------------------------ fused (norm) + matmul (+res)
def _make_linear_kernel(do_norm, do_res, eps):
    def kernel(*refs):
        refs = list(refs)
        x_ref = refs.pop(0)
        nw_ref = refs.pop(0) if do_norm else None
        w_ref = refs.pop(0)
        r_ref = refs.pop(0) if do_res else None
        o_ref = refs.pop(0)

        x = x_ref[...]
        if do_norm:
            xf = x.astype(jnp.float32)
            ms = jnp.mean(xf * xf, axis=-1, keepdims=True)
            xb = (xf * jax.lax.rsqrt(ms + eps) * nw_ref[...]).astype(jnp.bfloat16)
        else:
            xb = x.astype(jnp.bfloat16)
        acc = jnp.dot(xb, w_ref[...], preferred_element_type=jnp.float32)
        if do_res:
            acc = acc + r_ref[...].astype(jnp.float32)
        o_ref[...] = acc.astype(o_ref.dtype)
    return kernel


def fused_linear(x2d, w, *, norm_w=None, residual=None, eps=1e-5,
                 out_dtype=jnp.float32):
    """out = [residual +] (rmsnorm(x) if norm_w else x) @ w."""
    M, K = x2d.shape
    N = w.shape[1]
    tm, Mp = _row_tile(M)
    tn = _col_tile(N)

    xp = x2d if Mp == M else jnp.pad(x2d, ((0, Mp - M), (0, 0)))
    wp = w.astype(jnp.bfloat16)

    do_norm = norm_w is not None
    do_res = residual is not None

    inputs = [xp]
    in_specs = [pl.BlockSpec((tm, K), lambda i, j: (i, 0))]
    blk = tm * K * xp.dtype.itemsize
    if do_norm:
        inputs.append(norm_w.astype(jnp.float32).reshape(1, K))
        in_specs.append(pl.BlockSpec((1, K), lambda i, j: (0, 0)))
        blk += K * 4
    inputs.append(wp)
    in_specs.append(pl.BlockSpec((K, tn), lambda i, j: (0, j)))
    blk += K * tn * 2
    if do_res:
        rp = residual if Mp == M else jnp.pad(residual, ((0, Mp - M), (0, 0)))
        inputs.append(rp)
        in_specs.append(pl.BlockSpec((tm, tn), lambda i, j: (i, j)))
        blk += tm * tn * rp.dtype.itemsize
    blk += tm * tn * jnp.dtype(out_dtype).itemsize

    cost = pl.CostEstimate(
        flops=int(2 * Mp * K * N),
        transcendentals=int(Mp if do_norm else 0),
        bytes_accessed=int(xp.dtype.itemsize * Mp * K + 2 * K * N
                           + (4 * Mp * N if do_res else 0)
                           + jnp.dtype(out_dtype).itemsize * Mp * N))

    out = pl.pallas_call(
        _make_linear_kernel(do_norm, do_res, eps),
        out_shape=jax.ShapeDtypeStruct((Mp, N), out_dtype),
        grid=(Mp // tm, N // tn),
        in_specs=in_specs,
        out_specs=pl.BlockSpec((tm, tn), lambda i, j: (i, j)),
        compiler_params=pltpu.CompilerParams(
            dimension_semantics=("parallel", "parallel"),
            vmem_limit_bytes=_vmem_limit(2 * blk)),
        cost_estimate=cost,
    )(*inputs)
    return out[:M] if Mp != M else out


# ----------------------------------- fused RMSNorm + SwiGLU FFN (+ residual)
def _make_ffn_kernel(eps):
    def kernel(x_ref, nw_ref, w1_ref, w3_ref, w2_ref, o_ref, xn_ref, acc_ref):
        j = pl.program_id(1)

        @pl.when(j == 0)
        def _():
            x = x_ref[...].astype(jnp.float32)
            ms = jnp.mean(x * x, axis=-1, keepdims=True)
            xn_ref[...] = (x * jax.lax.rsqrt(ms + eps) * nw_ref[...]).astype(jnp.bfloat16)
            acc_ref[...] = jnp.zeros(acc_ref.shape, acc_ref.dtype)

        xn = xn_ref[...]
        h1 = jnp.dot(xn, w1_ref[...], preferred_element_type=jnp.float32)
        h3 = jnp.dot(xn, w3_ref[...], preferred_element_type=jnp.float32)
        h = (h1 * jax.nn.sigmoid(h1) * h3).astype(jnp.bfloat16)
        acc_ref[...] = acc_ref[...] + jnp.dot(h, w2_ref[...],
                                              preferred_element_type=jnp.float32)

        @pl.when(j == pl.num_programs(1) - 1)
        def _():
            # residual add fused into the store: out = x + w2(silu(w1 xn) * w3 xn)
            o_ref[...] = acc_ref[...] + x_ref[...].astype(jnp.float32)
    return kernel


def ffn_block(x2d, norm_w, w1, w3, w2, eps):
    M, D = x2d.shape
    Hd = w1.shape[1]
    tm, Mp = _row_tile(M)
    t_hd = _col_tile(Hd)                      # hidden-dim tiling bounds VMEM (v7x)
    xp = x2d if Mp == M else jnp.pad(x2d, ((0, Mp - M), (0, 0)))

    blk = (tm * D * 4 + D * 4 + 2 * D * t_hd * 2 + t_hd * D * 2 + tm * D * 4)
    scratch_bytes = tm * D * (2 + 4)
    cost = pl.CostEstimate(
        flops=int(6 * Mp * D * Hd),
        transcendentals=int(Mp * Hd),
        bytes_accessed=int(8 * Mp * D + 2 * 3 * D * Hd))

    out = pl.pallas_call(
        _make_ffn_kernel(eps),
        out_shape=jax.ShapeDtypeStruct((Mp, D), jnp.float32),
        grid=(Mp // tm, Hd // t_hd),
        in_specs=[pl.BlockSpec((tm, D), lambda i, j: (i, 0)),
                  pl.BlockSpec((1, D), lambda i, j: (0, 0)),
                  pl.BlockSpec((D, t_hd), lambda i, j: (0, j)),
                  pl.BlockSpec((D, t_hd), lambda i, j: (0, j)),
                  pl.BlockSpec((t_hd, D), lambda i, j: (j, 0))],
        out_specs=pl.BlockSpec((tm, D), lambda i, j: (i, 0)),
        scratch_shapes=[pltpu.VMEM((tm, D), jnp.bfloat16),
                        pltpu.VMEM((tm, D), jnp.float32)],
        compiler_params=pltpu.CompilerParams(
            dimension_semantics=("parallel", "arbitrary"),
            vmem_limit_bytes=_vmem_limit(2 * blk + scratch_bytes)),
        cost_estimate=cost,
    )(xp, norm_w.astype(jnp.float32).reshape(1, D),
      w1.astype(jnp.bfloat16), w3.astype(jnp.bfloat16), w2.astype(jnp.bfloat16))
    return out[:M] if Mp != M else out


# ---------------------------------------- bridge: split KV and RoPE-rotate K
def _make_rope_split_kernel(n_head, head_dim):
    D = n_head * head_dim
    half = head_dim // 2

    def kernel(kv_ref, cos_ref, sin_ref, k_ref, v_ref):
        kv = kv_ref[0]
        kf = kv[:, :D].astype(jnp.float32)
        cos = cos_ref[0]
        sin = sin_ref[0]
        for h in range(n_head):
            a = h * head_dim
            c = cos[:, h * half:(h + 1) * half]
            s = sin[:, h * half:(h + 1) * half]
            x0 = kf[:, a:a + half]
            x1 = kf[:, a + half:a + head_dim]
            k_ref[0, :, a:a + half] = (x0 * c - x1 * s).astype(k_ref.dtype)
            k_ref[0, :, a + half:a + head_dim] = (x1 * c + x0 * s).astype(k_ref.dtype)
        v_ref[0] = kv[:, D:2 * D].astype(v_ref.dtype)
    return kernel


def rope_split_kv(kv, cos, sin, n_head, head_dim):
    """kv: (B, N, 2D) bf16 -> (rotated k, v), each (B, N, D) bf16."""
    B, N, W = kv.shape
    D = n_head * head_dim
    t = _seq_tile(N, 512)
    blk = t * (W * kv.dtype.itemsize + 2 * (D // 2) * 4 + 2 * D * 2)
    out = pl.pallas_call(
        _make_rope_split_kernel(n_head, head_dim),
        out_shape=(jax.ShapeDtypeStruct((B, N, D), jnp.bfloat16),
                   jax.ShapeDtypeStruct((B, N, D), jnp.bfloat16)),
        grid=(B, N // t),
        in_specs=[pl.BlockSpec((1, t, W), lambda b, i: (b, i, 0)),
                  pl.BlockSpec((1, t, D // 2), lambda b, i: (b, i, 0)),
                  pl.BlockSpec((1, t, D // 2), lambda b, i: (b, i, 0))],
        out_specs=(pl.BlockSpec((1, t, D), lambda b, i: (b, i, 0)),
                   pl.BlockSpec((1, t, D), lambda b, i: (b, i, 0))),
        compiler_params=pltpu.CompilerParams(
            dimension_semantics=("parallel", "parallel"),
            vmem_limit_bytes=_vmem_limit(2 * blk)),
    )(kv, cos, sin)
    return out


# ---------------------------------------- flash-style MHA with fused RoPE
def _make_mha_kernel(n_head, head_dim, scale, rope_q, rope_k, q_col, k_col, v_col):
    D = n_head * head_dim
    half = head_dim // 2

    def _extract(ref, col):
        blk = ref[0]
        if blk.shape[-1] == D:
            return blk
        return blk[:, col * D:(col + 1) * D]

    def _rope_store(dst_ref, x_f32, cos, sin, mul):
        # x_f32 (rows, D) in half-split head layout; cos/sin (rows, D//2).
        for h in range(n_head):
            a = h * head_dim
            c = cos[:, h * half:(h + 1) * half]
            s = sin[:, h * half:(h + 1) * half]
            x0 = x_f32[:, a:a + half]
            x1 = x_f32[:, a + half:a + head_dim]
            r0 = x0 * c - x1 * s
            r1 = x1 * c + x0 * s
            if mul != 1.0:
                r0 = r0 * mul
                r1 = r1 * mul
            dst_ref[:, a:a + half] = r0.astype(dst_ref.dtype)
            dst_ref[:, a + half:a + head_dim] = r1.astype(dst_ref.dtype)

    def kernel(*refs):
        refs = list(refs)
        q_ref = refs.pop(0)
        k_ref = refs.pop(0)
        v_ref = refs.pop(0)
        qcos_ref = refs.pop(0) if rope_q else None
        qsin_ref = refs.pop(0) if rope_q else None
        kcos_ref = refs.pop(0) if rope_k else None
        ksin_ref = refs.pop(0) if rope_k else None
        o_ref = refs.pop(0)
        qs_ref = refs.pop(0)
        ks_ref = refs.pop(0) if rope_k else None
        m_ref, l_ref, acc_ref = refs

        kv_i = pl.program_id(2)

        @pl.when(kv_i == 0)
        def _():
            q = _extract(q_ref, q_col).astype(jnp.float32)
            if rope_q:
                _rope_store(qs_ref, q, qcos_ref[0], qsin_ref[0], scale)
            else:
                qs_ref[...] = (q * scale).astype(qs_ref.dtype)
            m_ref[...] = jnp.full(m_ref.shape, -jnp.inf, dtype=m_ref.dtype)
            l_ref[...] = jnp.zeros(l_ref.shape, l_ref.dtype)
            acc_ref[...] = jnp.zeros(acc_ref.shape, acc_ref.dtype)

        if rope_k:
            kf = _extract(k_ref, k_col).astype(jnp.float32)
            _rope_store(ks_ref, kf, kcos_ref[0], ksin_ref[0], 1.0)
            kb = None
        else:
            kb = _extract(k_ref, k_col)
            if kb.dtype != jnp.bfloat16:
                kb = kb.astype(jnp.bfloat16)
        vb = _extract(v_ref, v_col)
        if vb.dtype != jnp.bfloat16:
            vb = vb.astype(jnp.bfloat16)

        # static unroll over heads; online softmax state per head in scratch.
        # TODO(synk): group several heads per MXU call when head_dim < 128 to
        # raise systolic-array utilization on v6e/v7x.
        for h in range(n_head):
            a = h * head_dim
            qh = qs_ref[:, a:a + head_dim]
            kh = ks_ref[:, a:a + head_dim] if rope_k else kb[:, a:a + head_dim]
            s = jnp.dot(qh, kh.T, preferred_element_type=jnp.float32)
            m_prev = m_ref[:, h:h + 1]
            m_new = jnp.maximum(m_prev, jnp.max(s, axis=-1, keepdims=True))
            alpha = jnp.exp(m_prev - m_new)
            p = jnp.exp(s - m_new)
            l_ref[:, h:h + 1] = alpha * l_ref[:, h:h + 1] + jnp.sum(p, axis=-1, keepdims=True)
            acc_ref[:, a:a + head_dim] = (
                alpha * acc_ref[:, a:a + head_dim]
                + jnp.dot(p.astype(jnp.bfloat16), vb[:, a:a + head_dim],
                          preferred_element_type=jnp.float32))
            m_ref[:, h:h + 1] = m_new

        @pl.when(kv_i == pl.num_programs(2) - 1)
        def _():
            inv = pl.reciprocal(l_ref[...], approx=True)
            for h in range(n_head):
                a = h * head_dim
                o_ref[0, :, a:a + head_dim] = (
                    acc_ref[:, a:a + head_dim] * inv[:, h:h + 1]).astype(o_ref.dtype)

    return kernel


def mha(q_arr, k_arr, v_arr, *, n_head, head_dim,
        q_col=0, k_col=0, v_col=0,
        q_cos=None, q_sin=None, k_cos=None, k_sin=None,
        out_dtype=jnp.bfloat16):
    """Non-causal multi-head attention (eval mode).

    q_arr / k_arr / v_arr may be the same packed (B, N, n*D) buffer; the D-wide
    column `*_col` selects q / k / v at the BlockSpec level (no XLA slicing)."""
    B, Nq, _ = q_arr.shape
    Nk = k_arr.shape[1]
    D = n_head * head_dim
    scale = 1.0 / math.sqrt(head_dim)
    rope_q = q_cos is not None
    rope_k = k_cos is not None

    tq = _seq_tile(Nq, 256)
    tkv = _seq_tile(Nk, 512)

    def _blk_w(arr):
        W = arr.shape[-1]
        return D if (D % 128 == 0 or W == D) else W

    qw, kw, vw = _blk_w(q_arr), _blk_w(k_arr), _blk_w(v_arr)
    q_bi = q_col if qw == D else 0
    k_bi = k_col if kw == D else 0
    v_bi = v_col if vw == D else 0

    inputs = [q_arr, k_arr, v_arr]
    in_specs = [
        pl.BlockSpec((1, tq, qw), lambda b, qi, ki, c=q_bi: (b, qi, c)),
        pl.BlockSpec((1, tkv, kw), lambda b, qi, ki, c=k_bi: (b, ki, c)),
        pl.BlockSpec((1, tkv, vw), lambda b, qi, ki, c=v_bi: (b, ki, c)),
    ]
    blk = tq * qw * q_arr.dtype.itemsize + tkv * (kw + vw) * k_arr.dtype.itemsize
    if rope_q:
        in_specs += [pl.BlockSpec((1, tq, D // 2), lambda b, qi, ki: (b, qi, 0))] * 2
        inputs += [q_cos, q_sin]
        blk += 2 * tq * (D // 2) * 4
    if rope_k:
        in_specs += [pl.BlockSpec((1, tkv, D // 2), lambda b, qi, ki: (b, ki, 0))] * 2
        inputs += [k_cos, k_sin]
        blk += 2 * tkv * (D // 2) * 4
    blk += tq * D * jnp.dtype(out_dtype).itemsize

    scratch = [pltpu.VMEM((tq, D), jnp.bfloat16)]
    scratch_bytes = tq * D * 2
    if rope_k:
        scratch.append(pltpu.VMEM((tkv, D), jnp.bfloat16))
        scratch_bytes += tkv * D * 2
    scratch += [pltpu.VMEM((tq, n_head), jnp.float32),
                pltpu.VMEM((tq, n_head), jnp.float32),
                pltpu.VMEM((tq, D), jnp.float32)]
    scratch_bytes += 2 * tq * n_head * 4 + tq * D * 4

    cost = pl.CostEstimate(
        flops=int(4 * B * Nq * Nk * D),
        transcendentals=int(B * n_head * Nq * Nk),
        bytes_accessed=int(q_arr.size * q_arr.dtype.itemsize
                           + k_arr.size * k_arr.dtype.itemsize
                           + v_arr.size * v_arr.dtype.itemsize
                           + B * Nq * D * jnp.dtype(out_dtype).itemsize))

    return pl.pallas_call(
        _make_mha_kernel(n_head, head_dim, scale, rope_q, rope_k,
                         q_col, k_col, v_col),
        out_shape=jax.ShapeDtypeStruct((B, Nq, D), out_dtype),
        grid=(B, Nq // tq, Nk // tkv),
        in_specs=in_specs,
        out_specs=pl.BlockSpec((1, tq, D), lambda b, qi, ki: (b, qi, 0)),
        scratch_shapes=scratch,
        compiler_params=pltpu.CompilerParams(
            dimension_semantics=("parallel", "parallel", "arbitrary"),
            vmem_limit_bytes=_vmem_limit(2 * blk + scratch_bytes)),
        cost_estimate=cost,
    )(*inputs)


# ---------------------------------------------------------------- model blocks
def self_decoder(x, cos, sin, p, n_head, head_dim, eps):
    B, N, D = x.shape
    x2 = x.reshape(B * N, D)
    # fused rmsnorm + single (D, 3D) QKV projection, bf16 output.
    qkv = fused_linear(x2, p['wqkv'], norm_w=p['attn_norm_w'], eps=eps,
                       out_dtype=jnp.bfloat16).reshape(B, N, 3 * D)
    # RoPE on q & k + attention fully inside one Pallas kernel; q/k/v taken
    # straight from the packed qkv buffer via BlockSpec column selection.
    attn = mha(qkv, qkv, qkv, n_head=n_head, head_dim=head_dim,
               q_col=0, k_col=1, v_col=2,
               q_cos=cos, q_sin=sin, k_cos=cos, k_sin=sin)
    # proj with residual add fused: h = x + proj(attn_out)
    h = fused_linear(attn.reshape(B * N, D), p['proj'], residual=x2, eps=eps,
                     out_dtype=jnp.float32)
    # fused rmsnorm + SwiGLU FFN + residual (hidden dim tiled).
    out = ffn_block(h, p['ffn_norm_w'], p['w1'], p['w3'], p['w2'], eps)
    return out.reshape(B, N, D)


def cross_decoder(xq, k_rot, v, q_cos, q_sin, p, n_head, head_dim, eps):
    B, Nq, D = xq.shape
    x2 = xq.reshape(B * Nq, D)
    q = fused_linear(x2, p['to_q'], norm_w=p['attn_norm_w'], eps=eps,
                     out_dtype=jnp.bfloat16).reshape(B, Nq, D)
    attn = mha(q, k_rot, v, n_head=n_head, head_dim=head_dim,
               q_cos=q_cos, q_sin=q_sin)
    h = fused_linear(attn.reshape(B * Nq, D), p['proj'], residual=x2, eps=eps,
                     out_dtype=jnp.float32)
    out = ffn_block(h, p['ffn_norm_w'], p['w1'], p['w3'], p['w2'], eps)
    return out.reshape(B, Nq, D)


def decoder_decoder(x, q, cos_all, sin_all, params, cfg):
    n_head, eps = cfg['n_head'], cfg['norm_eps']
    D = cfg['dim']
    head_dim = D // n_head
    B, N, _ = x.shape
    Nq = q.shape[1]
    cos_ctx, sin_ctx = cos_all[:, :N], sin_all[:, :N]
    cos_q, sin_q = cos_all[:, -Nq:], sin_all[:, -Nq:]

    for p in params['self_dec']:
        x = self_decoder(x, cos_ctx, sin_ctx, p, n_head, head_dim, eps)

    # Decoder_Decoder bridge: fused norm + (D, 2D) K/V projection, then one
    # Pallas kernel splits KV and rotates K (consumed by all cross layers).
    kv = fused_linear(x.reshape(B * N, D), params['dd_wkv'],
                      norm_w=params['dd_norm_w'], eps=eps,
                      out_dtype=jnp.bfloat16).reshape(B, N, 2 * D)
    k_rot, v = rope_split_kv(kv, cos_ctx, sin_ctx, n_head, head_dim)

    for p in params['cross_dec']:
        q = cross_decoder(q, k_rot, v, cos_q, sin_q, p, n_head, head_dim, eps)
    return q


def forward_shared(input_ids, freqs_cis, params, cfg, num_query=None):
    B, N = input_ids.shape
    D = cfg['dim']
    n_head = cfg['n_head']
    # TODO(synk): embedding gather stays in XLA (data-dependent row gather).
    x = jnp.take(params['embedding'], input_ids, axis=0)        # embed_drop = identity (eval)
    num_query = N if num_query is None else num_query
    mask_ids = jnp.full((B, num_query), cfg['vocab_size'], dtype=jnp.int32)
    queries = jnp.take(params['embedding'], mask_ids, axis=0)
    cos_all, sin_all = build_rope_planes(freqs_cis, n_head)
    x = decoder_decoder(x, queries, cos_all, sin_all, params, cfg)
    Bq, Nq, _ = x.shape
    # fused final rmsnorm + LM head.
    logits = fused_linear(x.reshape(Bq * Nq, D), params['head'],
                          norm_w=params['final_norm_w'], eps=cfg['norm_eps'],
                          out_dtype=jnp.float32)
    return logits.reshape(Bq, Nq, cfg['vocab_size'])


def transformer_forward(input_ids, condition, params, freqs_table, cfg, key):
    B, N = input_ids.shape
    k_drop, k_shuf = jax.random.split(key)
    # preprocess_condition (host-equivalent randomness, stays in XLA)
    drop = jax.random.uniform(k_drop, condition.shape) < cfg['class_dropout_prob']
    none_conds_id = cfg['vocab_size'] + cfg['num_classes'] + 1
    cond = jnp.where(drop, none_conds_id, condition + cfg['vocab_size'] + 1)
    cond = cond[:, None] if cond.ndim == 1 else cond
    # batch_seq_shuffle of tokens and the (shared) rope table
    orders = jnp.argsort(jax.random.uniform(k_shuf, (B, N)), axis=1)
    shuffled_ids = jnp.take_along_axis(input_ids, orders, axis=1)
    freqs = jnp.broadcast_to(freqs_table[None], (B,) + freqs_table.shape)
    fixed = freqs[:, :1]
    shuf_freqs = jnp.take_along_axis(freqs[:, 1:], orders[:, :, None, None], axis=1)
    freqs = jnp.concatenate([fixed, shuf_freqs], axis=1)
    logits = forward_shared(jnp.concatenate([cond, shuffled_ids[:, :-1]], axis=-1),
                            freqs, params, cfg)
    return logits, None   # targets=None -> loss=None


# --------------------------------------------------------------------- params
def init_params(key, cfg):
    D = cfg['dim']
    n_head = cfg['n_head']
    head_dim = D // n_head
    hidden = find_multiple(int(2 * (4 * D) / 3), cfg['multiple_of'])
    std = cfg['initializer_range']
    keys = iter(jax.random.split(key, 256))

    def normal(shape):
        return jax.random.normal(next(keys), shape, jnp.float32) * std

    def qk_perm(w):
        # q/k projections store their output columns in the half-split RoPE
        # layout (one-off conversion from the PyTorch interleaved layout).
        return rope_permute_cols(w, n_head, head_dim)

    n_emb = cfg['vocab_size'] + 1 + cfg['num_classes'] + 1 + 1
    params = {
        'embedding': normal((n_emb, D)),
        'self_dec': [], 'cross_dec': [],
        'dd_norm_w': jnp.ones((D,), jnp.float32),
        'dd_wkv': jnp.concatenate([qk_perm(normal((D, D))), normal((D, D))],
                                  axis=1).astype(jnp.bfloat16),   # to_k || to_v
        'final_norm_w': jnp.ones((D,), jnp.float32),
        'head': jnp.zeros((D, cfg['vocab_size']), jnp.bfloat16),  # nn.init.constant_(head, 0)
    }
    for _ in range(cfg['n_layer'] // 2):
        params['self_dec'].append({
            'wqkv': jnp.concatenate([qk_perm(normal((D, D))), qk_perm(normal((D, D))),
                                     normal((D, D))], axis=1).astype(jnp.bfloat16),
            'proj': normal((D, D)).astype(jnp.bfloat16),
            'w1': normal((D, hidden)).astype(jnp.bfloat16),
            'w3': normal((D, hidden)).astype(jnp.bfloat16),
            'w2': normal((hidden, D)).astype(jnp.bfloat16),
            'attn_norm_w': jnp.ones((D,), jnp.float32),
            'ffn_norm_w': jnp.ones((D,), jnp.float32),
        })
        params['cross_dec'].append({
            'to_q': qk_perm(normal((D, D))).astype(jnp.bfloat16),
            'proj': normal((D, D)).astype(jnp.bfloat16),
            'w1': normal((D, hidden)).astype(jnp.bfloat16),
            'w3': normal((D, hidden)).astype(jnp.bfloat16),
            'w2': normal((hidden, D)).astype(jnp.bfloat16),
            'attn_norm_w': jnp.ones((D,), jnp.float32),
            'ffn_norm_w': jnp.ones((D,), jnp.float32),
        })
    return params


# ----------------------------------------------------------------------- main
if __name__ == "__main__":
    cfg = dict(dim=64, n_layer=2, n_head=4, multiple_of=32, rope_base=10000,
               norm_eps=1e-5, initializer_range=0.02, num_classes=10,
               class_dropout_prob=0.1, vocab_size=64, cls_token_num=1, block_size=16)

    key = jax.random.PRNGKey(0)
    kp, kin, kcond, kfwd = jax.random.split(key, 4)

    params = init_params(kp, cfg)
    grid_size = int(cfg['block_size'] ** 0.5)
    freqs_table = precompute_freqs_cis_2d(grid_size, cfg['dim'] // cfg['n_head'],
                                          cfg['rope_base'], cfg['cls_token_num'])

    B = 2
    input_ids = jax.random.randint(kin, (B, cfg['block_size']), 0, cfg['vocab_size'],
                                   dtype=jnp.int32)
    condition = jax.random.randint(kcond, (B,), 0, cfg['num_classes'], dtype=jnp.int32)

    @jax.jit
    def run(input_ids, condition, params, key):
        return transformer_forward(input_ids, condition, params, freqs_table, cfg, key)

    # TODO(synk): training-mode dropout / causal SDPA, the cross-entropy loss and the
    # generate() sampling loop (top-k/top-p, multinomial) are host-side control flow
    # and are not lowered to Pallas.
    logits, loss = run(input_ids, condition, params, kfwd)
    jax.block_until_ready(logits)
    assert logits.shape == (B, cfg['block_size'], cfg['vocab_size'])
    assert logits.dtype == jnp.float32
    print("KERNEL_OK")
</pallas_src>

<mosaic_0001>
module attributes {stable_mosaic.version = 11 : i64} {
  func.func @kernel(%arg0: i32, %arg1: i32, %arg2: memref<32x64xf32, #tpu.memory_space<vmem>>, %arg3: memref<1x64xf32, #tpu.memory_space<vmem>>, %arg4: memref<64x64xbf16, #tpu.memory_space<vmem>>, %arg5: memref<32x64xbf16, #tpu.memory_space<vmem>>) attributes {dimension_semantics = [#tpu.dimension_semantics<parallel>, #tpu.dimension_semantics<parallel>], iteration_bounds = array<i64: 1, 1>, scalar_prefetch = 0 : i64, scratch_operands = 0 : i64, tpu.core_type = #tpu.core_type<tc>, window_params = [{transform_indices = @transform_0, window_bounds = array<i64: 32, 64>}, {pipeline_mode = #tpu.pipeline_mode<synchronous>, transform_indices = @transform_1, window_bounds = array<i64: 1, 64>}, {transform_indices = @transform_2, window_bounds = array<i64: 64, 64>}, {transform_indices = @transform_3, window_bounds = array<i64: 32, 64>}]} {
    %c0 = arith.constant 0 : index
    %c0_0 = arith.constant 0 : index
    %0 = vector.load %arg2[%c0, %c0_0] : memref<32x64xf32, #tpu.memory_space<vmem>>, vector<32x64xf32>
    %1 = arith.mulf %0, %0 : vector<32x64xf32>
    %cst = arith.constant dense<0.000000e+00> : vector<32xf32>
    %2 = vector.multi_reduction <add>, %1, %cst [1] : vector<32x64xf32> to vector<32xf32>
    %3 = vector.shape_cast %2 : vector<32xf32> to vector<32x1xf32>
    %cst_1 = arith.constant 6.400000e+01 : f32
    %4 = vector.broadcast %cst_1 : f32 to vector<32x1xf32>
    %5 = arith.divf %3, %4 : vector<32x1xf32>
    %cst_2 = arith.constant 9.99999974E-6 : f32
    %6 = vector.broadcast %cst_2 : f32 to vector<32x1xf32>
    %7 = arith.addf %5, %6 : vector<32x1xf32>
    %8 = math.rsqrt %7 : vector<32x1xf32>
    %9 = vector.broadcast %8 : vector<32x1xf32> to vector<32x64xf32>
    %10 = arith.mulf %0, %9 : vector<32x64xf32>
    %c0_3 = arith.constant 0 : index
    %c0_4 = arith.constant 0 : index
    %11 = vector.load %arg3[%c0_3, %c0_4] : memref<1x64xf32, #tpu.memory_space<vmem>>, vector<1x64xf32>
    %12 = vector.broadcast %11 : vector<1x64xf32> to vector<32x64xf32>
    %13 = arith.mulf %10, %12 : vector<32x64xf32>
    %14 = arith.truncf %13 : vector<32x64xf32> to vector<32x64xbf16>
    %c0_5 = arith.constant 0 : index
    %c0_6 = arith.constant 0 : index
    %15 = vector.load %arg4[%c0_5, %c0_6] : memref<64x64xbf16, #tpu.memory_space<vmem>>, vector<64x64xbf16>
    %cst_7 = arith.constant dense<0.000000e+00> : vector<32x64xf32>
    %16 = tpu.matmul %14, %15, %cst_7 {dimension_numbers = #tpu.dot_dimension_numbers<[1], [0], [0], [1], [0, 0, 1, 1], [], []>} : vector<32x64xbf16>, vector<64x64xbf16>, vector<32x64xf32> -> vector<32x64xf32>
    %17 = arith.truncf %16 : vector<32x64xf32> to vector<32x64xbf16>
    %c0_8 = arith.constant 0 : index
    %c0_9 = arith.constant 0 : index
    %18 = vector.load %arg5[%c0_8, %c0_9] : memref<32x64xbf16, #tpu.memory_space<vmem>>, vector<32x64xbf16>
    tpu.vector_store %arg5[%c0_8, %c0_9], %17 {strides = array<i32>} : memref<32x64xbf16, #tpu.memory_space<vmem>>, vector<32x64xbf16>,
    return
  }
  func.func @transform_0(%arg0: i32, %arg1: i32) -> (i32, i32) {
    %c0_i32 = arith.constant 0 : i32
    %c0_i32_0 = arith.constant 0 : i32
    return %arg0, %c0_i32 : i32, i32
  }
  func.func @transform_1(%arg0: i32, %arg1: i32) -> (i32, i32) {
    %c0_i32 = arith.constant 0 : i32
    %c0_i32_0 = arith.constant 0 : i32
    %c0_i32_1 = arith.constant 0 : i32
    return %c0_i32, %c0_i32_0 : i32, i32
  }
  func.func @transform_2(%arg0: i32, %arg1: i32) -> (i32, i32) {
    %c0_i32 = arith.constant 0 : i32
    %c0_i32_0 = arith.constant 0 : i32
    return %c0_i32, %arg1 : i32, i32
  }
  func.func @transform_3(%arg0: i32, %arg1: i32) -> (i32, i32) {
    %c0_i32 = arith.constant 0 : i32
    return %arg0, %arg1 : i32, i32
  }
}

module attributes {stable_mosaic.version = 11 : i64} {
  func.func @kernel(%arg0: i32, %arg1: i32, %arg2: memref<32x64xbf16, #tpu.memory_space<vmem>>, %arg3: memref<64x64xbf16, #tpu.memory_space<vmem>>, %arg4: memref<32x64xf32, #tpu.memory_space<vmem>>, %arg5: memref<32x64xf32, #tpu.memory_space<vmem>>) attributes {dimension_semantics = [#tpu.dimension_semantics<parallel>, #tpu.dimension_semantics<parallel>], iteration_bounds = array<i64: 1, 1>, scalar_prefetch = 0 : i64, scratch_operands = 0 : i64, tpu.core_type = #tpu.core_type<tc>, window_params = [{transform_indices = @transform_0, window_bounds = array<i64: 32, 64>}, {transform_indices = @transform_1, window_bounds = array<i64: 64, 64>}, {transform_indices = @transform_2, window_bounds = array<i64: 32, 64>}, {transform_indices = @transform_3, window_bounds = array<i64: 32, 64>}]} {
    %c0 = arith.constant 0 : index
    %c0_0 = arith.constant 0 : index
    %0 = vector.load %arg2[%c0, %c0_0] : memref<32x64xbf16, #tpu.memory_space<vmem>>, vector<32x64xbf16>
    %c0_1 = arith.constant 0 : index
    %c0_2 = arith.constant 0 : index
    %1 = vector.load %arg3[%c0_1, %c0_2] : memref<64x64xbf16, #tpu.memory_space<vmem>>, vector<64x64xbf16>
    %cst = arith.constant dense<0.000000e+00> : vector<32x64xf32>
    %2 = tpu.matmul %0, %1, %cst {dimension_numbers = #tpu.dot_dimension_numbers<[1], [0], [0], [1], [0, 0, 1, 1], [], []>} : vector<32x64xbf16>, vector<64x64xbf16>, vector<32x64xf32> -> vector<32x64xf32>
    %c0_3 = arith.constant 0 : index
    %c0_4 = arith.constant 0 : index
    %3 = vector.load %arg4[%c0_3, %c0_4] : memref<32x64xf32, #tpu.memory_space<vmem>>, vector<32x64xf32>
    %4 = arith.addf %2, %3 : vector<32x64xf32>
    %c0_5 = arith.constant 0 : index
    %c0_6 = arith.constant 0 : index
    %5 = vector.load %arg5[%c0_5, %c0_6] : memref<32x64xf32, #tpu.memory_space<vmem>>, vector<32x64xf32>
    tpu.vector_store %arg5[%c0_5, %c0_6], %4 {strides = array<i32>} : memref<32x64xf32, #tpu.memory_space<vmem>>, vector<32x64xf32>,
    return
  }
  func.func @transform_0(%arg0: i32, %arg1: i32) -> (i32, i32) {
    %c0_i32 = arith.constant 0 : i32
    %c0_i32_0 = arith.constant 0 : i32
    return %arg0, %c0_i32 : i32, i32
  }
  func.func @transform_1(%arg0: i32, %arg1: i32) -> (i32, i32) {
    %c0_i32 = arith.constant 0 : i32
    %c0_i32_0 = arith.constant 0 : i32
    return %c0_i32, %arg1 : i32, i32
  }
  func.func @transform_2(%arg0: i32, %arg1: i32) -> (i32, i32) {
    %c0_i32 = arith.constant 0 : i32
    return %arg0, %arg1 : i32, i32
  }
  func.func @transform_3(%arg0: i32, %arg1: i32) -> (i32, i32) {
    %c0_i32 = arith.constant 0 : i32
    return %arg0, %arg1 : i32, i32
  }
}

module attributes {stable_mosaic.version = 11 : i64} {
  func.func @kernel(%arg0: i32, %arg1: i32, %arg2: memref<32x64xf32, #tpu.memory_space<vmem>>, %arg3: memref<1x64xf32, #tpu.memory_space<vmem>>, %arg4: memref<64x192xbf16, #tpu.memory_space<vmem>>, %arg5: memref<32x192xbf16, #tpu.memory_space<vmem>>) attributes {dimension_semantics = [#tpu.dimension_semantics<parallel>, #tpu.dimension_semantics<parallel>], iteration_bounds = array<i64: 1, 1>, scalar_prefetch = 0 : i64, scratch_operands = 0 : i64, tpu.core_type = #tpu.core_type<tc>, window_params = [{transform_indices = @transform_0, window_bounds = array<i64: 32, 64>}, {pipeline_mode = #tpu.pipeline_mode<synchronous>, transform_indices = @transform_1, window_bounds = array<i64: 1, 64>}, {transform_indices = @transform_2, window_bounds = array<i64: 64, 192>}, {transform_indices = @transform_3, window_bounds = array<i64: 32, 192>}]} {
    %c0 = arith.constant 0 : index
    %c0_0 = arith.constant 0 : index
    %0 = vector.load %arg2[%c0, %c0_0] : memref<32x64xf32, #tpu.memory_space<vmem>>, vector<32x64xf32>
    %1 = arith.mulf %0, %0 : vector<32x64xf32>
    %cst = arith.constant dense<0.000000e+00> : vector<32xf32>
    %2 = vector.multi_reduction <add>, %1, %cst [1] : vector<32x64xf32> to vector<32xf32>
    %3 = vector.shape_cast %2 : vector<32xf32> to vector<32x1xf32>
    %cst_1 = arith.constant 6.400000e+01 : f32
    %4 = vector.broadcast %cst_1 : f32 to vector<32x1xf32>
    %5 = arith.divf %3, %4 : vector<32x1xf32>
    %cst_2 = arith.constant 9.99999974E-6 : f32
    %6 = vector.broadcast %cst_2 : f32 to vector<32x1xf32>
    %7 = arith.addf %5, %6 : vector<32x1xf32>
    %8 = math.rsqrt %7 : vector<32x1xf32>
    %9 = vector.broadcast %8 : vector<32x1xf32> to vector<32x64xf32>
    %10 = arith.mulf %0, %9 : vector<32x64xf32>
    %c0_3 = arith.constant 0 : index
    %c0_4 = arith.constant 0 : index
    %11 = vector.load %arg3[%c0_3, %c0_4] : memref<1x64xf32, #tpu.memory_space<vmem>>, vector<1x64xf32>
    %12 = vector.broadcast %11 : vector<1x64xf32> to vector<32x64xf32>
    %13 = arith.mulf %10, %12 : vector<32x64xf32>
    %14 = arith.truncf %13 : vector<32x64xf32> to vector<32x64xbf16>
    %c0_5 = arith.constant 0 : index
    %c0_6 = arith.constant 0 : index
    %15 = vector.load %arg4[%c0_5, %c0_6] : memref<64x192xbf16, #tpu.memory_space<vmem>>, vector<64x192xbf16>
    %cst_7 = arith.constant dense<0.000000e+00> : vector<32x192xf32>
    %16 = tpu.matmul %14, %15, %cst_7 {dimension_numbers = #tpu.dot_dimension_numbers<[1], [0], [0], [1], [0, 0, 1, 1], [], []>} : vector<32x64xbf16>, vector<64x192xbf16>, vector<32x192xf32> -> vector<32x192xf32>
    %17 = arith.truncf %16 : vector<32x192xf32> to vector<32x192xbf16>
    %c0_8 = arith.constant 0 : index
    %c0_9 = arith.constant 0 : index
    %18 = vector.load %arg5[%c0_8, %c0_9] : memref<32x192xbf16, #tpu.memory_space<vmem>>, vector<32x192xbf16>
    tpu.vector_store %arg5[%c0_8, %c0_9], %17 {strides = array<i32>} : memref<32x192xbf16, #tpu.memory_space<vmem>>, vector<32x192xbf16>,
    return
  }
  func.func @transform_0(%arg0: i32, %arg1: i32) -> (i32, i32) {
    %c0_i32 = arith.constant 0 : i32
    %c0_i32_0 = arith.constant 0 : i32
    return %arg0, %c0_i32 : i32, i32
  }
  func.func @transform_1(%arg0: i32, %arg1: i32) -> (i32, i32) {
    %c0_i32 = arith.constant 0 : i32
    %c0_i32_0 = arith.constant 0 : i32
    %c0_i32_1 = arith.constant 0 : i32
    return %c0_i32, %c0_i32_0 : i32, i32
  }
  func.func @transform_2(%arg0: i32, %arg1: i32) -> (i32, i32) {
    %c0_i32 = arith.constant 0 : i32
    %c0_i32_0 = arith.constant 0 : i32
    return %c0_i32, %arg1 : i32, i32
  }
  func.func @transform_3(%arg0: i32, %arg1: i32) -> (i32, i32) {
    %c0_i32 = arith.constant 0 : i32
    return %arg0, %arg1 : i32, i32
  }
}

module attributes {stable_mosaic.version = 11 : i64} {
  func.func @kernel(%arg0: i32, %arg1: i32, %arg2: i32, %arg3: memref<1x16x192xbf16, #tpu.memory_space<vmem>>, %arg4: memref<1x16x192xbf16, #tpu.memory_space<vmem>>, %arg5: memref<1x16x192xbf16, #tpu.memory_space<vmem>>, %arg6: memref<1x16x32xf32, #tpu.memory_space<vmem>>, %arg7: memref<1x16x32xf32, #tpu.memory_space<vmem>>, %arg8: memref<1x16x32xf32, #tpu.memory_space<vmem>>, %arg9: memref<1x16x32xf32, #tpu.memory_space<vmem>>, %arg10: memref<1x16x64xbf16, #tpu.memory_space<vmem>>, %arg11: memref<16x64xbf16, #tpu.memory_space<vmem>>, %arg12: memref<16x64xbf16, #tpu.memory_space<vmem>>, %arg13: memref<16x4xf32, #tpu.memory_space<vmem>>, %arg14: memref<16x4xf32, #tpu.memory_space<vmem>>, %arg15: memref<16x64xf32, #tpu.memory_space<vmem>>) attributes {dimension_semantics = [#tpu.dimension_semantics<parallel>, #tpu.dimension_semantics<parallel>, #tpu.dimension_semantics<arbitrary>], iteration_bounds = array<i64: 2, 1, 1>, scalar_prefetch = 0 : i64, scratch_operands = 5 : i64, tpu.core_type = #tpu.core_type<tc>, window_params = [{transform_indices = @transform_0, window_bounds = array<i64: 1, 16, 192>}, {transform_indices = @transform_1, window_bounds = array<i64: 1, 16, 192>}, {transform_indices = @transform_2, window_bounds = array<i64: 1, 16, 192>}, {transform_indices = @transform_3, window_bounds = array<i64: 1, 16, 32>}, {transform_indices = @transform_4, window_bounds = array<i64: 1, 16, 32>}, {transform_indices = @transform_5, window_bounds = array<i64: 1, 16, 32>}, {transform_indices = @transform_6, window_bounds = array<i64: 1, 16, 32>}, {transform_indices = @transform_7, window_bounds = array<i64: 1, 16, 64>}]} {
    %c0_i32 = arith.constant 0 : i32
    %0 = arith.cmpi eq, %arg2, %c0_i32 : i32
    %1 = arith.extui %0 : i1 to i32
    %c0_i32_0 = arith.constant 0 : i32
    %2 = arith.cmpi ne, %1, %c0_i32_0 : i32
    scf.if %2 {
      %c0_99 = arith.constant 0 : index
      %c0_100 = arith.constant 0 : index
      %c0_101 = arith.constant 0 : index
      %185 = vector.load %arg3[%c0_99, %c0_100, %c0_101] : memref<1x16x192xbf16, #tpu.memory_space<vmem>>, vector<1x16x192xbf16>
      %186 = vector.shape_cast %185 : vector<1x16x192xbf16> to vector<16x192xbf16>
      %187 = vector.extract_strided_slice %186 {offsets = [0, 0], sizes = [16, 64], strides = [1, 1]} : vector<16x192xbf16> to vector<16x64xbf16>
      %188 = arith.extf %187 : vector<16x64xbf16> to vector<16x64xf32>
      %c0_102 = arith.constant 0 : index
      %c0_103 = arith.constant 0 : index
      %c0_104 = arith.constant 0 : index
      %189 = vector.load %arg6[%c0_102, %c0_103, %c0_104] : memref<1x16x32xf32, #tpu.memory_space<vmem>>, vector<1x16x32xf32>
      %190 = vector.shape_cast %189 : vector<1x16x32xf32> to vector<16x32xf32>
      %c0_105 = arith.constant 0 : index
      %c0_106 = arith.constant 0 : index
      %c0_107 = arith.constant 0 : index
      %191 = vector.load %arg7[%c0_105, %c0_106, %c0_107] : memref<1x16x32xf32, #tpu.memory_space<vmem>>, vector<1x16x32xf32>
      %192 = vector.shape_cast %191 : vector<1x16x32xf32> to vector<16x32xf32>
      %193 = vector.extract_strided_slice %190 {offsets = [0, 0], sizes = [16, 8], strides = [1, 1]} : vector<16x32xf32> to vector<16x8xf32>
      %194 = vector.extract_strided_slice %192 {offsets = [0, 0], sizes = [16, 8], strides = [1, 1]} : vector<16x32xf32> to vector<16x8xf32>
      %195 = vector.extract_strided_slice %188 {offsets = [0, 0], sizes = [16, 8], strides = [1, 1]} : vector<16x64xf32> to vector<16x8xf32>
      %196 = vector.extract_strided_slice %188 {offsets = [0, 8], sizes = [16, 8], strides = [1, 1]} : vector<16x64xf32> to vector<16x8xf32>
      %197 = arith.mulf %195, %193 : vector<16x8xf32>
      %198 = arith.mulf %196, %194 : vector<16x8xf32>
      %199 = arith.subf %197, %198 : vector<16x8xf32>
      %200 = arith.mulf %196, %193 : vector<16x8xf32>
      %201 = arith.mulf %195, %194 : vector<16x8xf32>
      %202 = arith.addf %200, %201 : vector<16x8xf32>
      %cst_108 = arith.constant 2.500000e-01 : f32
      %203 = vector.broadcast %cst_108 : f32 to vector<16x8xf32>
      %204 = arith.mulf %199, %203 : vector<16x8xf32>
      %cst_109 = arith.constant 2.500000e-01 : f32
      %205 = vector.broadcast %cst_109 : f32 to vector<16x8xf32>
      %206 = arith.mulf %202, %205 : vector<16x8xf32>
      %207 = arith.truncf %204 : vector<16x8xf32> to vector<16x8xbf16>
      %c0_110 = arith.constant 0 : index
      %c0_111 = arith.constant 0 : index
      %208 = vector.load %arg11[%c0_110, %c0_111] : memref<16x64xbf16, #tpu.memory_space<vmem>>, vector<16x8xbf16>
      tpu.vector_store %arg11[%c0_110, %c0_111], %207 {strides = array<i32>} : memref<16x64xbf16, #tpu.memory_space<vmem>>, vector<16x8xbf16>,
      %209 = arith.truncf %206 : vector<16x8xf32> to vector<16x8xbf16>
      %c0_112 = arith.constant 0 : index
      %c8_113 = arith.constant 8 : index
      %210 = vector.load %arg11[%c0_112, %c8_113] : memref<16x64xbf16, #tpu.memory_space<vmem>>, vector<16x8xbf16>
      tpu.vector_store %arg11[%c0_112, %c8_113], %209 {strides = array<i32>} : memref<16x64xbf16, #tpu.memory_space<vmem>>, vector<16x8xbf16>,
      %211 = vector.extract_strided_slice %190 {offsets = [0, 8], sizes = [16, 8], strides = [1, 1]} : vector<16x32xf32> to vector<16x8xf32>
      %212 = vector.extract_strided_slice %192 {offsets = [0, 8], sizes = [16, 8], strides = [1, 1]} : vector<16x32xf32> to vector<16x8xf32>
      %213 = vector.extract_strided_slice %188 {offsets = [0, 16], sizes = [16, 8], strides = [1, 1]} : vector<16x64xf32> to vector<16x8xf32>
      %214 = vector.extract_strided_slice %188 {offsets = [0, 24], sizes = [16, 8], strides = [1, 1]} : vector<16x64xf32> to vector<16x8xf32>
      %215 = arith.mulf %213, %211 : vector<16x8xf32>
      %216 = arith.mulf %214, %212 : vector<16x8xf32>
      %217 = arith.subf %215, %216 : vector<16x8xf32>
      %218 = arith.mulf %214, %211 : vector<16x8xf32>
      %219 = arith.mulf %213, %212 : vector<16x8xf32>
      %220 = arith.addf %218, %219 : vector<16x8xf32>
      %cst_114 = arith.constant 2.500000e-01 : f32
      %221 = vector.broadcast %cst_114 : f32 to vector<16x8xf32>
      %222 = arith.mulf %217, %221 : vector<16x8xf32>
      %cst_115 = arith.constant 2.500000e-01 : f32
      %223 = vector.broadcast %cst_115 : f32 to vector<16x8xf32>
      %224 = arith.mulf %220, %223 : vector<16x8xf32>
      %225 = arith.truncf %222 : vector<16x8xf32> to vector<16x8xbf16>
      %c0_116 = arith.constant 0 : index
      %c16_117 = arith.constant 16 : index
      %226 = vector.load %arg11[%c0_116, %c16_117] : memref<16x64xbf16, #tpu.memory_space<vmem>>, vector<16x8xbf16>
      tpu.vector_store %arg11[%c0_116, %c16_117], %225 {strides = array<i32>} : memref<16x64xbf16, #tpu.memory_space<vmem>>, vector<16x8xbf16>,
      %227 = arith.truncf %224 : vector<16x8xf32> to vector<16x8xbf16>
      %c0_118 = arith.constant 0 : index
      %c24_119 = arith.constant 24 : index
      %228 = vector.load %arg11[%c0_118, %c24_119] : memref<16x64xbf16, #tpu.memory_space<vmem>>, vector<16x8xbf16>
      tpu.vector_store %arg11[%c0_118, %c24_119], %227 {strides = array<i32>} : memref<16x64xbf16, #tpu.memory_space<vmem>>, vector<16x8xbf16>,
      %229 = vector.extract_strided_slice %190 {offsets = [0, 16], sizes = [16, 8], strides = [1, 1]} : vector<16x32xf32> to vector<16x8xf32>
      %230 = vector.extract_strided_slice %192 {offsets = [0, 16], sizes = [16, 8], strides = [1, 1]} : vector<16x32xf32> to vector<16x8xf32>
      %231 = vector.extract_strided_slice %188 {offsets = [0, 32], sizes = [16, 8], strides = [1, 1]} : vector<16x64xf32> to vector<16x8xf32>
      %232 = vector.extract_strided_slice %188 {offsets = [0, 40], sizes = [16, 8], strides = [1, 1]} : vector<16x64xf32> to vector<16x8xf32>
      %233 = arith.mulf %231, %229 : vector<16x8xf32>
      %234 = arith.mulf %232, %230 : vector<16x8xf32>
      %235 = arith.subf %233, %234 : vector<16x8xf32>
      %236 = arith.mulf %232, %229 : vector<16x8xf32>
      %237 = arith.mulf %231, %230 : vector<16x8xf32>
      %238 = arith.addf %236, %237 : vector<16x8xf32>
      %cst_120 = arith.constant 2.500000e-01 : f32
      %239 = vector.broadcast %cst_120 : f32 to vector<16x8xf32>
      %240 = arith.mulf %235, %239 : vector<16x8xf32>
      %cst_121 = arith.constant 2.500000e-01 : f32
      %241 = vector.broadcast %cst_121 : f32 to vector<16x8xf32>
      %242 = arith.mulf %238, %241 : vector<16x8xf32>
      %243 = arith.truncf %240 : vector<16x8xf32> to vector<16x8xbf16>
      %c0_122 = arith.constant 0 : index
      %c32_123 = arith.constant 32 : index
      %244 = vector.load %arg11[%c0_122, %c32_123] : memref<16x64xbf16, #tpu.memory_space<vmem>>, vector<16x8xbf16>
      tpu.vector_store %arg11[%c0_122, %c32_123], %243 {strides = array<i32>} : memref<16x64xbf16, #tpu.memory_space<vmem>>, vector<16x8xbf16>,
      %245 = arith.truncf %242 : vector<16x8xf32> to vector<16x8xbf16>
      %c0_124 = arith.constant 0 : index
      %c40_125 = arith.constant 40 : index
      %246 = vector.load %arg11[%c0_124, %c40_125] : memref<16x64xbf16, #tpu.memory_space<vmem>>, vector<16x8xbf16>
      tpu.vector_store %arg11[%c0_124, %c40_125], %245 {strides = array<i32>} : memref<16x64xbf16, #tpu.memory_space<vmem>>, vector<16x8xbf16>,
      %247 = vector.extract_strided_slice %190 {offsets = [0, 24], sizes = [16, 8], strides = [1, 1]} : vector<16x32xf32> to vector<16x8xf32>
      %248 = vector.extract_strided_slice %192 {offsets = [0, 24], sizes = [16, 8], strides = [1, 1]} : vector<16x32xf32> to vector<16x8xf32>
      %249 = vector.extract_strided_slice %188 {offsets = [0, 48], sizes = [16, 8], strides = [1, 1]} : vector<16x64xf32> to vector<16x8xf32>
      %250 = vector.extract_strided_slice %188 {offsets = [0, 56], sizes = [16, 8], strides = [1, 1]} : vector<16x64xf32> to vector<16x8xf32>
      %251 = arith.mulf %249, %247 : vector<16x8xf32>
      %252 = arith.mulf %250, %248 : vector<16x8xf32>
      %253 = arith.subf %251, %252 : vector<16x8xf32>
      %254 = arith.mulf %250, %247 : vector<16x8xf32>
      %255 = arith.mulf %249, %248 : vector<16x8xf32>
      %256 = arith.addf %254, %255 : vector<16x8xf32>
      %cst_126 = arith.constant 2.500000e-01 : f32
      %257 = vector.broadcast %cst_126 : f32 to vector<16x8xf32>
      %258 = arith.mulf %253, %257 : vector<16x8xf32>
      %cst_127 = arith.constant 2.500000e-01 : f32
      %259 = vector.broadcast %cst_127 : f32 to vector<16x8xf32>
      %260 = arith.mulf %256, %259 : vector<16x8xf32>
      %261 = arith.truncf %258 : vector<16x8xf32> to vector<16x8xbf16>
      %c0_128 = arith.constant 0 : index
      %c48_129 = arith.constant 48 : index
      %262 = vector.load %arg11[%c0_128, %c48_129] : memref<16x64xbf16, #tpu.memory_space<vmem>>, vector<16x8xbf16>
      tpu.vector_store %arg11[%c0_128, %c48_129], %261 {strides = array<i32>} : memref<16x64xbf16, #tpu.memory_space<vmem>>, vector<16x8xbf16>,
      %263 = arith.truncf %260 : vector<16x8xf32> to vector<16x8xbf16>
      %c0_130 = arith.constant 0 : index
      %c56_131 = arith.constant 56 : index
      %264 = vector.load %arg11[%c0_130, %c56_131] : memref<16x64xbf16, #tpu.memory_space<vmem>>, vector<16x8xbf16>
      tpu.vector_store %arg11[%c0_130, %c56_131], %263 {strides = array<i32>} : memref<16x64xbf16, #tpu.memory_space<vmem>>, vector<16x8xbf16>,
      %cst_132 = arith.constant 0xFF800000 : f32
      %265 = vector.broadcast %cst_132 : f32 to vector<16x4xf32>
      %c0_133 = arith.constant 0 : index
      %c0_134 = arith.constant 0 : index
      %266 = vector.load %arg13[%c0_133, %c0_134] : memref<16x4xf32, #tpu.memory_space<vmem>>, vector<16x4xf32>
      tpu.vector_store %arg13[%c0_133, %c0_134], %265 {strides = array<i32>} : memref<16x4xf32, #tpu.memory_space<vmem>>, vector<16x4xf32>,
      %cst_135 = arith.constant 0.000000e+00 : f32
      %267 = vector.broadcast %cst_135 : f32 to vector<16x4xf32>
      %c0_136 = arith.constant 0 : index
      %c0_137 = arith.constant 0 : index
      %268 = vector.load %arg14[%c0_136, %c0_137] : memref<16x4xf32, #tpu.memory_space<vmem>>, vector<16x4xf32>
      tpu.vector_store %arg14[%c0_136, %c0_137], %267 {strides = array<i32>} : memref<16x4xf32, #tpu.memory_space<vmem>>, vector<16x4xf32>,
      %cst_138 = arith.constant 0.000000e+00 : f32
      %269 = vector.broadcast %cst_138 : f32 to vector<16x64xf32>
      %c0_139 = arith.constant 0 : index
      %c0_140 = arith.constant 0 : index
      %270 = vector.load %arg15[%c0_139, %c0_140] : memref<16x64xf32, #tpu.memory_space<vmem>>, vector<16x64xf32>
      tpu.vector_store %arg15[%c0_139, %c0_140], %269 {strides = array<i32>} : memref<16x64xf32, #tpu.memory_space<vmem>>, vector<16x64xf32>,
    } else {
    }
    %c0 = arith.constant 0 : index
    %c0_1 = arith.constant 0 : index
    %c0_2 = arith.constant 0 : index
    %3 = vector.load %arg4[%c0, %c0_1, %c0_2] : memref<1x16x192xbf16, #tpu.memory_space<vmem>>, vector<1x16x192xbf16>
    %4 = vector.shape_cast %3 : vector<1x16x192xbf16> to vector<16x192xbf16>
    %5 = vector.extract_strided_slice %4 {offsets = [0, 64], sizes = [16, 64], strides = [1, 1]} : vector<16x192xbf16> to vector<16x64xbf16>
    %6 = arith.extf %5 : vector<16x64xbf16> to vector<16x64xf32>
    %c0_3 = arith.constant 0 : index
    %c0_4 = arith.constant 0 : index
    %c0_5 = arith.constant 0 : index
    %7 = vector.load %arg8[%c0_3, %c0_4, %c0_5] : memref<1x16x32xf32, #tpu.memory_space<vmem>>, vector<1x16x32xf32>
    %8 = vector.shape_cast %7 : vector<1x16x32xf32> to vector<16x32xf32>
    %c0_6 = arith.constant 0 : index
    %c0_7 = arith.constant 0 : index
    %c0_8 = arith.constant 0 : index
    %9 = vector.load %arg9[%c0_6, %c0_7, %c0_8] : memref<1x16x32xf32, #tpu.memory_space<vmem>>, vector<1x16x32xf32>
    %10 = vector.shape_cast %9 : vector<1x16x32xf32> to vector<16x32xf32>
    %11 = vector.extract_strided_slice %8 {offsets = [0, 0], sizes = [16, 8], strides = [1, 1]} : vector<16x32xf32> to vector<16x8xf32>
    %12 = vector.extract_strided_slice %10 {offsets = [0, 0], sizes = [16, 8], strides = [1, 1]} : vector<16x32xf32> to vector<16x8xf32>
    %13 = vector.extract_strided_slice %6 {offsets = [0, 0], sizes = [16, 8], strides = [1, 1]} : vector<16x64xf32> to vector<16x8xf32>
    %14 = vector.extract_strided_slice %6 {offsets = [0, 8], sizes = [16, 8], strides = [1, 1]} : vector<16x64xf32> to vector<16x8xf32>
    %15 = arith.mulf %13, %11 : vector<16x8xf32>
    %16 = arith.mulf %14, %12 : vector<16x8xf32>
    %17 = arith.subf %15, %16 : vector<16x8xf32>
    %18 = arith.mulf %14, %11 : vector<16x8xf32>
    %19 = arith.mulf %13, %12 : vector<16x8xf32>
    %20 = arith.addf %18, %19 : vector<16x8xf32>
    %21 = arith.truncf %17 : vector<16x8xf32> to vector<16x8xbf16>
    %c0_9 = arith.constant 0 : index
    %c0_10 = arith.constant 0 : index
    %22 = vector.load %arg12[%c0_9, %c0_10] : memref<16x64xbf16, #tpu.memory_space<vmem>>, vector<16x8xbf16>
    tpu.vector_store %arg12[%c0_9, %c0_10], %21 {strides = array<i32>} : memref<16x64xbf16, #tpu.memory_space<vmem>>, vector<16x8xbf16>,
    %23 = arith.truncf %20 : vector<16x8xf32> to vector<16x8xbf16>
    %c0_11 = arith.constant 0 : index
    %c8 = arith.constant 8 : index
    %24 = vector.load %arg12[%c0_11, %c8] : memref<16x64xbf16, #tpu.memory_space<vmem>>, vector<16x8xbf16>
    tpu.vector_store %arg12[%c0_11, %c8], %23 {strides = array<i32>} : memref<16x64xbf16, #tpu.memory_space<vmem>>, vector<16x8xbf16>,
    %25 = vector.extract_strided_slice %8 {offsets = [0, 8], sizes = [16, 8], strides = [1, 1]} : vector<16x32xf32> to vector<16x8xf32>
    %26 = vector.extract_strided_slice %10 {offsets = [0, 8], sizes = [16, 8], strides = [1, 1]} : vector<16x32xf32> to vector<16x8xf32>
    %27 = vector.extract_strided_slice %6 {offsets = [0, 16], sizes = [16, 8], strides = [1, 1]} : vector<16x64xf32> to vector<16x8xf32>
    %28 = vector.extract_strided_slice %6 {offsets = [0, 24], sizes = [16, 8], strides = [1, 1]} : vector<16x64xf32> to vector<16x8xf32>
    %29 = arith.mulf %27, %25 : vector<16x8xf32>
    %30 = arith.mulf %28, %26 : vector<16x8xf32>
    %31 = arith.subf %29, %30 : vector<16x8xf32>
    %32 = arith.mulf %28, %25 : vector<16x8xf32>
    %33 = arith.mulf %27, %26 : vector<16x8xf32>
    %34 = arith.addf %32, %33 : vector<16x8xf32>
    %35 = arith.truncf %31 : vector<16x8xf32> to vector<16x8xbf16>
    %c0_12 = arith.constant 0 : index
    %c16 = arith.constant 16 : index
    %36 = vector.load %arg12[%c0_12, %c16] : memref<16x64xbf16, #tpu.memory_space<vmem>>, vector<16x8xbf16>
    tpu.vector_store %arg12[%c0_12, %c16], %35 {strides = array<i32>} : memref<16x64xbf16, #tpu.memory_space<vmem>>, vector<16x8xbf16>,
    %37 = arith.truncf %34 : vector<16x8xf32> to vector<16x8xbf16>
    %c0_13 = arith.constant 0 : index
    %c24 = arith.constant 24 : index
    %38 = vector.load %arg12[%c0_13, %c24] : memref<16x64xbf16, #tpu.memory_space<vmem>>, vector<16x8xbf16>
    tpu.vector_store %arg12[%c0_13, %c24], %37 {strides = array<i32>} : memref<16x64xbf16, #tpu.memory_space<vmem>>, vector<16x8xbf16>,
    %39 = vector.extract_strided_slice %8 {offsets = [0, 16], sizes = [16, 8], strides = [1, 1]} : vector<16x32xf32> to vector<16x8xf32>
    %40 = vector.extract_strided_slice %10 {offsets = [0, 16], sizes = [16, 8], strides = [1, 1]} : vector<16x32xf32> to vector<16x8xf32>
    %41 = vector.extract_strided_slice %6 {offsets = [0, 32], sizes = [16, 8], strides = [1, 1]} : vector<16x64xf32> to vector<16x8xf32>
    %42 = vector.extract_strided_slice %6 {offsets = [0, 40], sizes = [16, 8], strides = [1, 1]} : vector<16x64xf32> to vector<16x8xf32>
    %43 = arith.mulf %41, %39 : vector<16x8xf32>
    %44 = arith.mulf %42, %40 : vector<16x8xf32>
    %45 = arith.subf %43, %44 : vector<16x8xf32>
    %46 = arith.mulf %42, %39 : vector<16x8xf32>
    %47 = arith.mulf %41, %40 : vector<16x8xf32>
    %48 = arith.addf %46, %47 : vector<16x8xf32>
    %49 = arith.truncf %45 : vector<16x8xf32> to vector<16x8xbf16>
    %c0_14 = arith.constant 0 : index
    %c32 = arith.constant 32 : index
    %50 = vector.load %arg12[%c0_14, %c32] : memref<16x64xbf16, #tpu.memory_space<vmem>>, vector<16x8xbf16>
    tpu.vector_store %arg12[%c0_14, %c32], %49 {strides = array<i32>} : memref<16x64xbf16, #tpu.memory_space<vmem>>, vector<16x8xbf16>,
    %51 = arith.truncf %48 : vector<16x8xf32> to vector<16x8xbf16>
    %c0_15 = arith.constant 0 : index
    %c40 = arith.constant 40 : index
    %52 = vector.load %arg12[%c0_15, %c40] : memref<16x64xbf16, #tpu.memory_space<vmem>>, vector<16x8xbf16>
    tpu.vector_store %arg12[%c0_15, %c40], %51 {strides = array<i32>} : memref<16x64xbf16, #tpu.memory_space<vmem>>, vector<16x8xbf16>,
    %53 = vector.extract_strided_slice %8 {offsets = [0, 24], sizes = [16, 8], strides = [1, 1]} : vector<16x32xf32> to vector<16x8xf32>
    %54 = vector.extract_strided_slice %10 {offsets = [0, 24], sizes = [16, 8], strides = [1, 1]} : vector<16x32xf32> to vector<16x8xf32>
    %55 = vector.extract_strided_slice %6 {offsets = [0, 48], sizes = [16, 8], strides = [1, 1]} : vector<16x64xf32> to vector<16x8xf32>
    %56 = vector.extract_strided_slice %6 {offsets = [0, 56], sizes = [16, 8], strides = [1, 1]} : vector<16x64xf32> to vector<16x8xf32>
    %57 = arith.mulf %55, %53 : vector<16x8xf32>
    %58 = arith.mulf %56, %54 : vector<16x8xf32>
    %59 = arith.subf %57, %58 : vector<16x8xf32>
    %60 = arith.mulf %56, %53 : vector<16x8xf32>
    %61 = arith.mulf %55, %54 : vector<16x8xf32>
    %62 = arith.addf %60, %61 : vector<16x8xf32>
    %63 = arith.truncf %59 : vector<16x8xf32> to vector<16x8xbf16>
    %c0_16 = arith.constant 0 : index
    %c48 = arith.constant 48 : index
    %64 = vector.load %arg12[%c0_16, %c48] : memref<16x64xbf16, #tpu.memory_space<vmem>>, vector<16x8xbf16>
    tpu.vector_store %arg12[%c0_16, %c48], %63 {strides = array<i32>} : memref<16x64xbf16, #tpu.memory_space<vmem>>, vector<16x8xbf16>,
    %65 = arith.truncf %62 : vector<16x8xf32> to vector<16x8xbf16>
    %c0_17 = arith.constant 0 : index
    %c56 = arith.constant 56 : index
    %66 = vector.load %arg12[%c0_17, %c56] : memref<16x64xbf16, #tpu.memory_space<vmem>>, vector<16x8xbf16>
    tpu.vector_store %arg12[%c0_17, %c56], %65 {strides = array<i32>} : memref<16x64xbf16, #tpu.memory_space<vmem>>, vector<16x8xbf16>,
    %c0_18 = arith.constant 0 : index
    %c0_19 = arith.constant 0 : index
    %c0_20 = arith.constant 0 : index
    %67 = vector.load %arg5[%c0_18, %c0_19, %c0_20] : memref<1x16x192xbf16, #tpu.memory_space<vmem>>, vector<1x16x192xbf16>
    %68 = vector.shape_cast %67 : vector<1x16x192xbf16> to vector<16x192xbf16>
    %69 = vector.extract_strided_slice %68 {offsets = [0, 128], sizes = [16, 64], strides = [1, 1]} : vector<16x192xbf16> to vector<16x64xbf16>
    %c0_21 = arith.constant 0 : index
    %c0_22 = arith.constant 0 : index
    %70 = vector.load %arg11[%c0_21, %c0_22] : memref<16x64xbf16, #tpu.memory_space<vmem>>, vector<16x16xbf16>
    %c0_23 = arith.constant 0 : index
    %c0_24 = arith.constant 0 : index
    %71 = vector.load %arg12[%c0_23, %c0_24] : memref<16x64xbf16, #tpu.memory_space<vmem>>, vector<16x16xbf16>
    %72 = tpu.transpose %71, [1, 0] : vector<16x16xbf16> -> vector<16x16xbf16>
    %cst = arith.constant dense<0.000000e+00> : vector<16x16xf32>
    %73 = tpu.matmul %70, %72, %cst {dimension_numbers = #tpu.dot_dimension_numbers<[1], [0], [0], [1], [0, 0, 1, 1], [], []>} : vector<16x16xbf16>, vector<16x16xbf16>, vector<16x16xf32> -> vector<16x16xf32>
    %c0_25 = arith.constant 0 : index
    %c0_26 = arith.constant 0 : index
    %74 = vector.load %arg13[%c0_25, %c0_26] : memref<16x4xf32, #tpu.memory_space<vmem>>, vector<16x1xf32>
    %cst_27 = arith.constant dense<0xFF800000> : vector<16xf32>
    %75 = vector.multi_reduction <maximumf>, %73, %cst_27 [1] : vector<16x16xf32> to vector<16xf32>
    %76 = vector.shape_cast %75 : vector<16xf32> to vector<16x1xf32>
    %77 = arith.maximumf %74, %76 : vector<16x1xf32>
    %78 = arith.subf %74, %77 : vector<16x1xf32>
    %79 = math.exp %78 : vector<16x1xf32>
    %80 = vector.broadcast %77 : vector<16x1xf32> to vector<16x16xf32>
    %81 = arith.subf %73, %80 : vector<16x16xf32>
    %82 = math.exp %81 : vector<16x16xf32>
    %c0_28 = arith.constant 0 : index
    %c0_29 = arith.constant 0 : index
    %83 = vector.load %arg14[%c0_28, %c0_29] : memref<16x4xf32, #tpu.memory_space<vmem>>, vector<16x1xf32>
    %84 = arith.mulf %79, %83 : vector<16x1xf32>
    %cst_30 = arith.constant dense<0.000000e+00> : vector<16xf32>
    %85 = vector.multi_reduction <add>, %82, %cst_30 [1] : vector<16x16xf32> to vector<16xf32>
    %86 = vector.shape_cast %85 : vector<16xf32> to vector<16x1xf32>
    %87 = arith.addf %84, %86 : vector<16x1xf32>
    %c0_31 = arith.constant 0 : index
    %c0_32 = arith.constant 0 : index
    %88 = vector.load %arg14[%c0_31, %c0_32] : memref<16x4xf32, #tpu.memory_space<vmem>>, vector<16x1xf32>
    tpu.vector_store %arg14[%c0_31, %c0_32], %87 {strides = array<i32>} : memref<16x4xf32, #tpu.memory_space<vmem>>, vector<16x1xf32>,
    %c0_33 = arith.constant 0 : index
    %c0_34 = arith.constant 0 : index
    %89 = vector.load %arg15[%c0_33, %c0_34] : memref<16x64xf32, #tpu.memory_space<vmem>>, vector<16x16xf32>
    %90 = vector.broadcast %79 : vector<16x1xf32> to vector<16x16xf32>
    %91 = arith.mulf %90, %89 : vector<16x16xf32>
    %92 = arith.truncf %82 : vector<16x16xf32> to vector<16x16xbf16>
    %93 = vector.extract_strided_slice %69 {offsets = [0, 0], sizes = [16, 16], strides = [1, 1]} : vector<16x64xbf16> to vector<16x16xbf16>
    %cst_35 = arith.constant dense<0.000000e+00> : vector<16x16xf32>
    %94 = tpu.matmul %92, %93, %cst_35 {dimension_numbers = #tpu.dot_dimension_numbers<[1], [0], [0], [1], [0, 0, 1, 1], [], []>} : vector<16x16xbf16>, vector<16x16xbf16>, vector<16x16xf32> -> vector<16x16xf32>
    %95 = arith.addf %91, %94 : vector<16x16xf32>
    %c0_36 = arith.constant 0 : index
    %c0_37 = arith.constant 0 : index
    %96 = vector.load %arg15[%c0_36, %c0_37] : memref<16x64xf32, #tpu.memory_space<vmem>>, vector<16x16xf32>
    tpu.vector_store %arg15[%c0_36, %c0_37], %95 {strides = array<i32>} : memref<16x64xf32, #tpu.memory_space<vmem>>, vector<16x16xf32>,
    %c0_38 = arith.constant 0 : index
    %c0_39 = arith.constant 0 : index
    %97 = vector.load %arg13[%c0_38, %c0_39] : memref<16x4xf32, #tpu.memory_space<vmem>>, vector<16x1xf32>
    tpu.vector_store %arg13[%c0_38, %c0_39], %77 {strides = array<i32>} : memref<16x4xf32, #tpu.memory_space<vmem>>, vector<16x1xf32>,
    %c0_40 = arith.constant 0 : index
    %c16_41 = arith.constant 16 : index
    %98 = vector.load %arg11[%c0_40, %c16_41] : memref<16x64xbf16, #tpu.memory_space<vmem>>, vector<16x16xbf16>
    %c0_42 = arith.constant 0 : index
    %c16_43 = arith.constant 16 : index
    %99 = vector.load %arg12[%c0_42, %c16_43] : memref<16x64xbf16, #tpu.memory_space<vmem>>, vector<16x16xbf16>
    %100 = tpu.transpose %99, [1, 0] : vector<16x16xbf16> -> vector<16x16xbf16>
    %cst_44 = arith.constant dense<0.000000e+00> : vector<16x16xf32>
    %101 = tpu.matmul %98, %100, %cst_44 {dimension_numbers = #tpu.dot_dimension_numbers<[1], [0], [0], [1], [0, 0, 1, 1], [], []>} : vector<16x16xbf16>, vector<16x16xbf16>, vector<16x16xf32> -> vector<16x16xf32>
    %c0_45 = arith.constant 0 : index
    %c1 = arith.constant 1 : index
    %102 = vector.load %arg13[%c0_45, %c1] : memref<16x4xf32, #tpu.memory_space<vmem>>, vector<16x1xf32>
    %cst_46 = arith.constant dense<0xFF800000> : vector<16xf32>
    %103 = vector.multi_reduction <maximumf>, %101, %cst_46 [1] : vector<16x16xf32> to vector<16xf32>
    %104 = vector.shape_cast %103 : vector<16xf32> to vector<16x1xf32>
    %105 = arith.maximumf %102, %104 : vector<16x1xf32>
    %106 = arith.subf %102, %105 : vector<16x1xf32>
    %107 = math.exp %106 : vector<16x1xf32>
    %108 = vector.broadcast %105 : vector<16x1xf32> to vector<16x16xf32>
    %109 = arith.subf %101, %108 : vector<16x16xf32>
    %110 = math.exp %109 : vector<16x16xf32>
    %c0_47 = arith.constant 0 : index
    %c1_48 = arith.constant 1 : index
    %111 = vector.load %arg14[%c0_47, %c1_48] : memref<16x4xf32, #tpu.memory_space<vmem>>, vector<16x1xf32>
    %112 = arith.mulf %107, %111 : vector<16x1xf32>
    %cst_49 = arith.constant dense<0.000000e+00> : vector<16xf32>
    %113 = vector.multi_reduction <add>, %110, %cst_49 [1] : vector<16x16xf32> to vector<16xf32>
    %114 = vector.shape_cast %113 : vector<16xf32> to vector<16x1xf32>
    %115 = arith.addf %112, %114 : vector<16x1xf32>
    %c0_50 = arith.constant 0 : index
    %c1_51 = arith.constant 1 : index
    %116 = vector.load %arg14[%c0_50, %c1_51] : memref<16x4xf32, #tpu.memory_space<vmem>>, vector<16x1xf32>
    tpu.vector_store %arg14[%c0_50, %c1_51], %115 {strides = array<i32>} : memref<16x4xf32, #tpu.memory_space<vmem>>, vector<16x1xf32>,
    %c0_52 = arith.constant 0 : index
    %c16_53 = arith.constant 16 : index
    %117 = vector.load %arg15[%c0_52, %c16_53] : memref<16x64xf32, #tpu.memory_space<vmem>>, vector<16x16xf32>
    %118 = vector.broadcast %107 : vector<16x1xf32> to vector<16x16xf32>
    %119 = arith.mulf %118, %117 : vector<16x16xf32>
    %120 = arith.truncf %110 : vector<16x16xf32> to vector<16x16xbf16>
    %121 = vector.extract_strided_slice %69 {offsets = [0, 16], sizes = [16, 16], strides = [1, 1]} : vector<16x64xbf16> to vector<16x16xbf16>
    %cst_54 = arith.constant dense<0.000000e+00> : vector<16x16xf32>
    %122 = tpu.matmul %120, %121, %cst_54 {dimension_numbers = #tpu.dot_dimension_numbers<[1], [0], [0], [1], [0, 0, 1, 1], [], []>} : vector<16x16xbf16>, vector<16x16xbf16>, vector<16x16xf32> -> vector<16x16xf32>
    %123 = arith.addf %119, %122 : vector<16x16xf32>
    %c0_55 = arith.constant 0 : index
    %c16_56 = arith.constant 16 : index
    %124 = vector.load %arg15[%c0_55, %c16_56] : memref<16x64xf32, #tpu.memory_space<vmem>>, vector<16x16xf32>
    tpu.vector_store %arg15[%c0_55, %c16_56], %123 {strides = array<i32>} : memref<16x64xf32, #tpu.memory_space<vmem>>, vector<16x16xf32>,
    %c0_57 = arith.constant 0 : index
    %c1_58 = arith.constant 1 : index
    %125 = vector.load %arg13[%c0_57, %c1_58] : memref<16x4xf32, #tpu.memory_space<vmem>>, vector<16x1xf32>
    tpu.vector_store %arg13[%c0_57, %c1_58], %105 {strides = array<i32>} : memref<16x4xf32, #tpu.memory_space<vmem>>, vector<16x1xf32>,
    %c0_59 = arith.constant 0 : index
    %c32_60 = arith.constant 32 : index
    %126 = vector.load %arg11[%c0_59, %c32_60] : memref<16x64xbf16, #tpu.memory_space<vmem>>, vector<16x16xbf16>
    %c0_61 = arith.constant 0 : index
    %c32_62 = arith.constant 32 : index
    %127 = vector.load %arg12[%c0_61, %c32_62] : memref<16x64xbf16, #tpu.memory_space<vmem>>, vector<16x16xbf16>
    %128 = tpu.transpose %127, [1, 0] : vector<16x16xbf16> -> vector<16x16xbf16>
    %cst_63 = arith.constant dense<0.000000e+00> : vector<16x16xf32>
    %129 = tpu.matmul %126, %128, %cst_63 {dimension_numbers = #tpu.dot_dimension_numbers<[1], [0], [0], [1], [0, 0, 1, 1], [], []>} : vector<16x16xbf16>, vector<16x16xbf16>, vector<16x16xf32> -> vector<16x16xf32>
    %c0_64 = arith.constant 0 : index
    %c2 = arith.constant 2 : index
    %130 = vector.load %arg13[%c0_64, %c2] : memref<16x4xf32, #tpu.memory_space<vmem>>, vector<16x1xf32>
    %cst_65 = arith.constant dense<0xFF800000> : vector<16xf32>
    %131 = vector.multi_reduction <maximumf>, %129, %cst_65 [1] : vector<16x16xf32> to vector<16xf32>
    %132 = vector.shape_cast %131 : vector<16xf32> to vector<16x1xf32>
    %133 = arith.maximumf %130, %132 : vector<16x1xf32>
    %134 = arith.subf %130, %133 : vector<16x1xf32>
    %135 = math.exp %134 : vector<16x1xf32>
    %136 = vector.broadcast %133 : vector<16x1xf32> to vector<16x16xf32>
    %137 = arith.subf %129, %136 : vector<16x16xf32>
    %138 = math.exp %137 : vector<16x16xf32>
    %c0_66 = arith.constant 0 : index
    %c2_67 = arith.constant 2 : index
    %139 = vector.load %arg14[%c0_66, %c2_67] : memref<16x4xf32, #tpu.memory_space<vmem>>, vector<16x1xf32>
    %140 = arith.mulf %135, %139 : vector<16x1xf32>
    %cst_68 = arith.constant dense<0.000000e+00> : vector<16xf32>
    %141 = vector.multi_reduction <add>, %138, %cst_68 [1] : vector<16x16xf32> to vector<16xf32>
    %142 = vector.shape_cast %141 : vector<16xf32> to vector<16x1xf32>
    %143 = arith.addf %140, %142 : vector<16x1xf32>
    %c0_69 = arith.constant 0 : index
    %c2_70 = arith.constant 2 : index
    %144 = vector.load %arg14[%c0_69, %c2_70] : memref<16x4xf32, #tpu.memory_space<vmem>>, vector<16x1xf32>
    tpu.vector_store %arg14[%c0_69, %c2_70], %143 {strides = array<i32>} : memref<16x4xf32, #tpu.memory_space<vmem>>, vector<16x1xf32>,
    %c0_71 = arith.constant 0 : index
    %c32_72 = arith.constant 32 : index
    %145 = vector.load %arg15[%c0_71, %c32_72] : memref<16x64xf32, #tpu.memory_space<vmem>>, vector<16x16xf32>
    %146 = vector.broadcast %135 : vector<16x1xf32> to vector<16x16xf32>
    %147 = arith.mulf %146, %145 : vector<16x16xf32>
    %148 = arith.truncf %138 : vector<16x16xf32> to vector<16x16xbf16>
    %149 = vector.extract_strided_slice %69 {offsets = [0, 32], sizes = [16, 16], strides = [1, 1]} : vector<16x64xbf16> to vector<16x16xbf16>
    %cst_73 = arith.constant dense<0.000000e+00> : vector<16x16xf32>
    %150 = tpu.matmul %148, %149, %cst_73 {dimension_numbers = #tpu.dot_dimension_numbers<[1], [0], [0], [1], [0, 0, 1, 1], [], []>} : vector<16x16xbf16>, vector<16x16xbf16>, vector<16x16xf32> -> vector<16x16xf32>
    %151 = arith.addf %147, %150 : vector<16x16xf32>
    %c0_74 = arith.constant 0 : index
    %c32_75 = arith.constant 32 : index
    %152 = vector.load %arg15[%c0_74, %c32_75] : memref<16x64xf32, #tpu.memory_space<vmem>>, vector<16x16xf32>
    tpu.vector_store %arg15[%c0_74, %c32_75], %151 {strides = array<i32>} : memref<16x64xf32, #tpu.memory_space<vmem>>, vector<16x16xf32>,
    %c0_76 = arith.constant 0 : index
    %c2_77 = arith.constant 2 : index
    %153 = vector.load %arg13[%c0_76, %c2_77] : memref<16x4xf32, #tpu.memory_space<vmem>>, vector<16x1xf32>
    tpu.vector_store %arg13[%c0_76, %c2_77], %133 {strides = array<i32>} : memref<16x4xf32, #tpu.memory_space<vmem>>, vector<16x1xf32>,
    %c0_78 = arith.constant 0 : index
    %c48_79 = arith.constant 48 : index
    %154 = vector.load %arg11[%c0_78, %c48_79] : memref<16x64xbf16, #tpu.memory_space<vmem>>, vector<16x16xbf16>
    %c0_80 = arith.constant 0 : index
    %c48_81 = arith.constant 48 : index
    %155 = vector.load %arg12[%c0_80, %c48_81] : memref<16x64xbf16, #tpu.memory_space<vmem>>, vector<16x16xbf16>
    %156 = tpu.transpose %155, [1, 0] : vector<16x16xbf16> -> vector<16x16xbf16>
    %cst_82 = arith.constant dense<0.000000e+00> : vector<16x16xf32>
    %157 = tpu.matmul %154, %156, %cst_82 {dimension_numbers = #tpu.dot_dimension_numbers<[1], [0], [0], [1], [0, 0, 1, 1], [], []>} : vector<16x16xbf16>, vector<16x16xbf16>, vector<16x16xf32> -> vector<16x16xf32>
    %c0_83 = arith.constant 0 : index
    %c3 = arith.constant 3 : index
    %158 = vector.load %arg13[%c0_83, %c3] : memref<16x4xf32, #tpu.memory_space<vmem>>, vector<16x1xf32>
    %cst_84 = arith.constant dense<0xFF800000> : vector<16xf32>
    %159 = vector.multi_reduction <maximumf>, %157, %cst_84 [1] : vector<16x16xf32> to vector<16xf32>
    %160 = vector.shape_cast %159 : vector<16xf32> to vector<16x1xf32>
    %161 = arith.maximumf %158, %160 : vector<16x1xf32>
    %162 = arith.subf %158, %161 : vector<16x1xf32>
    %163 = math.exp %162 : vector<16x1xf32>
    %164 = vector.broadcast %161 : vector<16x1xf32> to vector<16x16xf32>
    %165 = arith.subf %157, %164 : vector<16x16xf32>
    %166 = math.exp %165 : vector<16x16xf32>
    %c0_85 = arith.constant 0 : index
    %c3_86 = arith.constant 3 : index
    %167 = vector.load %arg14[%c0_85, %c3_86] : memref<16x4xf32, #tpu.memory_space<vmem>>, vector<16x1xf32>
    %168 = arith.mulf %163, %167 : vector<16x1xf32>
    %cst_87 = arith.constant dense<0.000000e+00> : vector<16xf32>
    %169 = vector.multi_reduction <add>, %166, %cst_87 [1] : vector<16x16xf32> to vector<16xf32>
    %170 = vector.shape_cast %169 : vector<16xf32> to vector<16x1xf32>
    %171 = arith.addf %168, %170 : vector<16x1xf32>
    %c0_88 = arith.constant 0 : index
    %c3_89 = arith.constant 3 : index
    %172 = vector.load %arg14[%c0_88, %c3_89] : memref<16x4xf32, #tpu.memory_space<vmem>>, vector<16x1xf32>
    tpu.vector_store %arg14[%c0_88, %c3_89], %171 {strides = array<i32>} : memref<16x4xf32, #tpu.memory_space<vmem>>, vector<16x1xf32>,
    %c0_90 = arith.constant 0 : index
    %c48_91 = arith.constant 48 : index
    %173 = vector.load %arg15[%c0_90, %c48_91] : memref<16x64xf32, #tpu.memory_space<vmem>>, vector<16x16xf32>
    %174 = vector.broadcast %163 : vector<16x1xf32> to vector<16x16xf32>
    %175 = arith.mulf %174, %173 : vector<16x16xf32>
    %176 = arith.truncf %166 : vector<16x16xf32> to vector<16x16xbf16>
    %177 = vector.extract_strided_slice %69 {offsets = [0, 48], sizes = [16, 16], strides = [1, 1]} : vector<16x64xbf16> to vector<16x16xbf16>
    %cst_92 = arith.constant dense<0.000000e+00> : vector<16x16xf32>
    %178 = tpu.matmul %176, %177, %cst_92 {dimension_numbers = #tpu.dot_dimension_numbers<[1], [0], [0], [1], [0, 0, 1, 1], [], []>} : vector<16x16xbf16>, vector<16x16xbf16>, vector<16x16xf32> -> vector<16x16xf32>
    %179 = arith.addf %175, %178 : vector<16x16xf32>
    %c0_93 = arith.constant 0 : index
    %c48_94 = arith.constant 48 : index
    %180 = vector.load %arg15[%c0_93, %c48_94] : memref<16x64xf32, #tpu.memory_space<vmem>>, vector<16x16xf32>
    tpu.vector_store %arg15[%c0_93, %c48_94], %179 {strides = array<i32>} : memref<16x64xf32, #tpu.memory_space<vmem>>, vector<16x16xf32>,
    %c0_95 = arith.constant 0 : index
    %c3_96 = arith.constant 3 : index
    %181 = vector.load %arg13[%c0_95, %c3_96] : memref<16x4xf32, #tpu.memory_space<vmem>>, vector<16x1xf32>
    tpu.vector_store %arg13[%c0_95, %c3_96], %161 {strides = array<i32>} : memref<16x4xf32, #tpu.memory_space<vmem>>, vector<16x1xf32>,
    %c0_i32_97 = arith.constant 0 : i32
    %182 = arith.cmpi eq, %arg2, %c0_i32_97 : i32
    %183 = arith.extui %182 : i1 to i32
    %c0_i32_98 = arith.constant 0 : i32
    %184 = arith.cmpi ne, %183, %c0_i32_98 : i32
    scf.if %184 {
      %c0_99 = arith.constant 0 : index
      %c0_100 = arith.constant 0 : index
      %185 = vector.load %arg14[%c0_99, %c0_100] : memref<16x4xf32, #tpu.memory_space<vmem>>, vector<16x4xf32>
      %186 = tpu.reciprocal %185 {approx = true} : vector<16x4xf32> -> vector<16x4xf32>
      %c0_101 = arith.constant 0 : index
      %c0_102 = arith.constant 0 : index
      %187 = vector.load %arg15[%c0_101, %c0_102] : memref<16x64xf32, #tpu.memory_space<vmem>>, vector<16x16xf32>
      %188 = vector.extract_strided_slice %186 {offsets = [0, 0], sizes = [16, 1], strides = [1, 1]} : vector<16x4xf32> to vector<16x1xf32>
      %189 = vector.broadcast %188 : vector<16x1xf32> to vector<16x16xf32>
      %190 = arith.mulf %187, %189 : vector<16x16xf32>
      %191 = arith.truncf %190 : vector<16x16xf32> to vector<16x16xbf16>
      %c0_103 = arith.constant 0 : index
      %c0_104 = arith.constant 0 : index
      %c0_105 = arith.constant 0 : index
      %192 = vector.load %arg10[%c0_103, %c0_104, %c0_105] : memref<1x16x64xbf16, #tpu.memory_space<vmem>>, vector<1x16x16xbf16>
      %193 = vector.shape_cast %192 : vector<1x16x16xbf16> to vector<16x16xbf16>
      %194 = vector.shape_cast %191 : vector<16x16xbf16> to vector<1x16x16xbf16>
      tpu.vector_store %arg10[%c0_103, %c0_104, %c0_105], %194 {strides = array<i32>} : memref<1x16x64xbf16, #tpu.memory_space<vmem>>, vector<1x16x16xbf16>,
      %c0_106 = arith.constant 0 : index
      %c16_107 = arith.constant 16 : index
      %195 = vector.load %arg15[%c0_106, %c16_107] : memref<16x64xf32, #tpu.memory_space<vmem>>, vector<16x16xf32>
      %196 = vector.extract_strided_slice %186 {offsets = [0, 1], sizes = [16, 1], strides = [1, 1]} : vector<16x4xf32> to vector<16x1xf32>
      %197 = vector.broadcast %196 : vector<16x1xf32> to vector<16x16xf32>
      %198 = arith.mulf %195, %197 : vector<16x16xf32>
      %199 = arith.truncf %198 : vector<16x16xf32> to vector<16x16xbf16>
      %c0_108 = arith.constant 0 : index
      %c0_109 = arith.constant 0 : index
      %c16_110 = arith.constant 16 : index
      %200 = vector.load %arg10[%c0_108, %c0_109, %c16_110] : memref<1x16x64xbf16, #tpu.memory_space<vmem>>, vector<1x16x16xbf16>
      %201 = vector.shape_cast %200 : vector<1x16x16xbf16> to vector<16x16xbf16>
      %202 = vector.shape_cast %199 : vector<16x16xbf16> to vector<1x16x16xbf16>
      tpu.vector_store %arg10[%c0_108, %c0_109, %c16_110], %202 {strides = array<i32>} : memref<1x16x64xbf16, #tpu.memory_space<vmem>>, vector<1x16x16xbf16>,
      %c0_111 = arith.constant 0 : index
      %c32_112 = arith.constant 32 : index
      %203 = vector.load %arg15[%c0_111, %c32_112] : memref<16x64xf32, #tpu.memory_space<vmem>>, vector<16x16xf32>
      %204 = vector.extract_strided_slice %186 {offsets = [0, 2], sizes = [16, 1], strides = [1, 1]} : vector<16x4xf32> to vector<16x1xf32>
      %205 = vector.broadcast %204 : vector<16x1xf32> to vector<16x16xf32>
      %206 = arith.mulf %203, %205 : vector<16x16xf32>
      %207 = arith.truncf %206 : vector<16x16xf32> to vector<16x16xbf16>
      %c0_113 = arith.constant 0 : index
      %c0_114 = arith.constant 0 : index
      %c32_115 = arith.constant 32 : index
      %208 = vector.load %arg10[%c0_113, %c0_114, %c32_115] : memref<1x16x64xbf16, #tpu.memory_space<vmem>>, vector<1x16x16xbf16>
      %209 = vector.shape_cast %208 : vector<1x16x16xbf16> to vector<16x16xbf16>
      %210 = vector.shape_cast %207 : vector<16x16xbf16> to vector<1x16x16xbf16>
      tpu.vector_store %arg10[%c0_113, %c0_114, %c32_115], %210 {strides = array<i32>} : memref<1x16x64xbf16, #tpu.memory_space<vmem>>, vector<1x16x16xbf16>,
      %c0_116 = arith.constant 0 : index
      %c48_117 = arith.constant 48 : index
      %211 = vector.load %arg15[%c0_116, %c48_117] : memref<16x64xf32, #tpu.memory_space<vmem>>, vector<16x16xf32>
      %212 = vector.extract_strided_slice %186 {offsets = [0, 3], sizes = [16, 1], strides = [1, 1]} : vector<16x4xf32> to vector<16x1xf32>
      %213 = vector.broadcast %212 : vector<16x1xf32> to vector<16x16xf32>
      %214 = arith.mulf %211, %213 : vector<16x16xf32>
      %215 = arith.truncf %214 : vector<16x16xf32> to vector<16x16xbf16>
      %c0_118 = arith.constant 0 : index
      %c0_119 = arith.constant 0 : index
      %c48_120 = arith.constant 48 : index
      %216 = vector.load %arg10[%c0_118, %c0_119, %c48_120] : memref<1x16x64xbf16, #tpu.memory_space<vmem>>, vector<1x16x16xbf16>
      %217 = vector.shape_cast %216 : vector<1x16x16xbf16> to vector<16x16xbf16>
      %218 = vector.shape_cast %215 : vector<16x16xbf16> to vector<1x16x16xbf16>
      tpu.vector_store %arg10[%c0_118, %c0_119, %c48_120], %218 {strides = array<i32>} : memref<1x16x64xbf16, #tpu.memory_space<vmem>>, vector<1x16x16xbf16>,
    } else {
    }
    return
  }
  func.func @transform_0(%arg0: i32, %arg1: i32, %arg2: i32) -> (i32, i32, i32) {
    %c0_i32 = arith.constant 0 : i32
    %c0_i32_0 = arith.constant 0 : i32
    return %arg0, %arg1, %c0_i32 : i32, i32, i32
  }
  func.func @transform_1(%arg0: i32, %arg1: i32, %arg2: i32) -> (i32, i32, i32) {
    %c0_i32 = arith.constant 0 : i32
    %c0_i32_0 = arith.constant 0 : i32
    return %arg0, %arg2, %c0_i32 : i32, i32, i32
  }
  func.func @transform_2(%arg0: i32, %arg1: i32, %arg2: i32) -> (i32, i32, i32) {
    %c0_i32 = arith.constant 0 : i32
    %c0_i32_0 = arith.constant 0 : i32
    return %arg0, %arg2, %c0_i32 : i32, i32, i32
  }
  func.func @transform_3(%arg0: i32, %arg1: i32, %arg2: i32) -> (i32, i32, i32) {
    %c0_i32 = arith.constant 0 : i32
    %c0_i32_0 = arith.constant 0 : i32
    return %arg0, %arg1, %c0_i32 : i32, i32, i32
  }
  func.func @transform_4(%arg0: i32, %arg1: i32, %arg2: i32) -> (i32, i32, i32) {
    %c0_i32 = arith.constant 0 : i32
    %c0_i32_0 = arith.constant 0 : i32
    return %arg0, %arg1, %c0_i32 : i32, i32, i32
  }
  func.func @transform_5(%arg0: i32, %arg1: i32, %arg2: i32) -> (i32, i32, i32) {
    %c0_i32 = arith.constant 0 : i32
    %c0_i32_0 = arith.constant 0 : i32
    return %arg0, %arg2, %c0_i32 : i32, i32, i32
  }
  func.func @transform_6(%arg0: i32, %arg1: i32, %arg2: i32) -> (i32, i32, i32) {
    %c0_i32 = arith.constant 0 : i32
    %c0_i32_0 = arith.constant 0 : i32
    return %arg0, %arg2, %c0_i32 : i32, i32, i32
  }
  func.func @transform_7(%arg0: i32, %arg1: i32, %arg2: i32) -> (i32, i32, i32) {
    %c0_i32 = arith.constant 0 : i32
    %c0_i32_0 = arith.constant 0 : i32
    return %arg0, %arg1, %c0_i32 : i32, i32, i32
  }
}

module attributes {stable_mosaic.version = 11 : i64} {
  func.func @kernel(%arg0: i32, %arg1: i32, %arg2: memref<32x64xf32, #tpu.memory_space<vmem>>, %arg3: memref<1x64xf32, #tpu.memory_space<vmem>>, %arg4: memref<64x192xbf16, #tpu.memory_space<vmem>>, %arg5: memref<64x192xbf16, #tpu.memory_space<vmem>>, %arg6: memref<192x64xbf16, #tpu.memory_space<vmem>>, %arg7: memref<32x64xf32, #tpu.memory_space<vmem>>, %arg8: memref<32x64xbf16, #tpu.memory_space<vmem>>, %arg9: memref<32x64xf32, #tpu.memory_space<vmem>>) attributes {dimension_semantics = [#tpu.dimension_semantics<parallel>, #tpu.dimension_semantics<arbitrary>], iteration_bounds = array<i64: 1, 1>, scalar_prefetch = 0 : i64, scratch_operands = 2 : i64, tpu.core_type = #tpu.core_type<tc>, window_params = [{transform_indices = @transform_0, window_bounds = array<i64: 32, 64>}, {pipeline_mode = #tpu.pipeline_mode<synchronous>, transform_indices = @transform_1, window_bounds = array<i64: 1, 64>}, {transform_indices = @transform_2, window_bounds = array<i64: 64, 192>}, {transform_indices = @transform_3, window_bounds = array<i64: 64, 192>}, {transform_indices = @transform_4, window_bounds = array<i64: 192, 64>}, {transform_indices = @transform_5, window_bounds = array<i64: 32, 64>}]} {
    %c0_i32 = arith.constant 0 : i32
    %0 = arith.cmpi eq, %arg1, %c0_i32 : i32
    %1 = arith.extui %0 : i1 to i32
    %c0_i32_0 = arith.constant 0 : i32
    %2 = arith.cmpi ne, %1, %c0_i32_0 : i32
    scf.if %2 {
      %c0_17 = arith.constant 0 : index
      %c0_18 = arith.constant 0 : index
      %24 = vector.load %arg2[%c0_17, %c0_18] : memref<32x64xf32, #tpu.memory_space<vmem>>, vector<32x64xf32>
      %25 = arith.mulf %24, %24 : vector<32x64xf32>
      %cst_19 = arith.constant dense<0.000000e+00> : vector<32xf32>
      %26 = vector.multi_reduction <add>, %25, %cst_19 [1] : vector<32x64xf32> to vector<32xf32>
      %27 = vector.shape_cast %26 : vector<32xf32> to vector<32x1xf32>
      %cst_20 = arith.constant 6.400000e+01 : f32
      %28 = vector.broadcast %cst_20 : f32 to vector<32x1xf32>
      %29 = arith.divf %27, %28 : vector<32x1xf32>
      %cst_21 = arith.constant 9.99999974E-6 : f32
      %30 = vector.broadcast %cst_21 : f32 to vector<32x1xf32>
      %31 = arith.addf %29, %30 : vector<32x1xf32>
      %32 = math.rsqrt %31 : vector<32x1xf32>
      %33 = vector.broadcast %32 : vector<32x1xf32> to vector<32x64xf32>
      %34 = arith.mulf %24, %33 : vector<32x64xf32>
      %c0_22 = arith.constant 0 : index
      %c0_23 = arith.constant 0 : index
      %35 = vector.load %arg3[%c0_22, %c0_23] : memref<1x64xf32, #tpu.memory_space<vmem>>, vector<1x64xf32>
      %36 = vector.broadcast %35 : vector<1x64xf32> to vector<32x64xf32>
      %37 = arith.mulf %34, %36 : vector<32x64xf32>
      %38 = arith.truncf %37 : vector<32x64xf32> to vector<32x64xbf16>
      %c0_24 = arith.constant 0 : index
      %c0_25 = arith.constant 0 : index
      %39 = vector.load %arg8[%c0_24, %c0_25] : memref<32x64xbf16, #tpu.memory_space<vmem>>, vector<32x64xbf16>
      tpu.vector_store %arg8[%c0_24, %c0_25], %38 {strides = array<i32>} : memref<32x64xbf16, #tpu.memory_space<vmem>>, vector<32x64xbf16>,
      %cst_26 = arith.constant 0.000000e+00 : f32
      %40 = vector.broadcast %cst_26 : f32 to vector<32x64xf32>
      %c0_27 = arith.constant 0 : index
      %c0_28 = arith.constant 0 : index
      %41 = vector.load %arg9[%c0_27, %c0_28] : memref<32x64xf32, #tpu.memory_space<vmem>>, vector<32x64xf32>
      tpu.vector_store %arg9[%c0_27, %c0_28], %40 {strides = array<i32>} : memref<32x64xf32, #tpu.memory_space<vmem>>, vector<32x64xf32>,
    } else {
    }
    %c0 = arith.constant 0 : index
    %c0_1 = arith.constant 0 : index
    %3 = vector.load %arg8[%c0, %c0_1] : memref<32x64xbf16, #tpu.memory_space<vmem>>, vector<32x64xbf16>
    %c0_2 = arith.constant 0 : index
    %c0_3 = arith.constant 0 : index
    %4 = vector.load %arg4[%c0_2, %c0_3] : memref<64x192xbf16, #tpu.memory_space<vmem>>, vector<64x192xbf16>
    %cst = arith.constant dense<0.000000e+00> : vector<32x192xf32>
    %5 = tpu.matmul %3, %4, %cst {dimension_numbers = #tpu.dot_dimension_numbers<[1], [0], [0], [1], [0, 0, 1, 1], [], []>} : vector<32x64xbf16>, vector<64x192xbf16>, vector<32x192xf32> -> vector<32x192xf32>
    %c0_4 = arith.constant 0 : index
    %c0_5 = arith.constant 0 : index
    %6 = vector.load %arg5[%c0_4, %c0_5] : memref<64x192xbf16, #tpu.memory_space<vmem>>, vector<64x192xbf16>
    %cst_6 = arith.constant dense<0.000000e+00> : vector<32x192xf32>
    %7 = tpu.matmul %3, %6, %cst_6 {dimension_numbers = #tpu.dot_dimension_numbers<[1], [0], [0], [1], [0, 0, 1, 1], [], []>} : vector<32x64xbf16>, vector<64x192xbf16>, vector<32x192xf32> -> vector<32x192xf32>
    %8 = arith.negf %5 : vector<32x192xf32>
    %9 = math.exp %8 : vector<32x192xf32>
    %cst_7 = arith.constant 1.000000e+00 : f32
    %10 = vector.broadcast %cst_7 : f32 to vector<32x192xf32>
    %11 = arith.addf %10, %9 : vector<32x192xf32>
    %12 = arith.divf %10, %11 : vector<32x192xf32>
    %13 = arith.mulf %5, %12 : vector<32x192xf32>
    %14 = arith.mulf %13, %7 : vector<32x192xf32>
    %15 = arith.truncf %14 : vector<32x192xf32> to vector<32x192xbf16>
    %c0_8 = arith.constant 0 : index
    %c0_9 = arith.constant 0 : index
    %16 = vector.load %arg9[%c0_8, %c0_9] : memref<32x64xf32, #tpu.memory_space<vmem>>, vector<32x64xf32>
    %c0_10 = arith.constant 0 : index
    %c0_11 = arith.constant 0 : index
    %17 = vector.load %arg6[%c0_10, %c0_11] : memref<192x64xbf16, #tpu.memory_space<vmem>>, vector<192x64xbf16>
    %cst_12 = arith.constant dense<0.000000e+00> : vector<32x64xf32>
    %18 = tpu.matmul %15, %17, %cst_12 {dimension_numbers = #tpu.dot_dimension_numbers<[1], [0], [0], [1], [0, 0, 1, 1], [], []>} : vector<32x192xbf16>, vector<192x64xbf16>, vector<32x64xf32> -> vector<32x64xf32>
    %19 = arith.addf %16, %18 : vector<32x64xf32>
    %c0_13 = arith.constant 0 : index
    %c0_14 = arith.constant 0 : index
    %20 = vector.load %arg9[%c0_13, %c0_14] : memref<32x64xf32, #tpu.memory_space<vmem>>, vector<32x64xf32>
    tpu.vector_store %arg9[%c0_13, %c0_14], %19 {strides = array<i32>} : memref<32x64xf32, #tpu.memory_space<vmem>>, vector<32x64xf32>,
    %c0_i32_15 = arith.constant 0 : i32
    %21 = arith.cmpi eq, %arg1, %c0_i32_15 : i32
    %22 = arith.extui %21 : i1 to i32
    %c0_i32_16 = arith.constant 0 : i32
    %23 = arith.cmpi ne, %22, %c0_i32_16 : i32
    scf.if %23 {
      %c0_17 = arith.constant 0 : index
      %c0_18 = arith.constant 0 : index
      %24 = vector.load %arg9[%c0_17, %c0_18] : memref<32x64xf32, #tpu.memory_space<vmem>>, vector<32x64xf32>
      %c0_19 = arith.constant 0 : index
      %c0_20 = arith.constant 0 : index
      %25 = vector.load %arg2[%c0_19, %c0_20] : memref<32x64xf32, #tpu.memory_space<vmem>>, vector<32x64xf32>
      %26 = arith.addf %24, %25 : vector<32x64xf32>
      %c0_21 = arith.constant 0 : index
      %c0_22 = arith.constant 0 : index
      %27 = vector.load %arg7[%c0_21, %c0_22] : memref<32x64xf32, #tpu.memory_space<vmem>>, vector<32x64xf32>
      tpu.vector_store %arg7[%c0_21, %c0_22], %26 {strides = array<i32>} : memref<32x64xf32, #tpu.memory_space<vmem>>, vector<32x64xf32>,
    } else {
    }
    return
  }
  func.func @transform_0(%arg0: i32, %arg1: i32) -> (i32, i32) {
    %c0_i32 = arith.constant 0 : i32
    %c0_i32_0 = arith.constant 0 : i32
    return %arg0, %c0_i32 : i32, i32
  }
  func.func @transform_1(%arg0: i32, %arg1: i32) -> (i32, i32) {
    %c0_i32 = arith.constant 0 : i32
    %c0_i32_0 = arith.constant 0 : i32
    %c0_i32_1 = arith.constant 0 : i32
    return %c0_i32, %c0_i32_0 : i32, i32
  }
  func.func @transform_2(%arg0: i32, %arg1: i32) -> (i32, i32) {
    %c0_i32 = arith.constant 0 : i32
    %c0_i32_0 = arith.constant 0 : i32
    return %c0_i32, %arg1 : i32, i32
  }
  func.func @transform_3(%arg0: i32, %arg1: i32) -> (i32, i32) {
    %c0_i32 = arith.constant 0 : i32
    %c0_i32_0 = arith.constant 0 : i32
    return %c0_i32, %arg1 : i32, i32
  }
  func.func @transform_4(%arg0: i32, %arg1: i32) -> (i32, i32) {
    %c0_i32 = arith.constant 0 : i32
    %c0_i32_0 = arith.constant 0 : i32
    return %arg1, %c0_i32 : i32, i32
  }
  func.func @transform_5(%arg0: i32, %arg1: i32) -> (i32, i32) {
    %c0_i32 = arith.constant 0 : i32
    %c0_i32_0 = arith.constant 0 : i32
    return %arg0, %c0_i32 : i32, i32
  }
}

module attributes {stable_mosaic.version = 11 : i64} {
  func.func @kernel(%arg0: i32, %arg1: i32, %arg2: memref<32x64xf32, #tpu.memory_space<vmem>>, %arg3: memref<1x64xf32, #tpu.memory_space<vmem>>, %arg4: memref<64x128xbf16, #tpu.memory_space<vmem>>, %arg5: memref<32x128xbf16, #tpu.memory_space<vmem>>) attributes {dimension_semantics = [#tpu.dimension_semantics<parallel>, #tpu.dimension_semantics<parallel>], iteration_bounds = array<i64: 1, 1>, scalar_prefetch = 0 : i64, scratch_operands = 0 : i64, tpu.core_type = #tpu.core_type<tc>, window_params = [{transform_indices = @transform_0, window_bounds = array<i64: 32, 64>}, {pipeline_mode = #tpu.pipeline_mode<synchronous>, transform_indices = @transform_1, window_bounds = array<i64: 1, 64>}, {transform_indices = @transform_2, window_bounds = array<i64: 64, 128>}, {transform_indices = @transform_3, window_bounds = array<i64: 32, 128>}]} {
    %c0 = arith.constant 0 : index
    %c0_0 = arith.constant 0 : index
    %0 = vector.load %arg2[%c0, %c0_0] : memref<32x64xf32, #tpu.memory_space<vmem>>, vector<32x64xf32>
    %1 = arith.mulf %0, %0 : vector<32x64xf32>
    %cst = arith.constant dense<0.000000e+00> : vector<32xf32>
    %2 = vector.multi_reduction <add>, %1, %cst [1] : vector<32x64xf32> to vector<32xf32>
    %3 = vector.shape_cast %2 : vector<32xf32> to vector<32x1xf32>
    %cst_1 = arith.constant 6.400000e+01 : f32
    %4 = vector.broadcast %cst_1 : f32 to vector<32x1xf32>
    %5 = arith.divf %3, %4 : vector<32x1xf32>
    %cst_2 = arith.constant 9.99999974E-6 : f32
    %6 = vector.broadcast %cst_2 : f32 to vector<32x1xf32>
    %7 = arith.addf %5, %6 : vector<32x1xf32>
    %8 = math.rsqrt %7 : vector<32x1xf32>
    %9 = vector.broadcast %8 : vector<32x1xf32> to vector<32x64xf32>
    %10 = arith.mulf %0, %9 : vector<32x64xf32>
    %c0_3 = arith.constant 0 : index
    %c0_4 = arith.constant 0 : index
    %11 = vector.load %arg3[%c0_3, %c0_4] : memref<1x64xf32, #tpu.memory_space<vmem>>, vector<1x64xf32>
    %12 = vector.broadcast %11 : vector<1x64xf32> to vector<32x64xf32>
    %13 = arith.mulf %10, %12 : vector<32x64xf32>
    %14 = arith.truncf %13 : vector<32x64xf32> to vector<32x64xbf16>
    %c0_5 = arith.constant 0 : index
    %c0_6 = arith.constant 0 : index
    %15 = vector.load %arg4[%c0_5, %c0_6] : memref<64x128xbf16, #tpu.memory_space<vmem>>, vector<64x128xbf16>
    %cst_7 = arith.constant dense<0.000000e+00> : vector<32x128xf32>
    %16 = tpu.matmul %14, %15, %cst_7 {dimension_numbers = #tpu.dot_dimension_numbers<[1], [0], [0], [1], [0, 0, 1, 1], [], []>} : vector<32x64xbf16>, vector<64x128xbf16>, vector<32x128xf32> -> vector<32x128xf32>
    %17 = arith.truncf %16 : vector<32x128xf32> to vector<32x128xbf16>
    %c0_8 = arith.constant 0 : index
    %c0_9 = arith.constant 0 : index
    %18 = vector.load %arg5[%c0_8, %c0_9] : memref<32x128xbf16, #tpu.memory_space<vmem>>, vector<32x128xbf16>
    tpu.vector_store %arg5[%c0_8, %c0_9], %17 {strides = array<i32>} : memref<32x128xbf16, #tpu.memory_space<vmem>>, vector<32x128xbf16>,
    return
  }
  func.func @transform_0(%arg0: i32, %arg1: i32) -> (i32, i32) {
    %c0_i32 = arith.constant 0 : i32
    %c0_i32_0 = arith.constant 0 : i32
    return %arg0, %c0_i32 : i32, i32
  }
  func.func @transform_1(%arg0: i32, %arg1: i32) -> (i32, i32) {
    %c0_i32 = arith.constant 0 : i32
    %c0_i32_0 = arith.constant 0 : i32
    %c0_i32_1 = arith.constant 0 : i32
    return %c0_i32, %c0_i32_0 : i32, i32
  }
  func.func @transform_2(%arg0: i32, %arg1: i32) -> (i32, i32) {
    %c0_i32 = arith.constant 0 : i32
    %c0_i32_0 = arith.constant 0 : i32
    return %c0_i32, %arg1 : i32, i32
  }
  func.func @transform_3(%arg0: i32, %arg1: i32) -> (i32, i32) {
    %c0_i32 = arith.constant 0 : i32
    return %arg0, %arg1 : i32, i32
  }
}

module attributes {stable_mosaic.version = 11 : i64} {
  func.func @kernel(%arg0: i32, %arg1: i32, %arg2: memref<1x16x128xbf16, #tpu.memory_space<vmem>>, %arg3: memref<1x16x32xf32, #tpu.memory_space<vmem>>, %arg4: memref<1x16x32xf32, #tpu.memory_space<vmem>>, %arg5: memref<1x16x64xbf16, #tpu.memory_space<vmem>>, %arg6: memref<1x16x64xbf16, #tpu.memory_space<vmem>>) attributes {dimension_semantics = [#tpu.dimension_semantics<parallel>, #tpu.dimension_semantics<parallel>], iteration_bounds = array<i64: 2, 1>, scalar_prefetch = 0 : i64, scratch_operands = 0 : i64, tpu.core_type = #tpu.core_type<tc>, window_params = [{transform_indices = @transform_0, window_bounds = array<i64: 1, 16, 128>}, {transform_indices = @transform_1, window_bounds = array<i64: 1, 16, 32>}, {transform_indices = @transform_2, window_bounds = array<i64: 1, 16, 32>}, {transform_indices = @transform_3, window_bounds = array<i64: 1, 16, 64>}, {transform_indices = @transform_4, window_bounds = array<i64: 1, 16, 64>}]} {
    %c0 = arith.constant 0 : index
    %c0_0 = arith.constant 0 : index
    %c0_1 = arith.constant 0 : index
    %0 = vector.load %arg2[%c0, %c0_0, %c0_1] : memref<1x16x128xbf16, #tpu.memory_space<vmem>>, vector<1x16x128xbf16>
    %1 = vector.shape_cast %0 : vector<1x16x128xbf16> to vector<16x128xbf16>
    %2 = vector.extract_strided_slice %1 {offsets = [0, 0], sizes = [16, 64], strides = [1, 1]} : vector<16x128xbf16> to vector<16x64xbf16>
    %3 = arith.extf %2 : vector<16x64xbf16> to vector<16x64xf32>
    %c0_2 = arith.constant 0 : index
    %c0_3 = arith.constant 0 : index
    %c0_4 = arith.constant 0 : index
    %4 = vector.load %arg3[%c0_2, %c0_3, %c0_4] : memref<1x16x32xf32, #tpu.memory_space<vmem>>, vector<1x16x32xf32>
    %5 = vector.shape_cast %4 : vector<1x16x32xf32> to vector<16x32xf32>
    %c0_5 = arith.constant 0 : index
    %c0_6 = arith.constant 0 : index
    %c0_7 = arith.constant 0 : index
    %6 = vector.load %arg4[%c0_5, %c0_6, %c0_7] : memref<1x16x32xf32, #tpu.memory_space<vmem>>, vector<1x16x32xf32>
    %7 = vector.shape_cast %6 : vector<1x16x32xf32> to vector<16x32xf32>
    %8 = vector.extract_strided_slice %5 {offsets = [0, 0], sizes = [16, 8], strides = [1, 1]} : vector<16x32xf32> to vector<16x8xf32>
    %9 = vector.extract_strided_slice %7 {offsets = [0, 0], sizes = [16, 8], strides = [1, 1]} : vector<16x32xf32> to vector<16x8xf32>
    %10 = vector.extract_strided_slice %3 {offsets = [0, 0], sizes = [16, 8], strides = [1, 1]} : vector<16x64xf32> to vector<16x8xf32>
    %11 = vector.extract_strided_slice %3 {offsets = [0, 8], sizes = [16, 8], strides = [1, 1]} : vector<16x64xf32> to vector<16x8xf32>
    %12 = arith.mulf %10, %8 : vector<16x8xf32>
    %13 = arith.mulf %11, %9 : vector<16x8xf32>
    %14 = arith.subf %12, %13 : vector<16x8xf32>
    %15 = arith.truncf %14 : vector<16x8xf32> to vector<16x8xbf16>
    %c0_8 = arith.constant 0 : index
    %c0_9 = arith.constant 0 : index
    %c0_10 = arith.constant 0 : index
    %16 = vector.load %arg5[%c0_8, %c0_9, %c0_10] : memref<1x16x64xbf16, #tpu.memory_space<vmem>>, vector<1x16x8xbf16>
    %17 = vector.shape_cast %16 : vector<1x16x8xbf16> to vector<16x8xbf16>
    %18 = vector.shape_cast %15 : vector<16x8xbf16> to vector<1x16x8xbf16>
    tpu.vector_store %arg5[%c0_8, %c0_9, %c0_10], %18 {strides = array<i32>} : memref<1x16x64xbf16, #tpu.memory_space<vmem>>, vector<1x16x8xbf16>,
    %19 = arith.mulf %11, %8 : vector<16x8xf32>
    %20 = arith.mulf %10, %9 : vector<16x8xf32>
    %21 = arith.addf %19, %20 : vector<16x8xf32>
    %22 = arith.truncf %21 : vector<16x8xf32> to vector<16x8xbf16>
    %c0_11 = arith.constant 0 : index
    %c0_12 = arith.constant 0 : index
    %c8 = arith.constant 8 : index
    %23 = vector.load %arg5[%c0_11, %c0_12, %c8] : memref<1x16x64xbf16, #tpu.memory_space<vmem>>, vector<1x16x8xbf16>
    %24 = vector.shape_cast %23 : vector<1x16x8xbf16> to vector<16x8xbf16>
    %25 = vector.shape_cast %22 : vector<16x8xbf16> to vector<1x16x8xbf16>
    tpu.vector_store %arg5[%c0_11, %c0_12, %c8], %25 {strides = array<i32>} : memref<1x16x64xbf16, #tpu.memory_space<vmem>>, vector<1x16x8xbf16>,
    %26 = vector.extract_strided_slice %5 {offsets = [0, 8], sizes = [16, 8], strides = [1, 1]} : vector<16x32xf32> to vector<16x8xf32>
    %27 = vector.extract_strided_slice %7 {offsets = [0, 8], sizes = [16, 8], strides = [1, 1]} : vector<16x32xf32> to vector<16x8xf32>
    %28 = vector.extract_strided_slice %3 {offsets = [0, 16], sizes = [16, 8], strides = [1, 1]} : vector<16x64xf32> to vector<16x8xf32>
    %29 = vector.extract_strided_slice %3 {offsets = [0, 24], sizes = [16, 8], strides = [1, 1]} : vector<16x64xf32> to vector<16x8xf32>
    %30 = arith.mulf %28, %26 : vector<16x8xf32>
    %31 = arith.mulf %29, %27 : vector<16x8xf32>
    %32 = arith.subf %30, %31 : vector<16x8xf32>
    %33 = arith.truncf %32 : vector<16x8xf32> to vector<16x8xbf16>
    %c0_13 = arith.constant 0 : index
    %c0_14 = arith.constant 0 : index
    %c16 = arith.constant 16 : index
    %34 = vector.load %arg5[%c0_13, %c0_14, %c16] : memref<1x16x64xbf16, #tpu.memory_space<vmem>>, vector<1x16x8xbf16>
    %35 = vector.shape_cast %34 : vector<1x16x8xbf16> to vector<16x8xbf16>
    %36 = vector.shape_cast %33 : vector<16x8xbf16> to vector<1x16x8xbf16>
    tpu.vector_store %arg5[%c0_13, %c0_14, %c16], %36 {strides = array<i32>} : memref<1x16x64xbf16, #tpu.memory_space<vmem>>, vector<1x16x8xbf16>,
    %37 = arith.mulf %29, %26 : vector<16x8xf32>
    %38 = arith.mulf %28, %27 : vector<16x8xf32>
    %39 = arith.addf %37, %38 : vector<16x8xf32>
    %40 = arith.truncf %39 : vector<16x8xf32> to vector<16x8xbf16>
    %c0_15 = arith.constant 0 : index
    %c0_16 = arith.constant 0 : index
    %c24 = arith.constant 24 : index
    %41 = vector.load %arg5[%c0_15, %c0_16, %c24] : memref<1x16x64xbf16, #tpu.memory_space<vmem>>, vector<1x16x8xbf16>
    %42 = vector.shape_cast %41 : vector<1x16x8xbf16> to vector<16x8xbf16>
    %43 = vector.shape_cast %40 : vector<16x8xbf16> to vector<1x16x8xbf16>
    tpu.vector_store %arg5[%c0_15, %c0_16, %c24], %43 {strides = array<i32>} : memref<1x16x64xbf16, #tpu.memory_space<vmem>>, vector<1x16x8xbf16>,
    %44 = vector.extract_strided_slice %5 {offsets = [0, 16], sizes = [16, 8], strides = [1, 1]} : vector<16x32xf32> to vector<16x8xf32>
    %45 = vector.extract_strided_slice %7 {offsets = [0, 16], sizes = [16, 8], strides = [1, 1]} : vector<16x32xf32> to vector<16x8xf32>
    %46 = vector.extract_strided_slice %3 {offsets = [0, 32], sizes = [16, 8], strides = [1, 1]} : vector<16x64xf32> to vector<16x8xf32>
    %47 = vector.extract_strided_slice %3 {offsets = [0, 40], sizes = [16, 8], strides = [1, 1]} : vector<16x64xf32> to vector<16x8xf32>
    %48 = arith.mulf %46, %44 : vector<16x8xf32>
    %49 = arith.mulf %47, %45 : vector<16x8xf32>
    %50 = arith.subf %48, %49 : vector<16x8xf32>
    %51 = arith.truncf %50 : vector<16x8xf32> to vector<16x8xbf16>
    %c0_17 = arith.constant 0 : index
    %c0_18 = arith.constant 0 : index
    %c32 = arith.constant 32 : index
    %52 = vector.load %arg5[%c0_17, %c0_18, %c32] : memref<1x16x64xbf16, #tpu.memory_space<vmem>>, vector<1x16x8xbf16>
    %53 = vector.shape_cast %52 : vector<1x16x8xbf16> to vector<16x8xbf16>
    %54 = vector.shape_cast %51 : vector<16x8xbf16> to vector<1x16x8xbf16>
    tpu.vector_store %arg5[%c0_17, %c0_18, %c32], %54 {strides = array<i32>} : memref<1x16x64xbf16, #tpu.memory_space<vmem>>, vector<1x16x8xbf16>,
    %55 = arith.mulf %47, %44 : vector<16x8xf32>
    %56 = arith.mulf %46, %45 : vector<16x8xf32>
    %57 = arith.addf %55, %56 : vector<16x8xf32>
    %58 = arith.truncf %57 : vector<16x8xf32> to vector<16x8xbf16>
    %c0_19 = arith.constant 0 : index
    %c0_20 = arith.constant 0 : index
    %c40 = arith.constant 40 : index
    %59 = vector.load %arg5[%c0_19, %c0_20, %c40] : memref<1x16x64xbf16, #tpu.memory_space<vmem>>, vector<1x16x8xbf16>
    %60 = vector.shape_cast %59 : vector<1x16x8xbf16> to vector<16x8xbf16>
    %61 = vector.shape_cast %58 : vector<16x8xbf16> to vector<1x16x8xbf16>
    tpu.vector_store %arg5[%c0_19, %c0_20, %c40], %61 {strides = array<i32>} : memref<1x16x64xbf16, #tpu.memory_space<vmem>>, vector<1x16x8xbf16>,
    %62 = vector.extract_strided_slice %5 {offsets = [0, 24], sizes = [16, 8], strides = [1, 1]} : vector<16x32xf32> to vector<16x8xf32>
    %63 = vector.extract_strided_slice %7 {offsets = [0, 24], sizes = [16, 8], strides = [1, 1]} : vector<16x32xf32> to vector<16x8xf32>
    %64 = vector.extract_strided_slice %3 {offsets = [0, 48], sizes = [16, 8], strides = [1, 1]} : vector<16x64xf32> to vector<16x8xf32>
    %65 = vector.extract_strided_slice %3 {offsets = [0, 56], sizes = [16, 8], strides = [1, 1]} : vector<16x64xf32> to vector<16x8xf32>
    %66 = arith.mulf %64, %62 : vector<16x8xf32>
    %67 = arith.mulf %65, %63 : vector<16x8xf32>
    %68 = arith.subf %66, %67 : vector<16x8xf32>
    %69 = arith.truncf %68 : vector<16x8xf32> to vector<16x8xbf16>
    %c0_21 = arith.constant 0 : index
    %c0_22 = arith.constant 0 : index
    %c48 = arith.constant 48 : index
    %70 = vector.load %arg5[%c0_21, %c0_22, %c48] : memref<1x16x64xbf16, #tpu.memory_space<vmem>>, vector<1x16x8xbf16>
    %71 = vector.shape_cast %70 : vector<1x16x8xbf16> to vector<16x8xbf16>
    %72 = vector.shape_cast %69 : vector<16x8xbf16> to vector<1x16x8xbf16>
    tpu.vector_store %arg5[%c0_21, %c0_22, %c48], %72 {strides = array<i32>} : memref<1x16x64xbf16, #tpu.memory_space<vmem>>, vector<1x16x8xbf16>,
    %73 = arith.mulf %65, %62 : vector<16x8xf32>
    %74 = arith.mulf %64, %63 : vector<16x8xf32>
    %75 = arith.addf %73, %74 : vector<16x8xf32>
    %76 = arith.truncf %75 : vector<16x8xf32> to vector<16x8xbf16>
    %c0_23 = arith.constant 0 : index
    %c0_24 = arith.constant 0 : index
    %c56 = arith.constant 56 : index
    %77 = vector.load %arg5[%c0_23, %c0_24, %c56] : memref<1x16x64xbf16, #tpu.memory_space<vmem>>, vector<1x16x8xbf16>
    %78 = vector.shape_cast %77 : vector<1x16x8xbf16> to vector<16x8xbf16>
    %79 = vector.shape_cast %76 : vector<16x8xbf16> to vector<1x16x8xbf16>
    tpu.vector_store %arg5[%c0_23, %c0_24, %c56], %79 {strides = array<i32>} : memref<1x16x64xbf16, #tpu.memory_space<vmem>>, vector<1x16x8xbf16>,
    %80 = vector.extract_strided_slice %1 {offsets = [0, 64], sizes = [16, 64], strides = [1, 1]} : vector<16x128xbf16> to vector<16x64xbf16>
    %c0_25 = arith.constant 0 : index
    %c0_26 = arith.constant 0 : index
    %c0_27 = arith.constant 0 : index
    %81 = vector.load %arg6[%c0_25, %c0_26, %c0_27] : memref<1x16x64xbf16, #tpu.memory_space<vmem>>, vector<1x16x64xbf16>
    %82 = vector.shape_cast %81 : vector<1x16x64xbf16> to vector<16x64xbf16>
    %83 = vector.shape_cast %80 : vector<16x64xbf16> to vector<1x16x64xbf16>
    tpu.vector_store %arg6[%c0_25, %c0_26, %c0_27], %83 {strides = array<i32>} : memref<1x16x64xbf16, #tpu.memory_space<vmem>>, vector<1x16x64xbf16>,
    return
  }
  func.func @transform_0(%arg0: i32, %arg1: i32) -> (i32, i32, i32) {
    %c0_i32 = arith.constant 0 : i32
    %c0_i32_0 = arith.constant 0 : i32
    return %arg0, %arg1, %c0_i32 : i32, i32, i32
  }
  func.func @transform_1(%arg0: i32, %arg1: i32) -> (i32, i32, i32) {
    %c0_i32 = arith.constant 0 : i32
    %c0_i32_0 = arith.constant 0 : i32
    return %arg0, %arg1, %c0_i32 : i32, i32, i32
  }
  func.func @transform_2(%arg0: i32, %arg1: i32) -> (i32, i32, i32) {
    %c0_i32 = arith.constant 0 : i32
    %c0_i32_0 = arith.constant 0 : i32
    return %arg0, %arg1, %c0_i32 : i32, i32, i32
  }
  func.func @transform_3(%arg0: i32, %arg1: i32) -> (i32, i32, i32) {
    %c0_i32 = arith.constant 0 : i32
    %c0_i32_0 = arith.constant 0 : i32
    return %arg0, %arg1, %c0_i32 : i32, i32, i32
  }
  func.func @transform_4(%arg0: i32, %arg1: i32) -> (i32, i32, i32) {
    %c0_i32 = arith.constant 0 : i32
    %c0_i32_0 = arith.constant 0 : i32
    return %arg0, %arg1, %c0_i32 : i32, i32, i32
  }
}

module attributes {stable_mosaic.version = 11 : i64} {
  func.func @kernel(%arg0: i32, %arg1: i32, %arg2: memref<32x64xf32, #tpu.memory_space<vmem>>, %arg3: memref<1x64xf32, #tpu.memory_space<vmem>>, %arg4: memref<64x64xbf16, #tpu.memory_space<vmem>>, %arg5: memref<32x64xf32, #tpu.memory_space<vmem>>) attributes {dimension_semantics = [#tpu.dimension_semantics<parallel>, #tpu.dimension_semantics<parallel>], iteration_bounds = array<i64: 1, 1>, scalar_prefetch = 0 : i64, scratch_operands = 0 : i64, tpu.core_type = #tpu.core_type<tc>, window_params = [{transform_indices = @transform_0, window_bounds = array<i64: 32, 64>}, {pipeline_mode = #tpu.pipeline_mode<synchronous>, transform_indices = @transform_1, window_bounds = array<i64: 1, 64>}, {transform_indices = @transform_2, window_bounds = array<i64: 64, 64>}, {transform_indices = @transform_3, window_bounds = array<i64: 32, 64>}]} {
    %c0 = arith.constant 0 : index
    %c0_0 = arith.constant 0 : index
    %0 = vector.load %arg2[%c0, %c0_0] : memref<32x64xf32, #tpu.memory_space<vmem>>, vector<32x64xf32>
    %1 = arith.mulf %0, %0 : vector<32x64xf32>
    %cst = arith.constant dense<0.000000e+00> : vector<32xf32>
    %2 = vector.multi_reduction <add>, %1, %cst [1] : vector<32x64xf32> to vector<32xf32>
    %3 = vector.shape_cast %2 : vector<32xf32> to vector<32x1xf32>
    %cst_1 = arith.constant 6.400000e+01 : f32
    %4 = vector.broadcast %cst_1 : f32 to vector<32x1xf32>
    %5 = arith.divf %3, %4 : vector<32x1xf32>
    %cst_2 = arith.constant 9.99999974E-6 : f32
    %6 = vector.broadcast %cst_2 : f32 to vector<32x1xf32>
    %7 = arith.addf %5, %6 : vector<32x1xf32>
    %8 = math.rsqrt %7 : vector<32x1xf32>
    %9 = vector.broadcast %8 : vector<32x1xf32> to vector<32x64xf32>
    %10 = arith.mulf %0, %9 : vector<32x64xf32>
    %c0_3 = arith.constant 0 : index
    %c0_4 = arith.constant 0 : index
    %11 = vector.load %arg3[%c0_3, %c0_4] : memref<1x64xf32, #tpu.memory_space<vmem>>, vector<1x64xf32>
    %12 = vector.broadcast %11 : vector<1x64xf32> to vector<32x64xf32>
    %13 = arith.mulf %10, %12 : vector<32x64xf32>
    %14 = arith.truncf %13 : vector<32x64xf32> to vector<32x64xbf16>
    %c0_5 = arith.constant 0 : index
    %c0_6 = arith.constant 0 : index
    %15 = vector.load %arg4[%c0_5, %c0_6] : memref<64x64xbf16, #tpu.memory_space<vmem>>, vector<64x64xbf16>
    %cst_7 = arith.constant dense<0.000000e+00> : vector<32x64xf32>
    %16 = tpu.matmul %14, %15, %cst_7 {dimension_numbers = #tpu.dot_dimension_numbers<[1], [0], [0], [1], [0, 0, 1, 1], [], []>} : vector<32x64xbf16>, vector<64x64xbf16>, vector<32x64xf32> -> vector<32x64xf32>
    %c0_8 = arith.constant 0 : index
    %c0_9 = arith.constant 0 : index
    %17 = vector.load %arg5[%c0_8, %c0_9] : memref<32x64xf32, #tpu.memory_space<vmem>>, vector<32x64xf32>
    tpu.vector_store %arg5[%c0_8, %c0_9], %16 {strides = array<i32>} : memref<32x64xf32, #tpu.memory_space<vmem>>, vector<32x64xf32>,
    return
  }
  func.func @transform_0(%arg0: i32, %arg1: i32) -> (i32, i32) {
    %c0_i32 = arith.constant 0 : i32
    %c0_i32_0 = arith.constant 0 : i32
    return %arg0, %c0_i32 : i32, i32
  }
  func.func @transform_1(%arg0: i32, %arg1: i32) -> (i32, i32) {
    %c0_i32 = arith.constant 0 : i32
    %c0_i32_0 = arith.constant 0 : i32
    %c0_i32_1 = arith.constant 0 : i32
    return %c0_i32, %c0_i32_0 : i32, i32
  }
  func.func @transform_2(%arg0: i32, %arg1: i32) -> (i32, i32) {
    %c0_i32 = arith.constant 0 : i32
    %c0_i32_0 = arith.constant 0 : i32
    return %c0_i32, %arg1 : i32, i32
  }
  func.func @transform_3(%arg0: i32, %arg1: i32) -> (i32, i32) {
    %c0_i32 = arith.constant 0 : i32
    return %arg0, %arg1 : i32, i32
  }
}

module attributes {stable_mosaic.version = 11 : i64} {
  func.func @kernel(%arg0: i32, %arg1: i32, %arg2: i32, %arg3: memref<1x16x64xbf16, #tpu.memory_space<vmem>>, %arg4: memref<1x16x64xbf16, #tpu.memory_space<vmem>>, %arg5: memref<1x16x64xbf16, #tpu.memory_space<vmem>>, %arg6: memref<1x16x32xf32, #tpu.memory_space<vmem>>, %arg7: memref<1x16x32xf32, #tpu.memory_space<vmem>>, %arg8: memref<1x16x64xbf16, #tpu.memory_space<vmem>>, %arg9: memref<16x64xbf16, #tpu.memory_space<vmem>>, %arg10: memref<16x4xf32, #tpu.memory_space<vmem>>, %arg11: memref<16x4xf32, #tpu.memory_space<vmem>>, %arg12: memref<16x64xf32, #tpu.memory_space<vmem>>) attributes {dimension_semantics = [#tpu.dimension_semantics<parallel>, #tpu.dimension_semantics<parallel>, #tpu.dimension_semantics<arbitrary>], iteration_bounds = array<i64: 2, 1, 1>, scalar_prefetch = 0 : i64, scratch_operands = 4 : i64, tpu.core_type = #tpu.core_type<tc>, window_params = [{transform_indices = @transform_0, window_bounds = array<i64: 1, 16, 64>}, {transform_indices = @transform_1, window_bounds = array<i64: 1, 16, 64>}, {transform_indices = @transform_2, window_bounds = array<i64: 1, 16, 64>}, {transform_indices = @transform_3, window_bounds = array<i64: 1, 16, 32>}, {transform_indices = @transform_4, window_bounds = array<i64: 1, 16, 32>}, {transform_indices = @transform_5, window_bounds = array<i64: 1, 16, 64>}]} {
    %c0_i32 = arith.constant 0 : i32
    %0 = arith.cmpi eq, %arg2, %c0_i32 : i32
    %1 = arith.extui %0 : i1 to i32
    %c0_i32_0 = arith.constant 0 : i32
    %2 = arith.cmpi ne, %1, %c0_i32_0 : i32
    scf.if %2 {
      %c0_73 = arith.constant 0 : index
      %c0_74 = arith.constant 0 : index
      %c0_75 = arith.constant 0 : index
      %122 = vector.load %arg3[%c0_73, %c0_74, %c0_75] : memref<1x16x64xbf16, #tpu.memory_space<vmem>>, vector<1x16x64xbf16>
      %123 = vector.shape_cast %122 : vector<1x16x64xbf16> to vector<16x64xbf16>
      %124 = arith.extf %123 : vector<16x64xbf16> to vector<16x64xf32>
      %c0_76 = arith.constant 0 : index
      %c0_77 = arith.constant 0 : index
      %c0_78 = arith.constant 0 : index
      %125 = vector.load %arg6[%c0_76, %c0_77, %c0_78] : memref<1x16x32xf32, #tpu.memory_space<vmem>>, vector<1x16x32xf32>
      %126 = vector.shape_cast %125 : vector<1x16x32xf32> to vector<16x32xf32>
      %c0_79 = arith.constant 0 : index
      %c0_80 = arith.constant 0 : index
      %c0_81 = arith.constant 0 : index
      %127 = vector.load %arg7[%c0_79, %c0_80, %c0_81] : memref<1x16x32xf32, #tpu.memory_space<vmem>>, vector<1x16x32xf32>
      %128 = vector.shape_cast %127 : vector<1x16x32xf32> to vector<16x32xf32>
      %129 = vector.extract_strided_slice %126 {offsets = [0, 0], sizes = [16, 8], strides = [1, 1]} : vector<16x32xf32> to vector<16x8xf32>
      %130 = vector.extract_strided_slice %128 {offsets = [0, 0], sizes = [16, 8], strides = [1, 1]} : vector<16x32xf32> to vector<16x8xf32>
      %131 = vector.extract_strided_slice %124 {offsets = [0, 0], sizes = [16, 8], strides = [1, 1]} : vector<16x64xf32> to vector<16x8xf32>
      %132 = vector.extract_strided_slice %124 {offsets = [0, 8], sizes = [16, 8], strides = [1, 1]} : vector<16x64xf32> to vector<16x8xf32>
      %133 = arith.mulf %131, %129 : vector<16x8xf32>
      %134 = arith.mulf %132, %130 : vector<16x8xf32>
      %135 = arith.subf %133, %134 : vector<16x8xf32>
      %136 = arith.mulf %132, %129 : vector<16x8xf32>
      %137 = arith.mulf %131, %130 : vector<16x8xf32>
      %138 = arith.addf %136, %137 : vector<16x8xf32>
      %cst_82 = arith.constant 2.500000e-01 : f32
      %139 = vector.broadcast %cst_82 : f32 to vector<16x8xf32>
      %140 = arith.mulf %135, %139 : vector<16x8xf32>
      %cst_83 = arith.constant 2.500000e-01 : f32
      %141 = vector.broadcast %cst_83 : f32 to vector<16x8xf32>
      %142 = arith.mulf %138, %141 : vector<16x8xf32>
      %143 = arith.truncf %140 : vector<16x8xf32> to vector<16x8xbf16>
      %c0_84 = arith.constant 0 : index
      %c0_85 = arith.constant 0 : index
      %144 = vector.load %arg9[%c0_84, %c0_85] : memref<16x64xbf16, #tpu.memory_space<vmem>>, vector<16x8xbf16>
      tpu.vector_store %arg9[%c0_84, %c0_85], %143 {strides = array<i32>} : memref<16x64xbf16, #tpu.memory_space<vmem>>, vector<16x8xbf16>,
      %145 = arith.truncf %142 : vector<16x8xf32> to vector<16x8xbf16>
      %c0_86 = arith.constant 0 : index
      %c8 = arith.constant 8 : index
      %146 = vector.load %arg9[%c0_86, %c8] : memref<16x64xbf16, #tpu.memory_space<vmem>>, vector<16x8xbf16>
      tpu.vector_store %arg9[%c0_86, %c8], %145 {strides = array<i32>} : memref<16x64xbf16, #tpu.memory_space<vmem>>, vector<16x8xbf16>,
      %147 = vector.extract_strided_slice %126 {offsets = [0, 8], sizes = [16, 8], strides = [1, 1]} : vector<16x32xf32> to vector<16x8xf32>
      %148 = vector.extract_strided_slice %128 {offsets = [0, 8], sizes = [16, 8], strides = [1, 1]} : vector<16x32xf32> to vector<16x8xf32>
      %149 = vector.extract_strided_slice %124 {offsets = [0, 16], sizes = [16, 8], strides = [1, 1]} : vector<16x64xf32> to vector<16x8xf32>
      %150 = vector.extract_strided_slice %124 {offsets = [0, 24], sizes = [16, 8], strides = [1, 1]} : vector<16x64xf32> to vector<16x8xf32>
      %151 = arith.mulf %149, %147 : vector<16x8xf32>
      %152 = arith.mulf %150, %148 : vector<16x8xf32>
      %153 = arith.subf %151, %152 : vector<16x8xf32>
      %154 = arith.mulf %150, %147 : vector<16x8xf32>
      %155 = arith.mulf %149, %148 : vector<16x8xf32>
      %156 = arith.addf %154, %155 : vector<16x8xf32>
      %cst_87 = arith.constant 2.500000e-01 : f32
      %157 = vector.broadcast %cst_87 : f32 to vector<16x8xf32>
      %158 = arith.mulf %153, %157 : vector<16x8xf32>
      %cst_88 = arith.constant 2.500000e-01 : f32
      %159 = vector.broadcast %cst_88 : f32 to vector<16x8xf32>
      %160 = arith.mulf %156, %159 : vector<16x8xf32>
      %161 = arith.truncf %158 : vector<16x8xf32> to vector<16x8xbf16>
      %c0_89 = arith.constant 0 : index
      %c16_90 = arith.constant 16 : index
      %162 = vector.load %arg9[%c0_89, %c16_90] : memref<16x64xbf16, #tpu.memory_space<vmem>>, vector<16x8xbf16>
      tpu.vector_store %arg9[%c0_89, %c16_90], %161 {strides = array<i32>} : memref<16x64xbf16, #tpu.memory_space<vmem>>, vector<16x8xbf16>,
      %163 = arith.truncf %160 : vector<16x8xf32> to vector<16x8xbf16>
      %c0_91 = arith.constant 0 : index
      %c24 = arith.constant 24 : index
      %164 = vector.load %arg9[%c0_91, %c24] : memref<16x64xbf16, #tpu.memory_space<vmem>>, vector<16x8xbf16>
      tpu.vector_store %arg9[%c0_91, %c24], %163 {strides = array<i32>} : memref<16x64xbf16, #tpu.memory_space<vmem>>, vector<16x8xbf16>,
      %165 = vector.extract_strided_slice %126 {offsets = [0, 16], sizes = [16, 8], strides = [1, 1]} : vector<16x32xf32> to vector<16x8xf32>
      %166 = vector.extract_strided_slice %128 {offsets = [0, 16], sizes = [16, 8], strides = [1, 1]} : vector<16x32xf32> to vector<16x8xf32>
      %167 = vector.extract_strided_slice %124 {offsets = [0, 32], sizes = [16, 8], strides = [1, 1]} : vector<16x64xf32> to vector<16x8xf32>
      %168 = vector.extract_strided_slice %124 {offsets = [0, 40], sizes = [16, 8], strides = [1, 1]} : vector<16x64xf32> to vector<16x8xf32>
      %169 = arith.mulf %167, %165 : vector<16x8xf32>
      %170 = arith.mulf %168, %166 : vector<16x8xf32>
      %171 = arith.subf %169, %170 : vector<16x8xf32>
      %172 = arith.mulf %168, %165 : vector<16x8xf32>
      %173 = arith.mulf %167, %166 : vector<16x8xf32>
      %174 = arith.addf %172, %173 : vector<16x8xf32>
      %cst_92 = arith.constant 2.500000e-01 : f32
      %175 = vector.broadcast %cst_92 : f32 to vector<16x8xf32>
      %176 = arith.mulf %171, %175 : vector<16x8xf32>
      %cst_93 = arith.constant 2.500000e-01 : f32
      %177 = vector.broadcast %cst_93 : f32 to vector<16x8xf32>
      %178 = arith.mulf %174, %177 : vector<16x8xf32>
      %179 = arith.truncf %176 : vector<16x8xf32> to vector<16x8xbf16>
      %c0_94 = arith.constant 0 : index
      %c32_95 = arith.constant 32 : index
      %180 = vector.load %arg9[%c0_94, %c32_95] : memref<16x64xbf16, #tpu.memory_space<vmem>>, vector<16x8xbf16>
      tpu.vector_store %arg9[%c0_94, %c32_95], %179 {strides = array<i32>} : memref<16x64xbf16, #tpu.memory_space<vmem>>, vector<16x8xbf16>,
      %181 = arith.truncf %178 : vector<16x8xf32> to vector<16x8xbf16>
      %c0_96 = arith.constant 0 : index
      %c40 = arith.constant 40 : index
      %182 = vector.load %arg9[%c0_96, %c40] : memref<16x64xbf16, #tpu.memory_space<vmem>>, vector<16x8xbf16>
      tpu.vector_store %arg9[%c0_96, %c40], %181 {strides = array<i32>} : memref<16x64xbf16, #tpu.memory_space<vmem>>, vector<16x8xbf16>,
      %183 = vector.extract_strided_slice %126 {offsets = [0, 24], sizes = [16, 8], strides = [1, 1]} : vector<16x32xf32> to vector<16x8xf32>
      %184 = vector.extract_strided_slice %128 {offsets = [0, 24], sizes = [16, 8], strides = [1, 1]} : vector<16x32xf32> to vector<16x8xf32>
      %185 = vector.extract_strided_slice %124 {offsets = [0, 48], sizes = [16, 8], strides = [1, 1]} : vector<16x64xf32> to vector<16x8xf32>
      %186 = vector.extract_strided_slice %124 {offsets = [0, 56], sizes = [16, 8], strides = [1, 1]} : vector<16x64xf32> to vector<16x8xf32>
      %187 = arith.mulf %185, %183 : vector<16x8xf32>
      %188 = arith.mulf %186, %184 : vector<16x8xf32>
      %189 = arith.subf %187, %188 : vector<16x8xf32>
      %190 = arith.mulf %186, %183 : vector<16x8xf32>
      %191 = arith.mulf %185, %184 : vector<16x8xf32>
      %192 = arith.addf %190, %191 : vector<16x8xf32>
      %cst_97 = arith.constant 2.500000e-01 : f32
      %193 = vector.broadcast %cst_97 : f32 to vector<16x8xf32>
      %194 = arith.mulf %189, %193 : vector<16x8xf32>
      %cst_98 = arith.constant 2.500000e-01 : f32
      %195 = vector.broadcast %cst_98 : f32 to vector<16x8xf32>
      %196 = arith.mulf %192, %195 : vector<16x8xf32>
      %197 = arith.truncf %194 : vector<16x8xf32> to vector<16x8xbf16>
      %c0_99 = arith.constant 0 : index
      %c48_100 = arith.constant 48 : index
      %198 = vector.load %arg9[%c0_99, %c48_100] : memref<16x64xbf16, #tpu.memory_space<vmem>>, vector<16x8xbf16>
      tpu.vector_store %arg9[%c0_99, %c48_100], %197 {strides = array<i32>} : memref<16x64xbf16, #tpu.memory_space<vmem>>, vector<16x8xbf16>,
      %199 = arith.truncf %196 : vector<16x8xf32> to vector<16x8xbf16>
      %c0_101 = arith.constant 0 : index
      %c56 = arith.constant 56 : index
      %200 = vector.load %arg9[%c0_101, %c56] : memref<16x64xbf16, #tpu.memory_space<vmem>>, vector<16x8xbf16>
      tpu.vector_store %arg9[%c0_101, %c56], %199 {strides = array<i32>} : memref<16x64xbf16, #tpu.memory_space<vmem>>, vector<16x8xbf16>,
      %cst_102 = arith.constant 0xFF800000 : f32
      %201 = vector.broadcast %cst_102 : f32 to vector<16x4xf32>
      %c0_103 = arith.constant 0 : index
      %c0_104 = arith.constant 0 : index
      %202 = vector.load %arg10[%c0_103, %c0_104] : memref<16x4xf32, #tpu.memory_space<vmem>>, vector<16x4xf32>
      tpu.vector_store %arg10[%c0_103, %c0_104], %201 {strides = array<i32>} : memref<16x4xf32, #tpu.memory_space<vmem>>, vector<16x4xf32>,
      %cst_105 = arith.constant 0.000000e+00 : f32
      %203 = vector.broadcast %cst_105 : f32 to vector<16x4xf32>
      %c0_106 = arith.constant 0 : index
      %c0_107 = arith.constant 0 : index
      %204 = vector.load %arg11[%c0_106, %c0_107] : memref<16x4xf32, #tpu.memory_space<vmem>>, vector<16x4xf32>
      tpu.vector_store %arg11[%c0_106, %c0_107], %203 {strides = array<i32>} : memref<16x4xf32, #tpu.memory_space<vmem>>, vector<16x4xf32>,
      %cst_108 = arith.constant 0.000000e+00 : f32
      %205 = vector.broadcast %cst_108 : f32 to vector<16x64xf32>
      %c0_109 = arith.constant 0 : index
      %c0_110 = arith.constant 0 : index
      %206 = vector.load %arg12[%c0_109, %c0_110] : memref<16x64xf32, #tpu.memory_space<vmem>>, vector<16x64xf32>
      tpu.vector_store %arg12[%c0_109, %c0_110], %205 {strides = array<i32>} : memref<16x64xf32, #tpu.memory_space<vmem>>, vector<16x64xf32>,
    } else {
    }
    %c0 = arith.constant 0 : index
    %c0_1 = arith.constant 0 : index
    %c0_2 = arith.constant 0 : index
    %3 = vector.load %arg4[%c0, %c0_1, %c0_2] : memref<1x16x64xbf16, #tpu.memory_space<vmem>>, vector<1x16x64xbf16>
    %4 = vector.shape_cast %3 : vector<1x16x64xbf16> to vector<16x64xbf16>
    %c0_3 = arith.constant 0 : index
    %c0_4 = arith.constant 0 : index
    %c0_5 = arith.constant 0 : index
    %5 = vector.load %arg5[%c0_3, %c0_4, %c0_5] : memref<1x16x64xbf16, #tpu.memory_space<vmem>>, vector<1x16x64xbf16>
    %6 = vector.shape_cast %5 : vector<1x16x64xbf16> to vector<16x64xbf16>
    %c0_6 = arith.constant 0 : index
    %c0_7 = arith.constant 0 : index
    %7 = vector.load %arg9[%c0_6, %c0_7] : memref<16x64xbf16, #tpu.memory_space<vmem>>, vector<16x16xbf16>
    %8 = vector.extract_strided_slice %4 {offsets = [0, 0], sizes = [16, 16], strides = [1, 1]} : vector<16x64xbf16> to vector<16x16xbf16>
    %9 = tpu.transpose %8, [1, 0] : vector<16x16xbf16> -> vector<16x16xbf16>
    %cst = arith.constant dense<0.000000e+00> : vector<16x16xf32>
    %10 = tpu.matmul %7, %9, %cst {dimension_numbers = #tpu.dot_dimension_numbers<[1], [0], [0], [1], [0, 0, 1, 1], [], []>} : vector<16x16xbf16>, vector<16x16xbf16>, vector<16x16xf32> -> vector<16x16xf32>
    %c0_8 = arith.constant 0 : index
    %c0_9 = arith.constant 0 : index
    %11 = vector.load %arg10[%c0_8, %c0_9] : memref<16x4xf32, #tpu.memory_space<vmem>>, vector<16x1xf32>
    %cst_10 = arith.constant dense<0xFF800000> : vector<16xf32>
    %12 = vector.multi_reduction <maximumf>, %10, %cst_10 [1] : vector<16x16xf32> to vector<16xf32>
    %13 = vector.shape_cast %12 : vector<16xf32> to vector<16x1xf32>
    %14 = arith.maximumf %11, %13 : vector<16x1xf32>
    %15 = arith.subf %11, %14 : vector<16x1xf32>
    %16 = math.exp %15 : vector<16x1xf32>
    %17 = vector.broadcast %14 : vector<16x1xf32> to vector<16x16xf32>
    %18 = arith.subf %10, %17 : vector<16x16xf32>
    %19 = math.exp %18 : vector<16x16xf32>
    %c0_11 = arith.constant 0 : index
    %c0_12 = arith.constant 0 : index
    %20 = vector.load %arg11[%c0_11, %c0_12] : memref<16x4xf32, #tpu.memory_space<vmem>>, vector<16x1xf32>
    %21 = arith.mulf %16, %20 : vector<16x1xf32>
    %cst_13 = arith.constant dense<0.000000e+00> : vector<16xf32>
    %22 = vector.multi_reduction <add>, %19, %cst_13 [1] : vector<16x16xf32> to vector<16xf32>
    %23 = vector.shape_cast %22 : vector<16xf32> to vector<16x1xf32>
    %24 = arith.addf %21, %23 : vector<16x1xf32>
    %c0_14 = arith.constant 0 : index
    %c0_15 = arith.constant 0 : index
    %25 = vector.load %arg11[%c0_14, %c0_15] : memref<16x4xf32, #tpu.memory_space<vmem>>, vector<16x1xf32>
    tpu.vector_store %arg11[%c0_14, %c0_15], %24 {strides = array<i32>} : memref<16x4xf32, #tpu.memory_space<vmem>>, vector<16x1xf32>,
    %c0_16 = arith.constant 0 : index
    %c0_17 = arith.constant 0 : index
    %26 = vector.load %arg12[%c0_16, %c0_17] : memref<16x64xf32, #tpu.memory_space<vmem>>, vector<16x16xf32>
    %27 = vector.broadcast %16 : vector<16x1xf32> to vector<16x16xf32>
    %28 = arith.mulf %27, %26 : vector<16x16xf32>
    %29 = arith.truncf %19 : vector<16x16xf32> to vector<16x16xbf16>
    %30 = vector.extract_strided_slice %6 {offsets = [0, 0], sizes = [16, 16], strides = [1, 1]} : vector<16x64xbf16> to vector<16x16xbf16>
    %cst_18 = arith.constant dense<0.000000e+00> : vector<16x16xf32>
    %31 = tpu.matmul %29, %30, %cst_18 {dimension_numbers = #tpu.dot_dimension_numbers<[1], [0], [0], [1], [0, 0, 1, 1], [], []>} : vector<16x16xbf16>, vector<16x16xbf16>, vector<16x16xf32> -> vector<16x16xf32>
    %32 = arith.addf %28, %31 : vector<16x16xf32>
    %c0_19 = arith.constant 0 : index
    %c0_20 = arith.constant 0 : index
    %33 = vector.load %arg12[%c0_19, %c0_20] : memref<16x64xf32, #tpu.memory_space<vmem>>, vector<16x16xf32>
    tpu.vector_store %arg12[%c0_19, %c0_20], %32 {strides = array<i32>} : memref<16x64xf32, #tpu.memory_space<vmem>>, vector<16x16xf32>,
    %c0_21 = arith.constant 0 : index
    %c0_22 = arith.constant 0 : index
    %34 = vector.load %arg10[%c0_21, %c0_22] : memref<16x4xf32, #tpu.memory_space<vmem>>, vector<16x1xf32>
    tpu.vector_store %arg10[%c0_21, %c0_22], %14 {strides = array<i32>} : memref<16x4xf32, #tpu.memory_space<vmem>>, vector<16x1xf32>,
    %c0_23 = arith.constant 0 : index
    %c16 = arith.constant 16 : index
    %35 = vector.load %arg9[%c0_23, %c16] : memref<16x64xbf16, #tpu.memory_space<vmem>>, vector<16x16xbf16>
    %36 = vector.extract_strided_slice %4 {offsets = [0, 16], sizes = [16, 16], strides = [1, 1]} : vector<16x64xbf16> to vector<16x16xbf16>
    %37 = tpu.transpose %36, [1, 0] : vector<16x16xbf16> -> vector<16x16xbf16>
    %cst_24 = arith.constant dense<0.000000e+00> : vector<16x16xf32>
    %38 = tpu.matmul %35, %37, %cst_24 {dimension_numbers = #tpu.dot_dimension_numbers<[1], [0], [0], [1], [0, 0, 1, 1], [], []>} : vector<16x16xbf16>, vector<16x16xbf16>, vector<16x16xf32> -> vector<16x16xf32>
    %c0_25 = arith.constant 0 : index
    %c1 = arith.constant 1 : index
    %39 = vector.load %arg10[%c0_25, %c1] : memref<16x4xf32, #tpu.memory_space<vmem>>, vector<16x1xf32>
    %cst_26 = arith.constant dense<0xFF800000> : vector<16xf32>
    %40 = vector.multi_reduction <maximumf>, %38, %cst_26 [1] : vector<16x16xf32> to vector<16xf32>
    %41 = vector.shape_cast %40 : vector<16xf32> to vector<16x1xf32>
    %42 = arith.maximumf %39, %41 : vector<16x1xf32>
    %43 = arith.subf %39, %42 : vector<16x1xf32>
    %44 = math.exp %43 : vector<16x1xf32>
    %45 = vector.broadcast %42 : vector<16x1xf32> to vector<16x16xf32>
    %46 = arith.subf %38, %45 : vector<16x16xf32>
    %47 = math.exp %46 : vector<16x16xf32>
    %c0_27 = arith.constant 0 : index
    %c1_28 = arith.constant 1 : index
    %48 = vector.load %arg11[%c0_27, %c1_28] : memref<16x4xf32, #tpu.memory_space<vmem>>, vector<16x1xf32>
    %49 = arith.mulf %44, %48 : vector<16x1xf32>
    %cst_29 = arith.constant dense<0.000000e+00> : vector<16xf32>
    %50 = vector.multi_reduction <add>, %47, %cst_29 [1] : vector<16x16xf32> to vector<16xf32>
    %51 = vector.shape_cast %50 : vector<16xf32> to vector<16x1xf32>
    %52 = arith.addf %49, %51 : vector<16x1xf32>
    %c0_30 = arith.constant 0 : index
    %c1_31 = arith.constant 1 : index
    %53 = vector.load %arg11[%c0_30, %c1_31] : memref<16x4xf32, #tpu.memory_space<vmem>>, vector<16x1xf32>
    tpu.vector_store %arg11[%c0_30, %c1_31], %52 {strides = array<i32>} : memref<16x4xf32, #tpu.memory_space<vmem>>, vector<16x1xf32>,
    %c0_32 = arith.constant 0 : index
    %c16_33 = arith.constant 16 : index
    %54 = vector.load %arg12[%c0_32, %c16_33] : memref<16x64xf32, #tpu.memory_space<vmem>>, vector<16x16xf32>
    %55 = vector.broadcast %44 : vector<16x1xf32> to vector<16x16xf32>
    %56 = arith.mulf %55, %54 : vector<16x16xf32>
    %57 = arith.truncf %47 : vector<16x16xf32> to vector<16x16xbf16>
    %58 = vector.extract_strided_slice %6 {offsets = [0, 16], sizes = [16, 16], strides = [1, 1]} : vector<16x64xbf16> to vector<16x16xbf16>
    %cst_34 = arith.constant dense<0.000000e+00> : vector<16x16xf32>
    %59 = tpu.matmul %57, %58, %cst_34 {dimension_numbers = #tpu.dot_dimension_numbers<[1], [0], [0], [1], [0, 0, 1, 1], [], []>} : vector<16x16xbf16>, vector<16x16xbf16>, vector<16x16xf32> -> vector<16x16xf32>
    %60 = arith.addf %56, %59 : vector<16x16xf32>
    %c0_35 = arith.constant 0 : index
    %c16_36 = arith.constant 16 : index
    %61 = vector.load %arg12[%c0_35, %c16_36] : memref<16x64xf32, #tpu.memory_space<vmem>>, vector<16x16xf32>
    tpu.vector_store %arg12[%c0_35, %c16_36], %60 {strides = array<i32>} : memref<16x64xf32, #tpu.memory_space<vmem>>, vector<16x16xf32>,
    %c0_37 = arith.constant 0 : index
    %c1_38 = arith.constant 1 : index
    %62 = vector.load %arg10[%c0_37, %c1_38] : memref<16x4xf32, #tpu.memory_space<vmem>>, vector<16x1xf32>
    tpu.vector_store %arg10[%c0_37, %c1_38], %42 {strides = array<i32>} : memref<16x4xf32, #tpu.memory_space<vmem>>, vector<16x1xf32>,
    %c0_39 = arith.constant 0 : index
    %c32 = arith.constant 32 : index
    %63 = vector.load %arg9[%c0_39, %c32] : memref<16x64xbf16, #tpu.memory_space<vmem>>, vector<16x16xbf16>
    %64 = vector.extract_strided_slice %4 {offsets = [0, 32], sizes = [16, 16], strides = [1, 1]} : vector<16x64xbf16> to vector<16x16xbf16>
    %65 = tpu.transpose %64, [1, 0] : vector<16x16xbf16> -> vector<16x16xbf16>
    %cst_40 = arith.constant dense<0.000000e+00> : vector<16x16xf32>
    %66 = tpu.matmul %63, %65, %cst_40 {dimension_numbers = #tpu.dot_dimension_numbers<[1], [0], [0], [1], [0, 0, 1, 1], [], []>} : vector<16x16xbf16>, vector<16x16xbf16>, vector<16x16xf32> -> vector<16x16xf32>
    %c0_41 = arith.constant 0 : index
    %c2 = arith.constant 2 : index
    %67 = vector.load %arg10[%c0_41, %c2] : memref<16x4xf32, #tpu.memory_space<vmem>>, vector<16x1xf32>
    %cst_42 = arith.constant dense<0xFF800000> : vector<16xf32>
    %68 = vector.multi_reduction <maximumf>, %66, %cst_42 [1] : vector<16x16xf32> to vector<16xf32>
    %69 = vector.shape_cast %68 : vector<16xf32> to vector<16x1xf32>
    %70 = arith.maximumf %67, %69 : vector<16x1xf32>
    %71 = arith.subf %67, %70 : vector<16x1xf32>
    %72 = math.exp %71 : vector<16x1xf32>
    %73 = vector.broadcast %70 : vector<16x1xf32> to vector<16x16xf32>
    %74 = arith.subf %66, %73 : vector<16x16xf32>
    %75 = math.exp %74 : vector<16x16xf32>
    %c0_43 = arith.constant 0 : index
    %c2_44 = arith.constant 2 : index
    %76 = vector.load %arg11[%c0_43, %c2_44] : memref<16x4xf32, #tpu.memory_space<vmem>>, vector<16x1xf32>
    %77 = arith.mulf %72, %76 : vector<16x1xf32>
    %cst_45 = arith.constant dense<0.000000e+00> : vector<16xf32>
    %78 = vector.multi_reduction <add>, %75, %cst_45 [1] : vector<16x16xf32> to vector<16xf32>
    %79 = vector.shape_cast %78 : vector<16xf32> to vector<16x1xf32>
    %80 = arith.addf %77, %79 : vector<16x1xf32>
    %c0_46 = arith.constant 0 : index
    %c2_47 = arith.constant 2 : index
    %81 = vector.load %arg11[%c0_46, %c2_47] : memref<16x4xf32, #tpu.memory_space<vmem>>, vector<16x1xf32>
    tpu.vector_store %arg11[%c0_46, %c2_47], %80 {strides = array<i32>} : memref<16x4xf32, #tpu.memory_space<vmem>>, vector<16x1xf32>,
    %c0_48 = arith.constant 0 : index
    %c32_49 = arith.constant 32 : index
    %82 = vector.load %arg12[%c0_48, %c32_49] : memref<16x64xf32, #tpu.memory_space<vmem>>, vector<16x16xf32>
    %83 = vector.broadcast %72 : vector<16x1xf32> to vector<16x16xf32>
    %84 = arith.mulf %83, %82 : vector<16x16xf32>
    %85 = arith.truncf %75 : vector<16x16xf32> to vector<16x16xbf16>
    %86 = vector.extract_strided_slice %6 {offsets = [0, 32], sizes = [16, 16], strides = [1, 1]} : vector<16x64xbf16> to vector<16x16xbf16>
    %cst_50 = arith.constant dense<0.000000e+00> : vector<16x16xf32>
    %87 = tpu.matmul %85, %86, %cst_50 {dimension_numbers = #tpu.dot_dimension_numbers<[1], [0], [0], [1], [0, 0, 1, 1], [], []>} : vector<16x16xbf16>, vector<16x16xbf16>, vector<16x16xf32> -> vector<16x16xf32>
    %88 = arith.addf %84, %87 : vector<16x16xf32>
    %c0_51 = arith.constant 0 : index
    %c32_52 = arith.constant 32 : index
    %89 = vector.load %arg12[%c0_51, %c32_52] : memref<16x64xf32, #tpu.memory_space<vmem>>, vector<16x16xf32>
    tpu.vector_store %arg12[%c0_51, %c32_52], %88 {strides = array<i32>} : memref<16x64xf32, #tpu.memory_space<vmem>>, vector<16x16xf32>,
    %c0_53 = arith.constant 0 : index
    %c2_54 = arith.constant 2 : index
    %90 = vector.load %arg10[%c0_53, %c2_54] : memref<16x4xf32, #tpu.memory_space<vmem>>, vector<16x1xf32>
    tpu.vector_store %arg10[%c0_53, %c2_54], %70 {strides = array<i32>} : memref<16x4xf32, #tpu.memory_space<vmem>>, vector<16x1xf32>,
    %c0_55 = arith.constant 0 : index
    %c48 = arith.constant 48 : index
    %91 = vector.load %arg9[%c0_55, %c48] : memref<16x64xbf16, #tpu.memory_space<vmem>>, vector<16x16xbf16>
    %92 = vector.extract_strided_slice %4 {offsets = [0, 48], sizes = [16, 16], strides = [1, 1]} : vector<16x64xbf16> to vector<16x16xbf16>
    %93 = tpu.transpose %92, [1, 0] : vector<16x16xbf16> -> vector<16x16xbf16>
    %cst_56 = arith.constant dense<0.000000e+00> : vector<16x16xf32>
    %94 = tpu.matmul %91, %93, %cst_56 {dimension_numbers = #tpu.dot_dimension_numbers<[1], [0], [0], [1], [0, 0, 1, 1], [], []>} : vector<16x16xbf16>, vector<16x16xbf16>, vector<16x16xf32> -> vector<16x16xf32>
    %c0_57 = arith.constant 0 : index
    %c3 = arith.constant 3 : index
    %95 = vector.load %arg10[%c0_57, %c3] : memref<16x4xf32, #tpu.memory_space<vmem>>, vector<16x1xf32>
    %cst_58 = arith.constant dense<0xFF800000> : vector<16xf32>
    %96 = vector.multi_reduction <maximumf>, %94, %cst_58 [1] : vector<16x16xf32> to vector<16xf32>
    %97 = vector.shape_cast %96 : vector<16xf32> to vector<16x1xf32>
    %98 = arith.maximumf %95, %97 : vector<16x1xf32>
    %99 = arith.subf %95, %98 : vector<16x1xf32>
    %100 = math.exp %99 : vector<16x1xf32>
    %101 = vector.broadcast %98 : vector<16x1xf32> to vector<16x16xf32>
    %102 = arith.subf %94, %101 : vector<16x16xf32>
    %103 = math.exp %102 : vector<16x16xf32>
    %c0_59 = arith.constant 0 : index
    %c3_60 = arith.constant 3 : index
    %104 = vector.load %arg11[%c0_59, %c3_60] : memref<16x4xf32, #tpu.memory_space<vmem>>, vector<16x1xf32>
    %105 = arith.mulf %100, %104 : vector<16x1xf32>
    %cst_61 = arith.constant dense<0.000000e+00> : vector<16xf32>
    %106 = vector.multi_reduction <add>, %103, %cst_61 [1] : vector<16x16xf32> to vector<16xf32>
    %107 = vector.shape_cast %106 : vector<16xf32> to vector<16x1xf32>
    %108 = arith.addf %105, %107 : vector<16x1xf32>
    %c0_62 = arith.constant 0 : index
    %c3_63 = arith.constant 3 : index
    %109 = vector.load %arg11[%c0_62, %c3_63] : memref<16x4xf32, #tpu.memory_space<vmem>>, vector<16x1xf32>
    tpu.vector_store %arg11[%c0_62, %c3_63], %108 {strides = array<i32>} : memref<16x4xf32, #tpu.memory_space<vmem>>, vector<16x1xf32>,
    %c0_64 = arith.constant 0 : index
    %c48_65 = arith.constant 48 : index
    %110 = vector.load %arg12[%c0_64, %c48_65] : memref<16x64xf32, #tpu.memory_space<vmem>>, vector<16x16xf32>
    %111 = vector.broadcast %100 : vector<16x1xf32> to vector<16x16xf32>
    %112 = arith.mulf %111, %110 : vector<16x16xf32>
    %113 = arith.truncf %103 : vector<16x16xf32> to vector<16x16xbf16>
    %114 = vector.extract_strided_slice %6 {offsets = [0, 48], sizes = [16, 16], strides = [1, 1]} : vector<16x64xbf16> to vector<16x16xbf16>
    %cst_66 = arith.constant dense<0.000000e+00> : vector<16x16xf32>
    %115 = tpu.matmul %113, %114, %cst_66 {dimension_numbers = #tpu.dot_dimension_numbers<[1], [0], [0], [1], [0, 0, 1, 1], [], []>} : vector<16x16xbf16>, vector<16x16xbf16>, vector<16x16xf32> -> vector<16x16xf32>
    %116 = arith.addf %112, %115 : vector<16x16xf32>
    %c0_67 = arith.constant 0 : index
    %c48_68 = arith.constant 48 : index
    %117 = vector.load %arg12[%c0_67, %c48_68] : memref<16x64xf32, #tpu.memory_space<vmem>>, vector<16x16xf32>
    tpu.vector_store %arg12[%c0_67, %c48_68], %116 {strides = array<i32>} : memref<16x64xf32, #tpu.memory_space<vmem>>, vector<16x16xf32>,
    %c0_69 = arith.constant 0 : index
    %c3_70 = arith.constant 3 : index
    %118 = vector.load %arg10[%c0_69, %c3_70] : memref<16x4xf32, #tpu.memory_space<vmem>>, vector<16x1xf32>
    tpu.vector_store %arg10[%c0_69, %c3_70], %98 {strides = array<i32>} : memref<16x4xf32, #tpu.memory_space<vmem>>, vector<16x1xf32>,
    %c0_i32_71 = arith.constant 0 : i32
    %119 = arith.cmpi eq, %arg2, %c0_i32_71 : i32
    %120 = arith.extui %119 : i1 to i32
    %c0_i32_72 = arith.constant 0 : i32
    %121 = arith.cmpi ne, %120, %c0_i32_72 : i32
    scf.if %121 {
      %c0_73 = arith.constant 0 : index
      %c0_74 = arith.constant 0 : index
      %122 = vector.load %arg11[%c0_73, %c0_74] : memref<16x4xf32, #tpu.memory_space<vmem>>, vector<16x4xf32>
      %123 = tpu.reciprocal %122 {approx = true} : vector<16x4xf32> -> vector<16x4xf32>
      %c0_75 = arith.constant 0 : index
      %c0_76 = arith.constant 0 : index
      %124 = vector.load %arg12[%c0_75, %c0_76] : memref<16x64xf32, #tpu.memory_space<vmem>>, vector<16x16xf32>
      %125 = vector.extract_strided_slice %123 {offsets = [0, 0], sizes = [16, 1], strides = [1, 1]} : vector<16x4xf32> to vector<16x1xf32>
      %126 = vector.broadcast %125 : vector<16x1xf32> to vector<16x16xf32>
      %127 = arith.mulf %124, %126 : vector<16x16xf32>
      %128 = arith.truncf %127 : vector<16x16xf32> to vector<16x16xbf16>
      %c0_77 = arith.constant 0 : index
      %c0_78 = arith.constant 0 : index
      %c0_79 = arith.constant 0 : index
      %129 = vector.load %arg8[%c0_77, %c0_78, %c0_79] : memref<1x16x64xbf16, #tpu.memory_space<vmem>>, vector<1x16x16xbf16>
      %130 = vector.shape_cast %129 : vector<1x16x16xbf16> to vector<16x16xbf16>
      %131 = vector.shape_cast %128 : vector<16x16xbf16> to vector<1x16x16xbf16>
      tpu.vector_store %arg8[%c0_77, %c0_78, %c0_79], %131 {strides = array<i32>} : memref<1x16x64xbf16, #tpu.memory_space<vmem>>, vector<1x16x16xbf16>,
      %c0_80 = arith.constant 0 : index
      %c16_81 = arith.constant 16 : index
      %132 = vector.load %arg12[%c0_80, %c16_81] : memref<16x64xf32, #tpu.memory_space<vmem>>, vector<16x16xf32>
      %133 = vector.extract_strided_slice %123 {offsets = [0, 1], sizes = [16, 1], strides = [1, 1]} : vector<16x4xf32> to vector<16x1xf32>
      %134 = vector.broadcast %133 : vector<16x1xf32> to vector<16x16xf32>
      %135 = arith.mulf %132, %134 : vector<16x16xf32>
      %136 = arith.truncf %135 : vector<16x16xf32> to vector<16x16xbf16>
      %c0_82 = arith.constant 0 : index
      %c0_83 = arith.constant 0 : index
      %c16_84 = arith.constant 16 : index
      %137 = vector.load %arg8[%c0_82, %c0_83, %c16_84] : memref<1x16x64xbf16, #tpu.memory_space<vmem>>, vector<1x16x16xbf16>
      %138 = vector.shape_cast %137 : vector<1x16x16xbf16> to vector<16x16xbf16>
      %139 = vector.shape_cast %136 : vector<16x16xbf16> to vector<1x16x16xbf16>
      tpu.vector_store %arg8[%c0_82, %c0_83, %c16_84], %139 {strides = array<i32>} : memref<1x16x64xbf16, #tpu.memory_space<vmem>>, vector<1x16x16xbf16>,
      %c0_85 = arith.constant 0 : index
      %c32_86 = arith.constant 32 : index
      %140 = vector.load %arg12[%c0_85, %c32_86] : memref<16x64xf32, #tpu.memory_space<vmem>>, vector<16x16xf32>
      %141 = vector.extract_strided_slice %123 {offsets = [0, 2], sizes = [16, 1], strides = [1, 1]} : vector<16x4xf32> to vector<16x1xf32>
      %142 = vector.broadcast %141 : vector<16x1xf32> to vector<16x16xf32>
      %143 = arith.mulf %140, %142 : vector<16x16xf32>
      %144 = arith.truncf %143 : vector<16x16xf32> to vector<16x16xbf16>
      %c0_87 = arith.constant 0 : index
      %c0_88 = arith.constant 0 : index
      %c32_89 = arith.constant 32 : index
      %145 = vector.load %arg8[%c0_87, %c0_88, %c32_89] : memref<1x16x64xbf16, #tpu.memory_space<vmem>>, vector<1x16x16xbf16>
      %146 = vector.shape_cast %145 : vector<1x16x16xbf16> to vector<16x16xbf16>
      %147 = vector.shape_cast %144 : vector<16x16xbf16> to vector<1x16x16xbf16>
      tpu.vector_store %arg8[%c0_87, %c0_88, %c32_89], %147 {strides = array<i32>} : memref<1x16x64xbf16, #tpu.memory_space<vmem>>, vector<1x16x16xbf16>,
      %c0_90 = arith.constant 0 : index
      %c48_91 = arith.constant 48 : index
      %148 = vector.load %arg12[%c0_90, %c48_91] : memref<16x64xf32, #tpu.memory_space<vmem>>, vector<16x16xf32>
      %149 = vector.extract_strided_slice %123 {offsets = [0, 3], sizes = [16, 1], strides = [1, 1]} : vector<16x4xf32> to vector<16x1xf32>
      %150 = vector.broadcast %149 : vector<16x1xf32> to vector<16x16xf32>
      %151 = arith.mulf %148, %150 : vector<16x16xf32>
      %152 = arith.truncf %151 : vector<16x16xf32> to vector<16x16xbf16>
      %c0_92 = arith.constant 0 : index
      %c0_93 = arith.constant 0 : index
      %c48_94 = arith.constant 48 : index
      %153 = vector.load %arg8[%c0_92, %c0_93, %c48_94] : memref<1x16x64xbf16, #tpu.memory_space<vmem>>, vector<1x16x16xbf16>
      %154 = vector.shape_cast %153 : vector<1x16x16xbf16> to vector<16x16xbf16>
      %155 = vector.shape_cast %152 : vector<16x16xbf16> to vector<1x16x16xbf16>
      tpu.vector_store %arg8[%c0_92, %c0_93, %c48_94], %155 {strides = array<i32>} : memref<1x16x64xbf16, #tpu.memory_space<vmem>>, vector<1x16x16xbf16>,
    } else {
    }
    return
  }
  func.func @transform_0(%arg0: i32, %arg1: i32, %arg2: i32) -> (i32, i32, i32) {
    %c0_i32 = arith.constant 0 : i32
    %c0_i32_0 = arith.constant 0 : i32
    return %arg0, %arg1, %c0_i32 : i32, i32, i32
  }
  func.func @transform_1(%arg0: i32, %arg1: i32, %arg2: i32) -> (i32, i32, i32) {
    %c0_i32 = arith.constant 0 : i32
    %c0_i32_0 = arith.constant 0 : i32
    return %arg0, %arg2, %c0_i32 : i32, i32, i32
  }
  func.func @transform_2(%arg0: i32, %arg1: i32, %arg2: i32) -> (i32, i32, i32) {
    %c0_i32 = arith.constant 0 : i32
    %c0_i32_0 = arith.constant 0 : i32
    return %arg0, %arg2, %c0_i32 : i32, i32, i32
  }
  func.func @transform_3(%arg0: i32, %arg1: i32, %arg2: i32) -> (i32, i32, i32) {
    %c0_i32 = arith.constant 0 : i32
    %c0_i32_0 = arith.constant 0 : i32
    return %arg0, %arg1, %c0_i32 : i32, i32, i32
  }
  func.func @transform_4(%arg0: i32, %arg1: i32, %arg2: i32) -> (i32, i32, i32) {
    %c0_i32 = arith.constant 0 : i32
    %c0_i32_0 = arith.constant 0 : i32
    return %arg0, %arg1, %c0_i32 : i32, i32, i32
  }
  func.func @transform_5(%arg0: i32, %arg1: i32, %arg2: i32) -> (i32, i32, i32) {
    %c0_i32 = arith.constant 0 : i32
    %c0_i32_0 = arith.constant 0 : i32
    return %arg0, %arg1, %c0_i32 : i32, i32, i32
  }
}

</mosaic_0001>

<llo_original>
// kernel: run.14
$region0: #{run.14}
  #allocation0 [shape = 'u32[]', space=smem, size = 0x4, offset = 0x4, fixed_abs, tag = 'smem constant byte address 0x4 - core index']
  #allocation1 [shape = 'u32[144,128]{1,0:T(1,128)}', space=vmem, size = 0x12000, scoped, tag = 'internal scratch']
  %s0 = inlined_call_operand.vmem [shape: bf16[32,64], index: 0, kind: input, shape index: {}]
  %s1 = inlined_call_operand.vmem [shape: bf16[64,64], index: 1, kind: input, shape index: {}]
  %s2 = inlined_call_operand.vmem [shape: f32[32,64], index: 2, kind: input, shape index: {}]
  %s3 = inlined_call_operand.vmem [shape: f32[32,64], index: 3, kind: output, shape index: {}]
  %s4 = sld [smem:[#allocation0]]
  $region22: #{run.14} parent=0
    _
  %s6 = ssub.s32 1, %s4
  %s7 = scalar_select 0, %s6, %s4
  // Predicated region
  $region2: #{run.14} parent=0 // pred_check
    _
  $region3: #{run.14} parent=0 // pred_check_branch
    %9 = sbr.rel (0) target = $region5
  $region4: #{run.14} parent=0 // pred_region
    _
  $region5: #{run.14} parent=0 // pred_fallthru
    _
  // Predicated region
  $region6: #{run.14} parent=0 // pred_check
    _
  $region7: #{run.14} parent=0 // pred_check_branch
    %11 = sbr.rel (0) target = $region9
  $region8: #{run.14} parent=0 // pred_region
    _
  $region9: #{run.14} parent=0 // pred_fallthru
    _
  // Predicated region
  $region10: #{run.14} parent=0 // pred_check
    _
  $region11: #{run.14} parent=0 // pred_check_branch
    %13 = sbr.rel (0) target = $region13
  $region12: #{run.14} parent=0 // pred_region
    _
  $region13: #{run.14} parent=0 // pred_fallthru
    _
  %v15 = vld [vmem:[%s0] sm:$0xf]
  %v16 = vld [vmem:[%s0 + $0x4] sm:$0xf]
  %v17 = vld [vmem:[%s0 + $0x8] sm:$0xf]
  %v18 = vld [vmem:[%s0 + $0xc] sm:$0xf]
  %v19 = vld [vmem:[%s1] sm:$0xf]
  %v20 = vld [vmem:[%s1 + $0x4] sm:$0xf]
  %v21 = vld [vmem:[%s1 + $0x8] sm:$0xf]
  %v22 = vld [vmem:[%s1 + $0xc] sm:$0xf]
  %v23 = vld [vmem:[%s1 + $0x10] sm:$0xf]
  %v24 = vld [vmem:[%s1 + $0x14] sm:$0xf]
  %v25 = vld [vmem:[%s1 + $0x18] sm:$0xf]
  %v26 = vld [vmem:[%s1 + $0x1c] sm:$0xf]
  %v27 = vld [vmem:[%s2] sm:$0xff]
  %v28 = vld [vmem:[%s2 + $0x8] sm:$0xff]
  %v29 = vld [vmem:[%s2 + $0x10] sm:$0xff]
  %v30 = vld [vmem:[%s2 + $0x18] sm:$0xff]
  %v35 = vunpack.c.l.b16 %v15
  %v36 = vunpack.c.l.b16 %v16
  %v37 = vunpack.c.l.b16 %v17
  %v38 = vunpack.c.l.b16 %v18
  %v39 = vpack.c.b16 %v36, %v35
  %v40 = vpack.c.b16 %v38, %v37
  %v49 = vunpack.c.l.b16 %v19
  %v50 = vunpack.c.l.b16 %v20
  %v51 = vunpack.c.l.b16 %v21
  %v52 = vunpack.c.l.b16 %v22
  %v53 = vunpack.c.l.b16 %v23
  %v54 = vunpack.c.l.b16 %v24
  %v55 = vunpack.c.l.b16 %v25
  %v56 = vunpack.c.l.b16 %v26
  %v57 = vpack.c.b16 %v50, %v49
  %v58 = vpack.c.b16 %v52, %v51
  %v59 = vpack.c.b16 %v54, %v53
  %v60 = vpack.c.b16 %v56, %v55
  %vm65 = vcmask 523264
  %v67 = vsel %vm65, %v39, 0
  %v70 = vsel %vm65, %v40, 0
  %72 = vmatprep.subr.bf16.mxu0 0
  %73 = vmatpush1.bf16.msra.mxu0 %v57
  %74 = vmatprep.subr.bf16.mxu0 0
  %75 = vmatpush1.bf16.msra.mxu0 %v58
  %76 = vmatprep.subr.bf16.mxu0 0
  %77 = vmatpush1.bf16.msra.mxu0 %v59
  %78 = vmatprep.subr.bf16.mxu0 0
  %79 = vmatpush1.bf16.msra.mxu0 %v60
  %80 = vmatprep.subr.bf16.mxu0 0
  %81 = vmatpush1.bf16.msra.mxu0 0
  %82 = vmatprep.subr.bf16.mxu0 0
  %83 = vmatpush1.bf16.msra.mxu0 0
  %84 = vmatprep.subr.bf16.mxu0 0
  %85 = vmatpush1.bf16.msra.mxu0 0
  %86 = vmatprep.subr.bf16.mxu0 0
  %87 = vmatpush1.bf16.msra.mxu0 0
  %88 = vmatprep.subr.bf16.mxu0 0
  %89 = vmatpush1.bf16.msra.mxu0 0
  %90 = vmatprep.subr.bf16.mxu0 0
  %91 = vmatpush1.bf16.msra.mxu0 0
  %92 = vmatprep.subr.bf16.mxu0 0
  %93 = vmatpush1.bf16.msra.mxu0 0
  %94 = vmatprep.subr.bf16.mxu0 0
  %95 = vmatpush1.bf16.msra.mxu0 0
  %96 = vmatprep.subr.bf16.mxu0 0
  %97 = vmatpush1.bf16.msra.mxu0 0
  %98 = vmatprep.subr.bf16.mxu0 0
  %99 = vmatpush1.bf16.msra.mxu0 0
  %100 = vmatprep.subr.bf16.mxu0 0
  %101 = vmatpush1.bf16.msra.mxu0 0
  %102 = vmatprep.subr.bf16.mxu0 0
  %103 = vmatpush1.bf16.msra.mxu0 0
  %104 = vmatprep.mubr.bf16.mxu0 0
  %105 = vmatmul.mubr.bf16.gmra.mrb[0].mxu0 %v67
  %v106 = vpop.f32.mrb[0].mxu0
  %v107 = vadd.f32 %v27, %v106
  %v108 = vpop.f32.mrb[0].mxu0
  %v109 = vpop.f32.mrb[0].mxu0
  %v110 = vadd.f32 %v28, %v109
  %v111 = vpop.f32.mrb[0].mxu0
  %112 = vmatprep.mubr.bf16.mxu0 0
  %113 = vmatmul.mubr.bf16.gmra.mrb[0].mxu0 %v70
  %v114 = vpop.f32.mrb[0].mxu0
  %v115 = vadd.f32 %v29, %v114
  %v116 = vpop.f32.mrb[0].mxu0
  %v117 = vpop.f32.mrb[0].mxu0
  %v118 = vadd.f32 %v30, %v117
  %v119 = vpop.f32.mrb[0].mxu0
  %120 = vdwg.mxu0
  %121 = vst.msk [vmem:[%s3] sm:$0xff] %vm65, %v107
  %122 = vst.msk [vmem:[%s3 + $0x8] sm:$0xff] %vm65, %v110
  %123 = vst.msk [vmem:[%s3 + $0x10] sm:$0xff] %vm65, %v115
  %124 = vst.msk [vmem:[%s3 + $0x18] sm:$0xff] %vm65, %v118
  // Predicated region
  $region14: #{run.14} parent=0 // pred_check
    _
  $region15: #{run.14} parent=0 // pred_check_branch
    %126 = sbr.rel (0) target = $region17
  $region16: #{run.14} parent=0 // pred_region
    _
  $region17: #{run.14} parent=0 // pred_fallthru
    _
  // Predicated region
  $region18: #{run.14} parent=0 // pred_check
    _
  $region19: #{run.14} parent=0 // pred_check_branch
    %128 = sbr.rel (0) target = $region21
  $region20: #{run.14} parent=0 // pred_region
    _
  $region21: #{run.14} parent=0 // pred_fallthru
    _

// kernel: run.11
$region0: #{run.11}
  #allocation0 [shape = 'u32[]', space=smem, size = 0x4, offset = 0x4, fixed_abs, tag = 'smem constant byte address 0x4 - core index']
  #allocation1 [shape = 'u32[144,128]{1,0:T(1,128)}', space=vmem, size = 0x12000, scoped, tag = 'internal scratch']
  %s0 = inlined_call_operand.vmem [shape: f32[32,64], index: 0, kind: input, shape index: {}]
  %s1 = inlined_call_operand.vmem [shape: f32[1,64], index: 1, kind: input, shape index: {}]
  %s2 = inlined_call_operand.vmem [shape: bf16[64,64], index: 2, kind: input, shape index: {}]
  %s3 = inlined_call_operand.vmem [shape: bf16[32,64], index: 3, kind: output, shape index: {}]
  %s4 = sld [smem:[#allocation0]]
  $region22: #{run.11} parent=0
    _
  %s6 = ssub.s32 1, %s4
  %s7 = scalar_select 0, %s6, %s4
  // Predicated region
  $region2: #{run.11} parent=0 // pred_check
    _
  $region3: #{run.11} parent=0 // pred_check_branch
    %9 = sbr.rel (0) target = $region5
  $region4: #{run.11} parent=0 // pred_region
    _
  $region5: #{run.11} parent=0 // pred_fallthru
    _
  // Predicated region
  $region6: #{run.11} parent=0 // pred_check
    _
  $region7: #{run.11} parent=0 // pred_check_branch
    %11 = sbr.rel (0) target = $region9
  $region8: #{run.11} parent=0 // pred_region
    _
  $region9: #{run.11} parent=0 // pred_fallthru
    _
  // Predicated region
  $region10: #{run.11} parent=0 // pred_check
    _
  $region11: #{run.11} parent=0 // pred_check_branch
    %13 = sbr.rel (0) target = $region13
  $region12: #{run.11} parent=0 // pred_region
    _
  $region13: #{run.11} parent=0 // pred_fallthru
    _
  %v15 = vld [vmem:[%s0] sm:$0xff]
  %v16 = vld [vmem:[%s0 + $0x8] sm:$0xff]
  %v17 = vld [vmem:[%s0 + $0x10] sm:$0xff]
  %v18 = vld [vmem:[%s0 + $0x18] sm:$0xff]
  %v19 = vmul.f32 %v15, %v15
  %v20 = vmul.f32 %v16, %v16
  %v21 = vmul.f32 %v17, %v17
  %v22 = vmul.f32 %v18, %v18
  %vm23 = vcmask 523264
  %v24 = vsel %vm23, %v19, 0.0
  %25 = vadd.xlane.f32.xlu0 %v24
  %v26 = vpop.xlane.xlu0 %25
  %v27 = vsel %vm23, %v20, 0.0
  %28 = vadd.xlane.f32.xlu0 %v27
  %v29 = vpop.xlane.xlu0 %28
  %v30 = vsel %vm23, %v21, 0.0
  %31 = vadd.xlane.f32.xlu0 %v30
  %v32 = vpop.xlane.xlu0 %31
  %v33 = vsel %vm23, %v22, 0.0
  %34 = vadd.xlane.f32.xlu0 %v33
  %v35 = vpop.xlane.xlu0 %34
  %v36 = vrcp.pop 64.0
  %v37 = vmul.f32 %v26, %v36
  %v38 = vmul.f32 %v29, %v36
  %v39 = vmul.f32 %v32, %v36
  %v40 = vmul.f32 %v35, %v36
  %v41 = vadd.f32 %v37, 1e-05
  %v42 = vadd.f32 %v38, 1e-05
  %v43 = vadd.f32 %v39, 1e-05
  %v44 = vadd.f32 %v40, 1e-05
  %v45 = vrsqrt.pop %v41
  %v46 = vrsqrt.pop %v42
  %v47 = vrsqrt.pop %v43
  %v48 = vrsqrt.pop %v44
  %v49 = vmul.f32 %v15, %v45
  %v50 = vmul.f32 %v16, %v46
  %v51 = vmul.f32 %v17, %v47
  %v52 = vmul.f32 %v18, %v48
  %v53 = vld [vmem:[%s1] sm:$0x1]
  %v55 = vlaneseq
  %v56 = vshrl.u32 %v55, 7
  %v57 = vsub.s32 0, %v56
  %v58 = vrot.slane %v53, %v57
  %v60 = vmul.f32 %v49, %v58
  %v61 = vmul.f32 %v50, %v58
  %v62 = vmul.f32 %v51, %v58
  %v63 = vmul.f32 %v52, %v58
  %v64 = vpack.c.bf16 %v61, %v60
  %v65 = vpack.c.bf16 %v63, %v62
  %v66 = vld [vmem:[%s2] sm:$0xf]
  %v67 = vld [vmem:[%s2 + $0x4] sm:$0xf]
  %v68 = vld [vmem:[%s2 + $0x8] sm:$0xf]
  %v69 = vld [vmem:[%s2 + $0xc] sm:$0xf]
  %v70 = vld [vmem:[%s2 + $0x10] sm:$0xf]
  %v71 = vld [vmem:[%s2 + $0x14] sm:$0xf]
  %v72 = vld [vmem:[%s2 + $0x18] sm:$0xf]
  %v73 = vld [vmem:[%s2 + $0x1c] sm:$0xf]
  %v82 = vunpack.c.l.b16 %v66
  %v83 = vunpack.c.l.b16 %v67
  %v84 = vunpack.c.l.b16 %v68
  %v85 = vunpack.c.l.b16 %v69
  %v86 = vunpack.c.l.b16 %v70
  %v87 = vunpack.c.l.b16 %v71
  %v88 = vunpack.c.l.b16 %v72
  %v89 = vunpack.c.l.b16 %v73
  %v90 = vpack.c.b16 %v83, %v82
  %v91 = vpack.c.b16 %v85, %v84
  %v92 = vpack.c.b16 %v87, %v86
  %v93 = vpack.c.b16 %v89, %v88
  %v99 = vsel %vm23, %v64, 0
  %v102 = vsel %vm23, %v65, 0
  %104 = vmatprep.subr.bf16.mxu0 0
  %105 = vmatpush1.bf16.msra.mxu0 %v90
  %106 = vmatprep.subr.bf16.mxu0 0
  %107 = vmatpush1.bf16.msra.mxu0 %v91
  %108 = vmatprep.subr.bf16.mxu0 0
  %109 = vmatpush1.bf16.msra.mxu0 %v92
  %110 = vmatprep.subr.bf16.mxu0 0
  %111 = vmatpush1.bf16.msra.mxu0 %v93
  %112 = vmatprep.subr.bf16.mxu0 0
  %113 = vmatpush1.bf16.msra.mxu0 0
  %114 = vmatprep.subr.bf16.mxu0 0
  %115 = vmatpush1.bf16.msra.mxu0 0
  %116 = vmatprep.subr.bf16.mxu0 0
  %117 = vmatpush1.bf16.msra.mxu0 0
  %118 = vmatprep.subr.bf16.mxu0 0
  %119 = vmatpush1.bf16.msra.mxu0 0
  %120 = vmatprep.subr.bf16.mxu0 0
  %121 = vmatpush1.bf16.msra.mxu0 0
  %122 = vmatprep.subr.bf16.mxu0 0
  %123 = vmatpush1.bf16.msra.mxu0 0
  %124 = vmatprep.subr.bf16.mxu0 0
  %125 = vmatpush1.bf16.msra.mxu0 0
  %126 = vmatprep.subr.bf16.mxu0 0
  %127 = vmatpush1.bf16.msra.mxu0 0
  %128 = vmatprep.subr.bf16.mxu0 0
  %129 = vmatpush1.bf16.msra.mxu0 0
  %130 = vmatprep.subr.bf16.mxu0 0
  %131 = vmatpush1.bf16.msra.mxu0 0
  %132 = vmatprep.subr.bf16.mxu0 0
  %133 = vmatpush1.bf16.msra.mxu0 0
  %134 = vmatprep.subr.bf16.mxu0 0
  %135 = vmatpush1.bf16.msra.mxu0 0
  %136 = vmatprep.mubr.bf16.mxu0 0
  %137 = vmatmul.mubr.bf16.gmra.mrb[0].mxu0 %v99
  %v138 = vpop.f32.mrb[0].mxu0
  %v139 = vadd.f32 0.0, %v138
  %v140 = vpop.f32.mrb[0].mxu0
  %v141 = vpop.f32.mrb[0].mxu0
  %v142 = vadd.f32 0.0, %v141
  %v143 = vpop.f32.mrb[0].mxu0
  %144 = vmatprep.mubr.bf16.mxu0 0
  %145 = vmatmul.mubr.bf16.gmra.mrb[0].mxu0 %v102
  %v146 = vpop.f32.mrb[0].mxu0
  %v147 = vadd.f32 0.0, %v146
  %v148 = vpop.f32.mrb[0].mxu0
  %v149 = vpop.f32.mrb[0].mxu0
  %v150 = vadd.f32 0.0, %v149
  %v151 = vpop.f32.mrb[0].mxu0
  %152 = vdwg.mxu0
  %v153 = vpack.c.bf16 %v142, %v139
  %v154 = vpack.c.bf16 %v150, %v147
  %v157 = vunpack.c.l.b16 %v153
  %v158 = vunpack.c.h.b16 %v153
  %v159 = vunpack.c.l.b16 %v154
  %v160 = vunpack.c.h.b16 %v154
  %v161 = vpack.c.b16 %v157, %v157
  %v162 = vpack.c.b16 %v158, %v158
  %v163 = vpack.c.b16 %v159, %v159
  %v164 = vpack.c.b16 %v160, %v160
  %vm169 = vcmask 519168
  %170 = vst.msk [vmem:[%s3] sm:$0xf] %vm169, %v161
  %171 = vst.msk [vmem:[%s3 + $0x4] sm:$0xf] %vm169, %v162
  %172 = vst.msk [vmem:[%s3 + $0x8] sm:$0xf] %vm169, %v163
  %173 = vst.msk [vmem:[%s3 + $0xc] sm:$0xf] %vm169, %v164
  // Predicated region
  $region14: #{run.11} parent=0 // pred_check
    _
  $region15: #{run.11} parent=0 // pred_check_branch
    %175 = sbr.rel (0) target = $region17
  $region16: #{run.11} parent=0 // pred_region
    _
  $region17: #{run.11} parent=0 // pred_fallthru
    _
  // Predicated region
  $region18: #{run.11} parent=0 // pred_check
    _
  $region19: #{run.11} parent=0 // pred_check_branch
    %177 = sbr.rel (0) target = $region21
  $region20: #{run.11} parent=0 // pred_region
    _
  $region21: #{run.11} parent=0 // pred_fallthru
    _

// kernel: run.12
$region0: #{run.12}
  #allocation0 [shape = 'u32[]', space=smem, size = 0x4, offset = 0x4, fixed_abs, tag = 'smem constant byte address 0x4 - core index']
  #allocation1 [shape = 'u32[144,128]{1,0:T(1,128)}', space=vmem, size = 0x12000, scoped, tag = 'internal scratch']
  %s0 = inlined_call_operand.vmem [shape: f32[32,64], index: 0, kind: input, shape index: {}]
  %s1 = inlined_call_operand.vmem [shape: f32[1,64], index: 1, kind: input, shape index: {}]
  %s2 = inlined_call_operand.vmem [shape: bf16[64,192], index: 2, kind: input, shape index: {}]
  %s3 = inlined_call_operand.vmem [shape: bf16[32,192], index: 3, kind: output, shape index: {}]
  %s4 = sld [smem:[#allocation0]]
  $region22: #{run.12} parent=0
    _
  %s6 = ssub.s32 1, %s4
  %s7 = scalar_select 0, %s6, %s4
  // Predicated region
  $region2: #{run.12} parent=0 // pred_check
    _
  $region3: #{run.12} parent=0 // pred_check_branch
    %9 = sbr.rel (0) target = $region5
  $region4: #{run.12} parent=0 // pred_region
    _
  $region5: #{run.12} parent=0 // pred_fallthru
    _
  // Predicated region
  $region6: #{run.12} parent=0 // pred_check
    _
  $region7: #{run.12} parent=0 // pred_check_branch
    %11 = sbr.rel (0) target = $region9
  $region8: #{run.12} parent=0 // pred_region
    _
  $region9: #{run.12} parent=0 // pred_fallthru
    _
  // Predicated region
  $region10: #{run.12} parent=0 // pred_check
    _
  $region11: #{run.12} parent=0 // pred_check_branch
    %13 = sbr.rel (0) target = $region13
  $region12: #{run.12} parent=0 // pred_region
    _
  $region13: #{run.12} parent=0 // pred_fallthru
    _
  %v15 = vld [vmem:[%s0] sm:$0xff]
  %v16 = vld [vmem:[%s0 + $0x8] sm:$0xff]
  %v17 = vld [vmem:[%s0 + $0x10] sm:$0xff]
  %v18 = vld [vmem:[%s0 + $0x18] sm:$0xff]
  %v19 = vmul.f32 %v15, %v15
  %v20 = vmul.f32 %v16, %v16
  %v21 = vmul.f32 %v17, %v17
  %v22 = vmul.f32 %v18, %v18
  %vm23 = vcmask 523264
  %v24 = vsel %vm23, %v19, 0.0
  %25 = vadd.xlane.f32.xlu0 %v24
  %v26 = vpop.xlane.xlu0 %25
  %v27 = vsel %vm23, %v20, 0.0
  %28 = vadd.xlane.f32.xlu0 %v27
  %v29 = vpop.xlane.xlu0 %28
  %v30 = vsel %vm23, %v21, 0.0
  %31 = vadd.xlane.f32.xlu0 %v30
  %v32 = vpop.xlane.xlu0 %31
  %v33 = vsel %vm23, %v22, 0.0
  %34 = vadd.xlane.f32.xlu0 %v33
  %v35 = vpop.xlane.xlu0 %34
  %v36 = vrcp.pop 64.0
  %v37 = vmul.f32 %v26, %v36
  %v38 = vmul.f32 %v29, %v36
  %v39 = vmul.f32 %v32, %v36
  %v40 = vmul.f32 %v35, %v36
  %v41 = vadd.f32 %v37, 1e-05
  %v42 = vadd.f32 %v38, 1e-05
  %v43 = vadd.f32 %v39, 1e-05
  %v44 = vadd.f32 %v40, 1e-05
  %v45 = vrsqrt.pop %v41
  %v46 = vrsqrt.pop %v42
  %v47 = vrsqrt.pop %v43
  %v48 = vrsqrt.pop %v44
  %v49 = vmul.f32 %v15, %v45
  %v50 = vmul.f32 %v16, %v46
  %v51 = vmul.f32 %v17, %v47
  %v52 = vmul.f32 %v18, %v48
  %v53 = vld [vmem:[%s1] sm:$0x1]
  %v55 = vlaneseq
  %v56 = vshrl.u32 %v55, 7
  %v57 = vsub.s32 0, %v56
  %v58 = vrot.slane %v53, %v57
  %v60 = vmul.f32 %v49, %v58
  %v61 = vmul.f32 %v50, %v58
  %v62 = vmul.f32 %v51, %v58
  %v63 = vmul.f32 %v52, %v58
  %v64 = vpack.c.bf16 %v61, %v60
  %v65 = vpack.c.bf16 %v63, %v62
  %v66 = vld [vmem:[%s2] sm:$0xff]
  %v67 = vld [vmem:[%s2 + $0x8] sm:$0xff]
  %v68 = vld [vmem:[%s2 + $0x10] sm:$0xff]
  %v69 = vld [vmem:[%s2 + $0x18] sm:$0xff]
  %v70 = vld [vmem:[%s2 + $0x20] sm:$0xff]
  %v71 = vld [vmem:[%s2 + $0x28] sm:$0xff]
  %v72 = vld [vmem:[%s2 + $0x30] sm:$0xff]
  %v73 = vld [vmem:[%s2 + $0x38] sm:$0xff]
  %v82 = vunpack.c.l.b16 %v66
  %v83 = vunpack.c.h.b16 %v66
  %v84 = vunpack.c.l.b16 %v67
  %v85 = vunpack.c.h.b16 %v67
  %v86 = vunpack.c.l.b16 %v68
  %v87 = vunpack.c.h.b16 %v68
  %v88 = vunpack.c.l.b16 %v69
  %v89 = vunpack.c.h.b16 %v69
  %v90 = vunpack.c.l.b16 %v70
  %v91 = vunpack.c.h.b16 %v70
  %v92 = vunpack.c.l.b16 %v71
  %v93 = vunpack.c.h.b16 %v71
  %v94 = vunpack.c.l.b16 %v72
  %v95 = vunpack.c.h.b16 %v72
  %v96 = vunpack.c.l.b16 %v73
  %v97 = vunpack.c.h.b16 %v73
  %v98 = vpack.c.b16 %v84, %v82
  %v99 = vpack.c.b16 %v85, %v83
  %v100 = vpack.c.b16 %v88, %v86
  %v101 = vpack.c.b16 %v89, %v87
  %v102 = vpack.c.b16 %v92, %v90
  %v103 = vpack.c.b16 %v93, %v91
  %v104 = vpack.c.b16 %v96, %v94
  %v105 = vpack.c.b16 %v97, %v95
  %v115 = vsel %vm23, %v64, 0
  %v118 = vsel %vm23, %v65, 0
  %120 = vmatprep.subr.bf16.mxu0 %v99
  %121 = vmatpush1.bf16.msra.mxu0 %v98
  %122 = vmatprep.subr.bf16.mxu0 %v101
  %123 = vmatpush1.bf16.msra.mxu0 %v100
  %124 = vmatprep.subr.bf16.mxu0 %v103
  %125 = vmatpush1.bf16.msra.mxu0 %v102
  %126 = vmatprep.subr.bf16.mxu0 %v105
  %127 = vmatpush1.bf16.msra.mxu0 %v104
  %128 = vmatprep.subr.bf16.mxu0 0
  %129 = vmatpush1.bf16.msra.mxu0 0
  %130 = vmatprep.subr.bf16.mxu0 0
  %131 = vmatpush1.bf16.msra.mxu0 0
  %132 = vmatprep.subr.bf16.mxu0 0
  %133 = vmatpush1.bf16.msra.mxu0 0
  %134 = vmatprep.subr.bf16.mxu0 0
  %135 = vmatpush1.bf16.msra.mxu0 0
  %136 = vmatprep.subr.bf16.mxu0 0
  %137 = vmatpush1.bf16.msra.mxu0 0
  %138 = vmatprep.subr.bf16.mxu0 0
  %139 = vmatpush1.bf16.msra.mxu0 0
  %140 = vmatprep.subr.bf16.mxu0 0
  %141 = vmatpush1.bf16.msra.mxu0 0
  %142 = vmatprep.subr.bf16.mxu0 0
  %143 = vmatpush1.bf16.msra.mxu0 0
  %144 = vmatprep.subr.bf16.mxu0 0
  %145 = vmatpush1.bf16.msra.mxu0 0
  %146 = vmatprep.subr.bf16.mxu0 0
  %147 = vmatpush1.bf16.msra.mxu0 0
  %148 = vmatprep.subr.bf16.mxu0 0
  %149 = vmatpush1.bf16.msra.mxu0 0
  %150 = vmatprep.subr.bf16.mxu0 0
  %151 = vmatpush1.bf16.msra.mxu0 0
  %152 = vmatprep.mubr.bf16.mxu0 0
  %153 = vmatmul.mubr.bf16.gmra.mrb[0].mxu0 %v115
  %v154 = vpop.f32.mrb[0].mxu0
  %v155 = vadd.f32 0.0, %v154
  %v156 = vpop.f32.mrb[0].mxu0
  %v157 = vadd.f32 0.0, %v156
  %v158 = vpop.f32.mrb[0].mxu0
  %v159 = vadd.f32 0.0, %v158
  %v160 = vpop.f32.mrb[0].mxu0
  %v161 = vadd.f32 0.0, %v160
  %162 = vmatprep.mubr.bf16.mxu0 0
  %163 = vmatmul.mubr.bf16.gmra.mrb[0].mxu0 %v118
  %v164 = vpop.f32.mrb[0].mxu0
  %v165 = vadd.f32 0.0, %v164
  %v166 = vpop.f32.mrb[0].mxu0
  %v167 = vadd.f32 0.0, %v166
  %v168 = vpop.f32.mrb[0].mxu0
  %v169 = vadd.f32 0.0, %v168
  %v170 = vpop.f32.mrb[0].mxu0
  %v171 = vadd.f32 0.0, %v170
  %172 = vdwg.mxu0
  %v173 = vpack.c.bf16 %v159, %v155
  %v174 = vpack.c.bf16 %v161, %v157
  %v175 = vpack.c.bf16 %v169, %v165
  %v176 = vpack.c.bf16 %v171, %v167
  %v181 = vunpack.c.l.b16 %v173
  %v182 = vunpack.c.l.b16 %v174
  %v183 = vunpack.c.h.b16 %v173
  %v184 = vunpack.c.h.b16 %v174
  %v185 = vunpack.c.l.b16 %v175
  %v186 = vunpack.c.l.b16 %v176
  %v187 = vunpack.c.h.b16 %v175
  %v188 = vunpack.c.h.b16 %v176
  %v189 = vpack.c.b16 %v182, %v181
  %v190 = vpack.c.b16 %v184, %v183
  %v191 = vpack.c.b16 %v186, %v185
  %v192 = vpack.c.b16 %v188, %v187
  %vm197 = vcmask 1043456
  %vm198 = vcmask 523268
  %vm199 = vmor %vm198, %vm197
  %200 = vst.msk [vmem:[%s3] sm:$0xff] %vm199, %v189
  %201 = vst.msk [vmem:[%s3 + $0x8] sm:$0xff] %vm199, %v190
  %202 = vst.msk [vmem:[%s3 + $0x10] sm:$0xff] %vm199, %v191
  %203 = vst.msk [vmem:[%s3 + $0x18] sm:$0xff] %vm199, %v192
  // Predicated region
  $region14: #{run.12} parent=0 // pred_check
    _
  $region15: #{run.12} parent=0 // pred_check_branch
    %205 = sbr.rel (0) target = $region17
  $region16: #{run.12} parent=0 // pred_region
    _
  $region17: #{run.12} parent=0 // pred_fallthru
    _
  // Predicated region
  $region18: #{run.12} parent=0 // pred_check
    _
  $region19: #{run.12} parent=0 // pred_check_branch
    %207 = sbr.rel (0) target = $region21
  $region20: #{run.12} parent=0 // pred_region
    _
  $region21: #{run.12} parent=0 // pred_fallthru
    _

// kernel: run.15
$region0: #{run.15}
  #allocation0 [shape = 'u32[]', space=smem, size = 0x4, offset = 0x4, fixed_abs, tag = 'smem constant byte address 0x4 - core index']
  #allocation1 [shape = 'u32[144,128]{1,0:T(1,128)}', space=vmem, size = 0x12000, scoped, tag = 'internal scratch']
  #allocation2 [shape = 'bf16[32,64]{1,0:T(16,128)(2,1)}', space=vmem, size = 0x2000, scoped, tag = 'scratch operand']
  #allocation3 [shape = 'f32[32,64]{1,0:T(8,128)}', space=vmem, size = 0x4000, scoped, tag = 'scratch operand']
  %s0 = inlined_call_operand.vmem [shape: f32[32,64], index: 0, kind: input, shape index: {}]
  %s1 = inlined_call_operand.vmem [shape: f32[1,64], index: 1, kind: input, shape index: {}]
  %s2 = inlined_call_operand.vmem [shape: bf16[64,192], index: 2, kind: input, shape index: {}]
  %s3 = inlined_call_operand.vmem [shape: bf16[64,192], index: 3, kind: input, shape index: {}]
  %s4 = inlined_call_operand.vmem [shape: bf16[192,64], index: 4, kind: input, shape index: {}]
  %s5 = inlined_call_operand.vmem [shape: f32[32,64], index: 5, kind: output, shape index: {}]
  %s6 = sld [smem:[#allocation0]]
  $region38: #{run.15} parent=0
    _
  %s8 = ssub.s32 1, %s6
  %s9 = scalar_select 0, %s8, %s6
  // Predicated region
  $region2: #{run.15} parent=0 // pred_check
    _
  $region3: #{run.15} parent=0 // pred_check_branch
    %11 = sbr.rel (0) target = $region5
  $region4: #{run.15} parent=0 // pred_region
    _
  $region5: #{run.15} parent=0 // pred_fallthru
    _
  // Predicated region
  $region6: #{run.15} parent=0 // pred_check
    _
  $region7: #{run.15} parent=0 // pred_check_branch
    %13 = sbr.rel (0) target = $region9
  $region8: #{run.15} parent=0 // pred_region
    _
  $region9: #{run.15} parent=0 // pred_fallthru
    _
  // Predicated region
  $region10: #{run.15} parent=0 // pred_check
    _
  $region11: #{run.15} parent=0 // pred_check_branch
    %15 = sbr.rel (0) target = $region13
  $region12: #{run.15} parent=0 // pred_region
    _
  $region13: #{run.15} parent=0 // pred_fallthru
    _
  // Predicated region
  $region14: #{run.15} parent=0 // pred_check
    _
  $region15: #{run.15} parent=0 // pred_check_branch
    %17 = sbr.rel (0) target = $region17
  $region16: #{run.15} parent=0 // pred_region
    _
  $region17: #{run.15} parent=0 // pred_fallthru
    _
  // Predicated region
  $region18: #{run.15} parent=0 // pred_check
    _
  $region19: #{run.15} parent=0 // pred_check_branch
    %19 = sbr.rel (0) target = $region21
  $region20: #{run.15} parent=0 // pred_region
    _
  $region21: #{run.15} parent=0 // pred_fallthru
    _
  %p21 = scmp.eq.s32.totalorder 0, 0
  // Predicated region
  $region22: #{run.15} parent=0 // pred_check
    %p22 = pneg %p21
  $region23: #{run.15} parent=0 // pred_check_branch
    %24 = sbr.rel (%p22) target = $region25
  $region24: #{run.15} parent=0 // pred_region
    %v25 = vld [vmem:[%s0] sm:$0xff]
    %v26 = vld [vmem:[%s0 + $0x8] sm:$0xff]
    %v27 = vld [vmem:[%s0 + $0x10] sm:$0xff]
    %v28 = vld [vmem:[%s0 + $0x18] sm:$0xff]
    %v29 = vmul.f32 %v25, %v25
    %v30 = vmul.f32 %v26, %v26
    %v31 = vmul.f32 %v27, %v27
    %v32 = vmul.f32 %v28, %v28
    %vm33 = vcmask 523264
    %v34 = vsel %vm33, %v29, 0.0
    %35 = vadd.xlane.f32.xlu0 %v34
    %v36 = vpop.xlane.xlu0 %35
    %v37 = vsel %vm33, %v30, 0.0
    %38 = vadd.xlane.f32.xlu0 %v37
    %v39 = vpop.xlane.xlu0 %38
    %v40 = vsel %vm33, %v31, 0.0
    %41 = vadd.xlane.f32.xlu0 %v40
    %v42 = vpop.xlane.xlu0 %41
    %v43 = vsel %vm33, %v32, 0.0
    %44 = vadd.xlane.f32.xlu0 %v43
    %v45 = vpop.xlane.xlu0 %44
    %v46 = vrcp.pop 64.0
    %v47 = vmul.f32 %v36, %v46
    %v48 = vmul.f32 %v39, %v46
    %v49 = vmul.f32 %v42, %v46
    %v50 = vmul.f32 %v45, %v46
    %v51 = vadd.f32 %v47, 1e-05
    %v52 = vadd.f32 %v48, 1e-05
    %v53 = vadd.f32 %v49, 1e-05
    %v54 = vadd.f32 %v50, 1e-05
    %v55 = vrsqrt.pop %v51
    %v56 = vrsqrt.pop %v52
    %v57 = vrsqrt.pop %v53
    %v58 = vrsqrt.pop %v54
    %v59 = vmul.f32 %v25, %v55
    %v60 = vmul.f32 %v26, %v56
    %v61 = vmul.f32 %v27, %v57
    %v62 = vmul.f32 %v28, %v58
    %v63 = vld [vmem:[%s1] sm:$0x1]
    %v65 = vlaneseq
    %v66 = vshrl.u32 %v65, 7
    %v67 = vsub.s32 0, %v66
    %v68 = vrot.slane %v63, %v67
    %v70 = vmul.f32 %v59, %v68
    %v71 = vmul.f32 %v60, %v68
    %v72 = vmul.f32 %v61, %v68
    %v73 = vmul.f32 %v62, %v68
    %v74 = vpack.c.bf16 %v71, %v70
    %v75 = vpack.c.bf16 %v73, %v72
    %76 = vst.msk [vmem:[#allocation2] sm:$0xff] %vm33, %v74
    %77 = vst.msk [vmem:[#allocation2 + $0x8] sm:$0xff] %vm33, %v75
    %78 = vst.msk [vmem:[#allocation3] sm:$0xff] %vm33, 0.0
    %79 = vst.msk [vmem:[#allocation3 + $0x8] sm:$0xff] %vm33, 0.0
    %80 = vst.msk [vmem:[#allocation3 + $0x10] sm:$0xff] %vm33, 0.0
    %81 = vst.msk [vmem:[#allocation3 + $0x18] sm:$0xff] %vm33, 0.0
  $region25: #{run.15} parent=0 // pred_fallthru
    _
  %v82 = vld [vmem:[#allocation2] sm:$0xff]
  %v83 = vld [vmem:[#allocation2 + $0x8] sm:$0xff]
  %v84 = vld [vmem:[%s2] sm:$0xff]
  %v85 = vld [vmem:[%s2 + $0x8] sm:$0xff]
  %v86 = vld [vmem:[%s2 + $0x10] sm:$0xff]
  %v87 = vld [vmem:[%s2 + $0x18] sm:$0xff]
  %v88 = vld [vmem:[%s2 + $0x20] sm:$0xff]
  %v89 = vld [vmem:[%s2 + $0x28] sm:$0xff]
  %v90 = vld [vmem:[%s2 + $0x30] sm:$0xff]
  %v91 = vld [vmem:[%s2 + $0x38] sm:$0xff]
  %v100 = vunpack.c.l.b16 %v84
  %v101 = vunpack.c.h.b16 %v84
  %v102 = vunpack.c.l.b16 %v85
  %v103 = vunpack.c.h.b16 %v85
  %v104 = vunpack.c.l.b16 %v86
  %v105 = vunpack.c.h.b16 %v86
  %v106 = vunpack.c.l.b16 %v87
  %v107 = vunpack.c.h.b16 %v87
  %v108 = vunpack.c.l.b16 %v88
  %v109 = vunpack.c.h.b16 %v88
  %v110 = vunpack.c.l.b16 %v89
  %v111 = vunpack.c.h.b16 %v89
  %v112 = vunpack.c.l.b16 %v90
  %v113 = vunpack.c.h.b16 %v90
  %v114 = vunpack.c.l.b16 %v91
  %v115 = vunpack.c.h.b16 %v91
  %v116 = vpack.c.b16 %v102, %v100
  %v117 = vpack.c.b16 %v103, %v101
  %v118 = vpack.c.b16 %v106, %v104
  %v119 = vpack.c.b16 %v107, %v105
  %v120 = vpack.c.b16 %v110, %v108
  %v121 = vpack.c.b16 %v111, %v109
  %v122 = vpack.c.b16 %v114, %v112
  %v123 = vpack.c.b16 %v115, %v113
  %vm132 = vcmask 523264
  %v134 = vsel %vm132, %v82, 0
  %v137 = vsel %vm132, %v83, 0
  %139 = vmatprep.subr.bf16.mxu0 %v117
  %140 = vmatpush1.bf16.msra.mxu0 %v116
  %141 = vmatprep.subr.bf16.mxu0 %v119
  %142 = vmatpush1.bf16.msra.mxu0 %v118
  %143 = vmatprep.subr.bf16.mxu0 %v121
  %144 = vmatpush1.bf16.msra.mxu0 %v120
  %145 = vmatprep.subr.bf16.mxu0 %v123
  %146 = vmatpush1.bf16.msra.mxu0 %v122
  %147 = vmatprep.subr.bf16.mxu0 0
  %148 = vmatpush1.bf16.msra.mxu0 0
  %149 = vmatprep.subr.bf16.mxu0 0
  %150 = vmatpush1.bf16.msra.mxu0 0
  %151 = vmatprep.subr.bf16.mxu0 0
  %152 = vmatpush1.bf16.msra.mxu0 0
  %153 = vmatprep.subr.bf16.mxu0 0
  %154 = vmatpush1.bf16.msra.mxu0 0
  %155 = vmatprep.subr.bf16.mxu0 0
  %156 = vmatpush1.bf16.msra.mxu0 0
  %157 = vmatprep.subr.bf16.mxu0 0
  %158 = vmatpush1.bf16.msra.mxu0 0
  %159 = vmatprep.subr.bf16.mxu0 0
  %160 = vmatpush1.bf16.msra.mxu0 0
  %161 = vmatprep.subr.bf16.mxu0 0
  %162 = vmatpush1.bf16.msra.mxu0 0
  %163 = vmatprep.subr.bf16.mxu0 0
  %164 = vmatpush1.bf16.msra.mxu0 0
  %165 = vmatprep.subr.bf16.mxu0 0
  %166 = vmatpush1.bf16.msra.mxu0 0
  %167 = vmatprep.subr.bf16.mxu0 0
  %168 = vmatpush1.bf16.msra.mxu0 0
  %169 = vmatprep.subr.bf16.mxu0 0
  %170 = vmatpush1.bf16.msra.mxu0 0
  %171 = vmatprep.mubr.bf16.mxu0 0
  %172 = vmatmul.mubr.bf16.gmra.mrb[0].mxu0 %v134
  %v173 = vpop.f32.mrb[0].mxu0
  %v174 = vadd.f32 0.0, %v173
  %v175 = vpop.f32.mrb[0].mxu0
  %v176 = vadd.f32 0.0, %v175
  %v177 = vpop.f32.mrb[0].mxu0
  %v178 = vadd.f32 0.0, %v177
  %v179 = vpop.f32.mrb[0].mxu0
  %v180 = vadd.f32 0.0, %v179
  %181 = vmatprep.mubr.bf16.mxu0 0
  %182 = vmatmul.mubr.bf16.gmra.mrb[0].mxu0 %v137
  %v183 = vpop.f32.mrb[0].mxu0
  %v184 = vadd.f32 0.0, %v183
  %v185 = vpop.f32.mrb[0].mxu0
  %v186 = vadd.f32 0.0, %v185
  %v187 = vpop.f32.mrb[0].mxu0
  %v188 = vadd.f32 0.0, %v187
  %v189 = vpop.f32.mrb[0].mxu0
  %v190 = vadd.f32 0.0, %v189
  %191 = vdwg.mxu0
  %v192 = vld [vmem:[%s3] sm:$0xff]
  %v193 = vld [vmem:[%s3 + $0x8] sm:$0xff]
  %v194 = vld [vmem:[%s3 + $0x10] sm:$0xff]
  %v195 = vld [vmem:[%s3 + $0x18] sm:$0xff]
  %v196 = vld [vmem:[%s3 + $0x20] sm:$0xff]
  %v197 = vld [vmem:[%s3 + $0x28] sm:$0xff]
  %v198 = vld [vmem:[%s3 + $0x30] sm:$0xff]
  %v199 = vld [vmem:[%s3 + $0x38] sm:$0xff]
  %v208 = vunpack.c.l.b16 %v192
  %v209 = vunpack.c.h.b16 %v192
  %v210 = vunpack.c.l.b16 %v193
  %v211 = vunpack.c.h.b16 %v193
  %v212 = vunpack.c.l.b16 %v194
  %v213 = vunpack.c.h.b16 %v194
  %v214 = vunpack.c.l.b16 %v195
  %v215 = vunpack.c.h.b16 %v195
  %v216 = vunpack.c.l.b16 %v196
  %v217 = vunpack.c.h.b16 %v196
  %v218 = vunpack.c.l.b16 %v197
  %v219 = vunpack.c.h.b16 %v197
  %v220 = vunpack.c.l.b16 %v198
  %v221 = vunpack.c.h.b16 %v198
  %v222 = vunpack.c.l.b16 %v199
  %v223 = vunpack.c.h.b16 %v199
  %v224 = vpack.c.b16 %v210, %v208
  %v225 = vpack.c.b16 %v211, %v209
  %v226 = vpack.c.b16 %v214, %v212
  %v227 = vpack.c.b16 %v215, %v213
  %v228 = vpack.c.b16 %v218, %v216
  %v229 = vpack.c.b16 %v219, %v217
  %v230 = vpack.c.b16 %v222, %v220
  %v231 = vpack.c.b16 %v223, %v221
  %240 = vmatprep.subr.bf16.mxu0 %v225
  %241 = vmatpush1.bf16.msra.mxu0 %v224
  %242 = vmatprep.subr.bf16.mxu0 %v227
  %243 = vmatpush1.bf16.msra.mxu0 %v226
  %244 = vmatprep.subr.bf16.mxu0 %v229
  %245 = vmatpush1.bf16.msra.mxu0 %v228
  %246 = vmatprep.subr.bf16.mxu0 %v231
  %247 = vmatpush1.bf16.msra.mxu0 %v230
  %248 = vmatprep.subr.bf16.mxu0 0
  %249 = vmatpush1.bf16.msra.mxu0 0
  %250 = vmatprep.subr.bf16.mxu0 0
  %251 = vmatpush1.bf16.msra.mxu0 0
  %252 = vmatprep.subr.bf16.mxu0 0
  %253 = vmatpush1.bf16.msra.mxu0 0
  %254 = vmatprep.subr.bf16.mxu0 0
  %255 = vmatpush1.bf16.msra.mxu0 0
  %256 = vmatprep.subr.bf16.mxu0 0
  %257 = vmatpush1.bf16.msra.mxu0 0
  %258 = vmatprep.subr.bf16.mxu0 0
  %259 = vmatpush1.bf16.msra.mxu0 0
  %260 = vmatprep.subr.bf16.mxu0 0
  %261 = vmatpush1.bf16.msra.mxu0 0
  %262 = vmatprep.subr.bf16.mxu0 0
  %263 = vmatpush1.bf16.msra.mxu0 0
  %264 = vmatprep.subr.bf16.mxu0 0
  %265 = vmatpush1.bf16.msra.mxu0 0
  %266 = vmatprep.subr.bf16.mxu0 0
  %267 = vmatpush1.bf16.msra.mxu0 0
  %268 = vmatprep.subr.bf16.mxu0 0
  %269 = vmatpush1.bf16.msra.mxu0 0
  %270 = vmatprep.subr.bf16.mxu0 0
  %271 = vmatpush1.bf16.msra.mxu0 0
  %272 = vmatprep.mubr.bf16.mxu0 0
  %273 = vmatmul.mubr.bf16.gmra.mrb[0].mxu0 %v134
  %v274 = vpop.f32.mrb[0].mxu0
  %v275 = vadd.f32 0.0, %v274
  %v276 = vpop.f32.mrb[0].mxu0
  %v277 = vadd.f32 0.0, %v276
  %v278 = vpop.f32.mrb[0].mxu0
  %v279 = vadd.f32 0.0, %v278
  %v280 = vpop.f32.mrb[0].mxu0
  %v281 = vadd.f32 0.0, %v280
  %282 = vmatprep.mubr.bf16.mxu0 0
  %283 = vmatmul.mubr.bf16.gmra.mrb[0].mxu0 %v137
  %v284 = vpop.f32.mrb[0].mxu0
  %v285 = vadd.f32 0.0, %v284
  %v286 = vpop.f32.mrb[0].mxu0
  %v287 = vadd.f32 0.0, %v286
  %v288 = vpop.f32.mrb[0].mxu0
  %v289 = vadd.f32 0.0, %v288
  %v290 = vpop.f32.mrb[0].mxu0
  %v291 = vadd.f32 0.0, %v290
  %292 = vdwg.mxu0
  %v293 = vxor.u32 %v174, 2147483648
  %v294 = vxor.u32 %v176, 2147483648
  %v295 = vxor.u32 %v178, 2147483648
  %v296 = vxor.u32 %v180, 2147483648
  %v297 = vxor.u32 %v184, 2147483648
  %v298 = vxor.u32 %v186, 2147483648
  %v299 = vxor.u32 %v188, 2147483648
  %v300 = vxor.u32 %v190, 2147483648
  %v301 = vmul.f32 %v293, 1.442695
  %v302 = vpow.pop %v301
  %v303 = vmul.f32 %v294, 1.442695
  %v304 = vpow.pop %v303
  %v305 = vmul.f32 %v295, 1.442695
  %v306 = vpow.pop %v305
  %v307 = vmul.f32 %v296, 1.442695
  %v308 = vpow.pop %v307
  %v309 = vmul.f32 %v297, 1.442695
  %v310 = vpow.pop %v309
  %v311 = vmul.f32 %v298, 1.442695
  %v312 = vpow.pop %v311
  %v313 = vmul.f32 %v299, 1.442695
  %v314 = vpow.pop %v313
  %v315 = vmul.f32 %v300, 1.442695
  %v316 = vpow.pop %v315
  %v317 = vadd.f32 %v302, 1.0
  %v318 = vadd.f32 %v304, 1.0
  %v319 = vadd.f32 %v306, 1.0
  %v320 = vadd.f32 %v308, 1.0
  %v321 = vadd.f32 %v310, 1.0
  %v322 = vadd.f32 %v312, 1.0
  %v323 = vadd.f32 %v314, 1.0
  %v324 = vadd.f32 %v316, 1.0
  %v325 = vrcp.pop %v317
  %v326 = vmul.f32 1.0, %v325
  %v327 = vrcp.pop %v318
  %v328 = vmul.f32 1.0, %v327
  %v329 = vrcp.pop %v319
  %v330 = vmul.f32 1.0, %v329
  %v331 = vrcp.pop %v320
  %v332 = vmul.f32 1.0, %v331
  %v333 = vrcp.pop %v321
  %v334 = vmul.f32 1.0, %v333
  %v335 = vrcp.pop %v322
  %v336 = vmul.f32 1.0, %v335
  %v337 = vrcp.pop %v323
  %v338 = vmul.f32 1.0, %v337
  %v339 = vrcp.pop %v324
  %v340 = vmul.f32 1.0, %v339
  %v341 = vmul.f32 %v174, %v326
  %v342 = vmul.f32 %v176, %v328
  %v343 = vmul.f32 %v178, %v330
  %v344 = vmul.f32 %v180, %v332
  %v345 = vmul.f32 %v184, %v334
  %v346 = vmul.f32 %v186, %v336
  %v347 = vmul.f32 %v188, %v338
  %v348 = vmul.f32 %v190, %v340
  %v349 = vmul.f32 %v341, %v275
  %v350 = vmul.f32 %v342, %v277
  %v351 = vmul.f32 %v343, %v279
  %v352 = vmul.f32 %v344, %v281
  %v353 = vmul.f32 %v345, %v285
  %v354 = vmul.f32 %v346, %v287
  %v355 = vmul.f32 %v347, %v289
  %v356 = vmul.f32 %v348, %v291
  %v357 = vpack.c.bf16 %v351, %v349
  %v358 = vpack.c.bf16 %v352, %v350
  %v359 = vpack.c.bf16 %v355, %v353
  %v360 = vpack.c.bf16 %v356, %v354
  %v361 = vld [vmem:[#allocation3] sm:$0xff]
  %v362 = vld [vmem:[#allocation3 + $0x8] sm:$0xff]
  %v363 = vld [vmem:[#allocation3 + $0x10] sm:$0xff]
  %v364 = vld [vmem:[#allocation3 + $0x18] sm:$0xff]
  %v365 = vld [vmem:[%s4] sm:$0xf]
  %v366 = vld [vmem:[%s4 + $0x4] sm:$0xf]
  %v367 = vld [vmem:[%s4 + $0x8] sm:$0xf]
  %v368 = vld [vmem:[%s4 + $0xc] sm:$0xf]
  %v369 = vld [vmem:[%s4 + $0x10] sm:$0xf]
  %v370 = vld [vmem:[%s4 + $0x14] sm:$0xf]
  %v371 = vld [vmem:[%s4 + $0x18] sm:$0xf]
  %v372 = vld [vmem:[%s4 + $0x1c] sm:$0xf]
  %v373 = vld [vmem:[%s4 + $0x20] sm:$0xf]
  %v374 = vld [vmem:[%s4 + $0x24] sm:$0xf]
  %v375 = vld [vmem:[%s4 + $0x28] sm:$0xf]
  %v376 = vld [vmem:[%s4 + $0x2c] sm:$0xf]
  %v377 = vld [vmem:[%s4 + $0x30] sm:$0xf]
  %v378 = vld [vmem:[%s4 + $0x34] sm:$0xf]
  %v379 = vld [vmem:[%s4 + $0x38] sm:$0xf]
  %v380 = vld [vmem:[%s4 + $0x3c] sm:$0xf]
  %v381 = vld [vmem:[%s4 + $0x40] sm:$0xf]
  %v382 = vld [vmem:[%s4 + $0x44] sm:$0xf]
  %v383 = vld [vmem:[%s4 + $0x48] sm:$0xf]
  %v384 = vld [vmem:[%s4 + $0x4c] sm:$0xf]
  %v385 = vld [vmem:[%s4 + $0x50] sm:$0xf]
  %v386 = vld [vmem:[%s4 + $0x54] sm:$0xf]
  %v387 = vld [vmem:[%s4 + $0x58] sm:$0xf]
  %v388 = vld [vmem:[%s4 + $0x5c] sm:$0xf]
  %v413 = vunpack.c.l.b16 %v365
  %v414 = vunpack.c.l.b16 %v366
  %v415 = vunpack.c.l.b16 %v367
  %v416 = vunpack.c.l.b16 %v368
  %v417 = vunpack.c.l.b16 %v369
  %v418 = vunpack.c.l.b16 %v370
  %v419 = vunpack.c.l.b16 %v371
  %v420 = vunpack.c.l.b16 %v372
  %v421 = vunpack.c.l.b16 %v373
  %v422 = vunpack.c.l.b16 %v374
  %v423 = vunpack.c.l.b16 %v375
  %v424 = vunpack.c.l.b16 %v376
  %v425 = vunpack.c.l.b16 %v377
  %v426 = vunpack.c.l.b16 %v378
  %v427 = vunpack.c.l.b16 %v379
  %v428 = vunpack.c.l.b16 %v380
  %v429 = vunpack.c.l.b16 %v381
  %v430 = vunpack.c.l.b16 %v382
  %v431 = vunpack.c.l.b16 %v383
  %v432 = vunpack.c.l.b16 %v384
  %v433 = vunpack.c.l.b16 %v385
  %v434 = vunpack.c.l.b16 %v386
  %v435 = vunpack.c.l.b16 %v387
  %v436 = vunpack.c.l.b16 %v388
  %v437 = vpack.c.b16 %v414, %v413
  %v438 = vpack.c.b16 %v416, %v415
  %v439 = vpack.c.b16 %v418, %v417
  %v440 = vpack.c.b16 %v420, %v419
  %v441 = vpack.c.b16 %v422, %v421
  %v442 = vpack.c.b16 %v424, %v423
  %v443 = vpack.c.b16 %v426, %v425
  %v444 = vpack.c.b16 %v428, %v427
  %v445 = vpack.c.b16 %v430, %v429
  %v446 = vpack.c.b16 %v432, %v431
  %v447 = vpack.c.b16 %v434, %v433
  %v448 = vpack.c.b16 %v436, %v435
  %v462 = vsel %vm132, %v358, 0
  %v465 = vsel %vm132, %v360, 0
  %467 = vmatprep.subr.bf16.mxu0 0
  %468 = vmatpush1.bf16.msra.mxu0 %v437
  %469 = vmatprep.subr.bf16.mxu0 0
  %470 = vmatpush1.bf16.msra.mxu0 %v438
  %471 = vmatprep.subr.bf16.mxu0 0
  %472 = vmatpush1.bf16.msra.mxu0 %v439
  %473 = vmatprep.subr.bf16.mxu0 0
  %474 = vmatpush1.bf16.msra.mxu0 %v440
  %475 = vmatprep.subr.bf16.mxu0 0
  %476 = vmatpush1.bf16.msra.mxu0 %v441
  %477 = vmatprep.subr.bf16.mxu0 0
  %478 = vmatpush1.bf16.msra.mxu0 %v442
  %479 = vmatprep.subr.bf16.mxu0 0
  %480 = vmatpush1.bf16.msra.mxu0 %v443
  %481 = vmatprep.subr.bf16.mxu0 0
  %482 = vmatpush1.bf16.msra.mxu0 %v444
  %483 = vmatprep.subr.bf16.mxu0 0
  %484 = vmatpush1.bf16.msra.mxu0 %v445
  %485 = vmatprep.subr.bf16.mxu0 0
  %486 = vmatpush1.bf16.msra.mxu0 %v446
  %487 = vmatprep.subr.bf16.mxu0 0
  %488 = vmatpush1.bf16.msra.mxu0 %v447
  %489 = vmatprep.subr.bf16.mxu0 0
  %490 = vmatpush1.bf16.msra.mxu0 %v448
  %491 = vmatprep.subr.bf16.mxu0 0
  %492 = vmatpush1.bf16.msra.mxu0 0
  %493 = vmatprep.subr.bf16.mxu0 0
  %494 = vmatpush1.bf16.msra.mxu0 0
  %495 = vmatprep.subr.bf16.mxu0 0
  %496 = vmatpush1.bf16.msra.mxu0 0
  %497 = vmatprep.subr.bf16.mxu0 0
  %498 = vmatpush1.bf16.msra.mxu0 0
  %499 = vmatprep.mubr.bf16.mxu0 %v462
  %500 = vmatmul.mubr.bf16.gmra.mrb[0].mxu0 %v357
  %v501 = vpop.f32.mrb[0].mxu0
  %v502 = vadd.f32 0.0, %v501
  %v503 = vpop.f32.mrb[0].mxu0
  %v504 = vpop.f32.mrb[0].mxu0
  %v505 = vadd.f32 0.0, %v504
  %v506 = vpop.f32.mrb[0].mxu0
  %507 = vmatprep.mubr.bf16.mxu0 %v465
  %508 = vmatmul.mubr.bf16.gmra.mrb[0].mxu0 %v359
  %v509 = vpop.f32.mrb[0].mxu0
  %v510 = vadd.f32 0.0, %v509
  %v511 = vpop.f32.mrb[0].mxu0
  %v512 = vpop.f32.mrb[0].mxu0
  %v513 = vadd.f32 0.0, %v512
  %v514 = vpop.f32.mrb[0].mxu0
  %515 = vdwg.mxu0
  %v516 = vadd.f32 %v361, %v502
  %v517 = vadd.f32 %v362, %v505
  %v518 = vadd.f32 %v363, %v510
  %v519 = vadd.f32 %v364, %v513
  %520 = vst.msk [vmem:[#allocation3] sm:$0xff] %vm132, %v516
  %521 = vst.msk [vmem:[#allocation3 + $0x8] sm:$0xff] %vm132, %v517
  %522 = vst.msk [vmem:[#allocation3 + $0x10] sm:$0xff] %vm132, %v518
  %523 = vst.msk [vmem:[#allocation3 + $0x18] sm:$0xff] %vm132, %v519
  // Predicated region
  $region26: #{run.15} parent=0 // pred_check
    %p524 = pneg %p21
  $region27: #{run.15} parent=0 // pred_check_branch
    %526 = sbr.rel (%p524) target = $region29
  $region28: #{run.15} parent=0 // pred_region
    %v527 = vld [vmem:[#allocation3] sm:$0xff]
    %v528 = vld [vmem:[#allocation3 + $0x8] sm:$0xff]
    %v529 = vld [vmem:[#allocation3 + $0x10] sm:$0xff]
    %v530 = vld [vmem:[#allocation3 + $0x18] sm:$0xff]
    %v531 = vld [vmem:[%s0] sm:$0xff]
    %v532 = vld [vmem:[%s0 + $0x8] sm:$0xff]
    %v533 = vld [vmem:[%s0 + $0x10] sm:$0xff]
    %v534 = vld [vmem:[%s0 + $0x18] sm:$0xff]
    %v535 = vadd.f32 %v527, %v531
    %v536 = vadd.f32 %v528, %v532
    %v537 = vadd.f32 %v529, %v533
    %v538 = vadd.f32 %v530, %v534
    %539 = vst.msk [vmem:[%s5] sm:$0xff] %vm132, %v535
    %540 = vst.msk [vmem:[%s5 + $0x8] sm:$0xff] %vm132, %v536
    %541 = vst.msk [vmem:[%s5 + $0x10] sm:$0xff] %vm132, %v537
    %542 = vst.msk [vmem:[%s5 + $0x18] sm:$0xff] %vm132, %v538
  $region29: #{run.15} parent=0 // pred_fallthru
    _
  // Predicated region
  $region30: #{run.15} parent=0 // pred_check
    _
  $region31: #{run.15} parent=0 // pred_check_branch
    %544 = sbr.rel (0) target = $region33
  $region32: #{run.15} parent=0 // pred_region
    _
  $region33: #{run.15} parent=0 // pred_fallthru
    _
  // Predicated region
  $region34: #{run.15} parent=0 // pred_check
    _
  $region35: #{run.15} parent=0 // pred_check_branch
    %546 = sbr.rel (0) target = $region37
  $region36: #{run.15} parent=0 // pred_region
    _
  $region37: #{run.15} parent=0 // pred_fallthru
    _

// kernel: run.16
$region0: #{run.16}
  #allocation0 [shape = 'u32[]', space=smem, size = 0x4, offset = 0x4, fixed_abs, tag = 'smem constant byte address 0x4 - core index']
  #allocation1 [shape = 'u32[144,128]{1,0:T(1,128)}', space=vmem, size = 0x12000, scoped, tag = 'internal scratch']
  %s0 = inlined_call_operand.vmem [shape: f32[32,64], index: 0, kind: input, shape index: {}]
  %s1 = inlined_call_operand.vmem [shape: f32[1,64], index: 1, kind: input, shape index: {}]
  %s2 = inlined_call_operand.vmem [shape: bf16[64,128], index: 2, kind: input, shape index: {}]
  %s3 = inlined_call_operand.vmem [shape: bf16[32,128], index: 3, kind: output, shape index: {}]
  %s4 = sld [smem:[#allocation0]]
  $region22: #{run.16} parent=0
    _
  %s6 = ssub.s32 1, %s4
  %s7 = scalar_select 0, %s6, %s4
  // Predicated region
  $region2: #{run.16} parent=0 // pred_check
    _
  $region3: #{run.16} parent=0 // pred_check_branch
    %9 = sbr.rel (0) target = $region5
  $region4: #{run.16} parent=0 // pred_region
    _
  $region5: #{run.16} parent=0 // pred_fallthru
    _
  // Predicated region
  $region6: #{run.16} parent=0 // pred_check
    _
  $region7: #{run.16} parent=0 // pred_check_branch
    %11 = sbr.rel (0) target = $region9
  $region8: #{run.16} parent=0 // pred_region
    _
  $region9: #{run.16} parent=0 // pred_fallthru
    _
  // Predicated region
  $region10: #{run.16} parent=0 // pred_check
    _
  $region11: #{run.16} parent=0 // pred_check_branch
    %13 = sbr.rel (0) target = $region13
  $region12: #{run.16} parent=0 // pred_region
    _
  $region13: #{run.16} parent=0 // pred_fallthru
    _
  %v15 = vld [vmem:[%s0] sm:$0xff]
  %v16 = vld [vmem:[%s0 + $0x8] sm:$0xff]
  %v17 = vld [vmem:[%s0 + $0x10] sm:$0xff]
  %v18 = vld [vmem:[%s0 + $0x18] sm:$0xff]
  %v19 = vmul.f32 %v15, %v15
  %v20 = vmul.f32 %v16, %v16
  %v21 = vmul.f32 %v17, %v17
  %v22 = vmul.f32 %v18, %v18
  %vm23 = vcmask 523264
  %v24 = vsel %vm23, %v19, 0.0
  %25 = vadd.xlane.f32.xlu0 %v24
  %v26 = vpop.xlane.xlu0 %25
  %v27 = vsel %vm23, %v20, 0.0
  %28 = vadd.xlane.f32.xlu0 %v27
  %v29 = vpop.xlane.xlu0 %28
  %v30 = vsel %vm23, %v21, 0.0
  %31 = vadd.xlane.f32.xlu0 %v30
  %v32 = vpop.xlane.xlu0 %31
  %v33 = vsel %vm23, %v22, 0.0
  %34 = vadd.xlane.f32.xlu0 %v33
  %v35 = vpop.xlane.xlu0 %34
  %v36 = vrcp.pop 64.0
  %v37 = vmul.f32 %v26, %v36
  %v38 = vmul.f32 %v29, %v36
  %v39 = vmul.f32 %v32, %v36
  %v40 = vmul.f32 %v35, %v36
  %v41 = vadd.f32 %v37, 1e-05
  %v42 = vadd.f32 %v38, 1e-05
  %v43 = vadd.f32 %v39, 1e-05
  %v44 = vadd.f32 %v40, 1e-05
  %v45 = vrsqrt.pop %v41
  %v46 = vrsqrt.pop %v42
  %v47 = vrsqrt.pop %v43
  %v48 = vrsqrt.pop %v44
  %v49 = vmul.f32 %v15, %v45
  %v50 = vmul.f32 %v16, %v46
  %v51 = vmul.f32 %v17, %v47
  %v52 = vmul.f32 %v18, %v48
  %v53 = vld [vmem:[%s1] sm:$0x1]
  %v55 = vlaneseq
  %v56 = vshrl.u32 %v55, 7
  %v57 = vsub.s32 0, %v56
  %v58 = vrot.slane %v53, %v57
  %v60 = vmul.f32 %v49, %v58
  %v61 = vmul.f32 %v50, %v58
  %v62 = vmul.f32 %v51, %v58
  %v63 = vmul.f32 %v52, %v58
  %v64 = vpack.c.bf16 %v61, %v60
  %v65 = vpack.c.bf16 %v63, %v62
  %v66 = vld [vmem:[%s2] sm:$0xf]
  %v67 = vld [vmem:[%s2 + $0x4] sm:$0xf]
  %v68 = vld [vmem:[%s2 + $0x8] sm:$0xf]
  %v69 = vld [vmem:[%s2 + $0xc] sm:$0xf]
  %v70 = vld [vmem:[%s2 + $0x10] sm:$0xf]
  %v71 = vld [vmem:[%s2 + $0x14] sm:$0xf]
  %v72 = vld [vmem:[%s2 + $0x18] sm:$0xf]
  %v73 = vld [vmem:[%s2 + $0x1c] sm:$0xf]
  %v82 = vunpack.c.l.b16 %v66
  %v83 = vunpack.c.l.b16 %v67
  %v84 = vunpack.c.l.b16 %v68
  %v85 = vunpack.c.l.b16 %v69
  %v86 = vunpack.c.l.b16 %v70
  %v87 = vunpack.c.l.b16 %v71
  %v88 = vunpack.c.l.b16 %v72
  %v89 = vunpack.c.l.b16 %v73
  %v90 = vpack.c.b16 %v83, %v82
  %v91 = vpack.c.b16 %v85, %v84
  %v92 = vpack.c.b16 %v87, %v86
  %v93 = vpack.c.b16 %v89, %v88
  %v99 = vsel %vm23, %v64, 0
  %v102 = vsel %vm23, %v65, 0
  %104 = vmatprep.subr.bf16.mxu0 0
  %105 = vmatpush1.bf16.msra.mxu0 %v90
  %106 = vmatprep.subr.bf16.mxu0 0
  %107 = vmatpush1.bf16.msra.mxu0 %v91
  %108 = vmatprep.subr.bf16.mxu0 0
  %109 = vmatpush1.bf16.msra.mxu0 %v92
  %110 = vmatprep.subr.bf16.mxu0 0
  %111 = vmatpush1.bf16.msra.mxu0 %v93
  %112 = vmatprep.subr.bf16.mxu0 0
  %113 = vmatpush1.bf16.msra.mxu0 0
  %114 = vmatprep.subr.bf16.mxu0 0
  %115 = vmatpush1.bf16.msra.mxu0 0
  %116 = vmatprep.subr.bf16.mxu0 0
  %117 = vmatpush1.bf16.msra.mxu0 0
  %118 = vmatprep.subr.bf16.mxu0 0
  %119 = vmatpush1.bf16.msra.mxu0 0
  %120 = vmatprep.subr.bf16.mxu0 0
  %121 = vmatpush1.bf16.msra.mxu0 0
  %122 = vmatprep.subr.bf16.mxu0 0
  %123 = vmatpush1.bf16.msra.mxu0 0
  %124 = vmatprep.subr.bf16.mxu0 0
  %125 = vmatpush1.bf16.msra.mxu0 0
  %126 = vmatprep.subr.bf16.mxu0 0
  %127 = vmatpush1.bf16.msra.mxu0 0
  %128 = vmatprep.subr.bf16.mxu0 0
  %129 = vmatpush1.bf16.msra.mxu0 0
  %130 = vmatprep.subr.bf16.mxu0 0
  %131 = vmatpush1.bf16.msra.mxu0 0
  %132 = vmatprep.subr.bf16.mxu0 0
  %133 = vmatpush1.bf16.msra.mxu0 0
  %134 = vmatprep.subr.bf16.mxu0 0
  %135 = vmatpush1.bf16.msra.mxu0 0
  %136 = vmatprep.mubr.bf16.mxu0 0
  %137 = vmatmul.mubr.bf16.gmra.mrb[0].mxu0 %v99
  %v138 = vpop.f32.mrb[0].mxu0
  %v139 = vadd.f32 0.0, %v138
  %v140 = vpop.f32.mrb[0].mxu0
  %v141 = vpop.f32.mrb[0].mxu0
  %v142 = vadd.f32 0.0, %v141
  %v143 = vpop.f32.mrb[0].mxu0
  %144 = vmatprep.mubr.bf16.mxu0 0
  %145 = vmatmul.mubr.bf16.gmra.mrb[0].mxu0 %v102
  %v146 = vpop.f32.mrb[0].mxu0
  %v147 = vadd.f32 0.0, %v146
  %v148 = vpop.f32.mrb[0].mxu0
  %v149 = vpop.f32.mrb[0].mxu0
  %v150 = vadd.f32 0.0, %v149
  %v151 = vpop.f32.mrb[0].mxu0
  %152 = vdwg.mxu0
  %v153 = vpack.c.bf16 %v142, %v139
  %v154 = vpack.c.bf16 %v150, %v147
  %v157 = vunpack.c.l.b16 %v153
  %v158 = vunpack.c.h.b16 %v153
  %v159 = vunpack.c.l.b16 %v154
  %v160 = vunpack.c.h.b16 %v154
  %v161 = vpack.c.b16 %v157, %v157
  %v162 = vpack.c.b16 %v158, %v158
  %v163 = vpack.c.b16 %v159, %v159
  %v164 = vpack.c.b16 %v160, %v160
  %169 = vst [vmem:[%s3] sm:$0xf] %v161
  %170 = vst [vmem:[%s3 + $0x4] sm:$0xf] %v162
  %171 = vst [vmem:[%s3 + $0x8] sm:$0xf] %v163
  %172 = vst [vmem:[%s3 + $0xc] sm:$0xf] %v164
  // Predicated region
  $region14: #{run.16} parent=0 // pred_check
    _
  $region15: #{run.16} parent=0 // pred_check_branch
    %174 = sbr.rel (0) target = $region17
  $region16: #{run.16} parent=0 // pred_region
    _
  $region17: #{run.16} parent=0 // pred_fallthru
    _
  // Predicated region
  $region18: #{run.16} parent=0 // pred_check
    _
  $region19: #{run.16} parent=0 // pred_check_branch
    %176 = sbr.rel (0) target = $region21
  $region20: #{run.16} parent=0 // pred_region
    _
  $region21: #{run.16} parent=0 // pred_fallthru
    _

// kernel: run.13
$region0: #{run.13}
  #allocation0 [shape = 'u32[]', space=smem, size = 0x4, offset = 0x4, fixed_abs, tag = 'smem constant byte address 0x4 - core index']
  #allocation1 [shape = 'u32[144,128]{1,0:T(1,128)}', space=vmem, size = 0x12000, scoped, tag = 'internal scratch']
  #allocation2 [shape = 'bf16[16,64]{1,0:T(16,128)(2,1)}', space=vmem, size = 0x1000, scoped, tag = 'scratch operand']
  #allocation3 [shape = 'bf16[16,64]{1,0:T(16,128)(2,1)}', space=vmem, size = 0x1000, scoped, tag = 'scratch operand']
  #allocation4 [shape = 'f32[16,4]{1,0:T(8,128)}', space=vmem, size = 0x2000, scoped, tag = 'scratch operand']
  #allocation5 [shape = 'f32[16,4]{1,0:T(8,128)}', space=vmem, size = 0x2000, scoped, tag = 'scratch operand']
  #allocation6 [shape = 'f32[16,64]{1,0:T(8,128)}', space=vmem, size = 0x2000, scoped, tag = 'scratch operand']
  %s0 = inlined_call_operand.vmem [shape: bf16[2,16,192], index: 0, kind: input, shape index: {}, may-alias: {0,1,2}]
  %s1 = inlined_call_operand.vmem [shape: bf16[2,16,192], index: 1, kind: input, shape index: {}, may-alias: {0,1,2}]
  %s2 = inlined_call_operand.vmem [shape: bf16[2,16,192], index: 2, kind: input, shape index: {}, may-alias: {0,1,2}]
  %s3 = inlined_call_operand.vmem [shape: f32[2,16,32], index: 3, kind: input, shape index: {}, may-alias: {3,5}]
  %s4 = inlined_call_operand.vmem [shape: f32[2,16,32], index: 4, kind: input, shape index: {}, may-alias: {4,6}]
  %s5 = inlined_call_operand.vmem [shape: f32[2,16,32], index: 5, kind: input, shape index: {}, may-alias: {3,5}]
  %s6 = inlined_call_operand.vmem [shape: f32[2,16,32], index: 6, kind: input, shape index: {}, may-alias: {4,6}]
  %s7 = inlined_call_operand.vmem [shape: bf16[2,16,64], index: 7, kind: output, shape index: {}]
  %s8 = sld [smem:[#allocation0]]
  $region69: #{run.13} parent=0
    _
  %s10 = ssub.s32 1, %s8
  %s11 = scalar_select 0, %s10, %s8
  loop: start=0, step=1, limit=4
  $region2: #{run.13} parent=0 // loop_pre_header
    _
  $region3: #{run.13} parent=0 // loop_header
    %s13 = sphi 0, %s17
    %p14 = scmp.ge.s32.totalorder %s13, 4
    %s20 = sphi 0, %s39
    %s21 = sphi 0, %s35
    %s22 = sphi 0, %s31
    %s23 = sphi 0, %s20
    %s24 = sphi 0, %s21
    %s25 = sphi 0, %s22
    %s26 = sphi 0, %s23
    %s27 = sphi 0, %s24
    %s28 = sphi 0, %s25
    %s44 = sphi 0, %s46
    %s47 = sphi 0, %s44
    %s48 = sphi 0, %s47
    %s64 = sphi 0, %s48
    %s72 = sphi 0, %s74
    %s75 = sphi 0, %s72
    %s76 = sphi 0, %s75
    %s92 = sphi 0, %s76
    %s100 = sphi 0, %s102
    %s103 = sphi 0, %s100
    %s104 = sphi 0, %s103
    %s120 = sphi 0, %s104
    %s128 = sphi 0, %s130
    %s131 = sphi 0, %s128
    %s132 = sphi 0, %s131
    %s148 = sphi 0, %s132
    %s156 = sphi 0, %s158
    %s159 = sphi 0, %s156
    %s160 = sphi 0, %s159
    %s176 = sphi 0, %s160
    %s184 = sphi 0, %s186
    %s187 = sphi 0, %s184
    %s188 = sphi 0, %s187
    %s204 = sphi 0, %s188
    %s212 = sphi 0, %s214
    %s215 = sphi 0, %s212
    %s216 = sphi 0, %s215
    %s232 = sphi 0, %s216
    %s240 = sphi 0, %s242
    %s243 = sphi 0, %s240
    %s244 = sphi 0, %s243
    %s260 = sphi 0, %s244
  $region4: #{run.13} parent=0 // loop_header_branch
    %16 = sbr.rel (%p14) target = $region8
  $region5: #{run.13} parent=0 // loop_body
    %s18 = ssub.s32 %s13, 1
    %s19 = ssub.s32 %s13, 2
    %s29 = sadd.s32 1, %s22
    %p30 = scmp.ge.s32.totalorder %s29, 1
    %s31 = scalar_select %p30, 0, %s29
    %s32 = sadd.s32 1, %s21
    %s33 = scalar_select %p30, %s32, %s21
    %p34 = scmp.ge.s32.totalorder %s33, 1
    %s35 = scalar_select %p34, 0, %s33
    %s36 = sadd.s32 1, %s20
    %s37 = scalar_select %p34, %s36, %s20
    %p38 = scmp.ge.s32.totalorder %s37, 2
    %s39 = scalar_select %p38, 0, %s37
    %s40 = ssub.s32 %s20, %s39
    %s41 = ssub.s32 %s21, %s35
    %s42 = sor.u32 %s40, %s41
    %p43 = scmp.eq.s32.totalorder %s42, 0
    %s45 = sadd.s32 %s44, 1
    %s46 = scalar_select %p43, %s44, %s45
    %p49 = pneg %p43
    %p50 = scmp.eq.s32.totalorder %s13, 1
    %p51 = por %p49, %p50
    %p52 = scmp.ne.s32.totalorder %s44, %s47
    %p53 = scmp.eq.s32.totalorder %s13, 0
    %p54 = por %p52, %p53
    %p55 = scmp.ne.s32.totalorder %s44, %s47
    %p56 = scmp.eq.s32.totalorder %s18, 1
    %p57 = por %p55, %p56
    %p58 = scmp.ne.s32.totalorder %s47, %s48
    %p59 = scmp.eq.s32.totalorder %s18, 0
    %p60 = por %p58, %p59
    %p61 = scmp.ne.s32.totalorder %s47, %s48
    %p62 = scmp.eq.s32.totalorder %s19, 1
    %p63 = por %p61, %p62
    %p65 = scmp.ne.s32.totalorder %s48, %s64
    %p66 = scmp.eq.s32.totalorder %s19, 0
    %p67 = por %p65, %p66
    %s68 = ssub.s32 %s20, %s39
    %s69 = ssub.s32 %s22, %s31
    %s70 = sor.u32 %s68, %s69
    %p71 = scmp.eq.s32.totalorder %s70, 0
    %s73 = sadd.s32 %s72, 1
    %s74 = scalar_select %p71, %s72, %s73
    %p77 = pneg %p71
    %p78 = scmp.eq.s32.totalorder %s13, 1
    %p79 = por %p77, %p78
    %p80 = scmp.ne.s32.totalorder %s72, %s75
    %p81 = scmp.eq.s32.totalorder %s13, 0
    %p82 = por %p80, %p81
    %p83 = scmp.ne.s32.totalorder %s72, %s75
    %p84 = scmp.eq.s32.totalorder %s18, 1
    %p85 = por %p83, %p84
    %p86 = scmp.ne.s32.totalorder %s75, %s76
    %p87 = scmp.eq.s32.totalorder %s18, 0
    %p88 = por %p86, %p87
    %p89 = scmp.ne.s32.totalorder %s75, %s76
    %p90 = scmp.eq.s32.totalorder %s19, 1
    %p91 = por %p89, %p90
    %p93 = scmp.ne.s32.totalorder %s76, %s92
    %p94 = scmp.eq.s32.totalorder %s19, 0
    %p95 = por %p93, %p94
    %s96 = ssub.s32 %s20, %s39
    %s97 = ssub.s32 %s22, %s31
    %s98 = sor.u32 %s96, %s97
    %p99 = scmp.eq.s32.totalorder %s98, 0
    %s101 = sadd.s32 %s100, 1
    %s102 = scalar_select %p99, %s100, %s101
    %p105 = pneg %p99
    %p106 = scmp.eq.s32.totalorder %s13, 1
    %p107 = por %p105, %p106
    %p108 = scmp.ne.s32.totalorder %s100, %s103
    %p109 = scmp.eq.s32.totalorder %s13, 0
    %p110 = por %p108, %p109
    %p111 = scmp.ne.s32.totalorder %s100, %s103
    %p112 = scmp.eq.s32.totalorder %s18, 1
    %p113 = por %p111, %p112
    %p114 = scmp.ne.s32.totalorder %s103, %s104
    %p115 = scmp.eq.s32.totalorder %s18, 0
    %p116 = por %p114, %p115
    %p117 = scmp.ne.s32.totalorder %s103, %s104
    %p118 = scmp.eq.s32.totalorder %s19, 1
    %p119 = por %p117, %p118
    %p121 = scmp.ne.s32.totalorder %s104, %s120
    %p122 = scmp.eq.s32.totalorder %s19, 0
    %p123 = por %p121, %p122
    %s124 = ssub.s32 %s20, %s39
    %s125 = ssub.s32 %s21, %s35
    %s126 = sor.u32 %s124, %s125
    %p127 = scmp.eq.s32.totalorder %s126, 0
    %s129 = sadd.s32 %s128, 1
    %s130 = scalar_select %p127, %s128, %s129
    %p133 = pneg %p127
    %p134 = scmp.eq.s32.totalorder %s13, 1
    %p135 = por %p133, %p134
    %p136 = scmp.ne.s32.totalorder %s128, %s131
    %p137 = scmp.eq.s32.totalorder %s13, 0
    %p138 = por %p136, %p137
    %p139 = scmp.ne.s32.totalorder %s128, %s131
    %p140 = scmp.eq.s32.totalorder %s18, 1
    %p141 = por %p139, %p140
    %p142 = scmp.ne.s32.totalorder %s131, %s132
    %p143 = scmp.eq.s32.totalorder %s18, 0
    %p144 = por %p142, %p143
    %p145 = scmp.ne.s32.totalorder %s131, %s132
    %p146 = scmp.eq.s32.totalorder %s19, 1
    %p147 = por %p145, %p146
    %p149 = scmp.ne.s32.totalorder %s132, %s148
    %p150 = scmp.eq.s32.totalorder %s19, 0
    %p151 = por %p149, %p150
    %s152 = ssub.s32 %s20, %s39
    %s153 = ssub.s32 %s21, %s35
    %s154 = sor.u32 %s152, %s153
    %p155 = scmp.eq.s32.totalorder %s154, 0
    %s157 = sadd.s32 %s156, 1
    %s158 = scalar_select %p155, %s156, %s157
    %p161 = pneg %p155
    %p162 = scmp.eq.s32.totalorder %s13, 1
    %p163 = por %p161, %p162
    %p164 = scmp.ne.s32.totalorder %s156, %s159
    %p165 = scmp.eq.s32.totalorder %s13, 0
    %p166 = por %p164, %p165
    %p167 = scmp.ne.s32.totalorder %s156, %s159
    %p168 = scmp.eq.s32.totalorder %s18, 1
    %p169 = por %p167, %p168
    %p170 = scmp.ne.s32.totalorder %s159, %s160
    %p171 = scmp.eq.s32.totalorder %s18, 0
    %p172 = por %p170, %p171
    %p173 = scmp.ne.s32.totalorder %s159, %s160
    %p174 = scmp.eq.s32.totalorder %s19, 1
    %p175 = por %p173, %p174
    %p177 = scmp.ne.s32.totalorder %s160, %s176
    %p178 = scmp.eq.s32.totalorder %s19, 0
    %p179 = por %p177, %p178
    %s180 = ssub.s32 %s20, %s39
    %s181 = ssub.s32 %s22, %s31
    %s182 = sor.u32 %s180, %s181
    %p183 = scmp.eq.s32.totalorder %s182, 0
    %s185 = sadd.s32 %s184, 1
    %s186 = scalar_select %p183, %s184, %s185
    %p189 = pneg %p183
    %p190 = scmp.eq.s32.totalorder %s13, 1
    %p191 = por %p189, %p190
    %p192 = scmp.ne.s32.totalorder %s184, %s187
    %p193 = scmp.eq.s32.totalorder %s13, 0
    %p194 = por %p192, %p193
    %p195 = scmp.ne.s32.totalorder %s184, %s187
    %p196 = scmp.eq.s32.totalorder %s18, 1
    %p197 = por %p195, %p196
    %p198 = scmp.ne.s32.totalorder %s187, %s188
    %p199 = scmp.eq.s32.totalorder %s18, 0
    %p200 = por %p198, %p199
    %p201 = scmp.ne.s32.totalorder %s187, %s188
    %p202 = scmp.eq.s32.totalorder %s19, 1
    %p203 = por %p201, %p202
    %p205 = scmp.ne.s32.totalorder %s188, %s204
    %p206 = scmp.eq.s32.totalorder %s19, 0
    %p207 = por %p205, %p206
    %s208 = ssub.s32 %s20, %s39
    %s209 = ssub.s32 %s22, %s31
    %s210 = sor.u32 %s208, %s209
    %p211 = scmp.eq.s32.totalorder %s210, 0
    %s213 = sadd.s32 %s212, 1
    %s214 = scalar_select %p211, %s212, %s213
    %p217 = pneg %p211
    %p218 = scmp.eq.s32.totalorder %s13, 1
    %p219 = por %p217, %p218
    %p220 = scmp.ne.s32.totalorder %s212, %s215
    %p221 = scmp.eq.s32.totalorder %s13, 0
    %p222 = por %p220, %p221
    %p223 = scmp.ne.s32.totalorder %s212, %s215
    %p224 = scmp.eq.s32.totalorder %s18, 1
    %p225 = por %p223, %p224
    %p226 = scmp.ne.s32.totalorder %s215, %s216
    %p227 = scmp.eq.s32.totalorder %s18, 0
    %p228 = por %p226, %p227
    %p229 = scmp.ne.s32.totalorder %s215, %s216
    %p230 = scmp.eq.s32.totalorder %s19, 1
    %p231 = por %p229, %p230
    %p233 = scmp.ne.s32.totalorder %s216, %s232
    %p234 = scmp.eq.s32.totalorder %s19, 0
    %p235 = por %p233, %p234
    %s236 = ssub.s32 %s20, %s39
    %s237 = ssub.s32 %s21, %s35
    %s238 = sor.u32 %s236, %s237
    %p239 = scmp.eq.s32.totalorder %s238, 0
    %s241 = sadd.s32 %s240, 1
    %s242 = scalar_select %p239, %s240, %s241
    %p245 = pneg %p239
    %p246 = scmp.eq.s32.totalorder %s13, 1
    %p247 = por %p245, %p246
    %p248 = scmp.ne.s32.totalorder %s240, %s243
    %p249 = scmp.eq.s32.totalorder %s13, 0
    %p250 = por %p248, %p249
    %p251 = scmp.ne.s32.totalorder %s240, %s243
    %p252 = scmp.eq.s32.totalorder %s18, 1
    %p253 = por %p251, %p252
    %p254 = scmp.ne.s32.totalorder %s243, %s244
    %p255 = scmp.eq.s32.totalorder %s18, 0
    %p256 = por %p254, %p255
    %p257 = scmp.ne.s32.totalorder %s243, %s244
    %p258 = scmp.eq.s32.totalorder %s19, 1
    %p259 = por %p257, %p258
    %p261 = scmp.ne.s32.totalorder %s244, %s260
    %p262 = scmp.eq.s32.totalorder %s19, 0
    %p263 = por %p261, %p262
    %p264 = scmp.le.s32.totalorder 1, %s13
    %p265 = scmp.lt.s32.totalorder %s13, 3
    %p266 = pnand %p264, %p265
    %p267 = pneg %p266
    // Predicated region
    $region9: #{run.13} parent=5 // pred_check
      _
    $region10: #{run.13} parent=5 // pred_check_branch
      %269 = sbr.rel (%p266) target = $region12
    $region11: #{run.13} parent=5 // pred_region
      %s270 = ssub.s32 %s13, 1
    $region12: #{run.13} parent=5 // pred_fallthru
      _
    %p271 = scmp.lt.s32.totalorder %s13, 2
    // Predicated region
    $region13: #{run.13} parent=5 // pred_check
      %p272 = pneg %p271
    $region14: #{run.13} parent=5 // pred_check_branch
      %274 = sbr.rel (%p272) target = $region16
    $region15: #{run.13} parent=5 // pred_region
      // Predicated region
      $region17: #{run.13} parent=15 // pred_check
        %p275 = pneg %p54
      $region18: #{run.13} parent=15 // pred_check_branch
        %277 = sbr.rel (%p275) target = $region20
      $region19: #{run.13} parent=15 // pred_region
        %s278 = smul.u32 2, %s21
        %p279 = scmp.lt.s32.totalorder %s20, 1
        %s280 = scalar_select %p279, %s20, 1
        %p281 = scmp.lt.s32.totalorder %s278, 1
        %s282 = scalar_select %p281, %s278, 1
        %s283 = smul.addr %s282, 2
        %s284 = smul.addr %s280, 4
        %s285 = sadd.s32 %s283, %s284
        %s286 = smul.addr %s285, 4
        %s287 = scalar_lea.vmem %s0, %s286
        %s288 = smul.u32 2, %s21
      $region20: #{run.13} parent=15 // pred_fallthru
        _
      // Predicated region
      $region21: #{run.13} parent=15 // pred_check
        %p289 = pneg %p82
      $region22: #{run.13} parent=15 // pred_check_branch
        %291 = sbr.rel (%p289) target = $region24
      $region23: #{run.13} parent=15 // pred_region
        %s292 = smul.u32 2, %s22
        %p293 = scmp.lt.s32.totalorder %s20, 1
        %s294 = scalar_select %p293, %s20, 1
        %p295 = scmp.lt.s32.totalorder %s292, 1
        %s296 = scalar_select %p295, %s292, 1
        %s297 = smul.addr %s296, 2
        %s298 = smul.addr %s294, 4
        %s299 = sadd.s32 %s297, %s298
        %s300 = smul.addr %s299, 4
        %s301 = scalar_lea.vmem %s1, %s300
        %s302 = smul.u32 2, %s22
      $region24: #{run.13} parent=15 // pred_fallthru
        _
      // Predicated region
      $region25: #{run.13} parent=15 // pred_check
        %p303 = pneg %p110
      $region26: #{run.13} parent=15 // pred_check_branch
        %305 = sbr.rel (%p303) target = $region28
      $region27: #{run.13} parent=15 // pred_region
        %s306 = smul.u32 2, %s22
        %p307 = scmp.lt.s32.totalorder %s20, 1
        %s308 = scalar_select %p307, %s20, 1
        %p309 = scmp.lt.s32.totalorder %s306, 1
        %s310 = scalar_select %p309, %s306, 1
        %s311 = smul.addr %s310, 2
        %s312 = smul.addr %s308, 4
        %s313 = sadd.s32 %s311, %s312
        %s314 = smul.addr %s313, 4
        %s315 = scalar_lea.vmem %s2, %s314
        %s316 = smul.u32 2, %s22
      $region28: #{run.13} parent=15 // pred_fallthru
        _
      // Predicated region
      $region29: #{run.13} parent=15 // pred_check
        %p317 = pneg %p138
      $region30: #{run.13} parent=15 // pred_check_branch
        %319 = sbr.rel (%p317) target = $region32
      $region31: #{run.13} parent=15 // pred_region
        %s320 = smul.u32 2, %s21
        %p321 = scmp.lt.s32.totalorder %s20, 1
        %s322 = scalar_select %p321, %s20, 1
        %p323 = scmp.lt.s32.totalorder %s320, 1
        %s324 = scalar_select %p323, %s320, 1
        %s325 = smul.addr %s322, 2
        %s326 = sadd.s32 %s324, %s325
        %s327 = smul.addr %s326, 8
        %s328 = scalar_lea.vmem %s3, %s327
        %s329 = smul.u32 2, %s21
      $region32: #{run.13} parent=15 // pred_fallthru
        _
      // Predicated region
      $region33: #{run.13} parent=15 // pred_check
        %p330 = pneg %p166
      $region34: #{run.13} parent=15 // pred_check_branch
        %332 = sbr.rel (%p330) target = $region36
      $region35: #{run.13} parent=15 // pred_region
        %s333 = smul.u32 2, %s21
        %p334 = scmp.lt.s32.totalorder %s20, 1
        %s335 = scalar_select %p334, %s20, 1
        %p336 = scmp.lt.s32.totalorder %s333, 1
        %s337 = scalar_select %p336, %s333, 1
        %s338 = smul.addr %s335, 2
        %s339 = sadd.s32 %s337, %s338
        %s340 = smul.addr %s339, 8
        %s341 = scalar_lea.vmem %s4, %s340
        %s342 = smul.u32 2, %s21
      $region36: #{run.13} parent=15 // pred_fallthru
        _
      // Predicated region
      $region37: #{run.13} parent=15 // pred_check
        %p343 = pneg %p194
      $region38: #{run.13} parent=15 // pred_check_branch
        %345 = sbr.rel (%p343) target = $region40
      $region39: #{run.13} parent=15 // pred_region
        %s346 = smul.u32 2, %s22
        %p347 = scmp.lt.s32.totalorder %s20, 1
        %s348 = scalar_select %p347, %s20, 1
        %p349 = scmp.lt.s32.totalorder %s346, 1
        %s350 = scalar_select %p349, %s346, 1
        %s351 = smul.addr %s348, 2
        %s352 = sadd.s32 %s350, %s351
        %s353 = smul.addr %s352, 8
        %s354 = scalar_lea.vmem %s5, %s353
        %s355 = smul.u32 2, %s22
      $region40: #{run.13} parent=15 // pred_fallthru
        _
      // Predicated region
      $region41: #{run.13} parent=15 // pred_check
        %p356 = pneg %p222
      $region42: #{run.13} parent=15 // pred_check_branch
        %358 = sbr.rel (%p356) target = $region44
      $region43: #{run.13} parent=15 // pred_region
        %s359 = smul.u32 2, %s22
        %p360 = scmp.lt.s32.totalorder %s20, 1
        %s361 = scalar_select %p360, %s20, 1
        %p362 = scmp.lt.s32.totalorder %s359, 1
        %s363 = scalar_select %p362, %s359, 1
        %s364 = smul.addr %s361, 2
        %s365 = sadd.s32 %s363, %s364
        %s366 = smul.addr %s365, 8
        %s367 = scalar_lea.vmem %s6, %s366
        %s368 = smul.u32 2, %s22
      $region44: #{run.13} parent=15 // pred_fallthru
        _
    $region16: #{run.13} parent=5 // pred_fallthru
      _
    %p369 = scmp.le.s32.totalorder 1, %s13
    %p370 = scmp.lt.s32.totalorder %s13, 3
    %p371 = pnand %p369, %p370
    %p372 = pneg %p371
    // Predicated region
    $region45: #{run.13} parent=5 // pred_check
      _
    $region46: #{run.13} parent=5 // pred_check_branch
      %374 = sbr.rel (%p371) target = $region48
    $region47: #{run.13} parent=5 // pred_region
      %s375 = ssub.s32 %s13, 1
      %s376 = smul.u32 2, %s24
      %p377 = scmp.lt.s32.totalorder %s23, 1
      %s378 = scalar_select %p377, %s23, 1
      %p379 = scmp.lt.s32.totalorder %s376, 1
      %s380 = scalar_select %p379, %s376, 1
      %s381 = smul.addr %s380, 2
      %s382 = smul.addr %s378, 4
      %s383 = sadd.s32 %s381, %s382
      %s384 = smul.addr %s383, 4
      %s385 = scalar_lea.vmem %s0, %s384
      %p386 = pneg %p60
      %p387 = pneg %p57
      %s388 = smul.u32 2, %s25
      %p389 = scmp.lt.s32.totalorder %s23, 1
      %s390 = scalar_select %p389, %s23, 1
      %p391 = scmp.lt.s32.totalorder %s388, 1
      %s392 = scalar_select %p391, %s388, 1
      %s393 = smul.addr %s392, 2
      %s394 = smul.addr %s390, 4
      %s395 = sadd.s32 %s393, %s394
      %s396 = smul.addr %s395, 4
      %s397 = scalar_lea.vmem %s1, %s396
      %p398 = pneg %p88
      %p399 = pneg %p85
      %s400 = smul.u32 2, %s25
      %p401 = scmp.lt.s32.totalorder %s23, 1
      %s402 = scalar_select %p401, %s23, 1
      %p403 = scmp.lt.s32.totalorder %s400, 1
      %s404 = scalar_select %p403, %s400, 1
      %s405 = smul.addr %s404, 2
      %s406 = smul.addr %s402, 4
      %s407 = sadd.s32 %s405, %s406
      %s408 = smul.addr %s407, 4
      %s409 = scalar_lea.vmem %s2, %s408
      %p410 = pneg %p116
      %p411 = pneg %p113
      %s412 = smul.u32 2, %s24
      %p413 = scmp.lt.s32.totalorder %s23, 1
      %s414 = scalar_select %p413, %s23, 1
      %p415 = scmp.lt.s32.totalorder %s412, 1
      %s416 = scalar_select %p415, %s412, 1
      %s417 = smul.addr %s414, 2
      %s418 = sadd.s32 %s416, %s417
      %s419 = smul.addr %s418, 8
      %s420 = scalar_lea.vmem %s3, %s419
      %p421 = pneg %p144
      %p422 = pneg %p141
      %s423 = smul.u32 2, %s24
      %p424 = scmp.lt.s32.totalorder %s23, 1
      %s425 = scalar_select %p424, %s23, 1
      %p426 = scmp.lt.s32.totalorder %s423, 1
      %s427 = scalar_select %p426, %s423, 1
      %s428 = smul.addr %s425, 2
      %s429 = sadd.s32 %s427, %s428
      %s430 = smul.addr %s429, 8
      %s431 = scalar_lea.vmem %s4, %s430
      %p432 = pneg %p172
      %p433 = pneg %p169
      %s434 = smul.u32 2, %s25
      %p435 = scmp.lt.s32.totalorder %s23, 1
      %s436 = scalar_select %p435, %s23, 1
      %p437 = scmp.lt.s32.totalorder %s434, 1
      %s438 = scalar_select %p437, %s434, 1
      %s439 = smul.addr %s436, 2
      %s440 = sadd.s32 %s438, %s439
      %s441 = smul.addr %s440, 8
      %s442 = scalar_lea.vmem %s5, %s441
      %p443 = pneg %p200
      %p444 = pneg %p197
      %s445 = smul.u32 2, %s25
      %p446 = scmp.lt.s32.totalorder %s23, 1
      %s447 = scalar_select %p446, %s23, 1
      %p448 = scmp.lt.s32.totalorder %s445, 1
      %s449 = scalar_select %p448, %s445, 1
      %s450 = smul.addr %s447, 2
      %s451 = sadd.s32 %s449, %s450
      %s452 = smul.addr %s451, 8
      %s453 = scalar_lea.vmem %s6, %s452
      %p454 = pneg %p228
      %p455 = pneg %p225
      %p456 = pneg %p256
      %p457 = pneg %p253
      %s458 = smul.u32 2, %s24
      %p459 = scmp.lt.s32.totalorder %s23, 1
      %s460 = scalar_select %p459, %s23, 1
      %p461 = scmp.lt.s32.totalorder %s458, 1
      %s462 = scalar_select %p461, %s458, 1
      %s463 = smul.addr %s460, 2
      %s464 = sadd.s32 %s462, %s463
      %s465 = smul.addr %s464, 4
      %s466 = scalar_lea.vmem %s7, %s465
      %s467 = smul.u32 2, %s24
      %p468 = scmp.lt.s32.totalorder %s23, 1
      %s469 = scalar_select %p468, %s23, 1
      %p470 = scmp.lt.s32.totalorder %s467, 1
      %s471 = scalar_select %p470, %s467, 1
      %s472 = smul.addr %s471, 2
      %s473 = smul.addr %s469, 4
      %s474 = sadd.s32 %s472, %s473
      %s475 = smul.addr %s474, 4
      %s476 = scalar_lea.vmem %s0, %s475
      %s477 = smul.u32 2, %s24
      %s478 = smul.u32 2, %s25
      %p479 = scmp.lt.s32.totalorder %s23, 1
      %s480 = scalar_select %p479, %s23, 1
      %p481 = scmp.lt.s32.totalorder %s478, 1
      %s482 = scalar_select %p481, %s478, 1
      %s483 = smul.addr %s482, 2
      %s484 = smul.addr %s480, 4
      %s485 = sadd.s32 %s483, %s484
      %s486 = smul.addr %s485, 4
      %s487 = scalar_lea.vmem %s1, %s486
      %s488 = smul.u32 2, %s25
      %s489 = smul.u32 2, %s25
      %p490 = scmp.lt.s32.totalorder %s23, 1
      %s491 = scalar_select %p490, %s23, 1
      %p492 = scmp.lt.s32.totalorder %s489, 1
      %s493 = scalar_select %p492, %s489, 1
      %s494 = smul.addr %s493, 2
      %s495 = smul.addr %s491, 4
      %s496 = sadd.s32 %s494, %s495
      %s497 = smul.addr %s496, 4
      %s498 = scalar_lea.vmem %s2, %s497
      %s499 = smul.u32 2, %s25
      %s500 = smul.u32 2, %s24
      %p501 = scmp.lt.s32.totalorder %s23, 1
      %s502 = scalar_select %p501, %s23, 1
      %p503 = scmp.lt.s32.totalorder %s500, 1
      %s504 = scalar_select %p503, %s500, 1
      %s505 = smul.addr %s502, 2
      %s506 = sadd.s32 %s504, %s505
      %s507 = smul.addr %s506, 8
      %s508 = scalar_lea.vmem %s3, %s507
      %s509 = smul.u32 2, %s24
      %s510 = smul.u32 2, %s24
      %p511 = scmp.lt.s32.totalorder %s23, 1
      %s512 = scalar_select %p511, %s23, 1
      %p513 = scmp.lt.s32.totalorder %s510, 1
      %s514 = scalar_select %p513, %s510, 1
      %s515 = smul.addr %s512, 2
      %s516 = sadd.s32 %s514, %s515
      %s517 = smul.addr %s516, 8
      %s518 = scalar_lea.vmem %s4, %s517
      %s519 = smul.u32 2, %s24
      %s520 = smul.u32 2, %s25
      %p521 = scmp.lt.s32.totalorder %s23, 1
      %s522 = scalar_select %p521, %s23, 1
      %p523 = scmp.lt.s32.totalorder %s520, 1
      %s524 = scalar_select %p523, %s520, 1
      %s525 = smul.addr %s522, 2
      %s526 = sadd.s32 %s524, %s525
      %s527 = smul.addr %s526, 8
      %s528 = scalar_lea.vmem %s5, %s527
      %s529 = smul.u32 2, %s25
      %s530 = smul.u32 2, %s25
      %p531 = scmp.lt.s32.totalorder %s23, 1
      %s532 = scalar_select %p531, %s23, 1
      %p533 = scmp.lt.s32.totalorder %s530, 1
      %s534 = scalar_select %p533, %s530, 1
      %s535 = smul.addr %s532, 2
      %s536 = sadd.s32 %s534, %s535
      %s537 = smul.addr %s536, 8
      %s538 = scalar_lea.vmem %s6, %s537
      %s539 = smul.u32 2, %s25
      %s540 = smul.u32 2, %s24
      %p541 = scmp.lt.s32.totalorder %s23, 1
      %s542 = scalar_select %p541, %s23, 1
      %p543 = scmp.lt.s32.totalorder %s540, 1
      %s544 = scalar_select %p543, %s540, 1
      %s545 = smul.addr %s542, 2
      %s546 = sadd.s32 %s544, %s545
      %s547 = smul.addr %s546, 4
      %s548 = scalar_lea.vmem %s7, %s547
      %s549 = smul.u32 2, %s24
      %p551 = scmp.eq.s32.totalorder %s25, 0
      // Predicated region
      $region49: #{run.13} parent=47 // pred_check
        %p552 = pneg %p551
      $region50: #{run.13} parent=47 // pred_check_branch
        %554 = sbr.rel (%p552) target = $region52
      $region51: #{run.13} parent=47 // pred_region
        %v555 = vld [vmem:[%s476] sm:$0xff]
        %v556 = vld [vmem:[%s476 + $0x8] sm:$0xff]
        %v557 = vunpack.c.l.bf16 %v555
        %v558 = vunpack.c.l.bf16 %v556
        %v559 = vld [vmem:[%s508] sm:$0xff]
        %v560 = vld [vmem:[%s508 + $0x8] sm:$0xff]
        %v561 = vld [vmem:[%s518] sm:$0xff]
        %v562 = vld [vmem:[%s518 + $0x8] sm:$0xff]
        %v563 = vmul.f32 %v557, %v559
        %v564 = vmul.f32 %v558, %v560
        %567 = vrot.lane.b32.xlu0 %v561, 8
        %v568 = vpop.permute.xlu0 %567
        %569 = vrot.lane.b32.xlu0 %v562, 8
        %v570 = vpop.permute.xlu0 %569
        %v573 = vmul.f32 %v557, %v568
        %v574 = vmul.f32 %v558, %v570
        %577 = vrot.lane.b32.xlu0 %v573, 120
        %v578 = vpop.permute.xlu0 %577
        %579 = vrot.lane.b32.xlu0 %v574, 120
        %v580 = vpop.permute.xlu0 %579
        %v583 = vsub.f32 %v563, %v578
        %v584 = vsub.f32 %v564, %v580
        %587 = vrot.lane.b32.xlu0 %v559, 8
        %v588 = vpop.permute.xlu0 %587
        %589 = vrot.lane.b32.xlu0 %v560, 8
        %v590 = vpop.permute.xlu0 %589
        %v593 = vmul.f32 %v557, %v588
        %v594 = vmul.f32 %v558, %v590
        %v595 = vmul.f32 %v557, %v561
        %v596 = vmul.f32 %v558, %v562
        %599 = vrot.lane.b32.xlu0 %v595, 8
        %v600 = vpop.permute.xlu0 %599
        %601 = vrot.lane.b32.xlu0 %v596, 8
        %v602 = vpop.permute.xlu0 %601
        %v605 = vadd.f32 %v593, %v600
        %v606 = vadd.f32 %v594, %v602
        %v607 = vmul.f32 %v583, 0.25
        %v608 = vmul.f32 %v584, 0.25
        %v609 = vmul.f32 %v605, 0.25
        %v610 = vmul.f32 %v606, 0.25
        %v611 = vpack.c.bf16 %v608, %v607
        %vm612 = vcmask 64512
        %613 = vst.msk [vmem:[#allocation2] sm:$0xff] %vm612, %v611
        %v614 = vpack.c.bf16 %v610, %v609
        %vm615 = vcmask 130112
        %616 = vst.msk [vmem:[#allocation2] sm:$0xff] %vm615, %v614
        %617 = vrot.lane.b32.xlu0 %v561, 16
        %v618 = vpop.permute.xlu0 %617
        %619 = vrot.lane.b32.xlu0 %v562, 16
        %v620 = vpop.permute.xlu0 %619
        %v623 = vmul.f32 %v557, %v618
        %v624 = vmul.f32 %v558, %v620
        %627 = vrot.lane.b32.xlu0 %v623, 120
        %v628 = vpop.permute.xlu0 %627
        %629 = vrot.lane.b32.xlu0 %v624, 120
        %v630 = vpop.permute.xlu0 %629
        %v633 = vsub.f32 %v593, %v628
        %v634 = vsub.f32 %v594, %v630
        %635 = vrot.lane.b32.xlu0 %v559, 16
        %v636 = vpop.permute.xlu0 %635
        %637 = vrot.lane.b32.xlu0 %v560, 16
        %v638 = vpop.permute.xlu0 %637
        %v641 = vmul.f32 %v557, %v636
        %v642 = vmul.f32 %v558, %v638
        %643 = vrot.lane.b32.xlu0 %v573, 8
        %v644 = vpop.permute.xlu0 %643
        %645 = vrot.lane.b32.xlu0 %v574, 8
        %v646 = vpop.permute.xlu0 %645
        %v649 = vadd.f32 %v641, %v644
        %v650 = vadd.f32 %v642, %v646
        %v651 = vmul.f32 %v633, 0.25
        %v652 = vmul.f32 %v634, 0.25
        %v653 = vmul.f32 %v649, 0.25
        %v654 = vmul.f32 %v650, 0.25
        %v655 = vpack.c.bf16 %v652, %v651
        %vm656 = vcmask 195712
        %657 = vst.msk [vmem:[#allocation2] sm:$0xff] %vm656, %v655
        %v658 = vpack.c.bf16 %v654, %v653
        %vm659 = vcmask 261312
        %660 = vst.msk [vmem:[#allocation2] sm:$0xff] %vm659, %v658
        %661 = vrot.lane.b32.xlu0 %v561, 24
        %v662 = vpop.permute.xlu0 %661
        %663 = vrot.lane.b32.xlu0 %v562, 24
        %v664 = vpop.permute.xlu0 %663
        %v667 = vmul.f32 %v557, %v662
        %v668 = vmul.f32 %v558, %v664
        %671 = vrot.lane.b32.xlu0 %v667, 120
        %v672 = vpop.permute.xlu0 %671
        %673 = vrot.lane.b32.xlu0 %v668, 120
        %v674 = vpop.permute.xlu0 %673
        %v677 = vsub.f32 %v641, %v672
        %v678 = vsub.f32 %v642, %v674
        %679 = vrot.lane.b32.xlu0 %v559, 24
        %v680 = vpop.permute.xlu0 %679
        %681 = vrot.lane.b32.xlu0 %v560, 24
        %v682 = vpop.permute.xlu0 %681
        %v685 = vmul.f32 %v557, %v680
        %v686 = vmul.f32 %v558, %v682
        %687 = vrot.lane.b32.xlu0 %v623, 8
        %v688 = vpop.permute.xlu0 %687
        %689 = vrot.lane.b32.xlu0 %v624, 8
        %v690 = vpop.permute.xlu0 %689
        %v693 = vadd.f32 %v685, %v688
        %v694 = vadd.f32 %v686, %v690
        %v695 = vmul.f32 %v677, 0.25
        %v696 = vmul.f32 %v678, 0.25
        %v697 = vmul.f32 %v693, 0.25
        %v698 = vmul.f32 %v694, 0.25
        %v699 = vpack.c.bf16 %v696, %v695
        %vm700 = vcmask 326912
        %701 = vst.msk [vmem:[#allocation2] sm:$0xff] %vm700, %v699
        %v702 = vpack.c.bf16 %v698, %v697
        %vm703 = vcmask 392512
        %704 = vst.msk [vmem:[#allocation2] sm:$0xff] %vm703, %v702
        %705 = vrot.lane.b32.xlu0 %v561, 32
        %v706 = vpop.permute.xlu0 %705
        %707 = vrot.lane.b32.xlu0 %v562, 32
        %v708 = vpop.permute.xlu0 %707
        %v711 = vmul.f32 %v557, %v706
        %v712 = vmul.f32 %v558, %v708
        %715 = vrot.lane.b32.xlu0 %v711, 120
        %v716 = vpop.permute.xlu0 %715
        %717 = vrot.lane.b32.xlu0 %v712, 120
        %v718 = vpop.permute.xlu0 %717
        %v721 = vsub.f32 %v685, %v716
        %v722 = vsub.f32 %v686, %v718
        %723 = vrot.lane.b32.xlu0 %v559, 32
        %v724 = vpop.permute.xlu0 %723
        %725 = vrot.lane.b32.xlu0 %v560, 32
        %v726 = vpop.permute.xlu0 %725
        %v729 = vmul.f32 %v557, %v724
        %v730 = vmul.f32 %v558, %v726
        %731 = vrot.lane.b32.xlu0 %v667, 8
        %v732 = vpop.permute.xlu0 %731
        %733 = vrot.lane.b32.xlu0 %v668, 8
        %v734 = vpop.permute.xlu0 %733
        %v737 = vadd.f32 %v729, %v732
        %v738 = vadd.f32 %v730, %v734
        %v739 = vmul.f32 %v721, 0.25
        %v740 = vmul.f32 %v722, 0.25
        %v741 = vmul.f32 %v737, 0.25
        %v742 = vmul.f32 %v738, 0.25
        %v743 = vpack.c.bf16 %v740, %v739
        %vm744 = vcmask 458112
        %745 = vst.msk [vmem:[#allocation2] sm:$0xff] %vm744, %v743
        %v746 = vpack.c.bf16 %v742, %v741
        %vm747 = vcmask 523712
        %748 = vst.msk [vmem:[#allocation2] sm:$0xff] %vm747, %v746
        %vm749 = vcmask 31744
        %750 = vst.msk [vmem:[#allocation4] sm:$0xff] %vm749, -inf
        %751 = vst.msk [vmem:[#allocation4 + $0x8] sm:$0xff] %vm749, -inf
        %752 = vst.msk [vmem:[#allocation5] sm:$0xff] %vm749, 0.0
        %753 = vst.msk [vmem:[#allocation5 + $0x8] sm:$0xff] %vm749, 0.0
        %vm754 = vcmask 523264
        %755 = vst.msk [vmem:[#allocation6] sm:$0xff] %vm754, 0.0
        %756 = vst.msk [vmem:[#allocation6 + $0x8] sm:$0xff] %vm754, 0.0
      $region52: #{run.13} parent=47 // pred_fallthru
        _
      %v757 = vld [vmem:[%s487] sm:$0xff]
      %v758 = vld [vmem:[%s487 + $0x8] sm:$0xff]
      %v759 = vunpack.c.l.bf16 %v757
      %v760 = vunpack.c.l.bf16 %v758
      %v761 = vld [vmem:[%s528] sm:$0xff]
      %v762 = vld [vmem:[%s528 + $0x8] sm:$0xff]
      %v763 = vld [vmem:[%s538] sm:$0xff]
      %v764 = vld [vmem:[%s538 + $0x8] sm:$0xff]
      %767 = vrot.lane.b32.xlu0 %v761, 64
      %v768 = vpop.permute.xlu0 %767
      %769 = vrot.lane.b32.xlu0 %v762, 64
      %v770 = vpop.permute.xlu0 %769
      %v773 = vmul.f32 %v759, %v768
      %v774 = vmul.f32 %v760, %v770
      %777 = vrot.lane.b32.xlu0 %v763, 72
      %v778 = vpop.permute.xlu0 %777
      %779 = vrot.lane.b32.xlu0 %v764, 72
      %v780 = vpop.permute.xlu0 %779
      %v783 = vmul.f32 %v759, %v778
      %v784 = vmul.f32 %v760, %v780
      %787 = vrot.lane.b32.xlu0 %v783, 120
      %v788 = vpop.permute.xlu0 %787
      %789 = vrot.lane.b32.xlu0 %v784, 120
      %v790 = vpop.permute.xlu0 %789
      %v793 = vsub.f32 %v773, %v788
      %v794 = vsub.f32 %v774, %v790
      %795 = vrot.lane.b32.xlu0 %v761, 72
      %v796 = vpop.permute.xlu0 %795
      %797 = vrot.lane.b32.xlu0 %v762, 72
      %v798 = vpop.permute.xlu0 %797
      %v801 = vmul.f32 %v759, %v796
      %v802 = vmul.f32 %v760, %v798
      %803 = vrot.lane.b32.xlu0 %v763, 64
      %v804 = vpop.permute.xlu0 %803
      %805 = vrot.lane.b32.xlu0 %v764, 64
      %v806 = vpop.permute.xlu0 %805
      %v809 = vmul.f32 %v759, %v804
      %v810 = vmul.f32 %v760, %v806
      %813 = vrot.lane.b32.xlu0 %v809, 8
      %v814 = vpop.permute.xlu0 %813
      %815 = vrot.lane.b32.xlu0 %v810, 8
      %v816 = vpop.permute.xlu0 %815
      %v819 = vadd.f32 %v801, %v814
      %v820 = vadd.f32 %v802, %v816
      %v821 = vpack.c.bf16 %v794, %v793
      %823 = vrot.lane.b32.xlu0 %v821, 64
      %v824 = vpop.permute.xlu0 %823
      %vm826 = vcmask 64512
      %827 = vst.msk [vmem:[#allocation3] sm:$0xff] %vm826, %v824
      %v828 = vpack.c.bf16 %v820, %v819
      %830 = vrot.lane.b32.xlu0 %v828, 64
      %v831 = vpop.permute.xlu0 %830
      %vm833 = vcmask 130112
      %834 = vst.msk [vmem:[#allocation3] sm:$0xff] %vm833, %v831
      %835 = vrot.lane.b32.xlu0 %v763, 80
      %v836 = vpop.permute.xlu0 %835
      %837 = vrot.lane.b32.xlu0 %v764, 80
      %v838 = vpop.permute.xlu0 %837
      %v841 = vmul.f32 %v759, %v836
      %v842 = vmul.f32 %v760, %v838
      %845 = vrot.lane.b32.xlu0 %v841, 120
      %v846 = vpop.permute.xlu0 %845
      %847 = vrot.lane.b32.xlu0 %v842, 120
      %v848 = vpop.permute.xlu0 %847
      %v851 = vsub.f32 %v801, %v846
      %v852 = vsub.f32 %v802, %v848
      %853 = vrot.lane.b32.xlu0 %v761, 80
      %v854 = vpop.permute.xlu0 %853
      %855 = vrot.lane.b32.xlu0 %v762, 80
      %v856 = vpop.permute.xlu0 %855
      %v859 = vmul.f32 %v759, %v854
      %v860 = vmul.f32 %v760, %v856
      %861 = vrot.lane.b32.xlu0 %v783, 8
      %v862 = vpop.permute.xlu0 %861
      %863 = vrot.lane.b32.xlu0 %v784, 8
      %v864 = vpop.permute.xlu0 %863
      %v867 = vadd.f32 %v859, %v862
      %v868 = vadd.f32 %v860, %v864
      %v869 = vpack.c.bf16 %v852, %v851
      %871 = vrot.lane.b32.xlu0 %v869, 64
      %v872 = vpop.permute.xlu0 %871
      %vm874 = vcmask 195712
      %875 = vst.msk [vmem:[#allocation3] sm:$0xff] %vm874, %v872
      %v876 = vpack.c.bf16 %v868, %v867
      %878 = vrot.lane.b32.xlu0 %v876, 64
      %v879 = vpop.permute.xlu0 %878
      %vm881 = vcmask 261312
      %882 = vst.msk [vmem:[#allocation3] sm:$0xff] %vm881, %v879
      %883 = vrot.lane.b32.xlu0 %v763, 88
      %v884 = vpop.permute.xlu0 %883
      %885 = vrot.lane.b32.xlu0 %v764, 88
      %v886 = vpop.permute.xlu0 %885
      %v889 = vmul.f32 %v759, %v884
      %v890 = vmul.f32 %v760, %v886
      %893 = vrot.lane.b32.xlu0 %v889, 120
      %v894 = vpop.permute.xlu0 %893
      %895 = vrot.lane.b32.xlu0 %v890, 120
      %v896 = vpop.permute.xlu0 %895
      %v899 = vsub.f32 %v859, %v894
      %v900 = vsub.f32 %v860, %v896
      %901 = vrot.lane.b32.xlu0 %v761, 88
      %v902 = vpop.permute.xlu0 %901
      %903 = vrot.lane.b32.xlu0 %v762, 88
      %v904 = vpop.permute.xlu0 %903
      %v907 = vmul.f32 %v759, %v902
      %v908 = vmul.f32 %v760, %v904
      %909 = vrot.lane.b32.xlu0 %v841, 8
      %v910 = vpop.permute.xlu0 %909
      %911 = vrot.lane.b32.xlu0 %v842, 8
      %v912 = vpop.permute.xlu0 %911
      %v915 = vadd.f32 %v907, %v910
      %v916 = vadd.f32 %v908, %v912
      %v917 = vpack.c.bf16 %v900, %v899
      %919 = vrot.lane.b32.xlu0 %v917, 64
      %v920 = vpop.permute.xlu0 %919
      %vm922 = vcmask 326912
      %923 = vst.msk [vmem:[#allocation3] sm:$0xff] %vm922, %v920
      %v924 = vpack.c.bf16 %v916, %v915
      %926 = vrot.lane.b32.xlu0 %v924, 64
      %v927 = vpop.permute.xlu0 %926
      %vm929 = vcmask 392512
      %930 = vst.msk [vmem:[#allocation3] sm:$0xff] %vm929, %v927
      %931 = vrot.lane.b32.xlu0 %v763, 96
      %v932 = vpop.permute.xlu0 %931
      %933 = vrot.lane.b32.xlu0 %v764, 96
      %v934 = vpop.permute.xlu0 %933
      %v937 = vmul.f32 %v759, %v932
      %v938 = vmul.f32 %v760, %v934
      %941 = vrot.lane.b32.xlu0 %v937, 120
      %v942 = vpop.permute.xlu0 %941
      %943 = vrot.lane.b32.xlu0 %v938, 120
      %v944 = vpop.permute.xlu0 %943
      %v947 = vsub.f32 %v907, %v942
      %v948 = vsub.f32 %v908, %v944
      %949 = vrot.lane.b32.xlu0 %v761, 96
      %v950 = vpop.permute.xlu0 %949
      %951 = vrot.lane.b32.xlu0 %v762, 96
      %v952 = vpop.permute.xlu0 %951
      %v955 = vmul.f32 %v759, %v950
      %v956 = vmul.f32 %v760, %v952
      %957 = vrot.lane.b32.xlu0 %v889, 8
      %v958 = vpop.permute.xlu0 %957
      %959 = vrot.lane.b32.xlu0 %v890, 8
      %v960 = vpop.permute.xlu0 %959
      %v963 = vadd.f32 %v955, %v958
      %v964 = vadd.f32 %v956, %v960
      %v965 = vpack.c.bf16 %v948, %v947
      %967 = vrot.lane.b32.xlu0 %v965, 64
      %v968 = vpop.permute.xlu0 %967
      %vm970 = vcmask 458112
      %971 = vst.msk [vmem:[#allocation3] sm:$0xff] %vm970, %v968
      %v972 = vpack.c.bf16 %v964, %v963
      %974 = vrot.lane.b32.xlu0 %v972, 64
      %v975 = vpop.permute.xlu0 %974
      %vm977 = vcmask 523712
      %978 = vst.msk [vmem:[#allocation3] sm:$0xff] %vm977, %v975
      %v979 = vld [vmem:[%s498] sm:$0xff]
      %v980 = vld [vmem:[%s498 + $0x8] sm:$0xff]
      %v981 = vld [vmem:[#allocation2] sm:$0xff]
      %v982 = vld [vmem:[#allocation3] sm:$0xff]
      %vm983 = vcmask 130048
      %v985 = vsel %vm983, %v981, 0
      %v988 = vsel %vm983, %v982, 0
      %990 = vmatprep.subr.bf16.mxu0 0
      %991 = vmatpush1.bf16.xpose.msra.mxu0 %v988
      %992 = vmatprep.subr.bf16.mxu0 0
      %993 = vmatpush1.bf16.xpose.msra.mxu0 0
      %994 = vmatprep.subr.bf16.mxu0 0
      %995 = vmatpush1.bf16.xpose.msra.mxu0 0
      %996 = vmatprep.subr.bf16.mxu0 0
      %997 = vmatpush1.bf16.xpose.msra.mxu0 0
      %998 = vmatprep.subr.bf16.mxu0 0
      %999 = vmatpush1.bf16.xpose.msra.mxu0 0
      %1000 = vmatprep.subr.bf16.mxu0 0
      %1001 = vmatpush1.bf16.xpose.msra.mxu0 0
      %1002 = vmatprep.subr.bf16.mxu0 0
      %1003 = vmatpush1.bf16.xpose.msra.mxu0 0
      %1004 = vmatprep.subr.bf16.mxu0 0
      %1005 = vmatpush1.bf16.xpose.msra.mxu0 0
      %1006 = vmatprep.subr.bf16.mxu0 0
      %1007 = vmatpush1.bf16.xpose.msra.mxu0 0
      %1008 = vmatprep.subr.bf16.mxu0 0
      %1009 = vmatpush1.bf16.xpose.msra.mxu0 0
      %1010 = vmatprep.subr.bf16.mxu0 0
      %1011 = vmatpush1.bf16.xpose.msra.mxu0 0
      %1012 = vmatprep.subr.bf16.mxu0 0
      %1013 = vmatpush1.bf16.xpose.msra.mxu0 0
      %1014 = vmatprep.subr.bf16.mxu0 0
      %1015 = vmatpush1.bf16.xpose.msra.mxu0 0
      %1016 = vmatprep.subr.bf16.mxu0 0
      %1017 = vmatpush1.bf16.xpose.msra.mxu0 0
      %1018 = vmatprep.subr.bf16.mxu0 0
      %1019 = vmatpush1.bf16.xpose.msra.mxu0 0
      %1020 = vmatprep.subr.bf16.mxu0 0
      %1021 = vmatpush1.bf16.xpose.msra.mxu0 0
      %1022 = vmatprep.mubr.bf16.mxu0 0
      %1023 = vmatmul.mubr.bf16.gmra.mrb[0].mxu0 %v985
      %v1024 = vpop.f32.mrb[0].mxu0
      %v1025 = vadd.f32 0.0, %v1024
      %v1026 = vpop.f32.mrb[0].mxu0
      %v1027 = vpop.f32.mrb[0].mxu0
      %v1028 = vadd.f32 0.0, %v1027
      %v1029 = vpop.f32.mrb[0].mxu0
      %1030 = vdwg.mxu0
      %v1031 = vld [vmem:[#allocation4] sm:$0xff]
      %v1032 = vld [vmem:[#allocation4 + $0x8] sm:$0xff]
      %v1033 = vsel %vm983, %v1025, -inf
      %1034 = vmax.xlane.f32.xlu0 %v1033
      %v1035 = vpop.xlane.xlu0 %1034
      %v1036 = vsel %vm983, %v1028, -inf
      %1037 = vmax.xlane.f32.xlu0 %v1036
      %v1038 = vpop.xlane.xlu0 %1037
      %v1039 = vmax.f32 %v1031, %v1035
      %v1040 = vmax.f32 %v1032, %v1038
      %v1041 = vsub.f32 %v1031, %v1039
      %v1042 = vsub.f32 %v1032, %v1040
      %v1043 = vmul.f32 %v1041, 1.442695
      %v1044 = vpow.pop %v1043
      %v1045 = vmul.f32 %v1042, 1.442695
      %v1046 = vpow.pop %v1045
      %1048 = vset.pattern.permute.xlu0 0
      %1049 = vperm.xlu0 %1048, %v1039
      %v1050 = vpop.permute.xlu0 %1049
      %1053 = vset.pattern.permute.xlu0 0
      %1054 = vperm.xlu0 %1053, %v1040
      %v1055 = vpop.permute.xlu0 %1054
      %v1057 = vsub.f32 %v1025, %v1050
      %v1058 = vsub.f32 %v1028, %v1055
      %v1059 = vmul.f32 %v1057, 1.442695
      %v1060 = vpow.pop %v1059
      %v1061 = vmul.f32 %v1058, 1.442695
      %v1062 = vpow.pop %v1061
      %v1063 = vld [vmem:[#allocation5] sm:$0xff]
      %v1064 = vld [vmem:[#allocation5 + $0x8] sm:$0xff]
      %v1065 = vmul.f32 %v1044, %v1063
      %v1066 = vmul.f32 %v1046, %v1064
      %v1067 = vsel %vm983, %v1060, 0.0
      %1068 = vadd.xlane.f32.xlu0 %v1067
      %v1069 = vpop.xlane.xlu0 %1068
      %v1070 = vsel %vm983, %v1062, 0.0
      %1071 = vadd.xlane.f32.xlu0 %v1070
      %v1072 = vpop.xlane.xlu0 %1071
      %v1073 = vadd.f32 %v1065, %v1069
      %v1074 = vadd.f32 %v1066, %v1072
      %vm1075 = vcmask 7168
      %1076 = vst.msk [vmem:[#allocation5] sm:$0xff] %vm1075, %v1073
      %1077 = vst.msk [vmem:[#allocation5 + $0x8] sm:$0xff] %vm1075, %v1074
      %v1078 = vld [vmem:[#allocation6] sm:$0xff]
      %v1079 = vld [vmem:[#allocation6 + $0x8] sm:$0xff]
      %1081 = vset.pattern.permute.xlu0 0
      %1082 = vperm.xlu0 %1081, %v1044
      %v1083 = vpop.permute.xlu0 %1082
      %1086 = vset.pattern.permute.xlu0 0
      %1087 = vperm.xlu0 %1086, %v1046
      %v1088 = vpop.permute.xlu0 %1087
      %v1090 = vmul.f32 %v1083, %v1078
      %v1091 = vmul.f32 %v1088, %v1079
      %v1092 = vpack.c.bf16 %v1062, %v1060
      %v1095 = vunpack.c.h.b16 %v979
      %v1096 = vunpack.c.h.b16 %v980
      %v1097 = vpack.c.b16 %v1096, %v1095
      %v1100 = vsel %vm983, %v1092, 0
      %1102 = vmatprep.subr.bf16.mxu0 0
      %1103 = vmatpush1.bf16.msra.mxu0 %v1097
      %1104 = vmatprep.subr.bf16.mxu0 0
      %1105 = vmatpush1.bf16.msra.mxu0 0
      %1106 = vmatprep.subr.bf16.mxu0 0
      %1107 = vmatpush1.bf16.msra.mxu0 0
      %1108 = vmatprep.subr.bf16.mxu0 0
      %1109 = vmatpush1.bf16.msra.mxu0 0
      %1110 = vmatprep.subr.bf16.mxu0 0
      %1111 = vmatpush1.bf16.msra.mxu0 0
      %1112 = vmatprep.subr.bf16.mxu0 0
      %1113 = vmatpush1.bf16.msra.mxu0 0
      %1114 = vmatprep.subr.bf16.mxu0 0
      %1115 = vmatpush1.bf16.msra.mxu0 0
      %1116 = vmatprep.subr.bf16.mxu0 0
      %1117 = vmatpush1.bf16.msra.mxu0 0
      %1118 = vmatprep.subr.bf16.mxu0 0
      %1119 = vmatpush1.bf16.msra.mxu0 0
      %1120 = vmatprep.subr.bf16.mxu0 0
      %1121 = vmatpush1.bf16.msra.mxu0 0
      %1122 = vmatprep.subr.bf16.mxu0 0
      %1123 = vmatpush1.bf16.msra.mxu0 0
      %1124 = vmatprep.subr.bf16.mxu0 0
      %1125 = vmatpush1.bf16.msra.mxu0 0
      %1126 = vmatprep.subr.bf16.mxu0 0
      %1127 = vmatpush1.bf16.msra.mxu0 0
      %1128 = vmatprep.subr.bf16.mxu0 0
      %1129 = vmatpush1.bf16.msra.mxu0 0
      %1130 = vmatprep.subr.bf16.mxu0 0
      %1131 = vmatpush1.bf16.msra.mxu0 0
      %1132 = vmatprep.subr.bf16.mxu0 0
      %1133 = vmatpush1.bf16.msra.mxu0 0
      %1134 = vmatprep.mubr.bf16.mxu0 0
      %1135 = vmatmul.mubr.bf16.gmra.mrb[0].mxu0 %v1100
      %v1136 = vpop.f32.mrb[0].mxu0
      %v1137 = vadd.f32 0.0, %v1136
      %v1138 = vpop.f32.mrb[0].mxu0
      %v1139 = vpop.f32.mrb[0].mxu0
      %v1140 = vadd.f32 0.0, %v1139
      %v1141 = vpop.f32.mrb[0].mxu0
      %1142 = vdwg.mxu0
      %v1143 = vadd.f32 %v1090, %v1137
      %v1144 = vadd.f32 %v1091, %v1140
      %1145 = vst.msk [vmem:[#allocation6] sm:$0xff] %vm983, %v1143
      %1146 = vst.msk [vmem:[#allocation6 + $0x8] sm:$0xff] %vm983, %v1144
      %1147 = vst.msk [vmem:[#allocation4] sm:$0xff] %vm1075, %v1039
      %1148 = vst.msk [vmem:[#allocation4 + $0x8] sm:$0xff] %vm1075, %v1040
      %v1149 = vld [vmem:[#allocation2] sm:$0xff]
      %v1150 = vld [vmem:[#allocation3] sm:$0xff]
      %1152 = vrot.lane.b32.xlu0 %v1149, 112
      %v1153 = vpop.permute.xlu0 %1152
      %1155 = vrot.lane.b32.xlu0 %v1150, 112
      %v1156 = vpop.permute.xlu0 %1155
      %v1158 = vsel %vm983, %v1153, 0
      %v1161 = vsel %vm983, %v1156, 0
      %1163 = vmatprep.subr.bf16.mxu0 0
      %1164 = vmatpush1.bf16.xpose.msra.mxu0 %v1161
      %1165 = vmatprep.subr.bf16.mxu0 0
      %1166 = vmatpush1.bf16.xpose.msra.mxu0 0
      %1167 = vmatprep.subr.bf16.mxu0 0
      %1168 = vmatpush1.bf16.xpose.msra.mxu0 0
      %1169 = vmatprep.subr.bf16.mxu0 0
      %1170 = vmatpush1.bf16.xpose.msra.mxu0 0
      %1171 = vmatprep.subr.bf16.mxu0 0
      %1172 = vmatpush1.bf16.xpose.msra.mxu0 0
      %1173 = vmatprep.subr.bf16.mxu0 0
      %1174 = vmatpush1.bf16.xpose.msra.mxu0 0
      %1175 = vmatprep.subr.bf16.mxu0 0
      %1176 = vmatpush1.bf16.xpose.msra.mxu0 0
      %1177 = vmatprep.subr.bf16.mxu0 0
      %1178 = vmatpush1.bf16.xpose.msra.mxu0 0
      %1179 = vmatprep.subr.bf16.mxu0 0
      %1180 = vmatpush1.bf16.xpose.msra.mxu0 0
      %1181 = vmatprep.subr.bf16.mxu0 0
      %1182 = vmatpush1.bf16.xpose.msra.mxu0 0
      %1183 = vmatprep.subr.bf16.mxu0 0
      %1184 = vmatpush1.bf16.xpose.msra.mxu0 0
      %1185 = vmatprep.subr.bf16.mxu0 0
      %1186 = vmatpush1.bf16.xpose.msra.mxu0 0
      %1187 = vmatprep.subr.bf16.mxu0 0
      %1188 = vmatpush1.bf16.xpose.msra.mxu0 0
      %1189 = vmatprep.subr.bf16.mxu0 0
      %1190 = vmatpush1.bf16.xpose.msra.mxu0 0
      %1191 = vmatprep.subr.bf16.mxu0 0
      %1192 = vmatpush1.bf16.xpose.msra.mxu0 0
      %1193 = vmatprep.subr.bf16.mxu0 0
      %1194 = vmatpush1.bf16.xpose.msra.mxu0 0
      %1195 = vmatprep.mubr.bf16.mxu0 0
      %1196 = vmatmul.mubr.bf16.gmra.mrb[0].mxu0 %v1158
      %v1197 = vpop.f32.mrb[0].mxu0
      %v1198 = vadd.f32 0.0, %v1197
      %v1199 = vpop.f32.mrb[0].mxu0
      %v1200 = vpop.f32.mrb[0].mxu0
      %v1201 = vadd.f32 0.0, %v1200
      %v1202 = vpop.f32.mrb[0].mxu0
      %1203 = vdwg.mxu0
      %v1204 = vld [vmem:[#allocation4] sm:$0xff]
      %v1205 = vld [vmem:[#allocation4 + $0x8] sm:$0xff]
      %v1206 = vsel %vm983, %v1198, -inf
      %1207 = vmax.xlane.f32.xlu0 %v1206
      %v1208 = vpop.xlane.xlu0 %1207
      %v1209 = vsel %vm983, %v1201, -inf
      %1210 = vmax.xlane.f32.xlu0 %v1209
      %v1211 = vpop.xlane.xlu0 %1210
      %v1212 = vmax.f32 %v1204, %v1208
      %v1213 = vmax.f32 %v1205, %v1211
      %v1214 = vsub.f32 %v1204, %v1212
      %v1215 = vsub.f32 %v1205, %v1213
      %v1216 = vmul.f32 %v1214, 1.442695
      %v1217 = vpow.pop %v1216
      %v1218 = vmul.f32 %v1215, 1.442695
      %v1219 = vpow.pop %v1218
      %1221 = vset.pattern.permute.xlu0 1
      %1222 = vperm.xlu0 %1221, %v1212
      %v1223 = vpop.permute.xlu0 %1222
      %1226 = vset.pattern.permute.xlu0 1
      %1227 = vperm.xlu0 %1226, %v1213
      %v1228 = vpop.permute.xlu0 %1227
      %v1230 = vsub.f32 %v1198, %v1223
      %v1231 = vsub.f32 %v1201, %v1228
      %v1232 = vmul.f32 %v1230, 1.442695
      %v1233 = vpow.pop %v1232
      %v1234 = vmul.f32 %v1231, 1.442695
      %v1235 = vpow.pop %v1234
      %v1236 = vld [vmem:[#allocation5] sm:$0xff]
      %v1237 = vld [vmem:[#allocation5 + $0x8] sm:$0xff]
      %v1238 = vmul.f32 %v1217, %v1236
      %v1239 = vmul.f32 %v1219, %v1237
      %v1240 = vsel %vm983, %v1233, 0.0
      %1241 = vadd.xlane.f32.xlu0 %v1240
      %v1242 = vpop.xlane.xlu0 %1241
      %v1243 = vsel %vm983, %v1235, 0.0
      %1244 = vadd.xlane.f32.xlu0 %v1243
      %v1245 = vpop.xlane.xlu0 %1244
      %v1246 = vadd.f32 %v1238, %v1242
      %v1247 = vadd.f32 %v1239, %v1245
      %vm1248 = vcmask 15368
      %1249 = vst.msk [vmem:[#allocation5] sm:$0xff] %vm1248, %v1246
      %1250 = vst.msk [vmem:[#allocation5 + $0x8] sm:$0xff] %vm1248, %v1247
      %v1251 = vld [vmem:[#allocation6] sm:$0xff]
      %v1252 = vld [vmem:[#allocation6 + $0x8] sm:$0xff]
      %1254 = vset.pattern.permute.xlu0 1
      %1255 = vperm.xlu0 %1254, %v1217
      %v1256 = vpop.permute.xlu0 %1255
      %1259 = vset.pattern.permute.xlu0 1
      %1260 = vperm.xlu0 %1259, %v1219
      %v1261 = vpop.permute.xlu0 %1260
      %v1263 = vmul.f32 %v1256, %v1251
      %v1264 = vmul.f32 %v1261, %v1252
      %v1265 = vpack.c.bf16 %v1235, %v1233
      %1266 = vrot.lane.b32.xlu0 %v1097, 112
      %v1267 = vpop.permute.xlu0 %1266
      %v1270 = vsel %vm983, %v1265, 0
      %1272 = vmatprep.subr.bf16.mxu0 0
      %1273 = vmatpush1.bf16.msra.mxu0 %v1267
      %1274 = vmatprep.subr.bf16.mxu0 0
      %1275 = vmatpush1.bf16.msra.mxu0 0
      %1276 = vmatprep.subr.bf16.mxu0 0
      %1277 = vmatpush1.bf16.msra.mxu0 0
      %1278 = vmatprep.subr.bf16.mxu0 0
      %1279 = vmatpush1.bf16.msra.mxu0 0
      %1280 = vmatprep.subr.bf16.mxu0 0
      %1281 = vmatpush1.bf16.msra.mxu0 0
      %1282 = vmatprep.subr.bf16.mxu0 0
      %1283 = vmatpush1.bf16.msra.mxu0 0
      %1284 = vmatprep.subr.bf16.mxu0 0
      %1285 = vmatpush1.bf16.msra.mxu0 0
      %1286 = vmatprep.subr.bf16.mxu0 0
      %1287 = vmatpush1.bf16.msra.mxu0 0
      %1288 = vmatprep.subr.bf16.mxu0 0
      %1289 = vmatpush1.bf16.msra.mxu0 0
      %1290 = vmatprep.subr.bf16.mxu0 0
      %1291 = vmatpush1.bf16.msra.mxu0 0
      %1292 = vmatprep.subr.bf16.mxu0 0
      %1293 = vmatpush1.bf16.msra.mxu0 0
      %1294 = vmatprep.subr.bf16.mxu0 0
      %1295 = vmatpush1.bf16.msra.mxu0 0
      %1296 = vmatprep.subr.bf16.mxu0 0
      %1297 = vmatpush1.bf16.msra.mxu0 0
      %1298 = vmatprep.subr.bf16.mxu0 0
      %1299 = vmatpush1.bf16.msra.mxu0 0
      %1300 = vmatprep.subr.bf16.mxu0 0
      %1301 = vmatpush1.bf16.msra.mxu0 0
      %1302 = vmatprep.subr.bf16.mxu0 0
      %1303 = vmatpush1.bf16.msra.mxu0 0
      %1304 = vmatprep.mubr.bf16.mxu0 0
      %1305 = vmatmul.mubr.bf16.gmra.mrb[0].mxu0 %v1270
      %v1306 = vpop.f32.mrb[0].mxu0
      %v1307 = vadd.f32 0.0, %v1306
      %v1308 = vpop.f32.mrb[0].mxu0
      %v1309 = vpop.f32.mrb[0].mxu0
      %v1310 = vadd.f32 0.0, %v1309
      %v1311 = vpop.f32.mrb[0].mxu0
      %1312 = vdwg.mxu0
      %1315 = vrot.lane.b32.xlu0 %v1307, 16
      %v1316 = vpop.permute.xlu0 %1315
      %1317 = vrot.lane.b32.xlu0 %v1310, 16
      %v1318 = vpop.permute.xlu0 %1317
      %v1321 = vadd.f32 %v1263, %v1316
      %v1322 = vadd.f32 %v1264, %v1318
      %vm1323 = vcmask 261248
      %1324 = vst.msk [vmem:[#allocation6] sm:$0xff] %vm1323, %v1321
      %1325 = vst.msk [vmem:[#allocation6 + $0x8] sm:$0xff] %vm1323, %v1322
      %1326 = vst.msk [vmem:[#allocation4] sm:$0xff] %vm1248, %v1212
      %1327 = vst.msk [vmem:[#allocation4 + $0x8] sm:$0xff] %vm1248, %v1213
      %v1328 = vld [vmem:[#allocation2] sm:$0xff]
      %v1329 = vld [vmem:[#allocation3] sm:$0xff]
      %1331 = vrot.lane.b32.xlu0 %v1328, 96
      %v1332 = vpop.permute.xlu0 %1331
      %1334 = vrot.lane.b32.xlu0 %v1329, 96
      %v1335 = vpop.permute.xlu0 %1334
      %v1337 = vsel %vm983, %v1332, 0
      %v1340 = vsel %vm983, %v1335, 0
      %1342 = vmatprep.subr.bf16.mxu0 0
      %1343 = vmatpush1.bf16.xpose.msra.mxu0 %v1340
      %1344 = vmatprep.subr.bf16.mxu0 0
      %1345 = vmatpush1.bf16.xpose.msra.mxu0 0
      %1346 = vmatprep.subr.bf16.mxu0 0
      %1347 = vmatpush1.bf16.xpose.msra.mxu0 0
      %1348 = vmatprep.subr.bf16.mxu0 0
      %1349 = vmatpush1.bf16.xpose.msra.mxu0 0
      %1350 = vmatprep.subr.bf16.mxu0 0
      %1351 = vmatpush1.bf16.xpose.msra.mxu0 0
      %1352 = vmatprep.subr.bf16.mxu0 0
      %1353 = vmatpush1.bf16.xpose.msra.mxu0 0
      %1354 = vmatprep.subr.bf16.mxu0 0
      %1355 = vmatpush1.bf16.xpose.msra.mxu0 0
      %1356 = vmatprep.subr.bf16.mxu0 0
      %1357 = vmatpush1.bf16.xpose.msra.mxu0 0
      %1358 = vmatprep.subr.bf16.mxu0 0
      %1359 = vmatpush1.bf16.xpose.msra.mxu0 0
      %1360 = vmatprep.subr.bf16.mxu0 0
      %1361 = vmatpush1.bf16.xpose.msra.mxu0 0
      %1362 = vmatprep.subr.bf16.mxu0 0
      %1363 = vmatpush1.bf16.xpose.msra.mxu0 0
      %1364 = vmatprep.subr.bf16.mxu0 0
      %1365 = vmatpush1.bf16.xpose.msra.mxu0 0
      %1366 = vmatprep.subr.bf16.mxu0 0
      %1367 = vmatpush1.bf16.xpose.msra.mxu0 0
      %1368 = vmatprep.subr.bf16.mxu0 0
      %1369 = vmatpush1.bf16.xpose.msra.mxu0 0
      %1370 = vmatprep.subr.bf16.mxu0 0
      %1371 = vmatpush1.bf16.xpose.msra.mxu0 0
      %1372 = vmatprep.subr.bf16.mxu0 0
      %1373 = vmatpush1.bf16.xpose.msra.mxu0 0
      %1374 = vmatprep.mubr.bf16.mxu0 0
      %1375 = vmatmul.mubr.bf16.gmra.mrb[0].mxu0 %v1337
      %v1376 = vpop.f32.mrb[0].mxu0
      %v1377 = vadd.f32 0.0, %v1376
      %v1378 = vpop.f32.mrb[0].mxu0
      %v1379 = vpop.f32.mrb[0].mxu0
      %v1380 = vadd.f32 0.0, %v1379
      %v1381 = vpop.f32.mrb[0].mxu0
      %1382 = vdwg.mxu0
      %v1383 = vld [vmem:[#allocation4] sm:$0xff]
      %v1384 = vld [vmem:[#allocation4 + $0x8] sm:$0xff]
      %v1385 = vsel %vm983, %v1377, -inf
      %1386 = vmax.xlane.f32.xlu0 %v1385
      %v1387 = vpop.xlane.xlu0 %1386
      %v1388 = vsel %vm983, %v1380, -inf
      %1389 = vmax.xlane.f32.xlu0 %v1388
      %v1390 = vpop.xlane.xlu0 %1389
      %v1391 = vmax.f32 %v1383, %v1387
      %v1392 = vmax.f32 %v1384, %v1390
      %v1393 = vsub.f32 %v1383, %v1391
      %v1394 = vsub.f32 %v1384, %v1392
      %v1395 = vmul.f32 %v1393, 1.442695
      %v1396 = vpow.pop %v1395
      %v1397 = vmul.f32 %v1394, 1.442695
      %v1398 = vpow.pop %v1397
      %1400 = vset.pattern.permute.xlu0 2
      %1401 = vperm.xlu0 %1400, %v1391
      %v1402 = vpop.permute.xlu0 %1401
      %1405 = vset.pattern.permute.xlu0 2
      %1406 = vperm.xlu0 %1405, %v1392
      %v1407 = vpop.permute.xlu0 %1406
      %v1409 = vsub.f32 %v1377, %v1402
      %v1410 = vsub.f32 %v1380, %v1407
      %v1411 = vmul.f32 %v1409, 1.442695
      %v1412 = vpow.pop %v1411
      %v1413 = vmul.f32 %v1410, 1.442695
      %v1414 = vpow.pop %v1413
      %v1415 = vld [vmem:[#allocation5] sm:$0xff]
      %v1416 = vld [vmem:[#allocation5 + $0x8] sm:$0xff]
      %v1417 = vmul.f32 %v1396, %v1415
      %v1418 = vmul.f32 %v1398, %v1416
      %v1419 = vsel %vm983, %v1412, 0.0
      %1420 = vadd.xlane.f32.xlu0 %v1419
      %v1421 = vpop.xlane.xlu0 %1420
      %v1422 = vsel %vm983, %v1414, 0.0
      %1423 = vadd.xlane.f32.xlu0 %v1422
      %v1424 = vpop.xlane.xlu0 %1423
      %v1425 = vadd.f32 %v1417, %v1421
      %v1426 = vadd.f32 %v1418, %v1424
      %vm1427 = vcmask 23568
      %1428 = vst.msk [vmem:[#allocation5] sm:$0xff] %vm1427, %v1425
      %1429 = vst.msk [vmem:[#allocation5 + $0x8] sm:$0xff] %vm1427, %v1426
      %v1430 = vld [vmem:[#allocation6] sm:$0xff]
      %v1431 = vld [vmem:[#allocation6 + $0x8] sm:$0xff]
      %1433 = vset.pattern.permute.xlu0 2
      %1434 = vperm.xlu0 %1433, %v1396
      %v1435 = vpop.permute.xlu0 %1434
      %1438 = vset.pattern.permute.xlu0 2
      %1439 = vperm.xlu0 %1438, %v1398
      %v1440 = vpop.permute.xlu0 %1439
      %v1442 = vmul.f32 %v1435, %v1430
      %v1443 = vmul.f32 %v1440, %v1431
      %v1444 = vpack.c.bf16 %v1414, %v1412
      %1445 = vrot.lane.b32.xlu0 %v1097, 96
      %v1446 = vpop.permute.xlu0 %1445
      %v1449 = vsel %vm983, %v1444, 0
      %1451 = vmatprep.subr.bf16.mxu0 0
      %1452 = vmatpush1.bf16.msra.mxu0 %v1446
      %1453 = vmatprep.subr.bf16.mxu0 0
      %1454 = vmatpush1.bf16.msra.mxu0 0
      %1455 = vmatprep.subr.bf16.mxu0 0
      %1456 = vmatpush1.bf16.msra.mxu0 0
      %1457 = vmatprep.subr.bf16.mxu0 0
      %1458 = vmatpush1.bf16.msra.mxu0 0
      %1459 = vmatprep.subr.bf16.mxu0 0
      %1460 = vmatpush1.bf16.msra.mxu0 0
      %1461 = vmatprep.subr.bf16.mxu0 0
      %1462 = vmatpush1.bf16.msra.mxu0 0
      %1463 = vmatprep.subr.bf16.mxu0 0
      %1464 = vmatpush1.bf16.msra.mxu0 0
      %1465 = vmatprep.subr.bf16.mxu0 0
      %1466 = vmatpush1.bf16.msra.mxu0 0
      %1467 = vmatprep.subr.bf16.mxu0 0
      %1468 = vmatpush1.bf16.msra.mxu0 0
      %1469 = vmatprep.subr.bf16.mxu0 0
      %1470 = vmatpush1.bf16.msra.mxu0 0
      %1471 = vmatprep.subr.bf16.mxu0 0
      %1472 = vmatpush1.bf16.msra.mxu0 0
      %1473 = vmatprep.subr.bf16.mxu0 0
      %1474 = vmatpush1.bf16.msra.mxu0 0
      %1475 = vmatprep.subr.bf16.mxu0 0
      %1476 = vmatpush1.bf16.msra.mxu0 0
      %1477 = vmatprep.subr.bf16.mxu0 0
      %1478 = vmatpush1.bf16.msra.mxu0 0
      %1479 = vmatprep.subr.bf16.mxu0 0
      %1480 = vmatpush1.bf16.msra.mxu0 0
      %1481 = vmatprep.subr.bf16.mxu0 0
      %1482 = vmatpush1.bf16.msra.mxu0 0
      %1483 = vmatprep.mubr.bf16.mxu0 0
      %1484 = vmatmul.mubr.bf16.gmra.mrb[0].mxu0 %v1449
      %v1485 = vpop.f32.mrb[0].mxu0
      %v1486 = vadd.f32 0.0, %v1485
      %v1487 = vpop.f32.mrb[0].mxu0
      %v1488 = vpop.f32.mrb[0].mxu0
      %v1489 = vadd.f32 0.0, %v1488
      %v1490 = vpop.f32.mrb[0].mxu0
      %1491 = vdwg.mxu0
      %1494 = vrot.lane.b32.xlu0 %v1486, 32
      %v1495 = vpop.permute.xlu0 %1494
      %1496 = vrot.lane.b32.xlu0 %v1489, 32
      %v1497 = vpop.permute.xlu0 %1496
      %v1500 = vadd.f32 %v1442, %v1495
      %v1501 = vadd.f32 %v1443, %v1497
      %vm1502 = vcmask 392448
      %1503 = vst.msk [vmem:[#allocation6] sm:$0xff] %vm1502, %v1500
      %1504 = vst.msk [vmem:[#allocation6 + $0x8] sm:$0xff] %vm1502, %v1501
      %1505 = vst.msk [vmem:[#allocation4] sm:$0xff] %vm1427, %v1391
      %1506 = vst.msk [vmem:[#allocation4 + $0x8] sm:$0xff] %vm1427, %v1392
      %v1507 = vld [vmem:[#allocation2] sm:$0xff]
      %v1508 = vld [vmem:[#allocation3] sm:$0xff]
      %1510 = vrot.lane.b32.xlu0 %v1507, 80
      %v1511 = vpop.permute.xlu0 %1510
      %1513 = vrot.lane.b32.xlu0 %v1508, 80
      %v1514 = vpop.permute.xlu0 %1513
      %v1516 = vsel %vm983, %v1511, 0
      %v1519 = vsel %vm983, %v1514, 0
      %1521 = vmatprep.subr.bf16.mxu0 0
      %1522 = vmatpush1.bf16.xpose.msra.mxu0 %v1519
      %1523 = vmatprep.subr.bf16.mxu0 0
      %1524 = vmatpush1.bf16.xpose.msra.mxu0 0
      %1525 = vmatprep.subr.bf16.mxu0 0
      %1526 = vmatpush1.bf16.xpose.msra.mxu0 0
      %1527 = vmatprep.subr.bf16.mxu0 0
      %1528 = vmatpush1.bf16.xpose.msra.mxu0 0
      %1529 = vmatprep.subr.bf16.mxu0 0
      %1530 = vmatpush1.bf16.xpose.msra.mxu0 0
      %1531 = vmatprep.subr.bf16.mxu0 0
      %1532 = vmatpush1.bf16.xpose.msra.mxu0 0
      %1533 = vmatprep.subr.bf16.mxu0 0
      %1534 = vmatpush1.bf16.xpose.msra.mxu0 0
      %1535 = vmatprep.subr.bf16.mxu0 0
      %1536 = vmatpush1.bf16.xpose.msra.mxu0 0
      %1537 = vmatprep.subr.bf16.mxu0 0
      %1538 = vmatpush1.bf16.xpose.msra.mxu0 0
      %1539 = vmatprep.subr.bf16.mxu0 0
      %1540 = vmatpush1.bf16.xpose.msra.mxu0 0
      %1541 = vmatprep.subr.bf16.mxu0 0
      %1542 = vmatpush1.bf16.xpose.msra.mxu0 0
      %1543 = vmatprep.subr.bf16.mxu0 0
      %1544 = vmatpush1.bf16.xpose.msra.mxu0 0
      %1545 = vmatprep.subr.bf16.mxu0 0
      %1546 = vmatpush1.bf16.xpose.msra.mxu0 0
      %1547 = vmatprep.subr.bf16.mxu0 0
      %1548 = vmatpush1.bf16.xpose.msra.mxu0 0
      %1549 = vmatprep.subr.bf16.mxu0 0
      %1550 = vmatpush1.bf16.xpose.msra.mxu0 0
      %1551 = vmatprep.subr.bf16.mxu0 0
      %1552 = vmatpush1.bf16.xpose.msra.mxu0 0
      %1553 = vmatprep.mubr.bf16.mxu0 0
      %1554 = vmatmul.mubr.bf16.gmra.mrb[0].mxu0 %v1516
      %v1555 = vpop.f32.mrb[0].mxu0
      %v1556 = vadd.f32 0.0, %v1555
      %v1557 = vpop.f32.mrb[0].mxu0
      %v1558 = vpop.f32.mrb[0].mxu0
      %v1559 = vadd.f32 0.0, %v1558
      %v1560 = vpop.f32.mrb[0].mxu0
      %1561 = vdwg.mxu0
      %v1562 = vld [vmem:[#allocation4] sm:$0xff]
      %v1563 = vld [vmem:[#allocation4 + $0x8] sm:$0xff]
      %v1564 = vsel %vm983, %v1556, -inf
      %1565 = vmax.xlane.f32.xlu0 %v1564
      %v1566 = vpop.xlane.xlu0 %1565
      %v1567 = vsel %vm983, %v1559, -inf
      %1568 = vmax.xlane.f32.xlu0 %v1567
      %v1569 = vpop.xlane.xlu0 %1568
      %v1570 = vmax.f32 %v1562, %v1566
      %v1571 = vmax.f32 %v1563, %v1569
      %v1572 = vsub.f32 %v1562, %v1570
      %v1573 = vsub.f32 %v1563, %v1571
      %v1574 = vmul.f32 %v1572, 1.442695
      %v1575 = vpow.pop %v1574
      %v1576 = vmul.f32 %v1573, 1.442695
      %v1577 = vpow.pop %v1576
      %1579 = vset.pattern.permute.xlu0 3
      %1580 = vperm.xlu0 %1579, %v1570
      %v1581 = vpop.permute.xlu0 %1580
      %1584 = vset.pattern.permute.xlu0 3
      %1585 = vperm.xlu0 %1584, %v1571
      %v1586 = vpop.permute.xlu0 %1585
      %v1588 = vsub.f32 %v1556, %v1581
      %v1589 = vsub.f32 %v1559, %v1586
      %v1590 = vmul.f32 %v1588, 1.442695
      %v1591 = vpow.pop %v1590
      %v1592 = vmul.f32 %v1589, 1.442695
      %v1593 = vpow.pop %v1592
      %v1594 = vld [vmem:[#allocation5] sm:$0xff]
      %v1595 = vld [vmem:[#allocation5 + $0x8] sm:$0xff]
      %v1596 = vmul.f32 %v1575, %v1594
      %v1597 = vmul.f32 %v1577, %v1595
      %v1598 = vsel %vm983, %v1591, 0.0
      %1599 = vadd.xlane.f32.xlu0 %v1598
      %v1600 = vpop.xlane.xlu0 %1599
      %v1601 = vsel %vm983, %v1593, 0.0
      %1602 = vadd.xlane.f32.xlu0 %v1601
      %v1603 = vpop.xlane.xlu0 %1602
      %v1604 = vadd.f32 %v1596, %v1600
      %v1605 = vadd.f32 %v1597, %v1603
      %vm1606 = vcmask 31768
      %1607 = vst.msk [vmem:[#allocation5] sm:$0xff] %vm1606, %v1604
      %1608 = vst.msk [vmem:[#allocation5 + $0x8] sm:$0xff] %vm1606, %v1605
      %v1609 = vld [vmem:[#allocation6] sm:$0xff]
      %v1610 = vld [vmem:[#allocation6 + $0x8] sm:$0xff]
      %1612 = vset.pattern.permute.xlu0 3
      %1613 = vperm.xlu0 %1612, %v1575
      %v1614 = vpop.permute.xlu0 %1613
      %1617 = vset.pattern.permute.xlu0 3
      %1618 = vperm.xlu0 %1617, %v1577
      %v1619 = vpop.permute.xlu0 %1618
      %v1621 = vmul.f32 %v1614, %v1609
      %v1622 = vmul.f32 %v1619, %v1610
      %v1623 = vpack.c.bf16 %v1593, %v1591
      %1624 = vrot.lane.b32.xlu0 %v1097, 80
      %v1625 = vpop.permute.xlu0 %1624
      %v1628 = vsel %vm983, %v1623, 0
      %1630 = vmatprep.subr.bf16.mxu0 0
      %1631 = vmatpush1.bf16.msra.mxu0 %v1625
      %1632 = vmatprep.subr.bf16.mxu0 0
      %1633 = vmatpush1.bf16.msra.mxu0 0
      %1634 = vmatprep.subr.bf16.mxu0 0
      %1635 = vmatpush1.bf16.msra.mxu0 0
      %1636 = vmatprep.subr.bf16.mxu0 0
      %1637 = vmatpush1.bf16.msra.mxu0 0
      %1638 = vmatprep.subr.bf16.mxu0 0
      %1639 = vmatpush1.bf16.msra.mxu0 0
      %1640 = vmatprep.subr.bf16.mxu0 0
      %1641 = vmatpush1.bf16.msra.mxu0 0
      %1642 = vmatprep.subr.bf16.mxu0 0
      %1643 = vmatpush1.bf16.msra.mxu0 0
      %1644 = vmatprep.subr.bf16.mxu0 0
      %1645 = vmatpush1.bf16.msra.mxu0 0
      %1646 = vmatprep.subr.bf16.mxu0 0
      %1647 = vmatpush1.bf16.msra.mxu0 0
      %1648 = vmatprep.subr.bf16.mxu0 0
      %1649 = vmatpush1.bf16.msra.mxu0 0
      %1650 = vmatprep.subr.bf16.mxu0 0
      %1651 = vmatpush1.bf16.msra.mxu0 0
      %1652 = vmatprep.subr.bf16.mxu0 0
      %1653 = vmatpush1.bf16.msra.mxu0 0
      %1654 = vmatprep.subr.bf16.mxu0 0
      %1655 = vmatpush1.bf16.msra.mxu0 0
      %1656 = vmatprep.subr.bf16.mxu0 0
      %1657 = vmatpush1.bf16.msra.mxu0 0
      %1658 = vmatprep.subr.bf16.mxu0 0
      %1659 = vmatpush1.bf16.msra.mxu0 0
      %1660 = vmatprep.subr.bf16.mxu0 0
      %1661 = vmatpush1.bf16.msra.mxu0 0
      %1662 = vmatprep.mubr.bf16.mxu0 0
      %1663 = vmatmul.mubr.bf16.gmra.mrb[0].mxu0 %v1628
      %v1664 = vpop.f32.mrb[0].mxu0
      %v1665 = vadd.f32 0.0, %v1664
      %v1666 = vpop.f32.mrb[0].mxu0
      %v1667 = vpop.f32.mrb[0].mxu0
      %v1668 = vadd.f32 0.0, %v1667
      %v1669 = vpop.f32.mrb[0].mxu0
      %1670 = vdwg.mxu0
      %1673 = vrot.lane.b32.xlu0 %v1665, 48
      %v1674 = vpop.permute.xlu0 %1673
      %1675 = vrot.lane.b32.xlu0 %v1668, 48
      %v1676 = vpop.permute.xlu0 %1675
      %v1679 = vadd.f32 %v1621, %v1674
      %v1680 = vadd.f32 %v1622, %v1676
      %vm1681 = vcmask 523648
      %1682 = vst.msk [vmem:[#allocation6] sm:$0xff] %vm1681, %v1679
      %1683 = vst.msk [vmem:[#allocation6 + $0x8] sm:$0xff] %vm1681, %v1680
      %1684 = vst.msk [vmem:[#allocation4] sm:$0xff] %vm1606, %v1570
      %1685 = vst.msk [vmem:[#allocation4 + $0x8] sm:$0xff] %vm1606, %v1571
      // Predicated region
      $region53: #{run.13} parent=47 // pred_check
        %p1686 = pneg %p551
      $region54: #{run.13} parent=47 // pred_check_branch
        %1688 = sbr.rel (%p1686) target = $region56
      $region55: #{run.13} parent=47 // pred_region
        %v1689 = vld [vmem:[#allocation5] sm:$0xff]
        %v1690 = vld [vmem:[#allocation5 + $0x8] sm:$0xff]
        %v1691 = vrcp.pop %v1689
        %v1692 = vrcp.pop %v1690
        %v1693 = vld [vmem:[#allocation6] sm:$0xff]
        %v1694 = vld [vmem:[#allocation6 + $0x8] sm:$0xff]
        %1696 = vset.pattern.permute.xlu0 0
        %1697 = vperm.xlu0 %1696, %v1691
        %v1698 = vpop.permute.xlu0 %1697
        %1701 = vset.pattern.permute.xlu0 0
        %1702 = vperm.xlu0 %1701, %v1692
        %v1703 = vpop.permute.xlu0 %1702
        %v1705 = vmul.f32 %v1693, %v1698
        %v1706 = vmul.f32 %v1694, %v1703
        %v1707 = vpack.c.bf16 %v1706, %v1705
        %v1709 = vunpack.c.l.b16 %v1707
        %v1710 = vunpack.c.h.b16 %v1707
        %v1711 = vpack.c.b16 %v1709, %v1709
        %v1712 = vpack.c.b16 %v1710, %v1710
        %vm1715 = vcmask 125952
        %1716 = vst.msk [vmem:[%s548] sm:$0xf] %vm1715, %v1711
        %1717 = vst.msk [vmem:[%s548 + $0x4] sm:$0xf] %vm1715, %v1712
        %v1718 = vld [vmem:[#allocation6] sm:$0xff]
        %v1719 = vld [vmem:[#allocation6 + $0x8] sm:$0xff]
        %1720 = vset.pattern.permute.xlu0 1
        %1721 = vperm.xlu0 %1720, %v1691
        %v1722 = vpop.permute.xlu0 %1721
        %1724 = vset.pattern.permute.xlu0 1
        %1725 = vperm.xlu0 %1724, %v1692
        %v1726 = vpop.permute.xlu0 %1725
        %v1728 = vmul.f32 %v1718, %v1722
        %v1729 = vmul.f32 %v1719, %v1726
        %v1730 = vpack.c.bf16 %v1729, %v1728
        %v1732 = vunpack.c.l.b16 %v1730
        %v1733 = vunpack.c.h.b16 %v1730
        %v1734 = vpack.c.b16 %v1732, %v1732
        %v1735 = vpack.c.b16 %v1733, %v1733
        %vm1738 = vcmask 257152
        %1739 = vst.msk [vmem:[%s548] sm:$0xf] %vm1738, %v1734
        %1740 = vst.msk [vmem:[%s548 + $0x4] sm:$0xf] %vm1738, %v1735
        %v1741 = vld [vmem:[#allocation6] sm:$0xff]
        %v1742 = vld [vmem:[#allocation6 + $0x8] sm:$0xff]
        %1743 = vset.pattern.permute.xlu0 2
        %1744 = vperm.xlu0 %1743, %v1691
        %v1745 = vpop.permute.xlu0 %1744
        %1747 = vset.pattern.permute.xlu0 2
        %1748 = vperm.xlu0 %1747, %v1692
        %v1749 = vpop.permute.xlu0 %1748
        %v1751 = vmul.f32 %v1741, %v1745
        %v1752 = vmul.f32 %v1742, %v1749
        %v1753 = vpack.c.bf16 %v1752, %v1751
        %v1755 = vunpack.c.l.b16 %v1753
        %v1756 = vunpack.c.h.b16 %v1753
        %v1757 = vpack.c.b16 %v1755, %v1755
        %v1758 = vpack.c.b16 %v1756, %v1756
        %vm1761 = vcmask 388352
        %1762 = vst.msk [vmem:[%s548] sm:$0xf] %vm1761, %v1757
        %1763 = vst.msk [vmem:[%s548 + $0x4] sm:$0xf] %vm1761, %v1758
        %v1764 = vld [vmem:[#allocation6] sm:$0xff]
        %v1765 = vld [vmem:[#allocation6 + $0x8] sm:$0xff]
        %1766 = vset.pattern.permute.xlu0 3
        %1767 = vperm.xlu0 %1766, %v1691
        %v1768 = vpop.permute.xlu0 %1767
        %1770 = vset.pattern.permute.xlu0 3
        %1771 = vperm.xlu0 %1770, %v1692
        %v1772 = vpop.permute.xlu0 %1771
        %v1774 = vmul.f32 %v1764, %v1768
        %v1775 = vmul.f32 %v1765, %v1772
        %v1776 = vpack.c.bf16 %v1775, %v1774
        %v1778 = vunpack.c.l.b16 %v1776
        %v1779 = vunpack.c.h.b16 %v1776
        %v1780 = vpack.c.b16 %v1778, %v1778
        %v1781 = vpack.c.b16 %v1779, %v1779
        %vm1784 = vcmask 519552
        %1785 = vst.msk [vmem:[%s548] sm:$0xf] %vm1784, %v1780
        %1786 = vst.msk [vmem:[%s548 + $0x4] sm:$0xf] %vm1784, %v1781
      $region56: #{run.13} parent=47 // pred_fallthru
        _
      %s1787 = smul.u32 2, %s24
      %p1788 = scmp.lt.s32.totalorder %s23, 1
      %s1789 = scalar_select %p1788, %s23, 1
      %p1790 = scmp.lt.s32.totalorder %s1787, 1
      %s1791 = scalar_select %p1790, %s1787, 1
      %s1792 = smul.addr %s1789, 2
      %s1793 = sadd.s32 %s1791, %s1792
      %s1794 = smul.addr %s1793, 4
      %s1795 = scalar_lea.vmem %s7, %s1794
      // Predicated region
      $region57: #{run.13} parent=47 // pred_check
        %p1796 = pneg %p253
      $region58: #{run.13} parent=47 // pred_check_branch
        %1798 = sbr.rel (%p1796) target = $region60
      $region59: #{run.13} parent=47 // pred_region
        %s1799 = smul.u32 2, %s24
      $region60: #{run.13} parent=47 // pred_fallthru
        _
    $region48: #{run.13} parent=5 // pred_fallthru
      _
    %p1800 = scmp.le.s32.totalorder 2, %s13
    // Predicated region
    $region61: #{run.13} parent=5 // pred_check
      %p1801 = pneg %p1800
    $region62: #{run.13} parent=5 // pred_check_branch
      %1803 = sbr.rel (%p1801) target = $region64
    $region63: #{run.13} parent=5 // pred_region
      %s1804 = ssub.s32 %s13, 2
      // Predicated region
      $region65: #{run.13} parent=63 // pred_check
        %p1805 = pneg %p259
      $region66: #{run.13} parent=63 // pred_check_branch
        %1807 = sbr.rel (%p1805) target = $region68
      $region67: #{run.13} parent=63 // pred_region
        %s1808 = smul.u32 2, %s27
        %p1809 = scmp.lt.s32.totalorder %s26, 1
        %s1810 = scalar_select %p1809, %s26, 1
        %p1811 = scmp.lt.s32.totalorder %s1808, 1
        %s1812 = scalar_select %p1811, %s1808, 1
        %s1813 = smul.addr %s1810, 2
        %s1814 = sadd.s32 %s1812, %s1813
        %s1815 = smul.addr %s1814, 4
        %s1816 = scalar_lea.vmem %s7, %s1815
      $region68: #{run.13} parent=63 // pred_fallthru
        _
    $region64: #{run.13} parent=5 // pred_fallthru
      _
  $region6: #{run.13} parent=0 // loop_footer
    %s17 = sadd.s32 1, %s13
  $region7: #{run.13} parent=0 // loop_footer_branch
    %12 = sbr.rel target = $region3
  $region8: #{run.13} parent=0 // loop_exit
    _

// kernel: run.17
$region0: #{run.17}
  #allocation0 [shape = 'u32[]', space=smem, size = 0x4, offset = 0x4, fixed_abs, tag = 'smem constant byte address 0x4 - core index']
  #allocation1 [shape = 'u32[144,128]{1,0:T(1,128)}', space=vmem, size = 0x12000, scoped, tag = 'internal scratch']
  %s0 = inlined_call_operand.vmem [shape: bf16[2,16,128], index: 0, kind: input, shape index: {}]
  %s1 = inlined_call_operand.vmem [shape: f32[2,16,32], index: 1, kind: input, shape index: {}]
  %s2 = inlined_call_operand.vmem [shape: f32[2,16,32], index: 2, kind: input, shape index: {}]
  %s3 = inlined_call_operand.vmem [shape: bf16[2,16,64], index: 3, kind: output, shape index: {0}]
  %s4 = inlined_call_operand.vmem [shape: bf16[2,16,64], index: 4, kind: output, shape index: {1}]
  %5 = xla_tuple %s3, %s4
  %s6 = sld [smem:[#allocation0]]
  $region53: #{run.17} parent=0
    _
  %s8 = ssub.s32 1, %s6
  %s9 = scalar_select 0, %s8, %s6
  loop: start=0, step=1, limit=4
  $region2: #{run.17} parent=0 // loop_pre_header
    _
  $region3: #{run.17} parent=0 // loop_header
    %s11 = sphi 0, %s15
    %p12 = scmp.ge.s32.totalorder %s11, 4
    %s18 = sphi 0, %s30
    %s19 = sphi 0, %s26
    %s20 = sphi 0, %s18
    %s21 = sphi 0, %s19
    %s22 = sphi 0, %s20
    %s23 = sphi 0, %s21
    %s35 = sphi 0, %s37
    %s38 = sphi 0, %s35
    %s39 = sphi 0, %s38
    %s55 = sphi 0, %s39
    %s63 = sphi 0, %s65
    %s66 = sphi 0, %s63
    %s67 = sphi 0, %s66
    %s83 = sphi 0, %s67
    %s91 = sphi 0, %s93
    %s94 = sphi 0, %s91
    %s95 = sphi 0, %s94
    %s111 = sphi 0, %s95
    %s119 = sphi 0, %s121
    %s122 = sphi 0, %s119
    %s123 = sphi 0, %s122
    %s139 = sphi 0, %s123
    %s147 = sphi 0, %s149
    %s150 = sphi 0, %s147
    %s151 = sphi 0, %s150
    %s167 = sphi 0, %s151
  $region4: #{run.17} parent=0 // loop_header_branch
    %14 = sbr.rel (%p12) target = $region8
  $region5: #{run.17} parent=0 // loop_body
    %s16 = ssub.s32 %s11, 1
    %s17 = ssub.s32 %s11, 2
    %s24 = sadd.s32 1, %s19
    %p25 = scmp.ge.s32.totalorder %s24, 1
    %s26 = scalar_select %p25, 0, %s24
    %s27 = sadd.s32 1, %s18
    %s28 = scalar_select %p25, %s27, %s18
    %p29 = scmp.ge.s32.totalorder %s28, 2
    %s30 = scalar_select %p29, 0, %s28
    %s31 = ssub.s32 %s18, %s30
    %s32 = ssub.s32 %s19, %s26
    %s33 = sor.u32 %s31, %s32
    %p34 = scmp.eq.s32.totalorder %s33, 0
    %s36 = sadd.s32 %s35, 1
    %s37 = scalar_select %p34, %s35, %s36
    %p40 = pneg %p34
    %p41 = scmp.eq.s32.totalorder %s11, 1
    %p42 = por %p40, %p41
    %p43 = scmp.ne.s32.totalorder %s35, %s38
    %p44 = scmp.eq.s32.totalorder %s11, 0
    %p45 = por %p43, %p44
    %p46 = scmp.ne.s32.totalorder %s35, %s38
    %p47 = scmp.eq.s32.totalorder %s16, 1
    %p48 = por %p46, %p47
    %p49 = scmp.ne.s32.totalorder %s38, %s39
    %p50 = scmp.eq.s32.totalorder %s16, 0
    %p51 = por %p49, %p50
    %p52 = scmp.ne.s32.totalorder %s38, %s39
    %p53 = scmp.eq.s32.totalorder %s17, 1
    %p54 = por %p52, %p53
    %p56 = scmp.ne.s32.totalorder %s39, %s55
    %p57 = scmp.eq.s32.totalorder %s17, 0
    %p58 = por %p56, %p57
    %s59 = ssub.s32 %s18, %s30
    %s60 = ssub.s32 %s19, %s26
    %s61 = sor.u32 %s59, %s60
    %p62 = scmp.eq.s32.totalorder %s61, 0
    %s64 = sadd.s32 %s63, 1
    %s65 = scalar_select %p62, %s63, %s64
    %p68 = pneg %p62
    %p69 = scmp.eq.s32.totalorder %s11, 1
    %p70 = por %p68, %p69
    %p71 = scmp.ne.s32.totalorder %s63, %s66
    %p72 = scmp.eq.s32.totalorder %s11, 0
    %p73 = por %p71, %p72
    %p74 = scmp.ne.s32.totalorder %s63, %s66
    %p75 = scmp.eq.s32.totalorder %s16, 1
    %p76 = por %p74, %p75
    %p77 = scmp.ne.s32.totalorder %s66, %s67
    %p78 = scmp.eq.s32.totalorder %s16, 0
    %p79 = por %p77, %p78
    %p80 = scmp.ne.s32.totalorder %s66, %s67
    %p81 = scmp.eq.s32.totalorder %s17, 1
    %p82 = por %p80, %p81
    %p84 = scmp.ne.s32.totalorder %s67, %s83
    %p85 = scmp.eq.s32.totalorder %s17, 0
    %p86 = por %p84, %p85
    %s87 = ssub.s32 %s18, %s30
    %s88 = ssub.s32 %s19, %s26
    %s89 = sor.u32 %s87, %s88
    %p90 = scmp.eq.s32.totalorder %s89, 0
    %s92 = sadd.s32 %s91, 1
    %s93 = scalar_select %p90, %s91, %s92
    %p96 = pneg %p90
    %p97 = scmp.eq.s32.totalorder %s11, 1
    %p98 = por %p96, %p97
    %p99 = scmp.ne.s32.totalorder %s91, %s94
    %p100 = scmp.eq.s32.totalorder %s11, 0
    %p101 = por %p99, %p100
    %p102 = scmp.ne.s32.totalorder %s91, %s94
    %p103 = scmp.eq.s32.totalorder %s16, 1
    %p104 = por %p102, %p103
    %p105 = scmp.ne.s32.totalorder %s94, %s95
    %p106 = scmp.eq.s32.totalorder %s16, 0
    %p107 = por %p105, %p106
    %p108 = scmp.ne.s32.totalorder %s94, %s95
    %p109 = scmp.eq.s32.totalorder %s17, 1
    %p110 = por %p108, %p109
    %p112 = scmp.ne.s32.totalorder %s95, %s111
    %p113 = scmp.eq.s32.totalorder %s17, 0
    %p114 = por %p112, %p113
    %s115 = ssub.s32 %s18, %s30
    %s116 = ssub.s32 %s19, %s26
    %s117 = sor.u32 %s115, %s116
    %p118 = scmp.eq.s32.totalorder %s117, 0
    %s120 = sadd.s32 %s119, 1
    %s121 = scalar_select %p118, %s119, %s120
    %p124 = pneg %p118
    %p125 = scmp.eq.s32.totalorder %s11, 1
    %p126 = por %p124, %p125
    %p127 = scmp.ne.s32.totalorder %s119, %s122
    %p128 = scmp.eq.s32.totalorder %s11, 0
    %p129 = por %p127, %p128
    %p130 = scmp.ne.s32.totalorder %s119, %s122
    %p131 = scmp.eq.s32.totalorder %s16, 1
    %p132 = por %p130, %p131
    %p133 = scmp.ne.s32.totalorder %s122, %s123
    %p134 = scmp.eq.s32.totalorder %s16, 0
    %p135 = por %p133, %p134
    %p136 = scmp.ne.s32.totalorder %s122, %s123
    %p137 = scmp.eq.s32.totalorder %s17, 1
    %p138 = por %p136, %p137
    %p140 = scmp.ne.s32.totalorder %s123, %s139
    %p141 = scmp.eq.s32.totalorder %s17, 0
    %p142 = por %p140, %p141
    %s143 = ssub.s32 %s18, %s30
    %s144 = ssub.s32 %s19, %s26
    %s145 = sor.u32 %s143, %s144
    %p146 = scmp.eq.s32.totalorder %s145, 0
    %s148 = sadd.s32 %s147, 1
    %s149 = scalar_select %p146, %s147, %s148
    %p152 = pneg %p146
    %p153 = scmp.eq.s32.totalorder %s11, 1
    %p154 = por %p152, %p153
    %p155 = scmp.ne.s32.totalorder %s147, %s150
    %p156 = scmp.eq.s32.totalorder %s11, 0
    %p157 = por %p155, %p156
    %p158 = scmp.ne.s32.totalorder %s147, %s150
    %p159 = scmp.eq.s32.totalorder %s16, 1
    %p160 = por %p158, %p159
    %p161 = scmp.ne.s32.totalorder %s150, %s151
    %p162 = scmp.eq.s32.totalorder %s16, 0
    %p163 = por %p161, %p162
    %p164 = scmp.ne.s32.totalorder %s150, %s151
    %p165 = scmp.eq.s32.totalorder %s17, 1
    %p166 = por %p164, %p165
    %p168 = scmp.ne.s32.totalorder %s151, %s167
    %p169 = scmp.eq.s32.totalorder %s17, 0
    %p170 = por %p168, %p169
    %p171 = scmp.le.s32.totalorder 1, %s11
    %p172 = scmp.lt.s32.totalorder %s11, 3
    %p173 = pnand %p171, %p172
    %p174 = pneg %p173
    // Predicated region
    $region9: #{run.17} parent=5 // pred_check
      _
    $region10: #{run.17} parent=5 // pred_check_branch
      %176 = sbr.rel (%p173) target = $region12
    $region11: #{run.17} parent=5 // pred_region
      %s177 = ssub.s32 %s11, 1
    $region12: #{run.17} parent=5 // pred_fallthru
      _
    %p178 = scmp.lt.s32.totalorder %s11, 2
    // Predicated region
    $region13: #{run.17} parent=5 // pred_check
      %p179 = pneg %p178
    $region14: #{run.17} parent=5 // pred_check_branch
      %181 = sbr.rel (%p179) target = $region16
    $region15: #{run.17} parent=5 // pred_region
      // Predicated region
      $region17: #{run.17} parent=15 // pred_check
        %p182 = pneg %p45
      $region18: #{run.17} parent=15 // pred_check_branch
        %184 = sbr.rel (%p182) target = $region20
      $region19: #{run.17} parent=15 // pred_region
        %s185 = smul.u32 2, %s19
        %p186 = scmp.lt.s32.totalorder %s18, 1
        %s187 = scalar_select %p186, %s18, 1
        %p188 = scmp.lt.s32.totalorder %s185, 1
        %s189 = scalar_select %p188, %s185, 1
        %s190 = smul.addr %s187, 2
        %s191 = sadd.s32 %s189, %s190
        %s192 = smul.addr %s191, 4
        %s193 = scalar_lea.vmem %s0, %s192
        %s194 = smul.u32 2, %s19
      $region20: #{run.17} parent=15 // pred_fallthru
        _
      // Predicated region
      $region21: #{run.17} parent=15 // pred_check
        %p195 = pneg %p73
      $region22: #{run.17} parent=15 // pred_check_branch
        %197 = sbr.rel (%p195) target = $region24
      $region23: #{run.17} parent=15 // pred_region
        %s198 = smul.u32 2, %s19
        %p199 = scmp.lt.s32.totalorder %s18, 1
        %s200 = scalar_select %p199, %s18, 1
        %p201 = scmp.lt.s32.totalorder %s198, 1
        %s202 = scalar_select %p201, %s198, 1
        %s203 = smul.addr %s200, 2
        %s204 = sadd.s32 %s202, %s203
        %s205 = smul.addr %s204, 8
        %s206 = scalar_lea.vmem %s1, %s205
        %s207 = smul.u32 2, %s19
      $region24: #{run.17} parent=15 // pred_fallthru
        _
      // Predicated region
      $region25: #{run.17} parent=15 // pred_check
        %p208 = pneg %p101
      $region26: #{run.17} parent=15 // pred_check_branch
        %210 = sbr.rel (%p208) target = $region28
      $region27: #{run.17} parent=15 // pred_region
        %s211 = smul.u32 2, %s19
        %p212 = scmp.lt.s32.totalorder %s18, 1
        %s213 = scalar_select %p212, %s18, 1
        %p214 = scmp.lt.s32.totalorder %s211, 1
        %s215 = scalar_select %p214, %s211, 1
        %s216 = smul.addr %s213, 2
        %s217 = sadd.s32 %s215, %s216
        %s218 = smul.addr %s217, 8
        %s219 = scalar_lea.vmem %s2, %s218
        %s220 = smul.u32 2, %s19
      $region28: #{run.17} parent=15 // pred_fallthru
        _
    $region16: #{run.17} parent=5 // pred_fallthru
      _
    %p221 = scmp.le.s32.totalorder 1, %s11
    %p222 = scmp.lt.s32.totalorder %s11, 3
    %p223 = pnand %p221, %p222
    %p224 = pneg %p223
    // Predicated region
    $region29: #{run.17} parent=5 // pred_check
      _
    $region30: #{run.17} parent=5 // pred_check_branch
      %226 = sbr.rel (%p223) target = $region32
    $region31: #{run.17} parent=5 // pred_region
      %s227 = ssub.s32 %s11, 1
      %s228 = smul.u32 2, %s21
      %p229 = scmp.lt.s32.totalorder %s20, 1
      %s230 = scalar_select %p229, %s20, 1
      %p231 = scmp.lt.s32.totalorder %s228, 1
      %s232 = scalar_select %p231, %s228, 1
      %s233 = smul.addr %s230, 2
      %s234 = sadd.s32 %s232, %s233
      %s235 = smul.addr %s234, 4
      %s236 = scalar_lea.vmem %s0, %s235
      %p237 = pneg %p51
      %p238 = pneg %p48
      %s239 = smul.u32 2, %s21
      %p240 = scmp.lt.s32.totalorder %s20, 1
      %s241 = scalar_select %p240, %s20, 1
      %p242 = scmp.lt.s32.totalorder %s239, 1
      %s243 = scalar_select %p242, %s239, 1
      %s244 = smul.addr %s241, 2
      %s245 = sadd.s32 %s243, %s244
      %s246 = smul.addr %s245, 8
      %s247 = scalar_lea.vmem %s1, %s246
      %p248 = pneg %p79
      %p249 = pneg %p76
      %s250 = smul.u32 2, %s21
      %p251 = scmp.lt.s32.totalorder %s20, 1
      %s252 = scalar_select %p251, %s20, 1
      %p253 = scmp.lt.s32.totalorder %s250, 1
      %s254 = scalar_select %p253, %s250, 1
      %s255 = smul.addr %s252, 2
      %s256 = sadd.s32 %s254, %s255
      %s257 = smul.addr %s256, 8
      %s258 = scalar_lea.vmem %s2, %s257
      %p259 = pneg %p107
      %p260 = pneg %p104
      %p261 = pneg %p135
      %p262 = pneg %p132
      %s263 = smul.u32 2, %s21
      %p264 = scmp.lt.s32.totalorder %s20, 1
      %s265 = scalar_select %p264, %s20, 1
      %p266 = scmp.lt.s32.totalorder %s263, 1
      %s267 = scalar_select %p266, %s263, 1
      %s268 = smul.addr %s265, 2
      %s269 = sadd.s32 %s267, %s268
      %s270 = smul.addr %s269, 4
      %s271 = scalar_lea.vmem %s3, %s270
      %p272 = pneg %p163
      %p273 = pneg %p160
      %s274 = smul.u32 2, %s21
      %p275 = scmp.lt.s32.totalorder %s20, 1
      %s276 = scalar_select %p275, %s20, 1
      %p277 = scmp.lt.s32.totalorder %s274, 1
      %s278 = scalar_select %p277, %s274, 1
      %s279 = smul.addr %s276, 2
      %s280 = sadd.s32 %s278, %s279
      %s281 = smul.addr %s280, 4
      %s282 = scalar_lea.vmem %s4, %s281
      %s283 = smul.u32 2, %s21
      %p284 = scmp.lt.s32.totalorder %s20, 1
      %s285 = scalar_select %p284, %s20, 1
      %p286 = scmp.lt.s32.totalorder %s283, 1
      %s287 = scalar_select %p286, %s283, 1
      %s288 = smul.addr %s285, 2
      %s289 = sadd.s32 %s287, %s288
      %s290 = smul.addr %s289, 4
      %s291 = scalar_lea.vmem %s0, %s290
      %s292 = smul.u32 2, %s21
      %s293 = smul.u32 2, %s21
      %p294 = scmp.lt.s32.totalorder %s20, 1
      %s295 = scalar_select %p294, %s20, 1
      %p296 = scmp.lt.s32.totalorder %s293, 1
      %s297 = scalar_select %p296, %s293, 1
      %s298 = smul.addr %s295, 2
      %s299 = sadd.s32 %s297, %s298
      %s300 = smul.addr %s299, 8
      %s301 = scalar_lea.vmem %s1, %s300
      %s302 = smul.u32 2, %s21
      %s303 = smul.u32 2, %s21
      %p304 = scmp.lt.s32.totalorder %s20, 1
      %s305 = scalar_select %p304, %s20, 1
      %p306 = scmp.lt.s32.totalorder %s303, 1
      %s307 = scalar_select %p306, %s303, 1
      %s308 = smul.addr %s305, 2
      %s309 = sadd.s32 %s307, %s308
      %s310 = smul.addr %s309, 8
      %s311 = scalar_lea.vmem %s2, %s310
      %s312 = smul.u32 2, %s21
      %s313 = smul.u32 2, %s21
      %p314 = scmp.lt.s32.totalorder %s20, 1
      %s315 = scalar_select %p314, %s20, 1
      %p316 = scmp.lt.s32.totalorder %s313, 1
      %s317 = scalar_select %p316, %s313, 1
      %s318 = smul.addr %s315, 2
      %s319 = sadd.s32 %s317, %s318
      %s320 = smul.addr %s319, 4
      %s321 = scalar_lea.vmem %s3, %s320
      %s322 = smul.u32 2, %s21
      %s323 = smul.u32 2, %s21
      %p324 = scmp.lt.s32.totalorder %s20, 1
      %s325 = scalar_select %p324, %s20, 1
      %p326 = scmp.lt.s32.totalorder %s323, 1
      %s327 = scalar_select %p326, %s323, 1
      %s328 = smul.addr %s325, 2
      %s329 = sadd.s32 %s327, %s328
      %s330 = smul.addr %s329, 4
      %s331 = scalar_lea.vmem %s4, %s330
      %s332 = smul.u32 2, %s21
      %v333 = vld [vmem:[%s291] sm:$0xf]
      %v334 = vld [vmem:[%s291 + $0x4] sm:$0xf]
      %v335 = vunpack.c.l.bf16 %v333
      %v336 = vunpack.c.l.bf16 %v334
      %v337 = vld [vmem:[%s301] sm:$0xff]
      %v338 = vld [vmem:[%s301 + $0x8] sm:$0xff]
      %v339 = vld [vmem:[%s311] sm:$0xff]
      %v340 = vld [vmem:[%s311 + $0x8] sm:$0xff]
      %v341 = vmul.f32 %v335, %v337
      %v342 = vmul.f32 %v336, %v338
      %345 = vrot.lane.b32.xlu0 %v339, 8
      %v346 = vpop.permute.xlu0 %345
      %347 = vrot.lane.b32.xlu0 %v340, 8
      %v348 = vpop.permute.xlu0 %347
      %v351 = vmul.f32 %v335, %v346
      %v352 = vmul.f32 %v336, %v348
      %355 = vrot.lane.b32.xlu0 %v351, 120
      %v356 = vpop.permute.xlu0 %355
      %357 = vrot.lane.b32.xlu0 %v352, 120
      %v358 = vpop.permute.xlu0 %357
      %v361 = vsub.f32 %v341, %v356
      %v362 = vsub.f32 %v342, %v358
      %v363 = vpack.c.bf16 %v362, %v361
      %v365 = vunpack.c.l.b16 %v363
      %v366 = vunpack.c.h.b16 %v363
      %v367 = vpack.c.b16 %v365, %v365
      %v368 = vpack.c.b16 %v366, %v366
      %vm371 = vcmask 60416
      %372 = vst.msk [vmem:[%s321] sm:$0xf] %vm371, %v367
      %373 = vst.msk [vmem:[%s321 + $0x4] sm:$0xf] %vm371, %v368
      %376 = vrot.lane.b32.xlu0 %v337, 8
      %v377 = vpop.permute.xlu0 %376
      %378 = vrot.lane.b32.xlu0 %v338, 8
      %v379 = vpop.permute.xlu0 %378
      %v382 = vmul.f32 %v335, %v377
      %v383 = vmul.f32 %v336, %v379
      %v384 = vmul.f32 %v335, %v339
      %v385 = vmul.f32 %v336, %v340
      %388 = vrot.lane.b32.xlu0 %v384, 8
      %v389 = vpop.permute.xlu0 %388
      %390 = vrot.lane.b32.xlu0 %v385, 8
      %v391 = vpop.permute.xlu0 %390
      %v394 = vadd.f32 %v382, %v389
      %v395 = vadd.f32 %v383, %v391
      %v396 = vpack.c.bf16 %v395, %v394
      %v398 = vunpack.c.l.b16 %v396
      %v399 = vunpack.c.h.b16 %v396
      %v400 = vpack.c.b16 %v398, %v398
      %v401 = vpack.c.b16 %v399, %v399
      %vm404 = vcmask 126016
      %405 = vst.msk [vmem:[%s321] sm:$0xf] %vm404, %v400
      %406 = vst.msk [vmem:[%s321 + $0x4] sm:$0xf] %vm404, %v401
      %407 = vrot.lane.b32.xlu0 %v339, 16
      %v408 = vpop.permute.xlu0 %407
      %409 = vrot.lane.b32.xlu0 %v340, 16
      %v410 = vpop.permute.xlu0 %409
      %v413 = vmul.f32 %v335, %v408
      %v414 = vmul.f32 %v336, %v410
      %417 = vrot.lane.b32.xlu0 %v413, 120
      %v418 = vpop.permute.xlu0 %417
      %419 = vrot.lane.b32.xlu0 %v414, 120
      %v420 = vpop.permute.xlu0 %419
      %v423 = vsub.f32 %v382, %v418
      %v424 = vsub.f32 %v383, %v420
      %v425 = vpack.c.bf16 %v424, %v423
      %v427 = vunpack.c.l.b16 %v425
      %v428 = vunpack.c.h.b16 %v425
      %v429 = vpack.c.b16 %v427, %v427
      %v430 = vpack.c.b16 %v428, %v428
      %vm433 = vcmask 191616
      %434 = vst.msk [vmem:[%s321] sm:$0xf] %vm433, %v429
      %435 = vst.msk [vmem:[%s321 + $0x4] sm:$0xf] %vm433, %v430
      %436 = vrot.lane.b32.xlu0 %v337, 16
      %v437 = vpop.permute.xlu0 %436
      %438 = vrot.lane.b32.xlu0 %v338, 16
      %v439 = vpop.permute.xlu0 %438
      %v442 = vmul.f32 %v335, %v437
      %v443 = vmul.f32 %v336, %v439
      %444 = vrot.lane.b32.xlu0 %v351, 8
      %v445 = vpop.permute.xlu0 %444
      %446 = vrot.lane.b32.xlu0 %v352, 8
      %v447 = vpop.permute.xlu0 %446
      %v450 = vadd.f32 %v442, %v445
      %v451 = vadd.f32 %v443, %v447
      %v452 = vpack.c.bf16 %v451, %v450
      %v454 = vunpack.c.l.b16 %v452
      %v455 = vunpack.c.h.b16 %v452
      %v456 = vpack.c.b16 %v454, %v454
      %v457 = vpack.c.b16 %v455, %v455
      %vm460 = vcmask 257216
      %461 = vst.msk [vmem:[%s321] sm:$0xf] %vm460, %v456
      %462 = vst.msk [vmem:[%s321 + $0x4] sm:$0xf] %vm460, %v457
      %463 = vrot.lane.b32.xlu0 %v339, 24
      %v464 = vpop.permute.xlu0 %463
      %465 = vrot.lane.b32.xlu0 %v340, 24
      %v466 = vpop.permute.xlu0 %465
      %v469 = vmul.f32 %v335, %v464
      %v470 = vmul.f32 %v336, %v466
      %473 = vrot.lane.b32.xlu0 %v469, 120
      %v474 = vpop.permute.xlu0 %473
      %475 = vrot.lane.b32.xlu0 %v470, 120
      %v476 = vpop.permute.xlu0 %475
      %v479 = vsub.f32 %v442, %v474
      %v480 = vsub.f32 %v443, %v476
      %v481 = vpack.c.bf16 %v480, %v479
      %v483 = vunpack.c.l.b16 %v481
      %v484 = vunpack.c.h.b16 %v481
      %v485 = vpack.c.b16 %v483, %v483
      %v486 = vpack.c.b16 %v484, %v484
      %vm489 = vcmask 322816
      %490 = vst.msk [vmem:[%s321] sm:$0xf] %vm489, %v485
      %491 = vst.msk [vmem:[%s321 + $0x4] sm:$0xf] %vm489, %v486
      %492 = vrot.lane.b32.xlu0 %v337, 24
      %v493 = vpop.permute.xlu0 %492
      %494 = vrot.lane.b32.xlu0 %v338, 24
      %v495 = vpop.permute.xlu0 %494
      %v498 = vmul.f32 %v335, %v493
      %v499 = vmul.f32 %v336, %v495
      %500 = vrot.lane.b32.xlu0 %v413, 8
      %v501 = vpop.permute.xlu0 %500
      %502 = vrot.lane.b32.xlu0 %v414, 8
      %v503 = vpop.permute.xlu0 %502
      %v506 = vadd.f32 %v498, %v501
      %v507 = vadd.f32 %v499, %v503
      %v508 = vpack.c.bf16 %v507, %v506
      %v510 = vunpack.c.l.b16 %v508
      %v511 = vunpack.c.h.b16 %v508
      %v512 = vpack.c.b16 %v510, %v510
      %v513 = vpack.c.b16 %v511, %v511
      %vm516 = vcmask 388416
      %517 = vst.msk [vmem:[%s321] sm:$0xf] %vm516, %v512
      %518 = vst.msk [vmem:[%s321 + $0x4] sm:$0xf] %vm516, %v513
      %519 = vrot.lane.b32.xlu0 %v339, 32
      %v520 = vpop.permute.xlu0 %519
      %521 = vrot.lane.b32.xlu0 %v340, 32
      %v522 = vpop.permute.xlu0 %521
      %v525 = vmul.f32 %v335, %v520
      %v526 = vmul.f32 %v336, %v522
      %529 = vrot.lane.b32.xlu0 %v525, 120
      %v530 = vpop.permute.xlu0 %529
      %531 = vrot.lane.b32.xlu0 %v526, 120
      %v532 = vpop.permute.xlu0 %531
      %v535 = vsub.f32 %v498, %v530
      %v536 = vsub.f32 %v499, %v532
      %v537 = vpack.c.bf16 %v536, %v535
      %v539 = vunpack.c.l.b16 %v537
      %v540 = vunpack.c.h.b16 %v537
      %v541 = vpack.c.b16 %v539, %v539
      %v542 = vpack.c.b16 %v540, %v540
      %vm545 = vcmask 454016
      %546 = vst.msk [vmem:[%s321] sm:$0xf] %vm545, %v541
      %547 = vst.msk [vmem:[%s321 + $0x4] sm:$0xf] %vm545, %v542
      %548 = vrot.lane.b32.xlu0 %v337, 32
      %v549 = vpop.permute.xlu0 %548
      %550 = vrot.lane.b32.xlu0 %v338, 32
      %v551 = vpop.permute.xlu0 %550
      %v554 = vmul.f32 %v335, %v549
      %v555 = vmul.f32 %v336, %v551
      %556 = vrot.lane.b32.xlu0 %v469, 8
      %v557 = vpop.permute.xlu0 %556
      %558 = vrot.lane.b32.xlu0 %v470, 8
      %v559 = vpop.permute.xlu0 %558
      %v562 = vadd.f32 %v554, %v557
      %v563 = vadd.f32 %v555, %v559
      %v564 = vpack.c.bf16 %v563, %v562
      %v566 = vunpack.c.l.b16 %v564
      %v567 = vunpack.c.h.b16 %v564
      %v568 = vpack.c.b16 %v566, %v566
      %v569 = vpack.c.b16 %v567, %v567
      %vm572 = vcmask 519616
      %573 = vst.msk [vmem:[%s321] sm:$0xf] %vm572, %v568
      %574 = vst.msk [vmem:[%s321 + $0x4] sm:$0xf] %vm572, %v569
      %577 = vrot.lane.b32.xlu0 %v333, 64
      %v578 = vpop.permute.xlu0 %577
      %579 = vrot.lane.b32.xlu0 %v334, 64
      %v580 = vpop.permute.xlu0 %579
      %vm583 = vcmask 519168
      %584 = vst.msk [vmem:[%s331] sm:$0xf] %vm583, %v578
      %585 = vst.msk [vmem:[%s331 + $0x4] sm:$0xf] %vm583, %v580
      %s586 = smul.u32 2, %s21
      %p587 = scmp.lt.s32.totalorder %s20, 1
      %s588 = scalar_select %p587, %s20, 1
      %p589 = scmp.lt.s32.totalorder %s586, 1
      %s590 = scalar_select %p589, %s586, 1
      %s591 = smul.addr %s588, 2
      %s592 = sadd.s32 %s590, %s591
      %s593 = smul.addr %s592, 4
      %s594 = scalar_lea.vmem %s3, %s593
      %s595 = smul.u32 2, %s21
      %p596 = scmp.lt.s32.totalorder %s20, 1
      %s597 = scalar_select %p596, %s20, 1
      %p598 = scmp.lt.s32.totalorder %s595, 1
      %s599 = scalar_select %p598, %s595, 1
      %s600 = smul.addr %s597, 2
      %s601 = sadd.s32 %s599, %s600
      %s602 = smul.addr %s601, 4
      %s603 = scalar_lea.vmem %s4, %s602
      // Predicated region
      $region33: #{run.17} parent=31 // pred_check
        %p604 = pneg %p132
      $region34: #{run.17} parent=31 // pred_check_branch
        %606 = sbr.rel (%p604) target = $region36
      $region35: #{run.17} parent=31 // pred_region
        %s607 = smul.u32 2, %s21
      $region36: #{run.17} parent=31 // pred_fallthru
        _
      // Predicated region
      $region37: #{run.17} parent=31 // pred_check
        %p608 = pneg %p160
      $region38: #{run.17} parent=31 // pred_check_branch
        %610 = sbr.rel (%p608) target = $region40
      $region39: #{run.17} parent=31 // pred_region
        %s611 = smul.u32 2, %s21
      $region40: #{run.17} parent=31 // pred_fallthru
        _
    $region32: #{run.17} parent=5 // pred_fallthru
      _
    %p612 = scmp.le.s32.totalorder 2, %s11
    // Predicated region
    $region41: #{run.17} parent=5 // pred_check
      %p613 = pneg %p612
    $region42: #{run.17} parent=5 // pred_check_branch
      %615 = sbr.rel (%p613) target = $region44
    $region43: #{run.17} parent=5 // pred_region
      %s616 = ssub.s32 %s11, 2
      // Predicated region
      $region45: #{run.17} parent=43 // pred_check
        %p617 = pneg %p138
      $region46: #{run.17} parent=43 // pred_check_branch
        %619 = sbr.rel (%p617) target = $region48
      $region47: #{run.17} parent=43 // pred_region
        %s620 = smul.u32 2, %s23
        %p621 = scmp.lt.s32.totalorder %s22, 1
        %s622 = scalar_select %p621, %s22, 1
        %p623 = scmp.lt.s32.totalorder %s620, 1
        %s624 = scalar_select %p623, %s620, 1
        %s625 = smul.addr %s622, 2
        %s626 = sadd.s32 %s624, %s625
        %s627 = smul.addr %s626, 4
        %s628 = scalar_lea.vmem %s3, %s627
      $region48: #{run.17} parent=43 // pred_fallthru
        _
      // Predicated region
      $region49: #{run.17} parent=43 // pred_check
        %p629 = pneg %p166
      $region50: #{run.17} parent=43 // pred_check_branch
        %631 = sbr.rel (%p629) target = $region52
      $region51: #{run.17} parent=43 // pred_region
        %s632 = smul.u32 2, %s23
        %p633 = scmp.lt.s32.totalorder %s22, 1
        %s634 = scalar_select %p633, %s22, 1
        %p635 = scmp.lt.s32.totalorder %s632, 1
        %s636 = scalar_select %p635, %s632, 1
        %s637 = smul.addr %s634, 2
        %s638 = sadd.s32 %s636, %s637
        %s639 = smul.addr %s638, 4
        %s640 = scalar_lea.vmem %s4, %s639
      $region52: #{run.17} parent=43 // pred_fallthru
        _
    $region44: #{run.17} parent=5 // pred_fallthru
      _
  $region6: #{run.17} parent=0 // loop_footer
    %s15 = sadd.s32 1, %s11
  $region7: #{run.17} parent=0 // loop_footer_branch
    %10 = sbr.rel target = $region3
  $region8: #{run.17} parent=0 // loop_exit
    _

// kernel: run.21
$region0: #{run.21}
  #allocation0 [shape = 'u32[]', space=smem, size = 0x4, offset = 0x4, fixed_abs, tag = 'smem constant byte address 0x4 - core index']
  #allocation1 [shape = 'u32[144,128]{1,0:T(1,128)}', space=vmem, size = 0x12000, scoped, tag = 'internal scratch']
  %s0 = inlined_call_operand.vmem [shape: f32[32,64], index: 0, kind: input, shape index: {}]
  %s1 = inlined_call_operand.vmem [shape: f32[1,64], index: 1, kind: input, shape index: {}]
  %s2 = inlined_call_operand.vmem [shape: bf16[64,64], index: 2, kind: input, shape index: {}]
  %s3 = inlined_call_operand.hbm [shape: f32[32,64], index: 3, kind: output, shape index: {}]
  %s4 = sld [smem:[#allocation0]]
  $region22: #{run.21} parent=0
    _
  %s6 = ssub.s32 1, %s4
  %s7 = scalar_select 0, %s6, %s4
  $region1: #{run.21} parent=0
    #allocation2 [shape = 'u8[16384]{0}', space=vmem, size = 0x4000, scoped, tag = 'output window, operand 0, single buffered']
    #allocation3 [shape = 's32[1]{0}', space=sflag, size = 0x4, scoped, tag = 'scoped memory for run.21']
    %8 = vsyncpa [#allocation3], 0
    // Predicated region
    $region2: #{run.21} parent=1 // pred_check
      _
    $region3: #{run.21} parent=1 // pred_check_branch
      %10 = sbr.rel (0) target = $region5
    $region4: #{run.21} parent=1 // pred_region
      _
    $region5: #{run.21} parent=1 // pred_fallthru
      _
    // Predicated region
    $region6: #{run.21} parent=1 // pred_check
      _
    $region7: #{run.21} parent=1 // pred_check_branch
      %12 = sbr.rel (0) target = $region9
    $region8: #{run.21} parent=1 // pred_region
      _
    $region9: #{run.21} parent=1 // pred_fallthru
      _
    // Predicated region
    $region10: #{run.21} parent=1 // pred_check
      _
    $region11: #{run.21} parent=1 // pred_check_branch
      %14 = sbr.rel (0) target = $region13
    $region12: #{run.21} parent=1 // pred_region
      _
    $region13: #{run.21} parent=1 // pred_fallthru
      _
    %v16 = vld [vmem:[%s0] sm:$0xff]
    %v17 = vld [vmem:[%s0 + $0x8] sm:$0xff]
    %v18 = vld [vmem:[%s0 + $0x10] sm:$0xff]
    %v19 = vld [vmem:[%s0 + $0x18] sm:$0xff]
    %v20 = vmul.f32 %v16, %v16
    %v21 = vmul.f32 %v17, %v17
    %v22 = vmul.f32 %v18, %v18
    %v23 = vmul.f32 %v19, %v19
    %vm24 = vcmask 523264
    %v25 = vsel %vm24, %v20, 0.0
    %26 = vadd.xlane.f32.xlu0 %v25
    %v27 = vpop.xlane.xlu0 %26
    %v28 = vsel %vm24, %v21, 0.0
    %29 = vadd.xlane.f32.xlu0 %v28
    %v30 = vpop.xlane.xlu0 %29
    %v31 = vsel %vm24, %v22, 0.0
    %32 = vadd.xlane.f32.xlu0 %v31
    %v33 = vpop.xlane.xlu0 %32
    %v34 = vsel %vm24, %v23, 0.0
    %35 = vadd.xlane.f32.xlu0 %v34
    %v36 = vpop.xlane.xlu0 %35
    %v37 = vrcp.pop 64.0
    %v38 = vmul.f32 %v27, %v37
    %v39 = vmul.f32 %v30, %v37
    %v40 = vmul.f32 %v33, %v37
    %v41 = vmul.f32 %v36, %v37
    %v42 = vadd.f32 %v38, 1e-05
    %v43 = vadd.f32 %v39, 1e-05
    %v44 = vadd.f32 %v40, 1e-05
    %v45 = vadd.f32 %v41, 1e-05
    %v46 = vrsqrt.pop %v42
    %v47 = vrsqrt.pop %v43
    %v48 = vrsqrt.pop %v44
    %v49 = vrsqrt.pop %v45
    %v50 = vmul.f32 %v16, %v46
    %v51 = vmul.f32 %v17, %v47
    %v52 = vmul.f32 %v18, %v48
    %v53 = vmul.f32 %v19, %v49
    %v54 = vld [vmem:[%s1] sm:$0x1]
    %v56 = vlaneseq
    %v57 = vshrl.u32 %v56, 7
    %v58 = vsub.s32 0, %v57
    %v59 = vrot.slane %v54, %v58
    %v61 = vmul.f32 %v50, %v59
    %v62 = vmul.f32 %v51, %v59
    %v63 = vmul.f32 %v52, %v59
    %v64 = vmul.f32 %v53, %v59
    %v65 = vpack.c.bf16 %v62, %v61
    %v66 = vpack.c.bf16 %v64, %v63
    %v67 = vld [vmem:[%s2] sm:$0xf]
    %v68 = vld [vmem:[%s2 + $0x4] sm:$0xf]
    %v69 = vld [vmem:[%s2 + $0x8] sm:$0xf]
    %v70 = vld [vmem:[%s2 + $0xc] sm:$0xf]
    %v71 = vld [vmem:[%s2 + $0x10] sm:$0xf]
    %v72 = vld [vmem:[%s2 + $0x14] sm:$0xf]
    %v73 = vld [vmem:[%s2 + $0x18] sm:$0xf]
    %v74 = vld [vmem:[%s2 + $0x1c] sm:$0xf]
    %v83 = vunpack.c.l.b16 %v67
    %v84 = vunpack.c.l.b16 %v68
    %v85 = vunpack.c.l.b16 %v69
    %v86 = vunpack.c.l.b16 %v70
    %v87 = vunpack.c.l.b16 %v71
    %v88 = vunpack.c.l.b16 %v72
    %v89 = vunpack.c.l.b16 %v73
    %v90 = vunpack.c.l.b16 %v74
    %v91 = vpack.c.b16 %v84, %v83
    %v92 = vpack.c.b16 %v86, %v85
    %v93 = vpack.c.b16 %v88, %v87
    %v94 = vpack.c.b16 %v90, %v89
    %v100 = vsel %vm24, %v65, 0
    %v103 = vsel %vm24, %v66, 0
    %105 = vmatprep.subr.bf16.mxu0 0
    %106 = vmatpush1.bf16.msra.mxu0 %v91
    %107 = vmatprep.subr.bf16.mxu0 0
    %108 = vmatpush1.bf16.msra.mxu0 %v92
    %109 = vmatprep.subr.bf16.mxu0 0
    %110 = vmatpush1.bf16.msra.mxu0 %v93
    %111 = vmatprep.subr.bf16.mxu0 0
    %112 = vmatpush1.bf16.msra.mxu0 %v94
    %113 = vmatprep.subr.bf16.mxu0 0
    %114 = vmatpush1.bf16.msra.mxu0 0
    %115 = vmatprep.subr.bf16.mxu0 0
    %116 = vmatpush1.bf16.msra.mxu0 0
    %117 = vmatprep.subr.bf16.mxu0 0
    %118 = vmatpush1.bf16.msra.mxu0 0
    %119 = vmatprep.subr.bf16.mxu0 0
    %120 = vmatpush1.bf16.msra.mxu0 0
    %121 = vmatprep.subr.bf16.mxu0 0
    %122 = vmatpush1.bf16.msra.mxu0 0
    %123 = vmatprep.subr.bf16.mxu0 0
    %124 = vmatpush1.bf16.msra.mxu0 0
    %125 = vmatprep.subr.bf16.mxu0 0
    %126 = vmatpush1.bf16.msra.mxu0 0
    %127 = vmatprep.subr.bf16.mxu0 0
    %128 = vmatpush1.bf16.msra.mxu0 0
    %129 = vmatprep.subr.bf16.mxu0 0
    %130 = vmatpush1.bf16.msra.mxu0 0
    %131 = vmatprep.subr.bf16.mxu0 0
    %132 = vmatpush1.bf16.msra.mxu0 0
    %133 = vmatprep.subr.bf16.mxu0 0
    %134 = vmatpush1.bf16.msra.mxu0 0
    %135 = vmatprep.subr.bf16.mxu0 0
    %136 = vmatpush1.bf16.msra.mxu0 0
    %137 = vmatprep.mubr.bf16.mxu0 0
    %138 = vmatmul.mubr.bf16.gmra.mrb[0].mxu0 %v100
    %v139 = vpop.f32.mrb[0].mxu0
    %v140 = vadd.f32 0.0, %v139
    %v141 = vpop.f32.mrb[0].mxu0
    %v142 = vpop.f32.mrb[0].mxu0
    %v143 = vadd.f32 0.0, %v142
    %v144 = vpop.f32.mrb[0].mxu0
    %145 = vmatprep.mubr.bf16.mxu0 0
    %146 = vmatmul.mubr.bf16.gmra.mrb[0].mxu0 %v103
    %v147 = vpop.f32.mrb[0].mxu0
    %v148 = vadd.f32 0.0, %v147
    %v149 = vpop.f32.mrb[0].mxu0
    %v150 = vpop.f32.mrb[0].mxu0
    %v151 = vadd.f32 0.0, %v150
    %v152 = vpop.f32.mrb[0].mxu0
    %153 = vdwg.mxu0
    %154 = vst.msk [vmem:[#allocation2] sm:$0xff] %vm24, %v140
    %155 = vst.msk [vmem:[#allocation2 + $0x8] sm:$0xff] %vm24, %v143
    %156 = vst.msk [vmem:[#allocation2 + $0x10] sm:$0xff] %vm24, %v148
    %157 = vst.msk [vmem:[#allocation2 + $0x18] sm:$0xff] %vm24, %v151
    // Predicated region
    $region14: #{run.21} parent=1 // pred_check
      _
    $region15: #{run.21} parent=1 // pred_check_branch
      %159 = sbr.rel (0) target = $region17
    $region16: #{run.21} parent=1 // pred_region
      %s161 = ssub.s32 512, 512
      %162 = vsyncadd [#allocation3], %s161
      %s163 = sshll.u32 [#allocation2], 4
      %s164 = int_to_ptr.vmem [resolvable:$true] %s163
      %169 = dma.vmem_to_hbm [thread:$0]  %s164, 512, %s3, [#allocation3], 128, 128, 8
    $region17: #{run.21} parent=1 // pred_fallthru
      _
    // Predicated region
    $region18: #{run.21} parent=1 // pred_check
      _
    $region19: #{run.21} parent=1 // pred_check_branch
      %171 = sbr.rel (0) target = $region21
    $region20: #{run.21} parent=1 // pred_region
      %172 = dma.done [#allocation3], 512
    $region21: #{run.21} parent=1 // pred_fallthru
      _
    %173 = vsyncpa [#allocation3], 1

// kernel: run.18
$region0: #{run.18}
  #allocation0 [shape = 'u32[]', space=smem, size = 0x4, offset = 0x4, fixed_abs, tag = 'smem constant byte address 0x4 - core index']
  #allocation1 [shape = 'u32[144,128]{1,0:T(1,128)}', space=vmem, size = 0x12000, scoped, tag = 'internal scratch']
  #allocation2 [shape = 'bf16[16,64]{1,0:T(16,128)(2,1)}', space=vmem, size = 0x1000, scoped, tag = 'scratch operand']
  #allocation3 [shape = 'f32[16,4]{1,0:T(8,128)}', space=vmem, size = 0x2000, scoped, tag = 'scratch operand']
  #allocation4 [shape = 'f32[16,4]{1,0:T(8,128)}', space=vmem, size = 0x2000, scoped, tag = 'scratch operand']
  #allocation5 [shape = 'f32[16,64]{1,0:T(8,128)}', space=vmem, size = 0x2000, scoped, tag = 'scratch operand']
  %s0 = inlined_call_operand.vmem [shape: bf16[2,16,64], index: 0, kind: input, shape index: {}]
  %s1 = inlined_call_operand.vmem [shape: bf16[2,16,64], index: 1, kind: input, shape index: {}]
  %s2 = inlined_call_operand.vmem [shape: bf16[2,16,64], index: 2, kind: input, shape index: {}]
  %s3 = inlined_call_operand.vmem [shape: f32[2,16,32], index: 3, kind: input, shape index: {}]
  %s4 = inlined_call_operand.vmem [shape: f32[2,16,32], index: 4, kind: input, shape index: {}]
  %s5 = inlined_call_operand.vmem [shape: bf16[2,16,64], index: 5, kind: output, shape index: {}]
  %s6 = sld [smem:[#allocation0]]
  $region61: #{run.18} parent=0
    _
  %s8 = ssub.s32 1, %s6
  %s9 = scalar_select 0, %s8, %s6
  loop: start=0, step=1, limit=4
  $region2: #{run.18} parent=0 // loop_pre_header
    _
  $region3: #{run.18} parent=0 // loop_header
    %s11 = sphi 0, %s15
    %p12 = scmp.ge.s32.totalorder %s11, 4
    %s18 = sphi 0, %s37
    %s19 = sphi 0, %s33
    %s20 = sphi 0, %s29
    %s21 = sphi 0, %s18
    %s22 = sphi 0, %s19
    %s23 = sphi 0, %s20
    %s24 = sphi 0, %s21
    %s25 = sphi 0, %s22
    %s26 = sphi 0, %s23
    %s42 = sphi 0, %s44
    %s45 = sphi 0, %s42
    %s46 = sphi 0, %s45
    %s62 = sphi 0, %s46
    %s70 = sphi 0, %s72
    %s73 = sphi 0, %s70
    %s74 = sphi 0, %s73
    %s90 = sphi 0, %s74
    %s98 = sphi 0, %s100
    %s101 = sphi 0, %s98
    %s102 = sphi 0, %s101
    %s118 = sphi 0, %s102
    %s126 = sphi 0, %s128
    %s129 = sphi 0, %s126
    %s130 = sphi 0, %s129
    %s146 = sphi 0, %s130
    %s154 = sphi 0, %s156
    %s157 = sphi 0, %s154
    %s158 = sphi 0, %s157
    %s174 = sphi 0, %s158
    %s182 = sphi 0, %s184
    %s185 = sphi 0, %s182
    %s186 = sphi 0, %s185
    %s202 = sphi 0, %s186
  $region4: #{run.18} parent=0 // loop_header_branch
    %14 = sbr.rel (%p12) target = $region8
  $region5: #{run.18} parent=0 // loop_body
    %s16 = ssub.s32 %s11, 1
    %s17 = ssub.s32 %s11, 2
    %s27 = sadd.s32 1, %s20
    %p28 = scmp.ge.s32.totalorder %s27, 1
    %s29 = scalar_select %p28, 0, %s27
    %s30 = sadd.s32 1, %s19
    %s31 = scalar_select %p28, %s30, %s19
    %p32 = scmp.ge.s32.totalorder %s31, 1
    %s33 = scalar_select %p32, 0, %s31
    %s34 = sadd.s32 1, %s18
    %s35 = scalar_select %p32, %s34, %s18
    %p36 = scmp.ge.s32.totalorder %s35, 2
    %s37 = scalar_select %p36, 0, %s35
    %s38 = ssub.s32 %s18, %s37
    %s39 = ssub.s32 %s19, %s33
    %s40 = sor.u32 %s38, %s39
    %p41 = scmp.eq.s32.totalorder %s40, 0
    %s43 = sadd.s32 %s42, 1
    %s44 = scalar_select %p41, %s42, %s43
    %p47 = pneg %p41
    %p48 = scmp.eq.s32.totalorder %s11, 1
    %p49 = por %p47, %p48
    %p50 = scmp.ne.s32.totalorder %s42, %s45
    %p51 = scmp.eq.s32.totalorder %s11, 0
    %p52 = por %p50, %p51
    %p53 = scmp.ne.s32.totalorder %s42, %s45
    %p54 = scmp.eq.s32.totalorder %s16, 1
    %p55 = por %p53, %p54
    %p56 = scmp.ne.s32.totalorder %s45, %s46
    %p57 = scmp.eq.s32.totalorder %s16, 0
    %p58 = por %p56, %p57
    %p59 = scmp.ne.s32.totalorder %s45, %s46
    %p60 = scmp.eq.s32.totalorder %s17, 1
    %p61 = por %p59, %p60
    %p63 = scmp.ne.s32.totalorder %s46, %s62
    %p64 = scmp.eq.s32.totalorder %s17, 0
    %p65 = por %p63, %p64
    %s66 = ssub.s32 %s18, %s37
    %s67 = ssub.s32 %s20, %s29
    %s68 = sor.u32 %s66, %s67
    %p69 = scmp.eq.s32.totalorder %s68, 0
    %s71 = sadd.s32 %s70, 1
    %s72 = scalar_select %p69, %s70, %s71
    %p75 = pneg %p69
    %p76 = scmp.eq.s32.totalorder %s11, 1
    %p77 = por %p75, %p76
    %p78 = scmp.ne.s32.totalorder %s70, %s73
    %p79 = scmp.eq.s32.totalorder %s11, 0
    %p80 = por %p78, %p79
    %p81 = scmp.ne.s32.totalorder %s70, %s73
    %p82 = scmp.eq.s32.totalorder %s16, 1
    %p83 = por %p81, %p82
    %p84 = scmp.ne.s32.totalorder %s73, %s74
    %p85 = scmp.eq.s32.totalorder %s16, 0
    %p86 = por %p84, %p85
    %p87 = scmp.ne.s32.totalorder %s73, %s74
    %p88 = scmp.eq.s32.totalorder %s17, 1
    %p89 = por %p87, %p88
    %p91 = scmp.ne.s32.totalorder %s74, %s90
    %p92 = scmp.eq.s32.totalorder %s17, 0
    %p93 = por %p91, %p92
    %s94 = ssub.s32 %s18, %s37
    %s95 = ssub.s32 %s20, %s29
    %s96 = sor.u32 %s94, %s95
    %p97 = scmp.eq.s32.totalorder %s96, 0
    %s99 = sadd.s32 %s98, 1
    %s100 = scalar_select %p97, %s98, %s99
    %p103 = pneg %p97
    %p104 = scmp.eq.s32.totalorder %s11, 1
    %p105 = por %p103, %p104
    %p106 = scmp.ne.s32.totalorder %s98, %s101
    %p107 = scmp.eq.s32.totalorder %s11, 0
    %p108 = por %p106, %p107
    %p109 = scmp.ne.s32.totalorder %s98, %s101
    %p110 = scmp.eq.s32.totalorder %s16, 1
    %p111 = por %p109, %p110
    %p112 = scmp.ne.s32.totalorder %s101, %s102
    %p113 = scmp.eq.s32.totalorder %s16, 0
    %p114 = por %p112, %p113
    %p115 = scmp.ne.s32.totalorder %s101, %s102
    %p116 = scmp.eq.s32.totalorder %s17, 1
    %p117 = por %p115, %p116
    %p119 = scmp.ne.s32.totalorder %s102, %s118
    %p120 = scmp.eq.s32.totalorder %s17, 0
    %p121 = por %p119, %p120
    %s122 = ssub.s32 %s18, %s37
    %s123 = ssub.s32 %s19, %s33
    %s124 = sor.u32 %s122, %s123
    %p125 = scmp.eq.s32.totalorder %s124, 0
    %s127 = sadd.s32 %s126, 1
    %s128 = scalar_select %p125, %s126, %s127
    %p131 = pneg %p125
    %p132 = scmp.eq.s32.totalorder %s11, 1
    %p133 = por %p131, %p132
    %p134 = scmp.ne.s32.totalorder %s126, %s129
    %p135 = scmp.eq.s32.totalorder %s11, 0
    %p136 = por %p134, %p135
    %p137 = scmp.ne.s32.totalorder %s126, %s129
    %p138 = scmp.eq.s32.totalorder %s16, 1
    %p139 = por %p137, %p138
    %p140 = scmp.ne.s32.totalorder %s129, %s130
    %p141 = scmp.eq.s32.totalorder %s16, 0
    %p142 = por %p140, %p141
    %p143 = scmp.ne.s32.totalorder %s129, %s130
    %p144 = scmp.eq.s32.totalorder %s17, 1
    %p145 = por %p143, %p144
    %p147 = scmp.ne.s32.totalorder %s130, %s146
    %p148 = scmp.eq.s32.totalorder %s17, 0
    %p149 = por %p147, %p148
    %s150 = ssub.s32 %s18, %s37
    %s151 = ssub.s32 %s19, %s33
    %s152 = sor.u32 %s150, %s151
    %p153 = scmp.eq.s32.totalorder %s152, 0
    %s155 = sadd.s32 %s154, 1
    %s156 = scalar_select %p153, %s154, %s155
    %p159 = pneg %p153
    %p160 = scmp.eq.s32.totalorder %s11, 1
    %p161 = por %p159, %p160
    %p162 = scmp.ne.s32.totalorder %s154, %s157
    %p163 = scmp.eq.s32.totalorder %s11, 0
    %p164 = por %p162, %p163
    %p165 = scmp.ne.s32.totalorder %s154, %s157
    %p166 = scmp.eq.s32.totalorder %s16, 1
    %p167 = por %p165, %p166
    %p168 = scmp.ne.s32.totalorder %s157, %s158
    %p169 = scmp.eq.s32.totalorder %s16, 0
    %p170 = por %p168, %p169
    %p171 = scmp.ne.s32.totalorder %s157, %s158
    %p172 = scmp.eq.s32.totalorder %s17, 1
    %p173 = por %p171, %p172
    %p175 = scmp.ne.s32.totalorder %s158, %s174
    %p176 = scmp.eq.s32.totalorder %s17, 0
    %p177 = por %p175, %p176
    %s178 = ssub.s32 %s18, %s37
    %s179 = ssub.s32 %s19, %s33
    %s180 = sor.u32 %s178, %s179
    %p181 = scmp.eq.s32.totalorder %s180, 0
    %s183 = sadd.s32 %s182, 1
    %s184 = scalar_select %p181, %s182, %s183
    %p187 = pneg %p181
    %p188 = scmp.eq.s32.totalorder %s11, 1
    %p189 = por %p187, %p188
    %p190 = scmp.ne.s32.totalorder %s182, %s185
    %p191 = scmp.eq.s32.totalorder %s11, 0
    %p192 = por %p190, %p191
    %p193 = scmp.ne.s32.totalorder %s182, %s185
    %p194 = scmp.eq.s32.totalorder %s16, 1
    %p195 = por %p193, %p194
    %p196 = scmp.ne.s32.totalorder %s185, %s186
    %p197 = scmp.eq.s32.totalorder %s16, 0
    %p198 = por %p196, %p197
    %p199 = scmp.ne.s32.totalorder %s185, %s186
    %p200 = scmp.eq.s32.totalorder %s17, 1
    %p201 = por %p199, %p200
    %p203 = scmp.ne.s32.totalorder %s186, %s202
    %p204 = scmp.eq.s32.totalorder %s17, 0
    %p205 = por %p203, %p204
    %p206 = scmp.le.s32.totalorder 1, %s11
    %p207 = scmp.lt.s32.totalorder %s11, 3
    %p208 = pnand %p206, %p207
    %p209 = pneg %p208
    // Predicated region
    $region9: #{run.18} parent=5 // pred_check
      _
    $region10: #{run.18} parent=5 // pred_check_branch
      %211 = sbr.rel (%p208) target = $region12
    $region11: #{run.18} parent=5 // pred_region
      %s212 = ssub.s32 %s11, 1
    $region12: #{run.18} parent=5 // pred_fallthru
      _
    %p213 = scmp.lt.s32.totalorder %s11, 2
    // Predicated region
    $region13: #{run.18} parent=5 // pred_check
      %p214 = pneg %p213
    $region14: #{run.18} parent=5 // pred_check_branch
      %216 = sbr.rel (%p214) target = $region16
    $region15: #{run.18} parent=5 // pred_region
      // Predicated region
      $region17: #{run.18} parent=15 // pred_check
        %p217 = pneg %p52
      $region18: #{run.18} parent=15 // pred_check_branch
        %219 = sbr.rel (%p217) target = $region20
      $region19: #{run.18} parent=15 // pred_region
        %s220 = smul.u32 2, %s19
        %p221 = scmp.lt.s32.totalorder %s18, 1
        %s222 = scalar_select %p221, %s18, 1
        %p223 = scmp.lt.s32.totalorder %s220, 1
        %s224 = scalar_select %p223, %s220, 1
        %s225 = smul.addr %s222, 2
        %s226 = sadd.s32 %s224, %s225
        %s227 = smul.addr %s226, 4
        %s228 = scalar_lea.vmem %s0, %s227
        %s229 = smul.u32 2, %s19
      $region20: #{run.18} parent=15 // pred_fallthru
        _
      // Predicated region
      $region21: #{run.18} parent=15 // pred_check
        %p230 = pneg %p80
      $region22: #{run.18} parent=15 // pred_check_branch
        %232 = sbr.rel (%p230) target = $region24
      $region23: #{run.18} parent=15 // pred_region
        %s233 = smul.u32 2, %s20
        %p234 = scmp.lt.s32.totalorder %s18, 1
        %s235 = scalar_select %p234, %s18, 1
        %p236 = scmp.lt.s32.totalorder %s233, 1
        %s237 = scalar_select %p236, %s233, 1
        %s238 = smul.addr %s235, 2
        %s239 = sadd.s32 %s237, %s238
        %s240 = smul.addr %s239, 4
        %s241 = scalar_lea.vmem %s1, %s240
        %s242 = smul.u32 2, %s20
      $region24: #{run.18} parent=15 // pred_fallthru
        _
      // Predicated region
      $region25: #{run.18} parent=15 // pred_check
        %p243 = pneg %p108
      $region26: #{run.18} parent=15 // pred_check_branch
        %245 = sbr.rel (%p243) target = $region28
      $region27: #{run.18} parent=15 // pred_region
        %s246 = smul.u32 2, %s20
        %p247 = scmp.lt.s32.totalorder %s18, 1
        %s248 = scalar_select %p247, %s18, 1
        %p249 = scmp.lt.s32.totalorder %s246, 1
        %s250 = scalar_select %p249, %s246, 1
        %s251 = smul.addr %s248, 2
        %s252 = sadd.s32 %s250, %s251
        %s253 = smul.addr %s252, 4
        %s254 = scalar_lea.vmem %s2, %s253
        %s255 = smul.u32 2, %s20
      $region28: #{run.18} parent=15 // pred_fallthru
        _
      // Predicated region
      $region29: #{run.18} parent=15 // pred_check
        %p256 = pneg %p136
      $region30: #{run.18} parent=15 // pred_check_branch
        %258 = sbr.rel (%p256) target = $region32
      $region31: #{run.18} parent=15 // pred_region
        %s259 = smul.u32 2, %s19
        %p260 = scmp.lt.s32.totalorder %s18, 1
        %s261 = scalar_select %p260, %s18, 1
        %p262 = scmp.lt.s32.totalorder %s259, 1
        %s263 = scalar_select %p262, %s259, 1
        %s264 = smul.addr %s261, 2
        %s265 = sadd.s32 %s263, %s264
        %s266 = smul.addr %s265, 8
        %s267 = scalar_lea.vmem %s3, %s266
        %s268 = smul.u32 2, %s19
      $region32: #{run.18} parent=15 // pred_fallthru
        _
      // Predicated region
      $region33: #{run.18} parent=15 // pred_check
        %p269 = pneg %p164
      $region34: #{run.18} parent=15 // pred_check_branch
        %271 = sbr.rel (%p269) target = $region36
      $region35: #{run.18} parent=15 // pred_region
        %s272 = smul.u32 2, %s19
        %p273 = scmp.lt.s32.totalorder %s18, 1
        %s274 = scalar_select %p273, %s18, 1
        %p275 = scmp.lt.s32.totalorder %s272, 1
        %s276 = scalar_select %p275, %s272, 1
        %s277 = smul.addr %s274, 2
        %s278 = sadd.s32 %s276, %s277
        %s279 = smul.addr %s278, 8
        %s280 = scalar_lea.vmem %s4, %s279
        %s281 = smul.u32 2, %s19
      $region36: #{run.18} parent=15 // pred_fallthru
        _
    $region16: #{run.18} parent=5 // pred_fallthru
      _
    %p282 = scmp.le.s32.totalorder 1, %s11
    %p283 = scmp.lt.s32.totalorder %s11, 3
    %p284 = pnand %p282, %p283
    %p285 = pneg %p284
    // Predicated region
    $region37: #{run.18} parent=5 // pred_check
      _
    $region38: #{run.18} parent=5 // pred_check_branch
      %287 = sbr.rel (%p284) target = $region40
    $region39: #{run.18} parent=5 // pred_region
      %s288 = ssub.s32 %s11, 1
      %s289 = smul.u32 2, %s22
      %p290 = scmp.lt.s32.totalorder %s21, 1
      %s291 = scalar_select %p290, %s21, 1
      %p292 = scmp.lt.s32.totalorder %s289, 1
      %s293 = scalar_select %p292, %s289, 1
      %s294 = smul.addr %s291, 2
      %s295 = sadd.s32 %s293, %s294
      %s296 = smul.addr %s295, 4
      %s297 = scalar_lea.vmem %s0, %s296
      %p298 = pneg %p58
      %p299 = pneg %p55
      %s300 = smul.u32 2, %s23
      %p301 = scmp.lt.s32.totalorder %s21, 1
      %s302 = scalar_select %p301, %s21, 1
      %p303 = scmp.lt.s32.totalorder %s300, 1
      %s304 = scalar_select %p303, %s300, 1
      %s305 = smul.addr %s302, 2
      %s306 = sadd.s32 %s304, %s305
      %s307 = smul.addr %s306, 4
      %s308 = scalar_lea.vmem %s1, %s307
      %p309 = pneg %p86
      %p310 = pneg %p83
      %s311 = smul.u32 2, %s23
      %p312 = scmp.lt.s32.totalorder %s21, 1
      %s313 = scalar_select %p312, %s21, 1
      %p314 = scmp.lt.s32.totalorder %s311, 1
      %s315 = scalar_select %p314, %s311, 1
      %s316 = smul.addr %s313, 2
      %s317 = sadd.s32 %s315, %s316
      %s318 = smul.addr %s317, 4
      %s319 = scalar_lea.vmem %s2, %s318
      %p320 = pneg %p114
      %p321 = pneg %p111
      %s322 = smul.u32 2, %s22
      %p323 = scmp.lt.s32.totalorder %s21, 1
      %s324 = scalar_select %p323, %s21, 1
      %p325 = scmp.lt.s32.totalorder %s322, 1
      %s326 = scalar_select %p325, %s322, 1
      %s327 = smul.addr %s324, 2
      %s328 = sadd.s32 %s326, %s327
      %s329 = smul.addr %s328, 8
      %s330 = scalar_lea.vmem %s3, %s329
      %p331 = pneg %p142
      %p332 = pneg %p139
      %s333 = smul.u32 2, %s22
      %p334 = scmp.lt.s32.totalorder %s21, 1
      %s335 = scalar_select %p334, %s21, 1
      %p336 = scmp.lt.s32.totalorder %s333, 1
      %s337 = scalar_select %p336, %s333, 1
      %s338 = smul.addr %s335, 2
      %s339 = sadd.s32 %s337, %s338
      %s340 = smul.addr %s339, 8
      %s341 = scalar_lea.vmem %s4, %s340
      %p342 = pneg %p170
      %p343 = pneg %p167
      %p344 = pneg %p198
      %p345 = pneg %p195
      %s346 = smul.u32 2, %s22
      %p347 = scmp.lt.s32.totalorder %s21, 1
      %s348 = scalar_select %p347, %s21, 1
      %p349 = scmp.lt.s32.totalorder %s346, 1
      %s350 = scalar_select %p349, %s346, 1
      %s351 = smul.addr %s348, 2
      %s352 = sadd.s32 %s350, %s351
      %s353 = smul.addr %s352, 4
      %s354 = scalar_lea.vmem %s5, %s353
      %s355 = smul.u32 2, %s22
      %p356 = scmp.lt.s32.totalorder %s21, 1
      %s357 = scalar_select %p356, %s21, 1
      %p358 = scmp.lt.s32.totalorder %s355, 1
      %s359 = scalar_select %p358, %s355, 1
      %s360 = smul.addr %s357, 2
      %s361 = sadd.s32 %s359, %s360
      %s362 = smul.addr %s361, 4
      %s363 = scalar_lea.vmem %s0, %s362
      %s364 = smul.u32 2, %s22
      %s365 = smul.u32 2, %s23
      %p366 = scmp.lt.s32.totalorder %s21, 1
      %s367 = scalar_select %p366, %s21, 1
      %p368 = scmp.lt.s32.totalorder %s365, 1
      %s369 = scalar_select %p368, %s365, 1
      %s370 = smul.addr %s367, 2
      %s371 = sadd.s32 %s369, %s370
      %s372 = smul.addr %s371, 4
      %s373 = scalar_lea.vmem %s1, %s372
      %s374 = smul.u32 2, %s23
      %s375 = smul.u32 2, %s23
      %p376 = scmp.lt.s32.totalorder %s21, 1
      %s377 = scalar_select %p376, %s21, 1
      %p378 = scmp.lt.s32.totalorder %s375, 1
      %s379 = scalar_select %p378, %s375, 1
      %s380 = smul.addr %s377, 2
      %s381 = sadd.s32 %s379, %s380
      %s382 = smul.addr %s381, 4
      %s383 = scalar_lea.vmem %s2, %s382
      %s384 = smul.u32 2, %s23
      %s385 = smul.u32 2, %s22
      %p386 = scmp.lt.s32.totalorder %s21, 1
      %s387 = scalar_select %p386, %s21, 1
      %p388 = scmp.lt.s32.totalorder %s385, 1
      %s389 = scalar_select %p388, %s385, 1
      %s390 = smul.addr %s387, 2
      %s391 = sadd.s32 %s389, %s390
      %s392 = smul.addr %s391, 8
      %s393 = scalar_lea.vmem %s3, %s392
      %s394 = smul.u32 2, %s22
      %s395 = smul.u32 2, %s22
      %p396 = scmp.lt.s32.totalorder %s21, 1
      %s397 = scalar_select %p396, %s21, 1
      %p398 = scmp.lt.s32.totalorder %s395, 1
      %s399 = scalar_select %p398, %s395, 1
      %s400 = smul.addr %s397, 2
      %s401 = sadd.s32 %s399, %s400
      %s402 = smul.addr %s401, 8
      %s403 = scalar_lea.vmem %s4, %s402
      %s404 = smul.u32 2, %s22
      %s405 = smul.u32 2, %s22
      %p406 = scmp.lt.s32.totalorder %s21, 1
      %s407 = scalar_select %p406, %s21, 1
      %p408 = scmp.lt.s32.totalorder %s405, 1
      %s409 = scalar_select %p408, %s405, 1
      %s410 = smul.addr %s407, 2
      %s411 = sadd.s32 %s409, %s410
      %s412 = smul.addr %s411, 4
      %s413 = scalar_lea.vmem %s5, %s412
      %s414 = smul.u32 2, %s22
      %p416 = scmp.eq.s32.totalorder %s23, 0
      // Predicated region
      $region41: #{run.18} parent=39 // pred_check
        %p417 = pneg %p416
      $region42: #{run.18} parent=39 // pred_check_branch
        %419 = sbr.rel (%p417) target = $region44
      $region43: #{run.18} parent=39 // pred_region
        %v420 = vld [vmem:[%s363] sm:$0xf]
        %v421 = vld [vmem:[%s363 + $0x4] sm:$0xf]
        %v422 = vunpack.c.l.bf16 %v420
        %v423 = vunpack.c.l.bf16 %v421
        %v424 = vld [vmem:[%s393] sm:$0xff]
        %v425 = vld [vmem:[%s393 + $0x8] sm:$0xff]
        %v426 = vld [vmem:[%s403] sm:$0xff]
        %v427 = vld [vmem:[%s403 + $0x8] sm:$0xff]
        %v428 = vmul.f32 %v422, %v424
        %v429 = vmul.f32 %v423, %v425
        %432 = vrot.lane.b32.xlu0 %v426, 8
        %v433 = vpop.permute.xlu0 %432
        %434 = vrot.lane.b32.xlu0 %v427, 8
        %v435 = vpop.permute.xlu0 %434
        %v438 = vmul.f32 %v422, %v433
        %v439 = vmul.f32 %v423, %v435
        %442 = vrot.lane.b32.xlu0 %v438, 120
        %v443 = vpop.permute.xlu0 %442
        %444 = vrot.lane.b32.xlu0 %v439, 120
        %v445 = vpop.permute.xlu0 %444
        %v448 = vsub.f32 %v428, %v443
        %v449 = vsub.f32 %v429, %v445
        %452 = vrot.lane.b32.xlu0 %v424, 8
        %v453 = vpop.permute.xlu0 %452
        %454 = vrot.lane.b32.xlu0 %v425, 8
        %v455 = vpop.permute.xlu0 %454
        %v458 = vmul.f32 %v422, %v453
        %v459 = vmul.f32 %v423, %v455
        %v460 = vmul.f32 %v422, %v426
        %v461 = vmul.f32 %v423, %v427
        %464 = vrot.lane.b32.xlu0 %v460, 8
        %v465 = vpop.permute.xlu0 %464
        %466 = vrot.lane.b32.xlu0 %v461, 8
        %v467 = vpop.permute.xlu0 %466
        %v470 = vadd.f32 %v458, %v465
        %v471 = vadd.f32 %v459, %v467
        %v472 = vmul.f32 %v448, 0.25
        %v473 = vmul.f32 %v449, 0.25
        %v474 = vmul.f32 %v470, 0.25
        %v475 = vmul.f32 %v471, 0.25
        %v476 = vpack.c.bf16 %v473, %v472
        %vm477 = vcmask 64512
        %478 = vst.msk [vmem:[#allocation2] sm:$0xff] %vm477, %v476
        %v479 = vpack.c.bf16 %v475, %v474
        %vm480 = vcmask 130112
        %481 = vst.msk [vmem:[#allocation2] sm:$0xff] %vm480, %v479
        %482 = vrot.lane.b32.xlu0 %v426, 16
        %v483 = vpop.permute.xlu0 %482
        %484 = vrot.lane.b32.xlu0 %v427, 16
        %v485 = vpop.permute.xlu0 %484
        %v488 = vmul.f32 %v422, %v483
        %v489 = vmul.f32 %v423, %v485
        %492 = vrot.lane.b32.xlu0 %v488, 120
        %v493 = vpop.permute.xlu0 %492
        %494 = vrot.lane.b32.xlu0 %v489, 120
        %v495 = vpop.permute.xlu0 %494
        %v498 = vsub.f32 %v458, %v493
        %v499 = vsub.f32 %v459, %v495
        %500 = vrot.lane.b32.xlu0 %v424, 16
        %v501 = vpop.permute.xlu0 %500
        %502 = vrot.lane.b32.xlu0 %v425, 16
        %v503 = vpop.permute.xlu0 %502
        %v506 = vmul.f32 %v422, %v501
        %v507 = vmul.f32 %v423, %v503
        %508 = vrot.lane.b32.xlu0 %v438, 8
        %v509 = vpop.permute.xlu0 %508
        %510 = vrot.lane.b32.xlu0 %v439, 8
        %v511 = vpop.permute.xlu0 %510
        %v514 = vadd.f32 %v506, %v509
        %v515 = vadd.f32 %v507, %v511
        %v516 = vmul.f32 %v498, 0.25
        %v517 = vmul.f32 %v499, 0.25
        %v518 = vmul.f32 %v514, 0.25
        %v519 = vmul.f32 %v515, 0.25
        %v520 = vpack.c.bf16 %v517, %v516
        %vm521 = vcmask 195712
        %522 = vst.msk [vmem:[#allocation2] sm:$0xff] %vm521, %v520
        %v523 = vpack.c.bf16 %v519, %v518
        %vm524 = vcmask 261312
        %525 = vst.msk [vmem:[#allocation2] sm:$0xff] %vm524, %v523
        %526 = vrot.lane.b32.xlu0 %v426, 24
        %v527 = vpop.permute.xlu0 %526
        %528 = vrot.lane.b32.xlu0 %v427, 24
        %v529 = vpop.permute.xlu0 %528
        %v532 = vmul.f32 %v422, %v527
        %v533 = vmul.f32 %v423, %v529
        %536 = vrot.lane.b32.xlu0 %v532, 120
        %v537 = vpop.permute.xlu0 %536
        %538 = vrot.lane.b32.xlu0 %v533, 120
        %v539 = vpop.permute.xlu0 %538
        %v542 = vsub.f32 %v506, %v537
        %v543 = vsub.f32 %v507, %v539
        %544 = vrot.lane.b32.xlu0 %v424, 24
        %v545 = vpop.permute.xlu0 %544
        %546 = vrot.lane.b32.xlu0 %v425, 24
        %v547 = vpop.permute.xlu0 %546
        %v550 = vmul.f32 %v422, %v545
        %v551 = vmul.f32 %v423, %v547
        %552 = vrot.lane.b32.xlu0 %v488, 8
        %v553 = vpop.permute.xlu0 %552
        %554 = vrot.lane.b32.xlu0 %v489, 8
        %v555 = vpop.permute.xlu0 %554
        %v558 = vadd.f32 %v550, %v553
        %v559 = vadd.f32 %v551, %v555
        %v560 = vmul.f32 %v542, 0.25
        %v561 = vmul.f32 %v543, 0.25
        %v562 = vmul.f32 %v558, 0.25
        %v563 = vmul.f32 %v559, 0.25
        %v564 = vpack.c.bf16 %v561, %v560
        %vm565 = vcmask 326912
        %566 = vst.msk [vmem:[#allocation2] sm:$0xff] %vm565, %v564
        %v567 = vpack.c.bf16 %v563, %v562
        %vm568 = vcmask 392512
        %569 = vst.msk [vmem:[#allocation2] sm:$0xff] %vm568, %v567
        %570 = vrot.lane.b32.xlu0 %v426, 32
        %v571 = vpop.permute.xlu0 %570
        %572 = vrot.lane.b32.xlu0 %v427, 32
        %v573 = vpop.permute.xlu0 %572
        %v576 = vmul.f32 %v422, %v571
        %v577 = vmul.f32 %v423, %v573
        %580 = vrot.lane.b32.xlu0 %v576, 120
        %v581 = vpop.permute.xlu0 %580
        %582 = vrot.lane.b32.xlu0 %v577, 120
        %v583 = vpop.permute.xlu0 %582
        %v586 = vsub.f32 %v550, %v581
        %v587 = vsub.f32 %v551, %v583
        %588 = vrot.lane.b32.xlu0 %v424, 32
        %v589 = vpop.permute.xlu0 %588
        %590 = vrot.lane.b32.xlu0 %v425, 32
        %v591 = vpop.permute.xlu0 %590
        %v594 = vmul.f32 %v422, %v589
        %v595 = vmul.f32 %v423, %v591
        %596 = vrot.lane.b32.xlu0 %v532, 8
        %v597 = vpop.permute.xlu0 %596
        %598 = vrot.lane.b32.xlu0 %v533, 8
        %v599 = vpop.permute.xlu0 %598
        %v602 = vadd.f32 %v594, %v597
        %v603 = vadd.f32 %v595, %v599
        %v604 = vmul.f32 %v586, 0.25
        %v605 = vmul.f32 %v587, 0.25
        %v606 = vmul.f32 %v602, 0.25
        %v607 = vmul.f32 %v603, 0.25
        %v608 = vpack.c.bf16 %v605, %v604
        %vm609 = vcmask 458112
        %610 = vst.msk [vmem:[#allocation2] sm:$0xff] %vm609, %v608
        %v611 = vpack.c.bf16 %v607, %v606
        %vm612 = vcmask 523712
        %613 = vst.msk [vmem:[#allocation2] sm:$0xff] %vm612, %v611
        %vm614 = vcmask 31744
        %615 = vst.msk [vmem:[#allocation3] sm:$0xff] %vm614, -inf
        %616 = vst.msk [vmem:[#allocation3 + $0x8] sm:$0xff] %vm614, -inf
        %617 = vst.msk [vmem:[#allocation4] sm:$0xff] %vm614, 0.0
        %618 = vst.msk [vmem:[#allocation4 + $0x8] sm:$0xff] %vm614, 0.0
        %vm619 = vcmask 523264
        %620 = vst.msk [vmem:[#allocation5] sm:$0xff] %vm619, 0.0
        %621 = vst.msk [vmem:[#allocation5 + $0x8] sm:$0xff] %vm619, 0.0
      $region44: #{run.18} parent=39 // pred_fallthru
        _
      %v622 = vld [vmem:[%s373] sm:$0xf]
      %v623 = vld [vmem:[%s373 + $0x4] sm:$0xf]
      %v624 = vld [vmem:[%s383] sm:$0xf]
      %v625 = vld [vmem:[%s383 + $0x4] sm:$0xf]
      %v626 = vld [vmem:[#allocation2] sm:$0xff]
      %v629 = vunpack.c.l.b16 %v622
      %v630 = vunpack.c.l.b16 %v623
      %v631 = vpack.c.b16 %v630, %v629
      %vm632 = vcmask 130048
      %v634 = vsel %vm632, %v626, 0
      %v637 = vsel %vm632, %v631, 0
      %639 = vmatprep.subr.bf16.mxu0 0
      %640 = vmatpush1.bf16.xpose.msra.mxu0 %v637
      %641 = vmatprep.subr.bf16.mxu0 0
      %642 = vmatpush1.bf16.xpose.msra.mxu0 0
      %643 = vmatprep.subr.bf16.mxu0 0
      %644 = vmatpush1.bf16.xpose.msra.mxu0 0
      %645 = vmatprep.subr.bf16.mxu0 0
      %646 = vmatpush1.bf16.xpose.msra.mxu0 0
      %647 = vmatprep.subr.bf16.mxu0 0
      %648 = vmatpush1.bf16.xpose.msra.mxu0 0
      %649 = vmatprep.subr.bf16.mxu0 0
      %650 = vmatpush1.bf16.xpose.msra.mxu0 0
      %651 = vmatprep.subr.bf16.mxu0 0
      %652 = vmatpush1.bf16.xpose.msra.mxu0 0
      %653 = vmatprep.subr.bf16.mxu0 0
      %654 = vmatpush1.bf16.xpose.msra.mxu0 0
      %655 = vmatprep.subr.bf16.mxu0 0
      %656 = vmatpush1.bf16.xpose.msra.mxu0 0
      %657 = vmatprep.subr.bf16.mxu0 0
      %658 = vmatpush1.bf16.xpose.msra.mxu0 0
      %659 = vmatprep.subr.bf16.mxu0 0
      %660 = vmatpush1.bf16.xpose.msra.mxu0 0
      %661 = vmatprep.subr.bf16.mxu0 0
      %662 = vmatpush1.bf16.xpose.msra.mxu0 0
      %663 = vmatprep.subr.bf16.mxu0 0
      %664 = vmatpush1.bf16.xpose.msra.mxu0 0
      %665 = vmatprep.subr.bf16.mxu0 0
      %666 = vmatpush1.bf16.xpose.msra.mxu0 0
      %667 = vmatprep.subr.bf16.mxu0 0
      %668 = vmatpush1.bf16.xpose.msra.mxu0 0
      %669 = vmatprep.subr.bf16.mxu0 0
      %670 = vmatpush1.bf16.xpose.msra.mxu0 0
      %671 = vmatprep.mubr.bf16.mxu0 0
      %672 = vmatmul.mubr.bf16.gmra.mrb[0].mxu0 %v634
      %v673 = vpop.f32.mrb[0].mxu0
      %v674 = vadd.f32 0.0, %v673
      %v675 = vpop.f32.mrb[0].mxu0
      %v676 = vpop.f32.mrb[0].mxu0
      %v677 = vadd.f32 0.0, %v676
      %v678 = vpop.f32.mrb[0].mxu0
      %679 = vdwg.mxu0
      %v680 = vld [vmem:[#allocation3] sm:$0xff]
      %v681 = vld [vmem:[#allocation3 + $0x8] sm:$0xff]
      %v682 = vsel %vm632, %v674, -inf
      %683 = vmax.xlane.f32.xlu0 %v682
      %v684 = vpop.xlane.xlu0 %683
      %v685 = vsel %vm632, %v677, -inf
      %686 = vmax.xlane.f32.xlu0 %v685
      %v687 = vpop.xlane.xlu0 %686
      %v688 = vmax.f32 %v680, %v684
      %v689 = vmax.f32 %v681, %v687
      %v690 = vsub.f32 %v680, %v688
      %v691 = vsub.f32 %v681, %v689
      %v692 = vmul.f32 %v690, 1.442695
      %v693 = vpow.pop %v692
      %v694 = vmul.f32 %v691, 1.442695
      %v695 = vpow.pop %v694
      %697 = vset.pattern.permute.xlu0 0
      %698 = vperm.xlu0 %697, %v688
      %v699 = vpop.permute.xlu0 %698
      %702 = vset.pattern.permute.xlu0 0
      %703 = vperm.xlu0 %702, %v689
      %v704 = vpop.permute.xlu0 %703
      %v706 = vsub.f32 %v674, %v699
      %v707 = vsub.f32 %v677, %v704
      %v708 = vmul.f32 %v706, 1.442695
      %v709 = vpow.pop %v708
      %v710 = vmul.f32 %v707, 1.442695
      %v711 = vpow.pop %v710
      %v712 = vld [vmem:[#allocation4] sm:$0xff]
      %v713 = vld [vmem:[#allocation4 + $0x8] sm:$0xff]
      %v714 = vmul.f32 %v693, %v712
      %v715 = vmul.f32 %v695, %v713
      %v716 = vsel %vm632, %v709, 0.0
      %717 = vadd.xlane.f32.xlu0 %v716
      %v718 = vpop.xlane.xlu0 %717
      %v719 = vsel %vm632, %v711, 0.0
      %720 = vadd.xlane.f32.xlu0 %v719
      %v721 = vpop.xlane.xlu0 %720
      %v722 = vadd.f32 %v714, %v718
      %v723 = vadd.f32 %v715, %v721
      %vm724 = vcmask 7168
      %725 = vst.msk [vmem:[#allocation4] sm:$0xff] %vm724, %v722
      %726 = vst.msk [vmem:[#allocation4 + $0x8] sm:$0xff] %vm724, %v723
      %v727 = vld [vmem:[#allocation5] sm:$0xff]
      %v728 = vld [vmem:[#allocation5 + $0x8] sm:$0xff]
      %730 = vset.pattern.permute.xlu0 0
      %731 = vperm.xlu0 %730, %v693
      %v732 = vpop.permute.xlu0 %731
      %735 = vset.pattern.permute.xlu0 0
      %736 = vperm.xlu0 %735, %v695
      %v737 = vpop.permute.xlu0 %736
      %v739 = vmul.f32 %v732, %v727
      %v740 = vmul.f32 %v737, %v728
      %v741 = vpack.c.bf16 %v711, %v709
      %v744 = vunpack.c.l.b16 %v624
      %v745 = vunpack.c.l.b16 %v625
      %v746 = vpack.c.b16 %v745, %v744
      %v749 = vsel %vm632, %v741, 0
      %751 = vmatprep.subr.bf16.mxu0 0
      %752 = vmatpush1.bf16.msra.mxu0 %v746
      %753 = vmatprep.subr.bf16.mxu0 0
      %754 = vmatpush1.bf16.msra.mxu0 0
      %755 = vmatprep.subr.bf16.mxu0 0
      %756 = vmatpush1.bf16.msra.mxu0 0
      %757 = vmatprep.subr.bf16.mxu0 0
      %758 = vmatpush1.bf16.msra.mxu0 0
      %759 = vmatprep.subr.bf16.mxu0 0
      %760 = vmatpush1.bf16.msra.mxu0 0
      %761 = vmatprep.subr.bf16.mxu0 0
      %762 = vmatpush1.bf16.msra.mxu0 0
      %763 = vmatprep.subr.bf16.mxu0 0
      %764 = vmatpush1.bf16.msra.mxu0 0
      %765 = vmatprep.subr.bf16.mxu0 0
      %766 = vmatpush1.bf16.msra.mxu0 0
      %767 = vmatprep.subr.bf16.mxu0 0
      %768 = vmatpush1.bf16.msra.mxu0 0
      %769 = vmatprep.subr.bf16.mxu0 0
      %770 = vmatpush1.bf16.msra.mxu0 0
      %771 = vmatprep.subr.bf16.mxu0 0
      %772 = vmatpush1.bf16.msra.mxu0 0
      %773 = vmatprep.subr.bf16.mxu0 0
      %774 = vmatpush1.bf16.msra.mxu0 0
      %775 = vmatprep.subr.bf16.mxu0 0
      %776 = vmatpush1.bf16.msra.mxu0 0
      %777 = vmatprep.subr.bf16.mxu0 0
      %778 = vmatpush1.bf16.msra.mxu0 0
      %779 = vmatprep.subr.bf16.mxu0 0
      %780 = vmatpush1.bf16.msra.mxu0 0
      %781 = vmatprep.subr.bf16.mxu0 0
      %782 = vmatpush1.bf16.msra.mxu0 0
      %783 = vmatprep.mubr.bf16.mxu0 0
      %784 = vmatmul.mubr.bf16.gmra.mrb[0].mxu0 %v749
      %v785 = vpop.f32.mrb[0].mxu0
      %v786 = vadd.f32 0.0, %v785
      %v787 = vpop.f32.mrb[0].mxu0
      %v788 = vpop.f32.mrb[0].mxu0
      %v789 = vadd.f32 0.0, %v788
      %v790 = vpop.f32.mrb[0].mxu0
      %791 = vdwg.mxu0
      %v792 = vadd.f32 %v739, %v786
      %v793 = vadd.f32 %v740, %v789
      %794 = vst.msk [vmem:[#allocation5] sm:$0xff] %vm632, %v792
      %795 = vst.msk [vmem:[#allocation5 + $0x8] sm:$0xff] %vm632, %v793
      %796 = vst.msk [vmem:[#allocation3] sm:$0xff] %vm724, %v688
      %797 = vst.msk [vmem:[#allocation3 + $0x8] sm:$0xff] %vm724, %v689
      %v798 = vld [vmem:[#allocation2] sm:$0xff]
      %800 = vrot.lane.b32.xlu0 %v798, 112
      %v801 = vpop.permute.xlu0 %800
      %802 = vrot.lane.b32.xlu0 %v631, 112
      %v803 = vpop.permute.xlu0 %802
      %v805 = vsel %vm632, %v801, 0
      %v808 = vsel %vm632, %v803, 0
      %810 = vmatprep.subr.bf16.mxu0 0
      %811 = vmatpush1.bf16.xpose.msra.mxu0 %v808
      %812 = vmatprep.subr.bf16.mxu0 0
      %813 = vmatpush1.bf16.xpose.msra.mxu0 0
      %814 = vmatprep.subr.bf16.mxu0 0
      %815 = vmatpush1.bf16.xpose.msra.mxu0 0
      %816 = vmatprep.subr.bf16.mxu0 0
      %817 = vmatpush1.bf16.xpose.msra.mxu0 0
      %818 = vmatprep.subr.bf16.mxu0 0
      %819 = vmatpush1.bf16.xpose.msra.mxu0 0
      %820 = vmatprep.subr.bf16.mxu0 0
      %821 = vmatpush1.bf16.xpose.msra.mxu0 0
      %822 = vmatprep.subr.bf16.mxu0 0
      %823 = vmatpush1.bf16.xpose.msra.mxu0 0
      %824 = vmatprep.subr.bf16.mxu0 0
      %825 = vmatpush1.bf16.xpose.msra.mxu0 0
      %826 = vmatprep.subr.bf16.mxu0 0
      %827 = vmatpush1.bf16.xpose.msra.mxu0 0
      %828 = vmatprep.subr.bf16.mxu0 0
      %829 = vmatpush1.bf16.xpose.msra.mxu0 0
      %830 = vmatprep.subr.bf16.mxu0 0
      %831 = vmatpush1.bf16.xpose.msra.mxu0 0
      %832 = vmatprep.subr.bf16.mxu0 0
      %833 = vmatpush1.bf16.xpose.msra.mxu0 0
      %834 = vmatprep.subr.bf16.mxu0 0
      %835 = vmatpush1.bf16.xpose.msra.mxu0 0
      %836 = vmatprep.subr.bf16.mxu0 0
      %837 = vmatpush1.bf16.xpose.msra.mxu0 0
      %838 = vmatprep.subr.bf16.mxu0 0
      %839 = vmatpush1.bf16.xpose.msra.mxu0 0
      %840 = vmatprep.subr.bf16.mxu0 0
      %841 = vmatpush1.bf16.xpose.msra.mxu0 0
      %842 = vmatprep.mubr.bf16.mxu0 0
      %843 = vmatmul.mubr.bf16.gmra.mrb[0].mxu0 %v805
      %v844 = vpop.f32.mrb[0].mxu0
      %v845 = vadd.f32 0.0, %v844
      %v846 = vpop.f32.mrb[0].mxu0
      %v847 = vpop.f32.mrb[0].mxu0
      %v848 = vadd.f32 0.0, %v847
      %v849 = vpop.f32.mrb[0].mxu0
      %850 = vdwg.mxu0
      %v851 = vld [vmem:[#allocation3] sm:$0xff]
      %v852 = vld [vmem:[#allocation3 + $0x8] sm:$0xff]
      %v853 = vsel %vm632, %v845, -inf
      %854 = vmax.xlane.f32.xlu0 %v853
      %v855 = vpop.xlane.xlu0 %854
      %v856 = vsel %vm632, %v848, -inf
      %857 = vmax.xlane.f32.xlu0 %v856
      %v858 = vpop.xlane.xlu0 %857
      %v859 = vmax.f32 %v851, %v855
      %v860 = vmax.f32 %v852, %v858
      %v861 = vsub.f32 %v851, %v859
      %v862 = vsub.f32 %v852, %v860
      %v863 = vmul.f32 %v861, 1.442695
      %v864 = vpow.pop %v863
      %v865 = vmul.f32 %v862, 1.442695
      %v866 = vpow.pop %v865
      %868 = vset.pattern.permute.xlu0 1
      %869 = vperm.xlu0 %868, %v859
      %v870 = vpop.permute.xlu0 %869
      %873 = vset.pattern.permute.xlu0 1
      %874 = vperm.xlu0 %873, %v860
      %v875 = vpop.permute.xlu0 %874
      %v877 = vsub.f32 %v845, %v870
      %v878 = vsub.f32 %v848, %v875
      %v879 = vmul.f32 %v877, 1.442695
      %v880 = vpow.pop %v879
      %v881 = vmul.f32 %v878, 1.442695
      %v882 = vpow.pop %v881
      %v883 = vld [vmem:[#allocation4] sm:$0xff]
      %v884 = vld [vmem:[#allocation4 + $0x8] sm:$0xff]
      %v885 = vmul.f32 %v864, %v883
      %v886 = vmul.f32 %v866, %v884
      %v887 = vsel %vm632, %v880, 0.0
      %888 = vadd.xlane.f32.xlu0 %v887
      %v889 = vpop.xlane.xlu0 %888
      %v890 = vsel %vm632, %v882, 0.0
      %891 = vadd.xlane.f32.xlu0 %v890
      %v892 = vpop.xlane.xlu0 %891
      %v893 = vadd.f32 %v885, %v889
      %v894 = vadd.f32 %v886, %v892
      %vm895 = vcmask 15368
      %896 = vst.msk [vmem:[#allocation4] sm:$0xff] %vm895, %v893
      %897 = vst.msk [vmem:[#allocation4 + $0x8] sm:$0xff] %vm895, %v894
      %v898 = vld [vmem:[#allocation5] sm:$0xff]
      %v899 = vld [vmem:[#allocation5 + $0x8] sm:$0xff]
      %901 = vset.pattern.permute.xlu0 1
      %902 = vperm.xlu0 %901, %v864
      %v903 = vpop.permute.xlu0 %902
      %906 = vset.pattern.permute.xlu0 1
      %907 = vperm.xlu0 %906, %v866
      %v908 = vpop.permute.xlu0 %907
      %v910 = vmul.f32 %v903, %v898
      %v911 = vmul.f32 %v908, %v899
      %v912 = vpack.c.bf16 %v882, %v880
      %913 = vrot.lane.b32.xlu0 %v746, 112
      %v914 = vpop.permute.xlu0 %913
      %v917 = vsel %vm632, %v912, 0
      %919 = vmatprep.subr.bf16.mxu0 0
      %920 = vmatpush1.bf16.msra.mxu0 %v914
      %921 = vmatprep.subr.bf16.mxu0 0
      %922 = vmatpush1.bf16.msra.mxu0 0
      %923 = vmatprep.subr.bf16.mxu0 0
      %924 = vmatpush1.bf16.msra.mxu0 0
      %925 = vmatprep.subr.bf16.mxu0 0
      %926 = vmatpush1.bf16.msra.mxu0 0
      %927 = vmatprep.subr.bf16.mxu0 0
      %928 = vmatpush1.bf16.msra.mxu0 0
      %929 = vmatprep.subr.bf16.mxu0 0
      %930 = vmatpush1.bf16.msra.mxu0 0
      %931 = vmatprep.subr.bf16.mxu0 0
      %932 = vmatpush1.bf16.msra.mxu0 0
      %933 = vmatprep.subr.bf16.mxu0 0
      %934 = vmatpush1.bf16.msra.mxu0 0
      %935 = vmatprep.subr.bf16.mxu0 0
      %936 = vmatpush1.bf16.msra.mxu0 0
      %937 = vmatprep.subr.bf16.mxu0 0
      %938 = vmatpush1.bf16.msra.mxu0 0
      %939 = vmatprep.subr.bf16.mxu0 0
      %940 = vmatpush1.bf16.msra.mxu0 0
      %941 = vmatprep.subr.bf16.mxu0 0
      %942 = vmatpush1.bf16.msra.mxu0 0
      %943 = vmatprep.subr.bf16.mxu0 0
      %944 = vmatpush1.bf16.msra.mxu0 0
      %945 = vmatprep.subr.bf16.mxu0 0
      %946 = vmatpush1.bf16.msra.mxu0 0
      %947 = vmatprep.subr.bf16.mxu0 0
      %948 = vmatpush1.bf16.msra.mxu0 0
      %949 = vmatprep.subr.bf16.mxu0 0
      %950 = vmatpush1.bf16.msra.mxu0 0
      %951 = vmatprep.mubr.bf16.mxu0 0
      %952 = vmatmul.mubr.bf16.gmra.mrb[0].mxu0 %v917
      %v953 = vpop.f32.mrb[0].mxu0
      %v954 = vadd.f32 0.0, %v953
      %v955 = vpop.f32.mrb[0].mxu0
      %v956 = vpop.f32.mrb[0].mxu0
      %v957 = vadd.f32 0.0, %v956
      %v958 = vpop.f32.mrb[0].mxu0
      %959 = vdwg.mxu0
      %962 = vrot.lane.b32.xlu0 %v954, 16
      %v963 = vpop.permute.xlu0 %962
      %964 = vrot.lane.b32.xlu0 %v957, 16
      %v965 = vpop.permute.xlu0 %964
      %v968 = vadd.f32 %v910, %v963
      %v969 = vadd.f32 %v911, %v965
      %vm970 = vcmask 261248
      %971 = vst.msk [vmem:[#allocation5] sm:$0xff] %vm970, %v968
      %972 = vst.msk [vmem:[#allocation5 + $0x8] sm:$0xff] %vm970, %v969
      %973 = vst.msk [vmem:[#allocation3] sm:$0xff] %vm895, %v859
      %974 = vst.msk [vmem:[#allocation3 + $0x8] sm:$0xff] %vm895, %v860
      %v975 = vld [vmem:[#allocation2] sm:$0xff]
      %977 = vrot.lane.b32.xlu0 %v975, 96
      %v978 = vpop.permute.xlu0 %977
      %979 = vrot.lane.b32.xlu0 %v631, 96
      %v980 = vpop.permute.xlu0 %979
      %v982 = vsel %vm632, %v978, 0
      %v985 = vsel %vm632, %v980, 0
      %987 = vmatprep.subr.bf16.mxu0 0
      %988 = vmatpush1.bf16.xpose.msra.mxu0 %v985
      %989 = vmatprep.subr.bf16.mxu0 0
      %990 = vmatpush1.bf16.xpose.msra.mxu0 0
      %991 = vmatprep.subr.bf16.mxu0 0
      %992 = vmatpush1.bf16.xpose.msra.mxu0 0
      %993 = vmatprep.subr.bf16.mxu0 0
      %994 = vmatpush1.bf16.xpose.msra.mxu0 0
      %995 = vmatprep.subr.bf16.mxu0 0
      %996 = vmatpush1.bf16.xpose.msra.mxu0 0
      %997 = vmatprep.subr.bf16.mxu0 0
      %998 = vmatpush1.bf16.xpose.msra.mxu0 0
      %999 = vmatprep.subr.bf16.mxu0 0
      %1000 = vmatpush1.bf16.xpose.msra.mxu0 0
      %1001 = vmatprep.subr.bf16.mxu0 0
      %1002 = vmatpush1.bf16.xpose.msra.mxu0 0
      %1003 = vmatprep.subr.bf16.mxu0 0
      %1004 = vmatpush1.bf16.xpose.msra.mxu0 0
      %1005 = vmatprep.subr.bf16.mxu0 0
      %1006 = vmatpush1.bf16.xpose.msra.mxu0 0
      %1007 = vmatprep.subr.bf16.mxu0 0
      %1008 = vmatpush1.bf16.xpose.msra.mxu0 0
      %1009 = vmatprep.subr.bf16.mxu0 0
      %1010 = vmatpush1.bf16.xpose.msra.mxu0 0
      %1011 = vmatprep.subr.bf16.mxu0 0
      %1012 = vmatpush1.bf16.xpose.msra.mxu0 0
      %1013 = vmatprep.subr.bf16.mxu0 0
      %1014 = vmatpush1.bf16.xpose.msra.mxu0 0
      %1015 = vmatprep.subr.bf16.mxu0 0
      %1016 = vmatpush1.bf16.xpose.msra.mxu0 0
      %1017 = vmatprep.subr.bf16.mxu0 0
      %1018 = vmatpush1.bf16.xpose.msra.mxu0 0
      %1019 = vmatprep.mubr.bf16.mxu0 0
      %1020 = vmatmul.mubr.bf16.gmra.mrb[0].mxu0 %v982
      %v1021 = vpop.f32.mrb[0].mxu0
      %v1022 = vadd.f32 0.0, %v1021
      %v1023 = vpop.f32.mrb[0].mxu0
      %v1024 = vpop.f32.mrb[0].mxu0
      %v1025 = vadd.f32 0.0, %v1024
      %v1026 = vpop.f32.mrb[0].mxu0
      %1027 = vdwg.mxu0
      %v1028 = vld [vmem:[#allocation3] sm:$0xff]
      %v1029 = vld [vmem:[#allocation3 + $0x8] sm:$0xff]
      %v1030 = vsel %vm632, %v1022, -inf
      %1031 = vmax.xlane.f32.xlu0 %v1030
      %v1032 = vpop.xlane.xlu0 %1031
      %v1033 = vsel %vm632, %v1025, -inf
      %1034 = vmax.xlane.f32.xlu0 %v1033
      %v1035 = vpop.xlane.xlu0 %1034
      %v1036 = vmax.f32 %v1028, %v1032
      %v1037 = vmax.f32 %v1029, %v1035
      %v1038 = vsub.f32 %v1028, %v1036
      %v1039 = vsub.f32 %v1029, %v1037
      %v1040 = vmul.f32 %v1038, 1.442695
      %v1041 = vpow.pop %v1040
      %v1042 = vmul.f32 %v1039, 1.442695
      %v1043 = vpow.pop %v1042
      %1045 = vset.pattern.permute.xlu0 2
      %1046 = vperm.xlu0 %1045, %v1036
      %v1047 = vpop.permute.xlu0 %1046
      %1050 = vset.pattern.permute.xlu0 2
      %1051 = vperm.xlu0 %1050, %v1037
      %v1052 = vpop.permute.xlu0 %1051
      %v1054 = vsub.f32 %v1022, %v1047
      %v1055 = vsub.f32 %v1025, %v1052
      %v1056 = vmul.f32 %v1054, 1.442695
      %v1057 = vpow.pop %v1056
      %v1058 = vmul.f32 %v1055, 1.442695
      %v1059 = vpow.pop %v1058
      %v1060 = vld [vmem:[#allocation4] sm:$0xff]
      %v1061 = vld [vmem:[#allocation4 + $0x8] sm:$0xff]
      %v1062 = vmul.f32 %v1041, %v1060
      %v1063 = vmul.f32 %v1043, %v1061
      %v1064 = vsel %vm632, %v1057, 0.0
      %1065 = vadd.xlane.f32.xlu0 %v1064
      %v1066 = vpop.xlane.xlu0 %1065
      %v1067 = vsel %vm632, %v1059, 0.0
      %1068 = vadd.xlane.f32.xlu0 %v1067
      %v1069 = vpop.xlane.xlu0 %1068
      %v1070 = vadd.f32 %v1062, %v1066
      %v1071 = vadd.f32 %v1063, %v1069
      %vm1072 = vcmask 23568
      %1073 = vst.msk [vmem:[#allocation4] sm:$0xff] %vm1072, %v1070
      %1074 = vst.msk [vmem:[#allocation4 + $0x8] sm:$0xff] %vm1072, %v1071
      %v1075 = vld [vmem:[#allocation5] sm:$0xff]
      %v1076 = vld [vmem:[#allocation5 + $0x8] sm:$0xff]
      %1078 = vset.pattern.permute.xlu0 2
      %1079 = vperm.xlu0 %1078, %v1041
      %v1080 = vpop.permute.xlu0 %1079
      %1083 = vset.pattern.permute.xlu0 2
      %1084 = vperm.xlu0 %1083, %v1043
      %v1085 = vpop.permute.xlu0 %1084
      %v1087 = vmul.f32 %v1080, %v1075
      %v1088 = vmul.f32 %v1085, %v1076
      %v1089 = vpack.c.bf16 %v1059, %v1057
      %1090 = vrot.lane.b32.xlu0 %v746, 96
      %v1091 = vpop.permute.xlu0 %1090
      %v1094 = vsel %vm632, %v1089, 0
      %1096 = vmatprep.subr.bf16.mxu0 0
      %1097 = vmatpush1.bf16.msra.mxu0 %v1091
      %1098 = vmatprep.subr.bf16.mxu0 0
      %1099 = vmatpush1.bf16.msra.mxu0 0
      %1100 = vmatprep.subr.bf16.mxu0 0
      %1101 = vmatpush1.bf16.msra.mxu0 0
      %1102 = vmatprep.subr.bf16.mxu0 0
      %1103 = vmatpush1.bf16.msra.mxu0 0
      %1104 = vmatprep.subr.bf16.mxu0 0
      %1105 = vmatpush1.bf16.msra.mxu0 0
      %1106 = vmatprep.subr.bf16.mxu0 0
      %1107 = vmatpush1.bf16.msra.mxu0 0
      %1108 = vmatprep.subr.bf16.mxu0 0
      %1109 = vmatpush1.bf16.msra.mxu0 0
      %1110 = vmatprep.subr.bf16.mxu0 0
      %1111 = vmatpush1.bf16.msra.mxu0 0
      %1112 = vmatprep.subr.bf16.mxu0 0
      %1113 = vmatpush1.bf16.msra.mxu0 0
      %1114 = vmatprep.subr.bf16.mxu0 0
      %1115 = vmatpush1.bf16.msra.mxu0 0
      %1116 = vmatprep.subr.bf16.mxu0 0
      %1117 = vmatpush1.bf16.msra.mxu0 0
      %1118 = vmatprep.subr.bf16.mxu0 0
      %1119 = vmatpush1.bf16.msra.mxu0 0
      %1120 = vmatprep.subr.bf16.mxu0 0
      %1121 = vmatpush1.bf16.msra.mxu0 0
      %1122 = vmatprep.subr.bf16.mxu0 0
      %1123 = vmatpush1.bf16.msra.mxu0 0
      %1124 = vmatprep.subr.bf16.mxu0 0
      %1125 = vmatpush1.bf16.msra.mxu0 0
      %1126 = vmatprep.subr.bf16.mxu0 0
      %1127 = vmatpush1.bf16.msra.mxu0 0
      %1128 = vmatprep.mubr.bf16.mxu0 0
      %1129 = vmatmul.mubr.bf16.gmra.mrb[0].mxu0 %v1094
      %v1130 = vpop.f32.mrb[0].mxu0
      %v1131 = vadd.f32 0.0, %v1130
      %v1132 = vpop.f32.mrb[0].mxu0
      %v1133 = vpop.f32.mrb[0].mxu0
      %v1134 = vadd.f32 0.0, %v1133
      %v1135 = vpop.f32.mrb[0].mxu0
      %1136 = vdwg.mxu0
      %1139 = vrot.lane.b32.xlu0 %v1131, 32
      %v1140 = vpop.permute.xlu0 %1139
      %1141 = vrot.lane.b32.xlu0 %v1134, 32
      %v1142 = vpop.permute.xlu0 %1141
      %v1145 = vadd.f32 %v1087, %v1140
      %v1146 = vadd.f32 %v1088, %v1142
      %vm1147 = vcmask 392448
      %1148 = vst.msk [vmem:[#allocation5] sm:$0xff] %vm1147, %v1145
      %1149 = vst.msk [vmem:[#allocation5 + $0x8] sm:$0xff] %vm1147, %v1146
      %1150 = vst.msk [vmem:[#allocation3] sm:$0xff] %vm1072, %v1036
      %1151 = vst.msk [vmem:[#allocation3 + $0x8] sm:$0xff] %vm1072, %v1037
      %v1152 = vld [vmem:[#allocation2] sm:$0xff]
      %1154 = vrot.lane.b32.xlu0 %v1152, 80
      %v1155 = vpop.permute.xlu0 %1154
      %1156 = vrot.lane.b32.xlu0 %v631, 80
      %v1157 = vpop.permute.xlu0 %1156
      %v1159 = vsel %vm632, %v1155, 0
      %v1162 = vsel %vm632, %v1157, 0
      %1164 = vmatprep.subr.bf16.mxu0 0
      %1165 = vmatpush1.bf16.xpose.msra.mxu0 %v1162
      %1166 = vmatprep.subr.bf16.mxu0 0
      %1167 = vmatpush1.bf16.xpose.msra.mxu0 0
      %1168 = vmatprep.subr.bf16.mxu0 0
      %1169 = vmatpush1.bf16.xpose.msra.mxu0 0
      %1170 = vmatprep.subr.bf16.mxu0 0
      %1171 = vmatpush1.bf16.xpose.msra.mxu0 0
      %1172 = vmatprep.subr.bf16.mxu0 0
      %1173 = vmatpush1.bf16.xpose.msra.mxu0 0
      %1174 = vmatprep.subr.bf16.mxu0 0
      %1175 = vmatpush1.bf16.xpose.msra.mxu0 0
      %1176 = vmatprep.subr.bf16.mxu0 0
      %1177 = vmatpush1.bf16.xpose.msra.mxu0 0
      %1178 = vmatprep.subr.bf16.mxu0 0
      %1179 = vmatpush1.bf16.xpose.msra.mxu0 0
      %1180 = vmatprep.subr.bf16.mxu0 0
      %1181 = vmatpush1.bf16.xpose.msra.mxu0 0
      %1182 = vmatprep.subr.bf16.mxu0 0
      %1183 = vmatpush1.bf16.xpose.msra.mxu0 0
      %1184 = vmatprep.subr.bf16.mxu0 0
      %1185 = vmatpush1.bf16.xpose.msra.mxu0 0
      %1186 = vmatprep.subr.bf16.mxu0 0
      %1187 = vmatpush1.bf16.xpose.msra.mxu0 0
      %1188 = vmatprep.subr.bf16.mxu0 0
      %1189 = vmatpush1.bf16.xpose.msra.mxu0 0
      %1190 = vmatprep.subr.bf16.mxu0 0
      %1191 = vmatpush1.bf16.xpose.msra.mxu0 0
      %1192 = vmatprep.subr.bf16.mxu0 0
      %1193 = vmatpush1.bf16.xpose.msra.mxu0 0
      %1194 = vmatprep.subr.bf16.mxu0 0
      %1195 = vmatpush1.bf16.xpose.msra.mxu0 0
      %1196 = vmatprep.mubr.bf16.mxu0 0
      %1197 = vmatmul.mubr.bf16.gmra.mrb[0].mxu0 %v1159
      %v1198 = vpop.f32.mrb[0].mxu0
      %v1199 = vadd.f32 0.0, %v1198
      %v1200 = vpop.f32.mrb[0].mxu0
      %v1201 = vpop.f32.mrb[0].mxu0
      %v1202 = vadd.f32 0.0, %v1201
      %v1203 = vpop.f32.mrb[0].mxu0
      %1204 = vdwg.mxu0
      %v1205 = vld [vmem:[#allocation3] sm:$0xff]
      %v1206 = vld [vmem:[#allocation3 + $0x8] sm:$0xff]
      %v1207 = vsel %vm632, %v1199, -inf
      %1208 = vmax.xlane.f32.xlu0 %v1207
      %v1209 = vpop.xlane.xlu0 %1208
      %v1210 = vsel %vm632, %v1202, -inf
      %1211 = vmax.xlane.f32.xlu0 %v1210
      %v1212 = vpop.xlane.xlu0 %1211
      %v1213 = vmax.f32 %v1205, %v1209
      %v1214 = vmax.f32 %v1206, %v1212
      %v1215 = vsub.f32 %v1205, %v1213
      %v1216 = vsub.f32 %v1206, %v1214
      %v1217 = vmul.f32 %v1215, 1.442695
      %v1218 = vpow.pop %v1217
      %v1219 = vmul.f32 %v1216, 1.442695
      %v1220 = vpow.pop %v1219
      %1222 = vset.pattern.permute.xlu0 3
      %1223 = vperm.xlu0 %1222, %v1213
      %v1224 = vpop.permute.xlu0 %1223
      %1227 = vset.pattern.permute.xlu0 3
      %1228 = vperm.xlu0 %1227, %v1214
      %v1229 = vpop.permute.xlu0 %1228
      %v1231 = vsub.f32 %v1199, %v1224
      %v1232 = vsub.f32 %v1202, %v1229
      %v1233 = vmul.f32 %v1231, 1.442695
      %v1234 = vpow.pop %v1233
      %v1235 = vmul.f32 %v1232, 1.442695
      %v1236 = vpow.pop %v1235
      %v1237 = vld [vmem:[#allocation4] sm:$0xff]
      %v1238 = vld [vmem:[#allocation4 + $0x8] sm:$0xff]
      %v1239 = vmul.f32 %v1218, %v1237
      %v1240 = vmul.f32 %v1220, %v1238
      %v1241 = vsel %vm632, %v1234, 0.0
      %1242 = vadd.xlane.f32.xlu0 %v1241
      %v1243 = vpop.xlane.xlu0 %1242
      %v1244 = vsel %vm632, %v1236, 0.0
      %1245 = vadd.xlane.f32.xlu0 %v1244
      %v1246 = vpop.xlane.xlu0 %1245
      %v1247 = vadd.f32 %v1239, %v1243
      %v1248 = vadd.f32 %v1240, %v1246
      %vm1249 = vcmask 31768
      %1250 = vst.msk [vmem:[#allocation4] sm:$0xff] %vm1249, %v1247
      %1251 = vst.msk [vmem:[#allocation4 + $0x8] sm:$0xff] %vm1249, %v1248
      %v1252 = vld [vmem:[#allocation5] sm:$0xff]
      %v1253 = vld [vmem:[#allocation5 + $0x8] sm:$0xff]
      %1255 = vset.pattern.permute.xlu0 3
      %1256 = vperm.xlu0 %1255, %v1218
      %v1257 = vpop.permute.xlu0 %1256
      %1260 = vset.pattern.permute.xlu0 3
      %1261 = vperm.xlu0 %1260, %v1220
      %v1262 = vpop.permute.xlu0 %1261
      %v1264 = vmul.f32 %v1257, %v1252
      %v1265 = vmul.f32 %v1262, %v1253
      %v1266 = vpack.c.bf16 %v1236, %v1234
      %1267 = vrot.lane.b32.xlu0 %v746, 80
      %v1268 = vpop.permute.xlu0 %1267
      %v1271 = vsel %vm632, %v1266, 0
      %1273 = vmatprep.subr.bf16.mxu0 0
      %1274 = vmatpush1.bf16.msra.mxu0 %v1268
      %1275 = vmatprep.subr.bf16.mxu0 0
      %1276 = vmatpush1.bf16.msra.mxu0 0
      %1277 = vmatprep.subr.bf16.mxu0 0
      %1278 = vmatpush1.bf16.msra.mxu0 0
      %1279 = vmatprep.subr.bf16.mxu0 0
      %1280 = vmatpush1.bf16.msra.mxu0 0
      %1281 = vmatprep.subr.bf16.mxu0 0
      %1282 = vmatpush1.bf16.msra.mxu0 0
      %1283 = vmatprep.subr.bf16.mxu0 0
      %1284 = vmatpush1.bf16.msra.mxu0 0
      %1285 = vmatprep.subr.bf16.mxu0 0
      %1286 = vmatpush1.bf16.msra.mxu0 0
      %1287 = vmatprep.subr.bf16.mxu0 0
      %1288 = vmatpush1.bf16.msra.mxu0 0
      %1289 = vmatprep.subr.bf16.mxu0 0
      %1290 = vmatpush1.bf16.msra.mxu0 0
      %1291 = vmatprep.subr.bf16.mxu0 0
      %1292 = vmatpush1.bf16.msra.mxu0 0
      %1293 = vmatprep.subr.bf16.mxu0 0
      %1294 = vmatpush1.bf16.msra.mxu0 0
      %1295 = vmatprep.subr.bf16.mxu0 0
      %1296 = vmatpush1.bf16.msra.mxu0 0
      %1297 = vmatprep.subr.bf16.mxu0 0
      %1298 = vmatpush1.bf16.msra.mxu0 0
      %1299 = vmatprep.subr.bf16.mxu0 0
      %1300 = vmatpush1.bf16.msra.mxu0 0
      %1301 = vmatprep.subr.bf16.mxu0 0
      %1302 = vmatpush1.bf16.msra.mxu0 0
      %1303 = vmatprep.subr.bf16.mxu0 0
      %1304 = vmatpush1.bf16.msra.mxu0 0
      %1305 = vmatprep.mubr.bf16.mxu0 0
      %1306 = vmatmul.mubr.bf16.gmra.mrb[0].mxu0 %v1271
      %v1307 = vpop.f32.mrb[0].mxu0
      %v1308 = vadd.f32 0.0, %v1307
      %v1309 = vpop.f32.mrb[0].mxu0
      %v1310 = vpop.f32.mrb[0].mxu0
      %v1311 = vadd.f32 0.0, %v1310
      %v1312 = vpop.f32.mrb[0].mxu0
      %1313 = vdwg.mxu0
      %1316 = vrot.lane.b32.xlu0 %v1308, 48
      %v1317 = vpop.permute.xlu0 %1316
      %1318 = vrot.lane.b32.xlu0 %v1311, 48
      %v1319 = vpop.permute.xlu0 %1318
      %v1322 = vadd.f32 %v1264, %v1317
      %v1323 = vadd.f32 %v1265, %v1319
      %vm1324 = vcmask 523648
      %1325 = vst.msk [vmem:[#allocation5] sm:$0xff] %vm1324, %v1322
      %1326 = vst.msk [vmem:[#allocation5 + $0x8] sm:$0xff] %vm1324, %v1323
      %1327 = vst.msk [vmem:[#allocation3] sm:$0xff] %vm1249, %v1213
      %1328 = vst.msk [vmem:[#allocation3 + $0x8] sm:$0xff] %vm1249, %v1214
      // Predicated region
      $region45: #{run.18} parent=39 // pred_check
        %p1329 = pneg %p416
      $region46: #{run.18} parent=39 // pred_check_branch
        %1331 = sbr.rel (%p1329) target = $region48
      $region47: #{run.18} parent=39 // pred_region
        %v1332 = vld [vmem:[#allocation4] sm:$0xff]
        %v1333 = vld [vmem:[#allocation4 + $0x8] sm:$0xff]
        %v1334 = vrcp.pop %v1332
        %v1335 = vrcp.pop %v1333
        %v1336 = vld [vmem:[#allocation5] sm:$0xff]
        %v1337 = vld [vmem:[#allocation5 + $0x8] sm:$0xff]
        %1339 = vset.pattern.permute.xlu0 0
        %1340 = vperm.xlu0 %1339, %v1334
        %v1341 = vpop.permute.xlu0 %1340
        %1344 = vset.pattern.permute.xlu0 0
        %1345 = vperm.xlu0 %1344, %v1335
        %v1346 = vpop.permute.xlu0 %1345
        %v1348 = vmul.f32 %v1336, %v1341
        %v1349 = vmul.f32 %v1337, %v1346
        %v1350 = vpack.c.bf16 %v1349, %v1348
        %v1352 = vunpack.c.l.b16 %v1350
        %v1353 = vunpack.c.h.b16 %v1350
        %v1354 = vpack.c.b16 %v1352, %v1352
        %v1355 = vpack.c.b16 %v1353, %v1353
        %vm1358 = vcmask 125952
        %1359 = vst.msk [vmem:[%s413] sm:$0xf] %vm1358, %v1354
        %1360 = vst.msk [vmem:[%s413 + $0x4] sm:$0xf] %vm1358, %v1355
        %v1361 = vld [vmem:[#allocation5] sm:$0xff]
        %v1362 = vld [vmem:[#allocation5 + $0x8] sm:$0xff]
        %1363 = vset.pattern.permute.xlu0 1
        %1364 = vperm.xlu0 %1363, %v1334
        %v1365 = vpop.permute.xlu0 %1364
        %1367 = vset.pattern.permute.xlu0 1
        %1368 = vperm.xlu0 %1367, %v1335
        %v1369 = vpop.permute.xlu0 %1368
        %v1371 = vmul.f32 %v1361, %v1365
        %v1372 = vmul.f32 %v1362, %v1369
        %v1373 = vpack.c.bf16 %v1372, %v1371
        %v1375 = vunpack.c.l.b16 %v1373
        %v1376 = vunpack.c.h.b16 %v1373
        %v1377 = vpack.c.b16 %v1375, %v1375
        %v1378 = vpack.c.b16 %v1376, %v1376
        %vm1381 = vcmask 257152
        %1382 = vst.msk [vmem:[%s413] sm:$0xf] %vm1381, %v1377
        %1383 = vst.msk [vmem:[%s413 + $0x4] sm:$0xf] %vm1381, %v1378
        %v1384 = vld [vmem:[#allocation5] sm:$0xff]
        %v1385 = vld [vmem:[#allocation5 + $0x8] sm:$0xff]
        %1386 = vset.pattern.permute.xlu0 2
        %1387 = vperm.xlu0 %1386, %v1334
        %v1388 = vpop.permute.xlu0 %1387
        %1390 = vset.pattern.permute.xlu0 2
        %1391 = vperm.xlu0 %1390, %v1335
        %v1392 = vpop.permute.xlu0 %1391
        %v1394 = vmul.f32 %v1384, %v1388
        %v1395 = vmul.f32 %v1385, %v1392
        %v1396 = vpack.c.bf16 %v1395, %v1394
        %v1398 = vunpack.c.l.b16 %v1396
        %v1399 = vunpack.c.h.b16 %v1396
        %v1400 = vpack.c.b16 %v1398, %v1398
        %v1401 = vpack.c.b16 %v1399, %v1399
        %vm1404 = vcmask 388352
        %1405 = vst.msk [vmem:[%s413] sm:$0xf] %vm1404, %v1400
        %1406 = vst.msk [vmem:[%s413 + $0x4] sm:$0xf] %vm1404, %v1401
        %v1407 = vld [vmem:[#allocation5] sm:$0xff]
        %v1408 = vld [vmem:[#allocation5 + $0x8] sm:$0xff]
        %1409 = vset.pattern.permute.xlu0 3
        %1410 = vperm.xlu0 %1409, %v1334
        %v1411 = vpop.permute.xlu0 %1410
        %1413 = vset.pattern.permute.xlu0 3
        %1414 = vperm.xlu0 %1413, %v1335
        %v1415 = vpop.permute.xlu0 %1414
        %v1417 = vmul.f32 %v1407, %v1411
        %v1418 = vmul.f32 %v1408, %v1415
        %v1419 = vpack.c.bf16 %v1418, %v1417
        %v1421 = vunpack.c.l.b16 %v1419
        %v1422 = vunpack.c.h.b16 %v1419
        %v1423 = vpack.c.b16 %v1421, %v1421
        %v1424 = vpack.c.b16 %v1422, %v1422
        %vm1427 = vcmask 519552
        %1428 = vst.msk [vmem:[%s413] sm:$0xf] %vm1427, %v1423
        %1429 = vst.msk [vmem:[%s413 + $0x4] sm:$0xf] %vm1427, %v1424
      $region48: #{run.18} parent=39 // pred_fallthru
        _
      %s1430 = smul.u32 2, %s22
      %p1431 = scmp.lt.s32.totalorder %s21, 1
      %s1432 = scalar_select %p1431, %s21, 1
      %p1433 = scmp.lt.s32.totalorder %s1430, 1
      %s1434 = scalar_select %p1433, %s1430, 1
      %s1435 = smul.addr %s1432, 2
      %s1436 = sadd.s32 %s1434, %s1435
      %s1437 = smul.addr %s1436, 4
      %s1438 = scalar_lea.vmem %s5, %s1437
      // Predicated region
      $region49: #{run.18} parent=39 // pred_check
        %p1439 = pneg %p195
      $region50: #{run.18} parent=39 // pred_check_branch
        %1441 = sbr.rel (%p1439) target = $region52
      $region51: #{run.18} parent=39 // pred_region
        %s1442 = smul.u32 2, %s22
      $region52: #{run.18} parent=39 // pred_fallthru
        _
    $region40: #{run.18} parent=5 // pred_fallthru
      _
    %p1443 = scmp.le.s32.totalorder 2, %s11
    // Predicated region
    $region53: #{run.18} parent=5 // pred_check
      %p1444 = pneg %p1443
    $region54: #{run.18} parent=5 // pred_check_branch
      %1446 = sbr.rel (%p1444) target = $region56
    $region55: #{run.18} parent=5 // pred_region
      %s1447 = ssub.s32 %s11, 2
      // Predicated region
      $region57: #{run.18} parent=55 // pred_check
        %p1448 = pneg %p201
      $region58: #{run.18} parent=55 // pred_check_branch
        %1450 = sbr.rel (%p1448) target = $region60
      $region59: #{run.18} parent=55 // pred_region
        %s1451 = smul.u32 2, %s25
        %p1452 = scmp.lt.s32.totalorder %s24, 1
        %s1453 = scalar_select %p1452, %s24, 1
        %p1454 = scmp.lt.s32.totalorder %s1451, 1
        %s1455 = scalar_select %p1454, %s1451, 1
        %s1456 = smul.addr %s1453, 2
        %s1457 = sadd.s32 %s1455, %s1456
        %s1458 = smul.addr %s1457, 4
        %s1459 = scalar_lea.vmem %s5, %s1458
      $region60: #{run.18} parent=55 // pred_fallthru
        _
    $region56: #{run.18} parent=5 // pred_fallthru
      _
  $region6: #{run.18} parent=0 // loop_footer
    %s15 = sadd.s32 1, %s11
  $region7: #{run.18} parent=0 // loop_footer_branch
    %10 = sbr.rel target = $region3
  $region8: #{run.18} parent=0 // loop_exit
    _

</llo_original>
